<compile_context>
chip_gen: v5e
topology: v5e:2x2
jax: 0.10.0
libtpu: 0.0.40
codegen_flags: <defaults>
</compile_context>

<pallas_src>
import functools
import math

import jax
import jax.numpy as jnp
from jax.experimental import pallas as pl
from jax.experimental.pallas import tpu as pltpu


def _round_up(x, m):
    return (x + m - 1) // m * m


# ---------------------------------------------------------------------------
# Fused conv (sum of shifted 1x1 matmuls) + BatchNorm + (residual add) + ReLU
# ---------------------------------------------------------------------------
def _conv_bn_kernel(*refs, taps, B, Ho, Wo, Cp, eps, relu, fuse_residual,
                    m_true):
    if fuse_residual:
        x_ref, w_ref, g_ref, b_ref, res_ref, o_ref = refs
    else:
        x_ref, w_ref, g_ref, b_ref, o_ref = refs
        res_ref = None

    M = B * Ho * Wo
    tn = o_ref.shape[1]
    acc = jnp.zeros((M, tn), jnp.float32)

    # Conv as a sum of shifted 1x1 matmuls.  Every tap is a unit-stride window
    # of the on-chip activation copy (phase-decomposed for stride 2), so no
    # im2col is ever written to HBM.  bf16 MXU inputs, f32 accumulation.
    for t, (ph, d, e) in enumerate(taps):
        xt = x_ref[ph, :, pl.ds(d, Ho), pl.ds(e, Wo), :]     # (B, Ho, Wo, Cp)
        xt = xt.reshape(M, Cp)
        wt = w_ref[pl.ds(t * Cp, Cp), :]
        acc = acc + jnp.dot(xt, wt, preferred_element_type=jnp.float32)

    # Training-mode BatchNorm over M = B*Ho*Wo (per output channel), two-pass
    # centered variance in f32 for numerical safety.
    inv_m = 1.0 / m_true
    mean = jnp.sum(acc, axis=0, keepdims=True) * inv_m
    cen = acc - mean
    var = jnp.sum(cen * cen, axis=0, keepdims=True) * inv_m
    y = cen * jax.lax.rsqrt(var + eps) * g_ref[...] + b_ref[...]

    if fuse_residual:
        y = y + res_ref[...]
    if relu:
        y = jnp.maximum(y, 0.0)
    o_ref[...] = y.astype(o_ref.dtype)


def conv_bn(x, p, *, stride, pad, relu, residual=None, eps=1e-5):
    """x: (B, H, W, Cin) f32 NHWC -> (B, Ho, Wo, Cout) f32.

    One fused Pallas kernel: conv (kh x kw, stride/pad) + BatchNorm
    (batch statistics) + optional residual add + ReLU.
    """
    kh, kw, cin, cout = p["kh"], p["kw"], p["cin"], p["cout"]
    Cp, Np = p["Cp"], p["Np"]
    B, H, W, C = x.shape
    assert C == cin
    Ho = (H + 2 * pad - kh) // stride + 1
    Wo = (W + 2 * pad - kw) // stride + 1
    M = B * Ho * Wo

    # Single spatial+channel zero-pad + bf16 cast: the only activation copy.
    xpad = jnp.pad(x, ((0, 0), (pad, pad), (pad, pad), (0, Cp - C)))
    xpad = xpad.astype(jnp.bfloat16)

    if stride == 1:
        xin = xpad[None]                                   # (1, B, Hp, Wp, Cp)
        taps = tuple((0, i, j) for i in range(kh) for j in range(kw))
    elif kh == 1 and kw == 1:
        xin = xpad[:, ::stride, ::stride, :][None]         # (1, B, Ho, Wo, Cp)
        taps = ((0, 0, 0),)
    else:
        assert stride == 2, "BasicBlock only uses stride 1 or 2"
        Hp, Wp = H + 2 * pad, W + 2 * pad
        Hs, Ws = -(-Hp // 2), -(-Wp // 2)
        phases = []
        for pp in range(2):
            for qq in range(2):
                ph = xpad[:, pp::2, qq::2, :]
                ph = jnp.pad(ph, ((0, 0), (0, Hs - ph.shape[1]),
                                  (0, Ws - ph.shape[2]), (0, 0)))
                phases.append(ph)
        xin = jnp.stack(phases, axis=0)                    # (4, B, Hs, Ws, Cp)
        taps = tuple(((i % 2) * 2 + (j % 2), i // 2, j // 2)
                     for i in range(kh) for j in range(kw))

    # 256-wide output-channel tiles when divisible (v6e/v7x MXU width),
    # 128 otherwise (matches v5e's 128x128 MXU).
    tn = 256 if Np % 256 == 0 else 128
    grid = (Np // tn,)

    in_specs = [
        pl.BlockSpec(xin.shape, lambda j: (0, 0, 0, 0, 0)),
        pl.BlockSpec((kh * kw * Cp, tn), lambda j: (0, j)),
        pl.BlockSpec((1, tn), lambda j: (0, j)),
        pl.BlockSpec((1, tn), lambda j: (0, j)),
    ]
    args = [xin, p["w"], p["gamma"], p["beta"]]

    fuse_residual = residual is not None
    if fuse_residual:
        res = residual.astype(jnp.float32).reshape(M, residual.shape[-1])
        res = jnp.pad(res, ((0, 0), (0, Np - res.shape[-1])))
        in_specs.append(pl.BlockSpec((M, tn), lambda j: (0, j)))
        args.append(res)

    kernel = functools.partial(
        _conv_bn_kernel, taps=taps, B=B, Ho=Ho, Wo=Wo, Cp=Cp, eps=eps,
        relu=relu, fuse_residual=fuse_residual, m_true=float(M))

    # TODO(synk): for much larger B*Ho*Wo / Cin this needs an M/K grid
    # reduction (Welford or two-pass BN across tiles); at BasicBlock demo
    # sizes everything fits comfortably in VMEM.
    out = pl.pallas_call(
        kernel,
        out_shape=jax.ShapeDtypeStruct((M, Np), jnp.float32),
        grid_spec=pltpu.PrefetchScalarGridSpec(
            num_scalar_prefetch=0,
            grid=grid,
            in_specs=in_specs,
            out_specs=pl.BlockSpec((M, tn), lambda j: (0, j)),
        ),
        compiler_params=pltpu.CompilerParams(
            dimension_semantics=("parallel",)),
    )(*args)
    return out[:, :cout].reshape(B, Ho, Wo, cout)


# ---------------------------------------------------------------------------
# Parameters (pre-padded / pre-packed bf16 weights; BN gamma=1, beta=0)
# ---------------------------------------------------------------------------
def make_conv_bn_params(key, kh, kw, cin, cout):
    fan_out = kh * kw * cout
    std = math.sqrt(2.0 / fan_out)
    w = jax.random.normal(key, (kh, kw, cin, cout), jnp.float32) * std
    Cp, Np = _round_up(cin, 128), _round_up(cout, 128)
    wp = jnp.pad(w, ((0, 0), (0, 0), (0, Cp - cin), (0, Np - cout)))
    wp = wp.reshape(kh * kw * Cp, Np).astype(jnp.bfloat16)
    gamma = jnp.ones((1, Np), jnp.float32)    # BatchNorm weight init = 1
    beta = jnp.zeros((1, Np), jnp.float32)    # BatchNorm bias   init = 0
    return {"w": wp, "gamma": gamma, "beta": beta,
            "kh": kh, "kw": kw, "cin": cin, "cout": cout, "Cp": Cp, "Np": Np}


def init_basic_block(key, inplanes, planes, stride=1, downsample=False):
    k1, k2, k3 = jax.random.split(key, 3)
    p = {"conv1": make_conv_bn_params(k1, 3, 3, inplanes, planes),
         "conv2": make_conv_bn_params(k2, 3, 3, planes, planes),
         "stride": stride}
    if downsample:
        # torchvision-style downsample: 1x1 conv (stride) + BatchNorm.
        p["downsample"] = make_conv_bn_params(k3, 1, 1, inplanes, planes)
    return p


# ---------------------------------------------------------------------------
# BasicBlock forward (mirrors the PyTorch module, training-mode BatchNorm)
# ---------------------------------------------------------------------------
def basic_block_forward(x_nchw, p):
    x = jnp.transpose(x_nchw, (0, 2, 3, 1))                 # NCHW -> NHWC
    out = conv_bn(x, p["conv1"], stride=p["stride"], pad=1, relu=True)
    if "downsample" in p:
        identity = conv_bn(x, p["downsample"], stride=p["stride"], pad=0,
                           relu=False)
    else:
        identity = x
    # conv2 + bn2 + (out += identity) + relu fused into a single kernel.
    out = conv_bn(out, p["conv2"], stride=1, pad=1, relu=True,
                  residual=identity)
    return jnp.transpose(out, (0, 3, 1, 2))                 # NHWC -> NCHW


if __name__ == "__main__":
    key = jax.random.PRNGKey(0)
    kx, kp1, kp2 = jax.random.split(key, 3)
    # NCHW like the PyTorch module: batch=2, channels=16, 16x16 spatial.
    x = jax.random.normal(kx, (2, 16, 16, 16), jnp.float32)
    blk_ds = init_basic_block(kp1, inplanes=16, planes=32, stride=2,
                              downsample=True)    # stride-2 + downsample path
    blk_id = init_basic_block(kp2, inplanes=32, planes=32, stride=1,
                              downsample=False)   # stride-1 identity path

    @jax.jit
    def forward(inp):
        y = basic_block_forward(inp, blk_ds)
        y = basic_block_forward(y, blk_id)
        return y

    y = jax.block_until_ready(forward(x))
    assert y.shape == (2, 32, 8, 8), y.shape
    assert bool(jnp.all(jnp.isfinite(y)))
    print("KERNEL_OK")
</pallas_src>

<mosaic_0001>
module attributes {stable_mosaic.version = 11 : i64} {
  func.func @_conv_bn_kernel(%arg0: i32, %arg1: memref<1x2x8x8x128xbf16, #tpu.memory_space<vmem>>, %arg2: memref<128x128xbf16, #tpu.memory_space<vmem>>, %arg3: memref<1x128xf32, #tpu.memory_space<vmem>>, %arg4: memref<1x128xf32, #tpu.memory_space<vmem>>, %arg5: memref<128x128xf32, #tpu.memory_space<vmem>>) attributes {dimension_semantics = [#tpu.dimension_semantics<parallel>], iteration_bounds = array<i64: 1>, scalar_prefetch = 0 : i64, scratch_operands = 0 : i64, tpu.core_type = #tpu.core_type<tc>, window_params = [{pipeline_mode = #tpu.pipeline_mode<synchronous>, transform_indices = @transform_0, window_bounds = array<i64: 1, 2, 8, 8, 128>}, {transform_indices = @transform_1, window_bounds = array<i64: 128, 128>}, {transform_indices = @transform_2, window_bounds = array<i64: 1, 128>}, {transform_indices = @transform_3, window_bounds = array<i64: 1, 128>}, {transform_indices = @transform_4, window_bounds = array<i64: 128, 128>}]} {
    %cst = arith.constant 0.000000e+00 : f32
    %0 = vector.broadcast %cst : f32 to vector<128x128xf32>
    %c0 = arith.constant 0 : index
    %c0_0 = arith.constant 0 : index
    %c0_1 = arith.constant 0 : index
    %c0_2 = arith.constant 0 : index
    %c0_3 = arith.constant 0 : index
    %1 = vector.load %arg1[%c0, %c0_0, %c0_1, %c0_2, %c0_3] : memref<1x2x8x8x128xbf16, #tpu.memory_space<vmem>>, vector<1x2x8x8x128xbf16>
    %2 = vector.shape_cast %1 : vector<1x2x8x8x128xbf16> to vector<2x8x8x128xbf16>
    %3 = vector.shape_cast %2 : vector<2x8x8x128xbf16> to vector<128x128xbf16>
    %c0_4 = arith.constant 0 : index
    %c0_5 = arith.constant 0 : index
    %4 = vector.load %arg2[%c0_4, %c0_5] : memref<128x128xbf16, #tpu.memory_space<vmem>>, vector<128x128xbf16>
    %cst_6 = arith.constant dense<0.000000e+00> : vector<128x128xf32>
    %5 = tpu.matmul %3, %4, %cst_6 {dimension_numbers = #tpu.dot_dimension_numbers<[1], [0], [0], [1], [0, 0, 1, 1], [], []>} : vector<128x128xbf16>, vector<128x128xbf16>, vector<128x128xf32> -> vector<128x128xf32>
    %6 = arith.addf %0, %5 : vector<128x128xf32>
    %cst_7 = arith.constant dense<0.000000e+00> : vector<128xf32>
    %7 = vector.multi_reduction <add>, %6, %cst_7 [0] : vector<128x128xf32> to vector<128xf32>
    %8 = vector.shape_cast %7 : vector<128xf32> to vector<1x128xf32>
    %cst_8 = arith.constant 7.812500e-03 : f32
    %9 = vector.broadcast %cst_8 : f32 to vector<1x128xf32>
    %10 = arith.mulf %8, %9 : vector<1x128xf32>
    %11 = vector.broadcast %10 : vector<1x128xf32> to vector<128x128xf32>
    %12 = arith.subf %6, %11 : vector<128x128xf32>
    %13 = arith.mulf %12, %12 : vector<128x128xf32>
    %cst_9 = arith.constant dense<0.000000e+00> : vector<128xf32>
    %14 = vector.multi_reduction <add>, %13, %cst_9 [0] : vector<128x128xf32> to vector<128xf32>
    %15 = vector.shape_cast %14 : vector<128xf32> to vector<1x128xf32>
    %cst_10 = arith.constant 7.812500e-03 : f32
    %16 = vector.broadcast %cst_10 : f32 to vector<1x128xf32>
    %17 = arith.mulf %15, %16 : vector<1x128xf32>
    %cst_11 = arith.constant 9.99999974E-6 : f32
    %18 = vector.broadcast %cst_11 : f32 to vector<1x128xf32>
    %19 = arith.addf %17, %18 : vector<1x128xf32>
    %20 = math.rsqrt %19 : vector<1x128xf32>
    %21 = vector.broadcast %20 : vector<1x128xf32> to vector<128x128xf32>
    %22 = arith.mulf %12, %21 : vector<128x128xf32>
    %c0_12 = arith.constant 0 : index
    %c0_13 = arith.constant 0 : index
    %23 = vector.load %arg3[%c0_12, %c0_13] : memref<1x128xf32, #tpu.memory_space<vmem>>, vector<1x128xf32>
    %24 = vector.broadcast %23 : vector<1x128xf32> to vector<128x128xf32>
    %25 = arith.mulf %22, %24 : vector<128x128xf32>
    %c0_14 = arith.constant 0 : index
    %c0_15 = arith.constant 0 : index
    %26 = vector.load %arg4[%c0_14, %c0_15] : memref<1x128xf32, #tpu.memory_space<vmem>>, vector<1x128xf32>
    %27 = vector.broadcast %26 : vector<1x128xf32> to vector<128x128xf32>
    %28 = arith.addf %25, %27 : vector<128x128xf32>
    %c0_16 = arith.constant 0 : index
    %c0_17 = arith.constant 0 : index
    %29 = vector.load %arg5[%c0_16, %c0_17] : memref<128x128xf32, #tpu.memory_space<vmem>>, vector<128x128xf32>
    tpu.vector_store %arg5[%c0_16, %c0_17], %28 {strides = array<i32>} : memref<128x128xf32, #tpu.memory_space<vmem>>, vector<128x128xf32>,
    return
  }
  func.func @transform_0(%arg0: i32) -> (i32, i32, i32, i32, i32) {
    %c0_i32 = arith.constant 0 : i32
    %c0_i32_0 = arith.constant 0 : i32
    %c0_i32_1 = arith.constant 0 : i32
    %c0_i32_2 = arith.constant 0 : i32
    %c0_i32_3 = arith.constant 0 : i32
    %c0_i32_4 = arith.constant 0 : i32
    return %c0_i32, %c0_i32_0, %c0_i32_1, %c0_i32_2, %c0_i32_3 : i32, i32, i32, i32, i32
  }
  func.func @transform_1(%arg0: i32) -> (i32, i32) {
    %c0_i32 = arith.constant 0 : i32
    %c0_i32_0 = arith.constant 0 : i32
    return %c0_i32, %arg0 : i32, i32
  }
  func.func @transform_2(%arg0: i32) -> (i32, i32) {
    %c0_i32 = arith.constant 0 : i32
    %c0_i32_0 = arith.constant 0 : i32
    return %c0_i32, %arg0 : i32, i32
  }
  func.func @transform_3(%arg0: i32) -> (i32, i32) {
    %c0_i32 = arith.constant 0 : i32
    %c0_i32_0 = arith.constant 0 : i32
    return %c0_i32, %arg0 : i32, i32
  }
  func.func @transform_4(%arg0: i32) -> (i32, i32) {
    %c0_i32 = arith.constant 0 : i32
    %c0_i32_0 = arith.constant 0 : i32
    return %c0_i32, %arg0 : i32, i32
  }
}

module attributes {stable_mosaic.version = 11 : i64} {
  func.func @_conv_bn_kernel(%arg0: i32, %arg1: memref<4x2x9x9x128xbf16, #tpu.memory_space<vmem>>, %arg2: memref<1152x128xbf16, #tpu.memory_space<vmem>>, %arg3: memref<1x128xf32, #tpu.memory_space<vmem>>, %arg4: memref<1x128xf32, #tpu.memory_space<vmem>>, %arg5: memref<128x128xf32, #tpu.memory_space<vmem>>) attributes {dimension_semantics = [#tpu.dimension_semantics<parallel>], iteration_bounds = array<i64: 1>, scalar_prefetch = 0 : i64, scratch_operands = 0 : i64, tpu.core_type = #tpu.core_type<tc>, window_params = [{pipeline_mode = #tpu.pipeline_mode<synchronous>, transform_indices = @transform_0, window_bounds = array<i64: 4, 2, 9, 9, 128>}, {transform_indices = @transform_1, window_bounds = array<i64: 1152, 128>}, {transform_indices = @transform_2, window_bounds = array<i64: 1, 128>}, {transform_indices = @transform_3, window_bounds = array<i64: 1, 128>}, {transform_indices = @transform_4, window_bounds = array<i64: 128, 128>}]} {
    %cst = arith.constant 0.000000e+00 : f32
    %0 = vector.broadcast %cst : f32 to vector<128x128xf32>
    %c0 = arith.constant 0 : index
    %c0_0 = arith.constant 0 : index
    %c0_1 = arith.constant 0 : index
    %c0_2 = arith.constant 0 : index
    %c0_3 = arith.constant 0 : index
    %1 = vector.load %arg1[%c0, %c0_0, %c0_1, %c0_2, %c0_3] : memref<4x2x9x9x128xbf16, #tpu.memory_space<vmem>>, vector<1x2x8x8x128xbf16>
    %2 = vector.shape_cast %1 : vector<1x2x8x8x128xbf16> to vector<2x8x8x128xbf16>
    %3 = vector.shape_cast %2 : vector<2x8x8x128xbf16> to vector<128x128xbf16>
    %c0_4 = arith.constant 0 : index
    %c0_5 = arith.constant 0 : index
    %4 = vector.load %arg2[%c0_4, %c0_5] : memref<1152x128xbf16, #tpu.memory_space<vmem>>, vector<128x128xbf16>
    %cst_6 = arith.constant dense<0.000000e+00> : vector<128x128xf32>
    %5 = tpu.matmul %3, %4, %cst_6 {dimension_numbers = #tpu.dot_dimension_numbers<[1], [0], [0], [1], [0, 0, 1, 1], [], []>} : vector<128x128xbf16>, vector<128x128xbf16>, vector<128x128xf32> -> vector<128x128xf32>
    %6 = arith.addf %0, %5 : vector<128x128xf32>
    %c1 = arith.constant 1 : index
    %c0_7 = arith.constant 0 : index
    %c0_8 = arith.constant 0 : index
    %c0_9 = arith.constant 0 : index
    %c0_10 = arith.constant 0 : index
    %7 = vector.load %arg1[%c1, %c0_7, %c0_8, %c0_9, %c0_10] : memref<4x2x9x9x128xbf16, #tpu.memory_space<vmem>>, vector<1x2x8x8x128xbf16>
    %8 = vector.shape_cast %7 : vector<1x2x8x8x128xbf16> to vector<2x8x8x128xbf16>
    %9 = vector.shape_cast %8 : vector<2x8x8x128xbf16> to vector<128x128xbf16>
    %c128 = arith.constant 128 : index
    %c0_11 = arith.constant 0 : index
    %10 = vector.load %arg2[%c128, %c0_11] : memref<1152x128xbf16, #tpu.memory_space<vmem>>, vector<128x128xbf16>
    %cst_12 = arith.constant dense<0.000000e+00> : vector<128x128xf32>
    %11 = tpu.matmul %9, %10, %cst_12 {dimension_numbers = #tpu.dot_dimension_numbers<[1], [0], [0], [1], [0, 0, 1, 1], [], []>} : vector<128x128xbf16>, vector<128x128xbf16>, vector<128x128xf32> -> vector<128x128xf32>
    %12 = arith.addf %6, %11 : vector<128x128xf32>
    %c0_13 = arith.constant 0 : index
    %c0_14 = arith.constant 0 : index
    %c0_15 = arith.constant 0 : index
    %c1_16 = arith.constant 1 : index
    %c0_17 = arith.constant 0 : index
    %13 = vector.load %arg1[%c0_13, %c0_14, %c0_15, %c1_16, %c0_17] : memref<4x2x9x9x128xbf16, #tpu.memory_space<vmem>>, vector<1x2x8x8x128xbf16>
    %14 = vector.shape_cast %13 : vector<1x2x8x8x128xbf16> to vector<2x8x8x128xbf16>
    %15 = vector.shape_cast %14 : vector<2x8x8x128xbf16> to vector<128x128xbf16>
    %c256 = arith.constant 256 : index
    %c0_18 = arith.constant 0 : index
    %16 = vector.load %arg2[%c256, %c0_18] : memref<1152x128xbf16, #tpu.memory_space<vmem>>, vector<128x128xbf16>
    %cst_19 = arith.constant dense<0.000000e+00> : vector<128x128xf32>
    %17 = tpu.matmul %15, %16, %cst_19 {dimension_numbers = #tpu.dot_dimension_numbers<[1], [0], [0], [1], [0, 0, 1, 1], [], []>} : vector<128x128xbf16>, vector<128x128xbf16>, vector<128x128xf32> -> vector<128x128xf32>
    %18 = arith.addf %12, %17 : vector<128x128xf32>
    %c2 = arith.constant 2 : index
    %c0_20 = arith.constant 0 : index
    %c0_21 = arith.constant 0 : index
    %c0_22 = arith.constant 0 : index
    %c0_23 = arith.constant 0 : index
    %19 = vector.load %arg1[%c2, %c0_20, %c0_21, %c0_22, %c0_23] : memref<4x2x9x9x128xbf16, #tpu.memory_space<vmem>>, vector<1x2x8x8x128xbf16>
    %20 = vector.shape_cast %19 : vector<1x2x8x8x128xbf16> to vector<2x8x8x128xbf16>
    %21 = vector.shape_cast %20 : vector<2x8x8x128xbf16> to vector<128x128xbf16>
    %c384 = arith.constant 384 : index
    %c0_24 = arith.constant 0 : index
    %22 = vector.load %arg2[%c384, %c0_24] : memref<1152x128xbf16, #tpu.memory_space<vmem>>, vector<128x128xbf16>
    %cst_25 = arith.constant dense<0.000000e+00> : vector<128x128xf32>
    %23 = tpu.matmul %21, %22, %cst_25 {dimension_numbers = #tpu.dot_dimension_numbers<[1], [0], [0], [1], [0, 0, 1, 1], [], []>} : vector<128x128xbf16>, vector<128x128xbf16>, vector<128x128xf32> -> vector<128x128xf32>
    %24 = arith.addf %18, %23 : vector<128x128xf32>
    %c3 = arith.constant 3 : index
    %c0_26 = arith.constant 0 : index
    %c0_27 = arith.constant 0 : index
    %c0_28 = arith.constant 0 : index
    %c0_29 = arith.constant 0 : index
    %25 = vector.load %arg1[%c3, %c0_26, %c0_27, %c0_28, %c0_29] : memref<4x2x9x9x128xbf16, #tpu.memory_space<vmem>>, vector<1x2x8x8x128xbf16>
    %26 = vector.shape_cast %25 : vector<1x2x8x8x128xbf16> to vector<2x8x8x128xbf16>
    %27 = vector.shape_cast %26 : vector<2x8x8x128xbf16> to vector<128x128xbf16>
    %c512 = arith.constant 512 : index
    %c0_30 = arith.constant 0 : index
    %28 = vector.load %arg2[%c512, %c0_30] : memref<1152x128xbf16, #tpu.memory_space<vmem>>, vector<128x128xbf16>
    %cst_31 = arith.constant dense<0.000000e+00> : vector<128x128xf32>
    %29 = tpu.matmul %27, %28, %cst_31 {dimension_numbers = #tpu.dot_dimension_numbers<[1], [0], [0], [1], [0, 0, 1, 1], [], []>} : vector<128x128xbf16>, vector<128x128xbf16>, vector<128x128xf32> -> vector<128x128xf32>
    %30 = arith.addf %24, %29 : vector<128x128xf32>
    %c2_32 = arith.constant 2 : index
    %c0_33 = arith.constant 0 : index
    %c0_34 = arith.constant 0 : index
    %c1_35 = arith.constant 1 : index
    %c0_36 = arith.constant 0 : index
    %31 = vector.load %arg1[%c2_32, %c0_33, %c0_34, %c1_35, %c0_36] : memref<4x2x9x9x128xbf16, #tpu.memory_space<vmem>>, vector<1x2x8x8x128xbf16>
    %32 = vector.shape_cast %31 : vector<1x2x8x8x128xbf16> to vector<2x8x8x128xbf16>
    %33 = vector.shape_cast %32 : vector<2x8x8x128xbf16> to vector<128x128xbf16>
    %c640 = arith.constant 640 : index
    %c0_37 = arith.constant 0 : index
    %34 = vector.load %arg2[%c640, %c0_37] : memref<1152x128xbf16, #tpu.memory_space<vmem>>, vector<128x128xbf16>
    %cst_38 = arith.constant dense<0.000000e+00> : vector<128x128xf32>
    %35 = tpu.matmul %33, %34, %cst_38 {dimension_numbers = #tpu.dot_dimension_numbers<[1], [0], [0], [1], [0, 0, 1, 1], [], []>} : vector<128x128xbf16>, vector<128x128xbf16>, vector<128x128xf32> -> vector<128x128xf32>
    %36 = arith.addf %30, %35 : vector<128x128xf32>
    %c0_39 = arith.constant 0 : index
    %c0_40 = arith.constant 0 : index
    %c1_41 = arith.constant 1 : index
    %c0_42 = arith.constant 0 : index
    %c0_43 = arith.constant 0 : index
    %37 = vector.load %arg1[%c0_39, %c0_40, %c1_41, %c0_42, %c0_43] : memref<4x2x9x9x128xbf16, #tpu.memory_space<vmem>>, vector<1x2x8x8x128xbf16>
    %38 = vector.shape_cast %37 : vector<1x2x8x8x128xbf16> to vector<2x8x8x128xbf16>
    %39 = vector.shape_cast %38 : vector<2x8x8x128xbf16> to vector<128x128xbf16>
    %c768 = arith.constant 768 : index
    %c0_44 = arith.constant 0 : index
    %40 = vector.load %arg2[%c768, %c0_44] : memref<1152x128xbf16, #tpu.memory_space<vmem>>, vector<128x128xbf16>
    %cst_45 = arith.constant dense<0.000000e+00> : vector<128x128xf32>
    %41 = tpu.matmul %39, %40, %cst_45 {dimension_numbers = #tpu.dot_dimension_numbers<[1], [0], [0], [1], [0, 0, 1, 1], [], []>} : vector<128x128xbf16>, vector<128x128xbf16>, vector<128x128xf32> -> vector<128x128xf32>
    %42 = arith.addf %36, %41 : vector<128x128xf32>
    %c1_46 = arith.constant 1 : index
    %c0_47 = arith.constant 0 : index
    %c1_48 = arith.constant 1 : index
    %c0_49 = arith.constant 0 : index
    %c0_50 = arith.constant 0 : index
    %43 = vector.load %arg1[%c1_46, %c0_47, %c1_48, %c0_49, %c0_50] : memref<4x2x9x9x128xbf16, #tpu.memory_space<vmem>>, vector<1x2x8x8x128xbf16>
    %44 = vector.shape_cast %43 : vector<1x2x8x8x128xbf16> to vector<2x8x8x128xbf16>
    %45 = vector.shape_cast %44 : vector<2x8x8x128xbf16> to vector<128x128xbf16>
    %c896 = arith.constant 896 : index
    %c0_51 = arith.constant 0 : index
    %46 = vector.load %arg2[%c896, %c0_51] : memref<1152x128xbf16, #tpu.memory_space<vmem>>, vector<128x128xbf16>
    %cst_52 = arith.constant dense<0.000000e+00> : vector<128x128xf32>
    %47 = tpu.matmul %45, %46, %cst_52 {dimension_numbers = #tpu.dot_dimension_numbers<[1], [0], [0], [1], [0, 0, 1, 1], [], []>} : vector<128x128xbf16>, vector<128x128xbf16>, vector<128x128xf32> -> vector<128x128xf32>
    %48 = arith.addf %42, %47 : vector<128x128xf32>
    %c0_53 = arith.constant 0 : index
    %c0_54 = arith.constant 0 : index
    %c1_55 = arith.constant 1 : index
    %c1_56 = arith.constant 1 : index
    %c0_57 = arith.constant 0 : index
    %49 = vector.load %arg1[%c0_53, %c0_54, %c1_55, %c1_56, %c0_57] : memref<4x2x9x9x128xbf16, #tpu.memory_space<vmem>>, vector<1x2x8x8x128xbf16>
    %50 = vector.shape_cast %49 : vector<1x2x8x8x128xbf16> to vector<2x8x8x128xbf16>
    %51 = vector.shape_cast %50 : vector<2x8x8x128xbf16> to vector<128x128xbf16>
    %c1024 = arith.constant 1024 : index
    %c0_58 = arith.constant 0 : index
    %52 = vector.load %arg2[%c1024, %c0_58] : memref<1152x128xbf16, #tpu.memory_space<vmem>>, vector<128x128xbf16>
    %cst_59 = arith.constant dense<0.000000e+00> : vector<128x128xf32>
    %53 = tpu.matmul %51, %52, %cst_59 {dimension_numbers = #tpu.dot_dimension_numbers<[1], [0], [0], [1], [0, 0, 1, 1], [], []>} : vector<128x128xbf16>, vector<128x128xbf16>, vector<128x128xf32> -> vector<128x128xf32>
    %54 = arith.addf %48, %53 : vector<128x128xf32>
    %cst_60 = arith.constant dense<0.000000e+00> : vector<128xf32>
    %55 = vector.multi_reduction <add>, %54, %cst_60 [0] : vector<128x128xf32> to vector<128xf32>
    %56 = vector.shape_cast %55 : vector<128xf32> to vector<1x128xf32>
    %cst_61 = arith.constant 7.812500e-03 : f32
    %57 = vector.broadcast %cst_61 : f32 to vector<1x128xf32>
    %58 = arith.mulf %56, %57 : vector<1x128xf32>
    %59 = vector.broadcast %58 : vector<1x128xf32> to vector<128x128xf32>
    %60 = arith.subf %54, %59 : vector<128x128xf32>
    %61 = arith.mulf %60, %60 : vector<128x128xf32>
    %cst_62 = arith.constant dense<0.000000e+00> : vector<128xf32>
    %62 = vector.multi_reduction <add>, %61, %cst_62 [0] : vector<128x128xf32> to vector<128xf32>
    %63 = vector.shape_cast %62 : vector<128xf32> to vector<1x128xf32>
    %cst_63 = arith.constant 7.812500e-03 : f32
    %64 = vector.broadcast %cst_63 : f32 to vector<1x128xf32>
    %65 = arith.mulf %63, %64 : vector<1x128xf32>
    %cst_64 = arith.constant 9.99999974E-6 : f32
    %66 = vector.broadcast %cst_64 : f32 to vector<1x128xf32>
    %67 = arith.addf %65, %66 : vector<1x128xf32>
    %68 = math.rsqrt %67 : vector<1x128xf32>
    %69 = vector.broadcast %68 : vector<1x128xf32> to vector<128x128xf32>
    %70 = arith.mulf %60, %69 : vector<128x128xf32>
    %c0_65 = arith.constant 0 : index
    %c0_66 = arith.constant 0 : index
    %71 = vector.load %arg3[%c0_65, %c0_66] : memref<1x128xf32, #tpu.memory_space<vmem>>, vector<1x128xf32>
    %72 = vector.broadcast %71 : vector<1x128xf32> to vector<128x128xf32>
    %73 = arith.mulf %70, %72 : vector<128x128xf32>
    %c0_67 = arith.constant 0 : index
    %c0_68 = arith.constant 0 : index
    %74 = vector.load %arg4[%c0_67, %c0_68] : memref<1x128xf32, #tpu.memory_space<vmem>>, vector<1x128xf32>
    %75 = vector.broadcast %74 : vector<1x128xf32> to vector<128x128xf32>
    %76 = arith.addf %73, %75 : vector<128x128xf32>
    %cst_69 = arith.constant 0.000000e+00 : f32
    %77 = vector.broadcast %cst_69 : f32 to vector<128x128xf32>
    %78 = arith.maximumf %76, %77 : vector<128x128xf32>
    %c0_70 = arith.constant 0 : index
    %c0_71 = arith.constant 0 : index
    %79 = vector.load %arg5[%c0_70, %c0_71] : memref<128x128xf32, #tpu.memory_space<vmem>>, vector<128x128xf32>
    tpu.vector_store %arg5[%c0_70, %c0_71], %78 {strides = array<i32>} : memref<128x128xf32, #tpu.memory_space<vmem>>, vector<128x128xf32>,
    return
  }
  func.func @transform_0(%arg0: i32) -> (i32, i32, i32, i32, i32) {
    %c0_i32 = arith.constant 0 : i32
    %c0_i32_0 = arith.constant 0 : i32
    %c0_i32_1 = arith.constant 0 : i32
    %c0_i32_2 = arith.constant 0 : i32
    %c0_i32_3 = arith.constant 0 : i32
    %c0_i32_4 = arith.constant 0 : i32
    return %c0_i32, %c0_i32_0, %c0_i32_1, %c0_i32_2, %c0_i32_3 : i32, i32, i32, i32, i32
  }
  func.func @transform_1(%arg0: i32) -> (i32, i32) {
    %c0_i32 = arith.constant 0 : i32
    %c0_i32_0 = arith.constant 0 : i32
    return %c0_i32, %arg0 : i32, i32
  }
  func.func @transform_2(%arg0: i32) -> (i32, i32) {
    %c0_i32 = arith.constant 0 : i32
    %c0_i32_0 = arith.constant 0 : i32
    return %c0_i32, %arg0 : i32, i32
  }
  func.func @transform_3(%arg0: i32) -> (i32, i32) {
    %c0_i32 = arith.constant 0 : i32
    %c0_i32_0 = arith.constant 0 : i32
    return %c0_i32, %arg0 : i32, i32
  }
  func.func @transform_4(%arg0: i32) -> (i32, i32) {
    %c0_i32 = arith.constant 0 : i32
    %c0_i32_0 = arith.constant 0 : i32
    return %c0_i32, %arg0 : i32, i32
  }
}

module attributes {stable_mosaic.version = 11 : i64} {
  func.func @_conv_bn_kernel(%arg0: i32, %arg1: memref<1x2x10x10x128xbf16, #tpu.memory_space<vmem>>, %arg2: memref<1152x128xbf16, #tpu.memory_space<vmem>>, %arg3: memref<1x128xf32, #tpu.memory_space<vmem>>, %arg4: memref<1x128xf32, #tpu.memory_space<vmem>>, %arg5: memref<128x128xf32, #tpu.memory_space<vmem>>, %arg6: memref<128x128xf32, #tpu.memory_space<vmem>>) attributes {dimension_semantics = [#tpu.dimension_semantics<parallel>], iteration_bounds = array<i64: 1>, scalar_prefetch = 0 : i64, scratch_operands = 0 : i64, tpu.core_type = #tpu.core_type<tc>, window_params = [{pipeline_mode = #tpu.pipeline_mode<synchronous>, transform_indices = @transform_0, window_bounds = array<i64: 1, 2, 10, 10, 128>}, {transform_indices = @transform_1, window_bounds = array<i64: 1152, 128>}, {transform_indices = @transform_2, window_bounds = array<i64: 1, 128>}, {transform_indices = @transform_3, window_bounds = array<i64: 1, 128>}, {transform_indices = @transform_4, window_bounds = array<i64: 128, 128>}, {transform_indices = @transform_5, window_bounds = array<i64: 128, 128>}]} {
    %cst = arith.constant 0.000000e+00 : f32
    %0 = vector.broadcast %cst : f32 to vector<128x128xf32>
    %c0 = arith.constant 0 : index
    %c0_0 = arith.constant 0 : index
    %c0_1 = arith.constant 0 : index
    %c0_2 = arith.constant 0 : index
    %c0_3 = arith.constant 0 : index
    %1 = vector.load %arg1[%c0, %c0_0, %c0_1, %c0_2, %c0_3] : memref<1x2x10x10x128xbf16, #tpu.memory_space<vmem>>, vector<1x2x8x8x128xbf16>
    %2 = vector.shape_cast %1 : vector<1x2x8x8x128xbf16> to vector<2x8x8x128xbf16>
    %3 = vector.shape_cast %2 : vector<2x8x8x128xbf16> to vector<128x128xbf16>
    %c0_4 = arith.constant 0 : index
    %c0_5 = arith.constant 0 : index
    %4 = vector.load %arg2[%c0_4, %c0_5] : memref<1152x128xbf16, #tpu.memory_space<vmem>>, vector<128x128xbf16>
    %cst_6 = arith.constant dense<0.000000e+00> : vector<128x128xf32>
    %5 = tpu.matmul %3, %4, %cst_6 {dimension_numbers = #tpu.dot_dimension_numbers<[1], [0], [0], [1], [0, 0, 1, 1], [], []>} : vector<128x128xbf16>, vector<128x128xbf16>, vector<128x128xf32> -> vector<128x128xf32>
    %6 = arith.addf %0, %5 : vector<128x128xf32>
    %c0_7 = arith.constant 0 : index
    %c0_8 = arith.constant 0 : index
    %c0_9 = arith.constant 0 : index
    %c1 = arith.constant 1 : index
    %c0_10 = arith.constant 0 : index
    %7 = vector.load %arg1[%c0_7, %c0_8, %c0_9, %c1, %c0_10] : memref<1x2x10x10x128xbf16, #tpu.memory_space<vmem>>, vector<1x2x8x8x128xbf16>
    %8 = vector.shape_cast %7 : vector<1x2x8x8x128xbf16> to vector<2x8x8x128xbf16>
    %9 = vector.shape_cast %8 : vector<2x8x8x128xbf16> to vector<128x128xbf16>
    %c128 = arith.constant 128 : index
    %c0_11 = arith.constant 0 : index
    %10 = vector.load %arg2[%c128, %c0_11] : memref<1152x128xbf16, #tpu.memory_space<vmem>>, vector<128x128xbf16>
    %cst_12 = arith.constant dense<0.000000e+00> : vector<128x128xf32>
    %11 = tpu.matmul %9, %10, %cst_12 {dimension_numbers = #tpu.dot_dimension_numbers<[1], [0], [0], [1], [0, 0, 1, 1], [], []>} : vector<128x128xbf16>, vector<128x128xbf16>, vector<128x128xf32> -> vector<128x128xf32>
    %12 = arith.addf %6, %11 : vector<128x128xf32>
    %c0_13 = arith.constant 0 : index
    %c0_14 = arith.constant 0 : index
    %c0_15 = arith.constant 0 : index
    %c2 = arith.constant 2 : index
    %c0_16 = arith.constant 0 : index
    %13 = vector.load %arg1[%c0_13, %c0_14, %c0_15, %c2, %c0_16] : memref<1x2x10x10x128xbf16, #tpu.memory_space<vmem>>, vector<1x2x8x8x128xbf16>
    %14 = vector.shape_cast %13 : vector<1x2x8x8x128xbf16> to vector<2x8x8x128xbf16>
    %15 = vector.shape_cast %14 : vector<2x8x8x128xbf16> to vector<128x128xbf16>
    %c256 = arith.constant 256 : index
    %c0_17 = arith.constant 0 : index
    %16 = vector.load %arg2[%c256, %c0_17] : memref<1152x128xbf16, #tpu.memory_space<vmem>>, vector<128x128xbf16>
    %cst_18 = arith.constant dense<0.000000e+00> : vector<128x128xf32>
    %17 = tpu.matmul %15, %16, %cst_18 {dimension_numbers = #tpu.dot_dimension_numbers<[1], [0], [0], [1], [0, 0, 1, 1], [], []>} : vector<128x128xbf16>, vector<128x128xbf16>, vector<128x128xf32> -> vector<128x128xf32>
    %18 = arith.addf %12, %17 : vector<128x128xf32>
    %c0_19 = arith.constant 0 : index
    %c0_20 = arith.constant 0 : index
    %c1_21 = arith.constant 1 : index
    %c0_22 = arith.constant 0 : index
    %c0_23 = arith.constant 0 : index
    %19 = vector.load %arg1[%c0_19, %c0_20, %c1_21, %c0_22, %c0_23] : memref<1x2x10x10x128xbf16, #tpu.memory_space<vmem>>, vector<1x2x8x8x128xbf16>
    %20 = vector.shape_cast %19 : vector<1x2x8x8x128xbf16> to vector<2x8x8x128xbf16>
    %21 = vector.shape_cast %20 : vector<2x8x8x128xbf16> to vector<128x128xbf16>
    %c384 = arith.constant 384 : index
    %c0_24 = arith.constant 0 : index
    %22 = vector.load %arg2[%c384, %c0_24] : memref<1152x128xbf16, #tpu.memory_space<vmem>>, vector<128x128xbf16>
    %cst_25 = arith.constant dense<0.000000e+00> : vector<128x128xf32>
    %23 = tpu.matmul %21, %22, %cst_25 {dimension_numbers = #tpu.dot_dimension_numbers<[1], [0], [0], [1], [0, 0, 1, 1], [], []>} : vector<128x128xbf16>, vector<128x128xbf16>, vector<128x128xf32> -> vector<128x128xf32>
    %24 = arith.addf %18, %23 : vector<128x128xf32>
    %c0_26 = arith.constant 0 : index
    %c0_27 = arith.constant 0 : index
    %c1_28 = arith.constant 1 : index
    %c1_29 = arith.constant 1 : index
    %c0_30 = arith.constant 0 : index
    %25 = vector.load %arg1[%c0_26, %c0_27, %c1_28, %c1_29, %c0_30] : memref<1x2x10x10x128xbf16, #tpu.memory_space<vmem>>, vector<1x2x8x8x128xbf16>
    %26 = vector.shape_cast %25 : vector<1x2x8x8x128xbf16> to vector<2x8x8x128xbf16>
    %27 = vector.shape_cast %26 : vector<2x8x8x128xbf16> to vector<128x128xbf16>
    %c512 = arith.constant 512 : index
    %c0_31 = arith.constant 0 : index
    %28 = vector.load %arg2[%c512, %c0_31] : memref<1152x128xbf16, #tpu.memory_space<vmem>>, vector<128x128xbf16>
    %cst_32 = arith.constant dense<0.000000e+00> : vector<128x128xf32>
    %29 = tpu.matmul %27, %28, %cst_32 {dimension_numbers = #tpu.dot_dimension_numbers<[1], [0], [0], [1], [0, 0, 1, 1], [], []>} : vector<128x128xbf16>, vector<128x128xbf16>, vector<128x128xf32> -> vector<128x128xf32>
    %30 = arith.addf %24, %29 : vector<128x128xf32>
    %c0_33 = arith.constant 0 : index
    %c0_34 = arith.constant 0 : index
    %c1_35 = arith.constant 1 : index
    %c2_36 = arith.constant 2 : index
    %c0_37 = arith.constant 0 : index
    %31 = vector.load %arg1[%c0_33, %c0_34, %c1_35, %c2_36, %c0_37] : memref<1x2x10x10x128xbf16, #tpu.memory_space<vmem>>, vector<1x2x8x8x128xbf16>
    %32 = vector.shape_cast %31 : vector<1x2x8x8x128xbf16> to vector<2x8x8x128xbf16>
    %33 = vector.shape_cast %32 : vector<2x8x8x128xbf16> to vector<128x128xbf16>
    %c640 = arith.constant 640 : index
    %c0_38 = arith.constant 0 : index
    %34 = vector.load %arg2[%c640, %c0_38] : memref<1152x128xbf16, #tpu.memory_space<vmem>>, vector<128x128xbf16>
    %cst_39 = arith.constant dense<0.000000e+00> : vector<128x128xf32>
    %35 = tpu.matmul %33, %34, %cst_39 {dimension_numbers = #tpu.dot_dimension_numbers<[1], [0], [0], [1], [0, 0, 1, 1], [], []>} : vector<128x128xbf16>, vector<128x128xbf16>, vector<128x128xf32> -> vector<128x128xf32>
    %36 = arith.addf %30, %35 : vector<128x128xf32>
    %c0_40 = arith.constant 0 : index
    %c0_41 = arith.constant 0 : index
    %c2_42 = arith.constant 2 : index
    %c0_43 = arith.constant 0 : index
    %c0_44 = arith.constant 0 : index
    %37 = vector.load %arg1[%c0_40, %c0_41, %c2_42, %c0_43, %c0_44] : memref<1x2x10x10x128xbf16, #tpu.memory_space<vmem>>, vector<1x2x8x8x128xbf16>
    %38 = vector.shape_cast %37 : vector<1x2x8x8x128xbf16> to vector<2x8x8x128xbf16>
    %39 = vector.shape_cast %38 : vector<2x8x8x128xbf16> to vector<128x128xbf16>
    %c768 = arith.constant 768 : index
    %c0_45 = arith.constant 0 : index
    %40 = vector.load %arg2[%c768, %c0_45] : memref<1152x128xbf16, #tpu.memory_space<vmem>>, vector<128x128xbf16>
    %cst_46 = arith.constant dense<0.000000e+00> : vector<128x128xf32>
    %41 = tpu.matmul %39, %40, %cst_46 {dimension_numbers = #tpu.dot_dimension_numbers<[1], [0], [0], [1], [0, 0, 1, 1], [], []>} : vector<128x128xbf16>, vector<128x128xbf16>, vector<128x128xf32> -> vector<128x128xf32>
    %42 = arith.addf %36, %41 : vector<128x128xf32>
    %c0_47 = arith.constant 0 : index
    %c0_48 = arith.constant 0 : index
    %c2_49 = arith.constant 2 : index
    %c1_50 = arith.constant 1 : index
    %c0_51 = arith.constant 0 : index
    %43 = vector.load %arg1[%c0_47, %c0_48, %c2_49, %c1_50, %c0_51] : memref<1x2x10x10x128xbf16, #tpu.memory_space<vmem>>, vector<1x2x8x8x128xbf16>
    %44 = vector.shape_cast %43 : vector<1x2x8x8x128xbf16> to vector<2x8x8x128xbf16>
    %45 = vector.shape_cast %44 : vector<2x8x8x128xbf16> to vector<128x128xbf16>
    %c896 = arith.constant 896 : index
    %c0_52 = arith.constant 0 : index
    %46 = vector.load %arg2[%c896, %c0_52] : memref<1152x128xbf16, #tpu.memory_space<vmem>>, vector<128x128xbf16>
    %cst_53 = arith.constant dense<0.000000e+00> : vector<128x128xf32>
    %47 = tpu.matmul %45, %46, %cst_53 {dimension_numbers = #tpu.dot_dimension_numbers<[1], [0], [0], [1], [0, 0, 1, 1], [], []>} : vector<128x128xbf16>, vector<128x128xbf16>, vector<128x128xf32> -> vector<128x128xf32>
    %48 = arith.addf %42, %47 : vector<128x128xf32>
    %c0_54 = arith.constant 0 : index
    %c0_55 = arith.constant 0 : index
    %c2_56 = arith.constant 2 : index
    %c2_57 = arith.constant 2 : index
    %c0_58 = arith.constant 0 : index
    %49 = vector.load %arg1[%c0_54, %c0_55, %c2_56, %c2_57, %c0_58] : memref<1x2x10x10x128xbf16, #tpu.memory_space<vmem>>, vector<1x2x8x8x128xbf16>
    %50 = vector.shape_cast %49 : vector<1x2x8x8x128xbf16> to vector<2x8x8x128xbf16>
    %51 = vector.shape_cast %50 : vector<2x8x8x128xbf16> to vector<128x128xbf16>
    %c1024 = arith.constant 1024 : index
    %c0_59 = arith.constant 0 : index
    %52 = vector.load %arg2[%c1024, %c0_59] : memref<1152x128xbf16, #tpu.memory_space<vmem>>, vector<128x128xbf16>
    %cst_60 = arith.constant dense<0.000000e+00> : vector<128x128xf32>
    %53 = tpu.matmul %51, %52, %cst_60 {dimension_numbers = #tpu.dot_dimension_numbers<[1], [0], [0], [1], [0, 0, 1, 1], [], []>} : vector<128x128xbf16>, vector<128x128xbf16>, vector<128x128xf32> -> vector<128x128xf32>
    %54 = arith.addf %48, %53 : vector<128x128xf32>
    %cst_61 = arith.constant dense<0.000000e+00> : vector<128xf32>
    %55 = vector.multi_reduction <add>, %54, %cst_61 [0] : vector<128x128xf32> to vector<128xf32>
    %56 = vector.shape_cast %55 : vector<128xf32> to vector<1x128xf32>
    %cst_62 = arith.constant 7.812500e-03 : f32
    %57 = vector.broadcast %cst_62 : f32 to vector<1x128xf32>
    %58 = arith.mulf %56, %57 : vector<1x128xf32>
    %59 = vector.broadcast %58 : vector<1x128xf32> to vector<128x128xf32>
    %60 = arith.subf %54, %59 : vector<128x128xf32>
    %61 = arith.mulf %60, %60 : vector<128x128xf32>
    %cst_63 = arith.constant dense<0.000000e+00> : vector<128xf32>
    %62 = vector.multi_reduction <add>, %61, %cst_63 [0] : vector<128x128xf32> to vector<128xf32>
    %63 = vector.shape_cast %62 : vector<128xf32> to vector<1x128xf32>
    %cst_64 = arith.constant 7.812500e-03 : f32
    %64 = vector.broadcast %cst_64 : f32 to vector<1x128xf32>
    %65 = arith.mulf %63, %64 : vector<1x128xf32>
    %cst_65 = arith.constant 9.99999974E-6 : f32
    %66 = vector.broadcast %cst_65 : f32 to vector<1x128xf32>
    %67 = arith.addf %65, %66 : vector<1x128xf32>
    %68 = math.rsqrt %67 : vector<1x128xf32>
    %69 = vector.broadcast %68 : vector<1x128xf32> to vector<128x128xf32>
    %70 = arith.mulf %60, %69 : vector<128x128xf32>
    %c0_66 = arith.constant 0 : index
    %c0_67 = arith.constant 0 : index
    %71 = vector.load %arg3[%c0_66, %c0_67] : memref<1x128xf32, #tpu.memory_space<vmem>>, vector<1x128xf32>
    %72 = vector.broadcast %71 : vector<1x128xf32> to vector<128x128xf32>
    %73 = arith.mulf %70, %72 : vector<128x128xf32>
    %c0_68 = arith.constant 0 : index
    %c0_69 = arith.constant 0 : index
    %74 = vector.load %arg4[%c0_68, %c0_69] : memref<1x128xf32, #tpu.memory_space<vmem>>, vector<1x128xf32>
    %75 = vector.broadcast %74 : vector<1x128xf32> to vector<128x128xf32>
    %76 = arith.addf %73, %75 : vector<128x128xf32>
    %c0_70 = arith.constant 0 : index
    %c0_71 = arith.constant 0 : index
    %77 = vector.load %arg5[%c0_70, %c0_71] : memref<128x128xf32, #tpu.memory_space<vmem>>, vector<128x128xf32>
    %78 = arith.addf %76, %77 : vector<128x128xf32>
    %cst_72 = arith.constant 0.000000e+00 : f32
    %79 = vector.broadcast %cst_72 : f32 to vector<128x128xf32>
    %80 = arith.maximumf %78, %79 : vector<128x128xf32>
    %c0_73 = arith.constant 0 : index
    %c0_74 = arith.constant 0 : index
    %81 = vector.load %arg6[%c0_73, %c0_74] : memref<128x128xf32, #tpu.memory_space<vmem>>, vector<128x128xf32>
    tpu.vector_store %arg6[%c0_73, %c0_74], %80 {strides = array<i32>} : memref<128x128xf32, #tpu.memory_space<vmem>>, vector<128x128xf32>,
    return
  }
  func.func @transform_0(%arg0: i32) -> (i32, i32, i32, i32, i32) {
    %c0_i32 = arith.constant 0 : i32
    %c0_i32_0 = arith.constant 0 : i32
    %c0_i32_1 = arith.constant 0 : i32
    %c0_i32_2 = arith.constant 0 : i32
    %c0_i32_3 = arith.constant 0 : i32
    %c0_i32_4 = arith.constant 0 : i32
    return %c0_i32, %c0_i32_0, %c0_i32_1, %c0_i32_2, %c0_i32_3 : i32, i32, i32, i32, i32
  }
  func.func @transform_1(%arg0: i32) -> (i32, i32) {
    %c0_i32 = arith.constant 0 : i32
    %c0_i32_0 = arith.constant 0 : i32
    return %c0_i32, %arg0 : i32, i32
  }
  func.func @transform_2(%arg0: i32) -> (i32, i32) {
    %c0_i32 = arith.constant 0 : i32
    %c0_i32_0 = arith.constant 0 : i32
    return %c0_i32, %arg0 : i32, i32
  }
  func.func @transform_3(%arg0: i32) -> (i32, i32) {
    %c0_i32 = arith.constant 0 : i32
    %c0_i32_0 = arith.constant 0 : i32
    return %c0_i32, %arg0 : i32, i32
  }
  func.func @transform_4(%arg0: i32) -> (i32, i32) {
    %c0_i32 = arith.constant 0 : i32
    %c0_i32_0 = arith.constant 0 : i32
    return %c0_i32, %arg0 : i32, i32
  }
  func.func @transform_5(%arg0: i32) -> (i32, i32) {
    %c0_i32 = arith.constant 0 : i32
    %c0_i32_0 = arith.constant 0 : i32
    return %c0_i32, %arg0 : i32, i32
  }
}

module attributes {stable_mosaic.version = 11 : i64} {
  func.func @_conv_bn_kernel(%arg0: i32, %arg1: memref<1x2x10x10x128xbf16, #tpu.memory_space<vmem>>, %arg2: memref<1152x128xbf16, #tpu.memory_space<vmem>>, %arg3: memref<1x128xf32, #tpu.memory_space<vmem>>, %arg4: memref<1x128xf32, #tpu.memory_space<vmem>>, %arg5: memref<128x128xf32, #tpu.memory_space<vmem>>) attributes {dimension_semantics = [#tpu.dimension_semantics<parallel>], iteration_bounds = array<i64: 1>, scalar_prefetch = 0 : i64, scratch_operands = 0 : i64, tpu.core_type = #tpu.core_type<tc>, window_params = [{pipeline_mode = #tpu.pipeline_mode<synchronous>, transform_indices = @transform_0, window_bounds = array<i64: 1, 2, 10, 10, 128>}, {transform_indices = @transform_1, window_bounds = array<i64: 1152, 128>}, {transform_indices = @transform_2, window_bounds = array<i64: 1, 128>}, {transform_indices = @transform_3, window_bounds = array<i64: 1, 128>}, {transform_indices = @transform_4, window_bounds = array<i64: 128, 128>}]} {
    %cst = arith.constant 0.000000e+00 : f32
    %0 = vector.broadcast %cst : f32 to vector<128x128xf32>
    %c0 = arith.constant 0 : index
    %c0_0 = arith.constant 0 : index
    %c0_1 = arith.constant 0 : index
    %c0_2 = arith.constant 0 : index
    %c0_3 = arith.constant 0 : index
    %1 = vector.load %arg1[%c0, %c0_0, %c0_1, %c0_2, %c0_3] : memref<1x2x10x10x128xbf16, #tpu.memory_space<vmem>>, vector<1x2x8x8x128xbf16>
    %2 = vector.shape_cast %1 : vector<1x2x8x8x128xbf16> to vector<2x8x8x128xbf16>
    %3 = vector.shape_cast %2 : vector<2x8x8x128xbf16> to vector<128x128xbf16>
    %c0_4 = arith.constant 0 : index
    %c0_5 = arith.constant 0 : index
    %4 = vector.load %arg2[%c0_4, %c0_5] : memref<1152x128xbf16, #tpu.memory_space<vmem>>, vector<128x128xbf16>
    %cst_6 = arith.constant dense<0.000000e+00> : vector<128x128xf32>
    %5 = tpu.matmul %3, %4, %cst_6 {dimension_numbers = #tpu.dot_dimension_numbers<[1], [0], [0], [1], [0, 0, 1, 1], [], []>} : vector<128x128xbf16>, vector<128x128xbf16>, vector<128x128xf32> -> vector<128x128xf32>
    %6 = arith.addf %0, %5 : vector<128x128xf32>
    %c0_7 = arith.constant 0 : index
    %c0_8 = arith.constant 0 : index
    %c0_9 = arith.constant 0 : index
    %c1 = arith.constant 1 : index
    %c0_10 = arith.constant 0 : index
    %7 = vector.load %arg1[%c0_7, %c0_8, %c0_9, %c1, %c0_10] : memref<1x2x10x10x128xbf16, #tpu.memory_space<vmem>>, vector<1x2x8x8x128xbf16>
    %8 = vector.shape_cast %7 : vector<1x2x8x8x128xbf16> to vector<2x8x8x128xbf16>
    %9 = vector.shape_cast %8 : vector<2x8x8x128xbf16> to vector<128x128xbf16>
    %c128 = arith.constant 128 : index
    %c0_11 = arith.constant 0 : index
    %10 = vector.load %arg2[%c128, %c0_11] : memref<1152x128xbf16, #tpu.memory_space<vmem>>, vector<128x128xbf16>
    %cst_12 = arith.constant dense<0.000000e+00> : vector<128x128xf32>
    %11 = tpu.matmul %9, %10, %cst_12 {dimension_numbers = #tpu.dot_dimension_numbers<[1], [0], [0], [1], [0, 0, 1, 1], [], []>} : vector<128x128xbf16>, vector<128x128xbf16>, vector<128x128xf32> -> vector<128x128xf32>
    %12 = arith.addf %6, %11 : vector<128x128xf32>
    %c0_13 = arith.constant 0 : index
    %c0_14 = arith.constant 0 : index
    %c0_15 = arith.constant 0 : index
    %c2 = arith.constant 2 : index
    %c0_16 = arith.constant 0 : index
    %13 = vector.load %arg1[%c0_13, %c0_14, %c0_15, %c2, %c0_16] : memref<1x2x10x10x128xbf16, #tpu.memory_space<vmem>>, vector<1x2x8x8x128xbf16>
    %14 = vector.shape_cast %13 : vector<1x2x8x8x128xbf16> to vector<2x8x8x128xbf16>
    %15 = vector.shape_cast %14 : vector<2x8x8x128xbf16> to vector<128x128xbf16>
    %c256 = arith.constant 256 : index
    %c0_17 = arith.constant 0 : index
    %16 = vector.load %arg2[%c256, %c0_17] : memref<1152x128xbf16, #tpu.memory_space<vmem>>, vector<128x128xbf16>
    %cst_18 = arith.constant dense<0.000000e+00> : vector<128x128xf32>
    %17 = tpu.matmul %15, %16, %cst_18 {dimension_numbers = #tpu.dot_dimension_numbers<[1], [0], [0], [1], [0, 0, 1, 1], [], []>} : vector<128x128xbf16>, vector<128x128xbf16>, vector<128x128xf32> -> vector<128x128xf32>
    %18 = arith.addf %12, %17 : vector<128x128xf32>
    %c0_19 = arith.constant 0 : index
    %c0_20 = arith.constant 0 : index
    %c1_21 = arith.constant 1 : index
    %c0_22 = arith.constant 0 : index
    %c0_23 = arith.constant 0 : index
    %19 = vector.load %arg1[%c0_19, %c0_20, %c1_21, %c0_22, %c0_23] : memref<1x2x10x10x128xbf16, #tpu.memory_space<vmem>>, vector<1x2x8x8x128xbf16>
    %20 = vector.shape_cast %19 : vector<1x2x8x8x128xbf16> to vector<2x8x8x128xbf16>
    %21 = vector.shape_cast %20 : vector<2x8x8x128xbf16> to vector<128x128xbf16>
    %c384 = arith.constant 384 : index
    %c0_24 = arith.constant 0 : index
    %22 = vector.load %arg2[%c384, %c0_24] : memref<1152x128xbf16, #tpu.memory_space<vmem>>, vector<128x128xbf16>
    %cst_25 = arith.constant dense<0.000000e+00> : vector<128x128xf32>
    %23 = tpu.matmul %21, %22, %cst_25 {dimension_numbers = #tpu.dot_dimension_numbers<[1], [0], [0], [1], [0, 0, 1, 1], [], []>} : vector<128x128xbf16>, vector<128x128xbf16>, vector<128x128xf32> -> vector<128x128xf32>
    %24 = arith.addf %18, %23 : vector<128x128xf32>
    %c0_26 = arith.constant 0 : index
    %c0_27 = arith.constant 0 : index
    %c1_28 = arith.constant 1 : index
    %c1_29 = arith.constant 1 : index
    %c0_30 = arith.constant 0 : index
    %25 = vector.load %arg1[%c0_26, %c0_27, %c1_28, %c1_29, %c0_30] : memref<1x2x10x10x128xbf16, #tpu.memory_space<vmem>>, vector<1x2x8x8x128xbf16>
    %26 = vector.shape_cast %25 : vector<1x2x8x8x128xbf16> to vector<2x8x8x128xbf16>
    %27 = vector.shape_cast %26 : vector<2x8x8x128xbf16> to vector<128x128xbf16>
    %c512 = arith.constant 512 : index
    %c0_31 = arith.constant 0 : index
    %28 = vector.load %arg2[%c512, %c0_31] : memref<1152x128xbf16, #tpu.memory_space<vmem>>, vector<128x128xbf16>
    %cst_32 = arith.constant dense<0.000000e+00> : vector<128x128xf32>
    %29 = tpu.matmul %27, %28, %cst_32 {dimension_numbers = #tpu.dot_dimension_numbers<[1], [0], [0], [1], [0, 0, 1, 1], [], []>} : vector<128x128xbf16>, vector<128x128xbf16>, vector<128x128xf32> -> vector<128x128xf32>
    %30 = arith.addf %24, %29 : vector<128x128xf32>
    %c0_33 = arith.constant 0 : index
    %c0_34 = arith.constant 0 : index
    %c1_35 = arith.constant 1 : index
    %c2_36 = arith.constant 2 : index
    %c0_37 = arith.constant 0 : index
    %31 = vector.load %arg1[%c0_33, %c0_34, %c1_35, %c2_36, %c0_37] : memref<1x2x10x10x128xbf16, #tpu.memory_space<vmem>>, vector<1x2x8x8x128xbf16>
    %32 = vector.shape_cast %31 : vector<1x2x8x8x128xbf16> to vector<2x8x8x128xbf16>
    %33 = vector.shape_cast %32 : vector<2x8x8x128xbf16> to vector<128x128xbf16>
    %c640 = arith.constant 640 : index
    %c0_38 = arith.constant 0 : index
    %34 = vector.load %arg2[%c640, %c0_38] : memref<1152x128xbf16, #tpu.memory_space<vmem>>, vector<128x128xbf16>
    %cst_39 = arith.constant dense<0.000000e+00> : vector<128x128xf32>
    %35 = tpu.matmul %33, %34, %cst_39 {dimension_numbers = #tpu.dot_dimension_numbers<[1], [0], [0], [1], [0, 0, 1, 1], [], []>} : vector<128x128xbf16>, vector<128x128xbf16>, vector<128x128xf32> -> vector<128x128xf32>
    %36 = arith.addf %30, %35 : vector<128x128xf32>
    %c0_40 = arith.constant 0 : index
    %c0_41 = arith.constant 0 : index
    %c2_42 = arith.constant 2 : index
    %c0_43 = arith.constant 0 : index
    %c0_44 = arith.constant 0 : index
    %37 = vector.load %arg1[%c0_40, %c0_41, %c2_42, %c0_43, %c0_44] : memref<1x2x10x10x128xbf16, #tpu.memory_space<vmem>>, vector<1x2x8x8x128xbf16>
    %38 = vector.shape_cast %37 : vector<1x2x8x8x128xbf16> to vector<2x8x8x128xbf16>
    %39 = vector.shape_cast %38 : vector<2x8x8x128xbf16> to vector<128x128xbf16>
    %c768 = arith.constant 768 : index
    %c0_45 = arith.constant 0 : index
    %40 = vector.load %arg2[%c768, %c0_45] : memref<1152x128xbf16, #tpu.memory_space<vmem>>, vector<128x128xbf16>
    %cst_46 = arith.constant dense<0.000000e+00> : vector<128x128xf32>
    %41 = tpu.matmul %39, %40, %cst_46 {dimension_numbers = #tpu.dot_dimension_numbers<[1], [0], [0], [1], [0, 0, 1, 1], [], []>} : vector<128x128xbf16>, vector<128x128xbf16>, vector<128x128xf32> -> vector<128x128xf32>
    %42 = arith.addf %36, %41 : vector<128x128xf32>
    %c0_47 = arith.constant 0 : index
    %c0_48 = arith.constant 0 : index
    %c2_49 = arith.constant 2 : index
    %c1_50 = arith.constant 1 : index
    %c0_51 = arith.constant 0 : index
    %43 = vector.load %arg1[%c0_47, %c0_48, %c2_49, %c1_50, %c0_51] : memref<1x2x10x10x128xbf16, #tpu.memory_space<vmem>>, vector<1x2x8x8x128xbf16>
    %44 = vector.shape_cast %43 : vector<1x2x8x8x128xbf16> to vector<2x8x8x128xbf16>
    %45 = vector.shape_cast %44 : vector<2x8x8x128xbf16> to vector<128x128xbf16>
    %c896 = arith.constant 896 : index
    %c0_52 = arith.constant 0 : index
    %46 = vector.load %arg2[%c896, %c0_52] : memref<1152x128xbf16, #tpu.memory_space<vmem>>, vector<128x128xbf16>
    %cst_53 = arith.constant dense<0.000000e+00> : vector<128x128xf32>
    %47 = tpu.matmul %45, %46, %cst_53 {dimension_numbers = #tpu.dot_dimension_numbers<[1], [0], [0], [1], [0, 0, 1, 1], [], []>} : vector<128x128xbf16>, vector<128x128xbf16>, vector<128x128xf32> -> vector<128x128xf32>
    %48 = arith.addf %42, %47 : vector<128x128xf32>
    %c0_54 = arith.constant 0 : index
    %c0_55 = arith.constant 0 : index
    %c2_56 = arith.constant 2 : index
    %c2_57 = arith.constant 2 : index
    %c0_58 = arith.constant 0 : index
    %49 = vector.load %arg1[%c0_54, %c0_55, %c2_56, %c2_57, %c0_58] : memref<1x2x10x10x128xbf16, #tpu.memory_space<vmem>>, vector<1x2x8x8x128xbf16>
    %50 = vector.shape_cast %49 : vector<1x2x8x8x128xbf16> to vector<2x8x8x128xbf16>
    %51 = vector.shape_cast %50 : vector<2x8x8x128xbf16> to vector<128x128xbf16>
    %c1024 = arith.constant 1024 : index
    %c0_59 = arith.constant 0 : index
    %52 = vector.load %arg2[%c1024, %c0_59] : memref<1152x128xbf16, #tpu.memory_space<vmem>>, vector<128x128xbf16>
    %cst_60 = arith.constant dense<0.000000e+00> : vector<128x128xf32>
    %53 = tpu.matmul %51, %52, %cst_60 {dimension_numbers = #tpu.dot_dimension_numbers<[1], [0], [0], [1], [0, 0, 1, 1], [], []>} : vector<128x128xbf16>, vector<128x128xbf16>, vector<128x128xf32> -> vector<128x128xf32>
    %54 = arith.addf %48, %53 : vector<128x128xf32>
    %cst_61 = arith.constant dense<0.000000e+00> : vector<128xf32>
    %55 = vector.multi_reduction <add>, %54, %cst_61 [0] : vector<128x128xf32> to vector<128xf32>
    %56 = vector.shape_cast %55 : vector<128xf32> to vector<1x128xf32>
    %cst_62 = arith.constant 7.812500e-03 : f32
    %57 = vector.broadcast %cst_62 : f32 to vector<1x128xf32>
    %58 = arith.mulf %56, %57 : vector<1x128xf32>
    %59 = vector.broadcast %58 : vector<1x128xf32> to vector<128x128xf32>
    %60 = arith.subf %54, %59 : vector<128x128xf32>
    %61 = arith.mulf %60, %60 : vector<128x128xf32>
    %cst_63 = arith.constant dense<0.000000e+00> : vector<128xf32>
    %62 = vector.multi_reduction <add>, %61, %cst_63 [0] : vector<128x128xf32> to vector<128xf32>
    %63 = vector.shape_cast %62 : vector<128xf32> to vector<1x128xf32>
    %cst_64 = arith.constant 7.812500e-03 : f32
    %64 = vector.broadcast %cst_64 : f32 to vector<1x128xf32>
    %65 = arith.mulf %63, %64 : vector<1x128xf32>
    %cst_65 = arith.constant 9.99999974E-6 : f32
    %66 = vector.broadcast %cst_65 : f32 to vector<1x128xf32>
    %67 = arith.addf %65, %66 : vector<1x128xf32>
    %68 = math.rsqrt %67 : vector<1x128xf32>
    %69 = vector.broadcast %68 : vector<1x128xf32> to vector<128x128xf32>
    %70 = arith.mulf %60, %69 : vector<128x128xf32>
    %c0_66 = arith.constant 0 : index
    %c0_67 = arith.constant 0 : index
    %71 = vector.load %arg3[%c0_66, %c0_67] : memref<1x128xf32, #tpu.memory_space<vmem>>, vector<1x128xf32>
    %72 = vector.broadcast %71 : vector<1x128xf32> to vector<128x128xf32>
    %73 = arith.mulf %70, %72 : vector<128x128xf32>
    %c0_68 = arith.constant 0 : index
    %c0_69 = arith.constant 0 : index
    %74 = vector.load %arg4[%c0_68, %c0_69] : memref<1x128xf32, #tpu.memory_space<vmem>>, vector<1x128xf32>
    %75 = vector.broadcast %74 : vector<1x128xf32> to vector<128x128xf32>
    %76 = arith.addf %73, %75 : vector<128x128xf32>
    %cst_70 = arith.constant 0.000000e+00 : f32
    %77 = vector.broadcast %cst_70 : f32 to vector<128x128xf32>
    %78 = arith.maximumf %76, %77 : vector<128x128xf32>
    %c0_71 = arith.constant 0 : index
    %c0_72 = arith.constant 0 : index
    %79 = vector.load %arg5[%c0_71, %c0_72] : memref<128x128xf32, #tpu.memory_space<vmem>>, vector<128x128xf32>
    tpu.vector_store %arg5[%c0_71, %c0_72], %78 {strides = array<i32>} : memref<128x128xf32, #tpu.memory_space<vmem>>, vector<128x128xf32>,
    return
  }
  func.func @transform_0(%arg0: i32) -> (i32, i32, i32, i32, i32) {
    %c0_i32 = arith.constant 0 : i32
    %c0_i32_0 = arith.constant 0 : i32
    %c0_i32_1 = arith.constant 0 : i32
    %c0_i32_2 = arith.constant 0 : i32
    %c0_i32_3 = arith.constant 0 : i32
    %c0_i32_4 = arith.constant 0 : i32
    return %c0_i32, %c0_i32_0, %c0_i32_1, %c0_i32_2, %c0_i32_3 : i32, i32, i32, i32, i32
  }
  func.func @transform_1(%arg0: i32) -> (i32, i32) {
    %c0_i32 = arith.constant 0 : i32
    %c0_i32_0 = arith.constant 0 : i32
    return %c0_i32, %arg0 : i32, i32
  }
  func.func @transform_2(%arg0: i32) -> (i32, i32) {
    %c0_i32 = arith.constant 0 : i32
    %c0_i32_0 = arith.constant 0 : i32
    return %c0_i32, %arg0 : i32, i32
  }
  func.func @transform_3(%arg0: i32) -> (i32, i32) {
    %c0_i32 = arith.constant 0 : i32
    %c0_i32_0 = arith.constant 0 : i32
    return %c0_i32, %arg0 : i32, i32
  }
  func.func @transform_4(%arg0: i32) -> (i32, i32) {
    %c0_i32 = arith.constant 0 : i32
    %c0_i32_0 = arith.constant 0 : i32
    return %c0_i32, %arg0 : i32, i32
  }
}

module attributes {stable_mosaic.version = 11 : i64} {
  func.func @_conv_bn_kernel(%arg0: i32, %arg1: memref<1x2x10x10x128xbf16, #tpu.memory_space<vmem>>, %arg2: memref<1152x128xbf16, #tpu.memory_space<vmem>>, %arg3: memref<1x128xf32, #tpu.memory_space<vmem>>, %arg4: memref<1x128xf32, #tpu.memory_space<vmem>>, %arg5: memref<128x128xf32, #tpu.memory_space<vmem>>, %arg6: memref<128x128xf32, #tpu.memory_space<vmem>>) attributes {dimension_semantics = [#tpu.dimension_semantics<parallel>], iteration_bounds = array<i64: 1>, scalar_prefetch = 0 : i64, scratch_operands = 0 : i64, tpu.core_type = #tpu.core_type<tc>, window_params = [{pipeline_mode = #tpu.pipeline_mode<synchronous>, transform_indices = @transform_0, window_bounds = array<i64: 1, 2, 10, 10, 128>}, {transform_indices = @transform_1, window_bounds = array<i64: 1152, 128>}, {transform_indices = @transform_2, window_bounds = array<i64: 1, 128>}, {transform_indices = @transform_3, window_bounds = array<i64: 1, 128>}, {transform_indices = @transform_4, window_bounds = array<i64: 128, 128>}, {transform_indices = @transform_5, window_bounds = array<i64: 128, 128>}]} {
    %cst = arith.constant 0.000000e+00 : f32
    %0 = vector.broadcast %cst : f32 to vector<128x128xf32>
    %c0 = arith.constant 0 : index
    %c0_0 = arith.constant 0 : index
    %c0_1 = arith.constant 0 : index
    %c0_2 = arith.constant 0 : index
    %c0_3 = arith.constant 0 : index
    %1 = vector.load %arg1[%c0, %c0_0, %c0_1, %c0_2, %c0_3] : memref<1x2x10x10x128xbf16, #tpu.memory_space<vmem>>, vector<1x2x8x8x128xbf16>
    %2 = vector.shape_cast %1 : vector<1x2x8x8x128xbf16> to vector<2x8x8x128xbf16>
    %3 = vector.shape_cast %2 : vector<2x8x8x128xbf16> to vector<128x128xbf16>
    %c0_4 = arith.constant 0 : index
    %c0_5 = arith.constant 0 : index
    %4 = vector.load %arg2[%c0_4, %c0_5] : memref<1152x128xbf16, #tpu.memory_space<vmem>>, vector<128x128xbf16>
    %cst_6 = arith.constant dense<0.000000e+00> : vector<128x128xf32>
    %5 = tpu.matmul %3, %4, %cst_6 {dimension_numbers = #tpu.dot_dimension_numbers<[1], [0], [0], [1], [0, 0, 1, 1], [], []>} : vector<128x128xbf16>, vector<128x128xbf16>, vector<128x128xf32> -> vector<128x128xf32>
    %6 = arith.addf %0, %5 : vector<128x128xf32>
    %c0_7 = arith.constant 0 : index
    %c0_8 = arith.constant 0 : index
    %c0_9 = arith.constant 0 : index
    %c1 = arith.constant 1 : index
    %c0_10 = arith.constant 0 : index
    %7 = vector.load %arg1[%c0_7, %c0_8, %c0_9, %c1, %c0_10] : memref<1x2x10x10x128xbf16, #tpu.memory_space<vmem>>, vector<1x2x8x8x128xbf16>
    %8 = vector.shape_cast %7 : vector<1x2x8x8x128xbf16> to vector<2x8x8x128xbf16>
    %9 = vector.shape_cast %8 : vector<2x8x8x128xbf16> to vector<128x128xbf16>
    %c128 = arith.constant 128 : index
    %c0_11 = arith.constant 0 : index
    %10 = vector.load %arg2[%c128, %c0_11] : memref<1152x128xbf16, #tpu.memory_space<vmem>>, vector<128x128xbf16>
    %cst_12 = arith.constant dense<0.000000e+00> : vector<128x128xf32>
    %11 = tpu.matmul %9, %10, %cst_12 {dimension_numbers = #tpu.dot_dimension_numbers<[1], [0], [0], [1], [0, 0, 1, 1], [], []>} : vector<128x128xbf16>, vector<128x128xbf16>, vector<128x128xf32> -> vector<128x128xf32>
    %12 = arith.addf %6, %11 : vector<128x128xf32>
    %c0_13 = arith.constant 0 : index
    %c0_14 = arith.constant 0 : index
    %c0_15 = arith.constant 0 : index
    %c2 = arith.constant 2 : index
    %c0_16 = arith.constant 0 : index
    %13 = vector.load %arg1[%c0_13, %c0_14, %c0_15, %c2, %c0_16] : memref<1x2x10x10x128xbf16, #tpu.memory_space<vmem>>, vector<1x2x8x8x128xbf16>
    %14 = vector.shape_cast %13 : vector<1x2x8x8x128xbf16> to vector<2x8x8x128xbf16>
    %15 = vector.shape_cast %14 : vector<2x8x8x128xbf16> to vector<128x128xbf16>
    %c256 = arith.constant 256 : index
    %c0_17 = arith.constant 0 : index
    %16 = vector.load %arg2[%c256, %c0_17] : memref<1152x128xbf16, #tpu.memory_space<vmem>>, vector<128x128xbf16>
    %cst_18 = arith.constant dense<0.000000e+00> : vector<128x128xf32>
    %17 = tpu.matmul %15, %16, %cst_18 {dimension_numbers = #tpu.dot_dimension_numbers<[1], [0], [0], [1], [0, 0, 1, 1], [], []>} : vector<128x128xbf16>, vector<128x128xbf16>, vector<128x128xf32> -> vector<128x128xf32>
    %18 = arith.addf %12, %17 : vector<128x128xf32>
    %c0_19 = arith.constant 0 : index
    %c0_20 = arith.constant 0 : index
    %c1_21 = arith.constant 1 : index
    %c0_22 = arith.constant 0 : index
    %c0_23 = arith.constant 0 : index
    %19 = vector.load %arg1[%c0_19, %c0_20, %c1_21, %c0_22, %c0_23] : memref<1x2x10x10x128xbf16, #tpu.memory_space<vmem>>, vector<1x2x8x8x128xbf16>
    %20 = vector.shape_cast %19 : vector<1x2x8x8x128xbf16> to vector<2x8x8x128xbf16>
    %21 = vector.shape_cast %20 : vector<2x8x8x128xbf16> to vector<128x128xbf16>
    %c384 = arith.constant 384 : index
    %c0_24 = arith.constant 0 : index
    %22 = vector.load %arg2[%c384, %c0_24] : memref<1152x128xbf16, #tpu.memory_space<vmem>>, vector<128x128xbf16>
    %cst_25 = arith.constant dense<0.000000e+00> : vector<128x128xf32>
    %23 = tpu.matmul %21, %22, %cst_25 {dimension_numbers = #tpu.dot_dimension_numbers<[1], [0], [0], [1], [0, 0, 1, 1], [], []>} : vector<128x128xbf16>, vector<128x128xbf16>, vector<128x128xf32> -> vector<128x128xf32>
    %24 = arith.addf %18, %23 : vector<128x128xf32>
    %c0_26 = arith.constant 0 : index
    %c0_27 = arith.constant 0 : index
    %c1_28 = arith.constant 1 : index
    %c1_29 = arith.constant 1 : index
    %c0_30 = arith.constant 0 : index
    %25 = vector.load %arg1[%c0_26, %c0_27, %c1_28, %c1_29, %c0_30] : memref<1x2x10x10x128xbf16, #tpu.memory_space<vmem>>, vector<1x2x8x8x128xbf16>
    %26 = vector.shape_cast %25 : vector<1x2x8x8x128xbf16> to vector<2x8x8x128xbf16>
    %27 = vector.shape_cast %26 : vector<2x8x8x128xbf16> to vector<128x128xbf16>
    %c512 = arith.constant 512 : index
    %c0_31 = arith.constant 0 : index
    %28 = vector.load %arg2[%c512, %c0_31] : memref<1152x128xbf16, #tpu.memory_space<vmem>>, vector<128x128xbf16>
    %cst_32 = arith.constant dense<0.000000e+00> : vector<128x128xf32>
    %29 = tpu.matmul %27, %28, %cst_32 {dimension_numbers = #tpu.dot_dimension_numbers<[1], [0], [0], [1], [0, 0, 1, 1], [], []>} : vector<128x128xbf16>, vector<128x128xbf16>, vector<128x128xf32> -> vector<128x128xf32>
    %30 = arith.addf %24, %29 : vector<128x128xf32>
    %c0_33 = arith.constant 0 : index
    %c0_34 = arith.constant 0 : index
    %c1_35 = arith.constant 1 : index
    %c2_36 = arith.constant 2 : index
    %c0_37 = arith.constant 0 : index
    %31 = vector.load %arg1[%c0_33, %c0_34, %c1_35, %c2_36, %c0_37] : memref<1x2x10x10x128xbf16, #tpu.memory_space<vmem>>, vector<1x2x8x8x128xbf16>
    %32 = vector.shape_cast %31 : vector<1x2x8x8x128xbf16> to vector<2x8x8x128xbf16>
    %33 = vector.shape_cast %32 : vector<2x8x8x128xbf16> to vector<128x128xbf16>
    %c640 = arith.constant 640 : index
    %c0_38 = arith.constant 0 : index
    %34 = vector.load %arg2[%c640, %c0_38] : memref<1152x128xbf16, #tpu.memory_space<vmem>>, vector<128x128xbf16>
    %cst_39 = arith.constant dense<0.000000e+00> : vector<128x128xf32>
    %35 = tpu.matmul %33, %34, %cst_39 {dimension_numbers = #tpu.dot_dimension_numbers<[1], [0], [0], [1], [0, 0, 1, 1], [], []>} : vector<128x128xbf16>, vector<128x128xbf16>, vector<128x128xf32> -> vector<128x128xf32>
    %36 = arith.addf %30, %35 : vector<128x128xf32>
    %c0_40 = arith.constant 0 : index
    %c0_41 = arith.constant 0 : index
    %c2_42 = arith.constant 2 : index
    %c0_43 = arith.constant 0 : index
    %c0_44 = arith.constant 0 : index
    %37 = vector.load %arg1[%c0_40, %c0_41, %c2_42, %c0_43, %c0_44] : memref<1x2x10x10x128xbf16, #tpu.memory_space<vmem>>, vector<1x2x8x8x128xbf16>
    %38 = vector.shape_cast %37 : vector<1x2x8x8x128xbf16> to vector<2x8x8x128xbf16>
    %39 = vector.shape_cast %38 : vector<2x8x8x128xbf16> to vector<128x128xbf16>
    %c768 = arith.constant 768 : index
    %c0_45 = arith.constant 0 : index
    %40 = vector.load %arg2[%c768, %c0_45] : memref<1152x128xbf16, #tpu.memory_space<vmem>>, vector<128x128xbf16>
    %cst_46 = arith.constant dense<0.000000e+00> : vector<128x128xf32>
    %41 = tpu.matmul %39, %40, %cst_46 {dimension_numbers = #tpu.dot_dimension_numbers<[1], [0], [0], [1], [0, 0, 1, 1], [], []>} : vector<128x128xbf16>, vector<128x128xbf16>, vector<128x128xf32> -> vector<128x128xf32>
    %42 = arith.addf %36, %41 : vector<128x128xf32>
    %c0_47 = arith.constant 0 : index
    %c0_48 = arith.constant 0 : index
    %c2_49 = arith.constant 2 : index
    %c1_50 = arith.constant 1 : index
    %c0_51 = arith.constant 0 : index
    %43 = vector.load %arg1[%c0_47, %c0_48, %c2_49, %c1_50, %c0_51] : memref<1x2x10x10x128xbf16, #tpu.memory_space<vmem>>, vector<1x2x8x8x128xbf16>
    %44 = vector.shape_cast %43 : vector<1x2x8x8x128xbf16> to vector<2x8x8x128xbf16>
    %45 = vector.shape_cast %44 : vector<2x8x8x128xbf16> to vector<128x128xbf16>
    %c896 = arith.constant 896 : index
    %c0_52 = arith.constant 0 : index
    %46 = vector.load %arg2[%c896, %c0_52] : memref<1152x128xbf16, #tpu.memory_space<vmem>>, vector<128x128xbf16>
    %cst_53 = arith.constant dense<0.000000e+00> : vector<128x128xf32>
    %47 = tpu.matmul %45, %46, %cst_53 {dimension_numbers = #tpu.dot_dimension_numbers<[1], [0], [0], [1], [0, 0, 1, 1], [], []>} : vector<128x128xbf16>, vector<128x128xbf16>, vector<128x128xf32> -> vector<128x128xf32>
    %48 = arith.addf %42, %47 : vector<128x128xf32>
    %c0_54 = arith.constant 0 : index
    %c0_55 = arith.constant 0 : index
    %c2_56 = arith.constant 2 : index
    %c2_57 = arith.constant 2 : index
    %c0_58 = arith.constant 0 : index
    %49 = vector.load %arg1[%c0_54, %c0_55, %c2_56, %c2_57, %c0_58] : memref<1x2x10x10x128xbf16, #tpu.memory_space<vmem>>, vector<1x2x8x8x128xbf16>
    %50 = vector.shape_cast %49 : vector<1x2x8x8x128xbf16> to vector<2x8x8x128xbf16>
    %51 = vector.shape_cast %50 : vector<2x8x8x128xbf16> to vector<128x128xbf16>
    %c1024 = arith.constant 1024 : index
    %c0_59 = arith.constant 0 : index
    %52 = vector.load %arg2[%c1024, %c0_59] : memref<1152x128xbf16, #tpu.memory_space<vmem>>, vector<128x128xbf16>
    %cst_60 = arith.constant dense<0.000000e+00> : vector<128x128xf32>
    %53 = tpu.matmul %51, %52, %cst_60 {dimension_numbers = #tpu.dot_dimension_numbers<[1], [0], [0], [1], [0, 0, 1, 1], [], []>} : vector<128x128xbf16>, vector<128x128xbf16>, vector<128x128xf32> -> vector<128x128xf32>
    %54 = arith.addf %48, %53 : vector<128x128xf32>
    %cst_61 = arith.constant dense<0.000000e+00> : vector<128xf32>
    %55 = vector.multi_reduction <add>, %54, %cst_61 [0] : vector<128x128xf32> to vector<128xf32>
    %56 = vector.shape_cast %55 : vector<128xf32> to vector<1x128xf32>
    %cst_62 = arith.constant 7.812500e-03 : f32
    %57 = vector.broadcast %cst_62 : f32 to vector<1x128xf32>
    %58 = arith.mulf %56, %57 : vector<1x128xf32>
    %59 = vector.broadcast %58 : vector<1x128xf32> to vector<128x128xf32>
    %60 = arith.subf %54, %59 : vector<128x128xf32>
    %61 = arith.mulf %60, %60 : vector<128x128xf32>
    %cst_63 = arith.constant dense<0.000000e+00> : vector<128xf32>
    %62 = vector.multi_reduction <add>, %61, %cst_63 [0] : vector<128x128xf32> to vector<128xf32>
    %63 = vector.shape_cast %62 : vector<128xf32> to vector<1x128xf32>
    %cst_64 = arith.constant 7.812500e-03 : f32
    %64 = vector.broadcast %cst_64 : f32 to vector<1x128xf32>
    %65 = arith.mulf %63, %64 : vector<1x128xf32>
    %cst_65 = arith.constant 9.99999974E-6 : f32
    %66 = vector.broadcast %cst_65 : f32 to vector<1x128xf32>
    %67 = arith.addf %65, %66 : vector<1x128xf32>
    %68 = math.rsqrt %67 : vector<1x128xf32>
    %69 = vector.broadcast %68 : vector<1x128xf32> to vector<128x128xf32>
    %70 = arith.mulf %60, %69 : vector<128x128xf32>
    %c0_66 = arith.constant 0 : index
    %c0_67 = arith.constant 0 : index
    %71 = vector.load %arg3[%c0_66, %c0_67] : memref<1x128xf32, #tpu.memory_space<vmem>>, vector<1x128xf32>
    %72 = vector.broadcast %71 : vector<1x128xf32> to vector<128x128xf32>
    %73 = arith.mulf %70, %72 : vector<128x128xf32>
    %c0_68 = arith.constant 0 : index
    %c0_69 = arith.constant 0 : index
    %74 = vector.load %arg4[%c0_68, %c0_69] : memref<1x128xf32, #tpu.memory_space<vmem>>, vector<1x128xf32>
    %75 = vector.broadcast %74 : vector<1x128xf32> to vector<128x128xf32>
    %76 = arith.addf %73, %75 : vector<128x128xf32>
    %c0_70 = arith.constant 0 : index
    %c0_71 = arith.constant 0 : index
    %77 = vector.load %arg5[%c0_70, %c0_71] : memref<128x128xf32, #tpu.memory_space<vmem>>, vector<128x128xf32>
    %78 = arith.addf %76, %77 : vector<128x128xf32>
    %cst_72 = arith.constant 0.000000e+00 : f32
    %79 = vector.broadcast %cst_72 : f32 to vector<128x128xf32>
    %80 = arith.maximumf %78, %79 : vector<128x128xf32>
    %c0_73 = arith.constant 0 : index
    %c0_74 = arith.constant 0 : index
    %81 = vector.load %arg6[%c0_73, %c0_74] : memref<128x128xf32, #tpu.memory_space<vmem>>, vector<128x128xf32>
    tpu.vector_store %arg6[%c0_73, %c0_74], %80 {strides = array<i32>} : memref<128x128xf32, #tpu.memory_space<vmem>>, vector<128x128xf32>,
    return
  }
  func.func @transform_0(%arg0: i32) -> (i32, i32, i32, i32, i32) {
    %c0_i32 = arith.constant 0 : i32
    %c0_i32_0 = arith.constant 0 : i32
    %c0_i32_1 = arith.constant 0 : i32
    %c0_i32_2 = arith.constant 0 : i32
    %c0_i32_3 = arith.constant 0 : i32
    %c0_i32_4 = arith.constant 0 : i32
    return %c0_i32, %c0_i32_0, %c0_i32_1, %c0_i32_2, %c0_i32_3 : i32, i32, i32, i32, i32
  }
  func.func @transform_1(%arg0: i32) -> (i32, i32) {
    %c0_i32 = arith.constant 0 : i32
    %c0_i32_0 = arith.constant 0 : i32
    return %c0_i32, %arg0 : i32, i32
  }
  func.func @transform_2(%arg0: i32) -> (i32, i32) {
    %c0_i32 = arith.constant 0 : i32
    %c0_i32_0 = arith.constant 0 : i32
    return %c0_i32, %arg0 : i32, i32
  }
  func.func @transform_3(%arg0: i32) -> (i32, i32) {
    %c0_i32 = arith.constant 0 : i32
    %c0_i32_0 = arith.constant 0 : i32
    return %c0_i32, %arg0 : i32, i32
  }
  func.func @transform_4(%arg0: i32) -> (i32, i32) {
    %c0_i32 = arith.constant 0 : i32
    %c0_i32_0 = arith.constant 0 : i32
    return %c0_i32, %arg0 : i32, i32
  }
  func.func @transform_5(%arg0: i32) -> (i32, i32) {
    %c0_i32 = arith.constant 0 : i32
    %c0_i32_0 = arith.constant 0 : i32
    return %c0_i32, %arg0 : i32, i32
  }
}

</mosaic_0001>

<llo_original>
// kernel: forward.6
$region0: #{forward.6}
  #allocation0 [shape = 'u32[]', space=smem, size = 0x4, offset = 0x4, fixed_abs, tag = 'smem constant byte address 0x4 - core index']
  #allocation1 [shape = 'u32[72,128]{1,0:T(1,128)}', space=vmem, size = 0x9000, scoped, tag = 'internal scratch']
  %s0 = inlined_call_operand.vmem [shape: bf16[1,2,8,8,128], index: 0, kind: input, shape index: {}]
  %s1 = inlined_call_operand.vmem [shape: bf16[128,128], index: 1, kind: input, shape index: {}]
  %s2 = inlined_call_operand.vmem [shape: f32[1,128], index: 2, kind: input, shape index: {}]
  %s3 = inlined_call_operand.vmem [shape: f32[1,128], index: 3, kind: input, shape index: {}]
  %s4 = inlined_call_operand.vmem [shape: f32[128,128], index: 4, kind: output, shape index: {}]
  %s5 = sld [smem:[#allocation0]]
  $region26: #{forward.6} parent=0
    _
  %s7 = ssub.s32 1, %s5
  %s8 = scalar_select 0, %s7, %s5
  // Predicated region
  $region2: #{forward.6} parent=0 // pred_check
    _
  $region3: #{forward.6} parent=0 // pred_check_branch
    %10 = sbr.rel (0) target = $region5
  $region4: #{forward.6} parent=0 // pred_region
    _
  $region5: #{forward.6} parent=0 // pred_fallthru
    _
  // Predicated region
  $region6: #{forward.6} parent=0 // pred_check
    _
  $region7: #{forward.6} parent=0 // pred_check_branch
    %12 = sbr.rel (0) target = $region9
  $region8: #{forward.6} parent=0 // pred_region
    _
  $region9: #{forward.6} parent=0 // pred_fallthru
    _
  // Predicated region
  $region10: #{forward.6} parent=0 // pred_check
    _
  $region11: #{forward.6} parent=0 // pred_check_branch
    %14 = sbr.rel (0) target = $region13
  $region12: #{forward.6} parent=0 // pred_region
    _
  $region13: #{forward.6} parent=0 // pred_fallthru
    _
  // Predicated region
  $region14: #{forward.6} parent=0 // pred_check
    _
  $region15: #{forward.6} parent=0 // pred_check_branch
    %16 = sbr.rel (0) target = $region17
  $region16: #{forward.6} parent=0 // pred_region
    _
  $region17: #{forward.6} parent=0 // pred_fallthru
    _
  %v17 = vld [vmem:[%s0] sm:$0xf]
  %v18 = vld [vmem:[%s0 + $0x4] sm:$0xf]
  %v19 = vld [vmem:[%s0 + $0x8] sm:$0xf]
  %v20 = vld [vmem:[%s0 + $0xc] sm:$0xf]
  %v21 = vld [vmem:[%s0 + $0x10] sm:$0xf]
  %v22 = vld [vmem:[%s0 + $0x14] sm:$0xf]
  %v23 = vld [vmem:[%s0 + $0x18] sm:$0xf]
  %v24 = vld [vmem:[%s0 + $0x1c] sm:$0xf]
  %v25 = vld [vmem:[%s0 + $0x20] sm:$0xf]
  %v26 = vld [vmem:[%s0 + $0x24] sm:$0xf]
  %v27 = vld [vmem:[%s0 + $0x28] sm:$0xf]
  %v28 = vld [vmem:[%s0 + $0x2c] sm:$0xf]
  %v29 = vld [vmem:[%s0 + $0x30] sm:$0xf]
  %v30 = vld [vmem:[%s0 + $0x34] sm:$0xf]
  %v31 = vld [vmem:[%s0 + $0x38] sm:$0xf]
  %v32 = vld [vmem:[%s0 + $0x3c] sm:$0xf]
  %v33 = vld [vmem:[%s1] sm:$0xf]
  %v34 = vld [vmem:[%s1 + $0x4] sm:$0xf]
  %v35 = vld [vmem:[%s1 + $0x8] sm:$0xf]
  %v36 = vld [vmem:[%s1 + $0xc] sm:$0xf]
  %v37 = vld [vmem:[%s1 + $0x10] sm:$0xf]
  %v38 = vld [vmem:[%s1 + $0x14] sm:$0xf]
  %v39 = vld [vmem:[%s1 + $0x18] sm:$0xf]
  %v40 = vld [vmem:[%s1 + $0x1c] sm:$0xf]
  %v41 = vld [vmem:[%s1 + $0x20] sm:$0xf]
  %v42 = vld [vmem:[%s1 + $0x24] sm:$0xf]
  %v43 = vld [vmem:[%s1 + $0x28] sm:$0xf]
  %v44 = vld [vmem:[%s1 + $0x2c] sm:$0xf]
  %v45 = vld [vmem:[%s1 + $0x30] sm:$0xf]
  %v46 = vld [vmem:[%s1 + $0x34] sm:$0xf]
  %v47 = vld [vmem:[%s1 + $0x38] sm:$0xf]
  %v48 = vld [vmem:[%s1 + $0x3c] sm:$0xf]
  %v65 = vunpack.c.l.b16 %v17
  %v66 = vunpack.c.l.b16 %v18
  %v67 = vunpack.c.l.b16 %v19
  %v68 = vunpack.c.l.b16 %v20
  %v69 = vunpack.c.l.b16 %v21
  %v70 = vunpack.c.l.b16 %v22
  %v71 = vunpack.c.l.b16 %v23
  %v72 = vunpack.c.l.b16 %v24
  %v73 = vunpack.c.l.b16 %v25
  %v74 = vunpack.c.l.b16 %v26
  %v75 = vunpack.c.l.b16 %v27
  %v76 = vunpack.c.l.b16 %v28
  %v77 = vunpack.c.l.b16 %v29
  %v78 = vunpack.c.l.b16 %v30
  %v79 = vunpack.c.l.b16 %v31
  %v80 = vunpack.c.l.b16 %v32
  %v81 = vpack.c.b16 %v66, %v65
  %v82 = vpack.c.b16 %v68, %v67
  %v83 = vpack.c.b16 %v70, %v69
  %v84 = vpack.c.b16 %v72, %v71
  %v85 = vpack.c.b16 %v74, %v73
  %v86 = vpack.c.b16 %v76, %v75
  %v87 = vpack.c.b16 %v78, %v77
  %v88 = vpack.c.b16 %v80, %v79
  %v113 = vunpack.c.l.b16 %v33
  %v114 = vunpack.c.l.b16 %v34
  %v115 = vunpack.c.l.b16 %v35
  %v116 = vunpack.c.l.b16 %v36
  %v117 = vunpack.c.l.b16 %v37
  %v118 = vunpack.c.l.b16 %v38
  %v119 = vunpack.c.l.b16 %v39
  %v120 = vunpack.c.l.b16 %v40
  %v121 = vunpack.c.l.b16 %v41
  %v122 = vunpack.c.l.b16 %v42
  %v123 = vunpack.c.l.b16 %v43
  %v124 = vunpack.c.l.b16 %v44
  %v125 = vunpack.c.l.b16 %v45
  %v126 = vunpack.c.l.b16 %v46
  %v127 = vunpack.c.l.b16 %v47
  %v128 = vunpack.c.l.b16 %v48
  %v129 = vpack.c.b16 %v114, %v113
  %v130 = vpack.c.b16 %v116, %v115
  %v131 = vpack.c.b16 %v118, %v117
  %v132 = vpack.c.b16 %v120, %v119
  %v133 = vpack.c.b16 %v122, %v121
  %v134 = vpack.c.b16 %v124, %v123
  %v135 = vpack.c.b16 %v126, %v125
  %v136 = vpack.c.b16 %v128, %v127
  %145 = vmatpush.bf16.msra.mxu0 %v136
  %146 = vmatpush.bf16.msra.mxu0 %v135
  %147 = vmatpush.bf16.msra.mxu0 %v134
  %148 = vmatpush.bf16.msra.mxu0 %v133
  %149 = vmatpush.bf16.msra.mxu0 %v132
  %150 = vmatpush.bf16.msra.mxu0 %v131
  %151 = vmatpush.bf16.msra.mxu0 %v130
  %152 = vmatpush.bf16.msra.mxu0 %v129
  %153 = vmatmul.bf16.gmra.mxu0 %v81
  %v154 = vpop.f32.mrf.mxu0
  %v155 = vadd.f32 0.0, %v154
  %v156 = vpop.f32.mrf.mxu0
  %v157 = vadd.f32 0.0, %v156
  %158 = vmatmul.bf16.gmra.mxu0 %v82
  %v159 = vpop.f32.mrf.mxu0
  %v160 = vadd.f32 0.0, %v159
  %v161 = vpop.f32.mrf.mxu0
  %v162 = vadd.f32 0.0, %v161
  %163 = vmatmul.bf16.gmra.mxu0 %v83
  %v164 = vpop.f32.mrf.mxu0
  %v165 = vadd.f32 0.0, %v164
  %v166 = vpop.f32.mrf.mxu0
  %v167 = vadd.f32 0.0, %v166
  %168 = vmatmul.bf16.gmra.mxu0 %v84
  %v169 = vpop.f32.mrf.mxu0
  %v170 = vadd.f32 0.0, %v169
  %v171 = vpop.f32.mrf.mxu0
  %v172 = vadd.f32 0.0, %v171
  %173 = vmatmul.bf16.gmra.mxu0 %v85
  %v174 = vpop.f32.mrf.mxu0
  %v175 = vadd.f32 0.0, %v174
  %v176 = vpop.f32.mrf.mxu0
  %v177 = vadd.f32 0.0, %v176
  %178 = vmatmul.bf16.gmra.mxu0 %v86
  %v179 = vpop.f32.mrf.mxu0
  %v180 = vadd.f32 0.0, %v179
  %v181 = vpop.f32.mrf.mxu0
  %v182 = vadd.f32 0.0, %v181
  %183 = vmatmul.bf16.gmra.mxu0 %v87
  %v184 = vpop.f32.mrf.mxu0
  %v185 = vadd.f32 0.0, %v184
  %v186 = vpop.f32.mrf.mxu0
  %v187 = vadd.f32 0.0, %v186
  %188 = vmatmul.bf16.gmra.mxu0 %v88
  %v189 = vpop.f32.mrf.mxu0
  %v190 = vadd.f32 0.0, %v189
  %v191 = vpop.f32.mrf.mxu0
  %v192 = vadd.f32 0.0, %v191
  %193 = vdwg.mxu0
  %v194 = vadd.f32 %v155, %v157
  %v195 = vadd.f32 %v194, %v160
  %v196 = vadd.f32 %v195, %v162
  %v197 = vadd.f32 %v196, %v165
  %v198 = vadd.f32 %v197, %v167
  %v199 = vadd.f32 %v198, %v170
  %v200 = vadd.f32 %v199, %v172
  %v201 = vadd.f32 %v200, %v175
  %v202 = vadd.f32 %v201, %v177
  %v203 = vadd.f32 %v202, %v180
  %v204 = vadd.f32 %v203, %v182
  %v205 = vadd.f32 %v204, %v185
  %v206 = vadd.f32 %v205, %v187
  %v207 = vadd.f32 %v206, %v190
  %v208 = vadd.f32 %v207, %v192
  %v209 = vrot.slane %v208, 4
  %v210 = vadd.f32 %v208, %v209
  %v211 = vrot.slane %v210, 2
  %v212 = vadd.f32 %v210, %v211
  %v213 = vrot.slane %v212, 1
  %v214 = vadd.f32 %v212, %v213
  %v215 = vmul.f32 %v214, 0.0078125
  %v216 = vsub.f32 %v155, %v215
  %v217 = vsub.f32 %v157, %v215
  %v218 = vsub.f32 %v160, %v215
  %v219 = vsub.f32 %v162, %v215
  %v220 = vsub.f32 %v165, %v215
  %v221 = vsub.f32 %v167, %v215
  %v222 = vsub.f32 %v170, %v215
  %v223 = vsub.f32 %v172, %v215
  %v224 = vsub.f32 %v175, %v215
  %v225 = vsub.f32 %v177, %v215
  %v226 = vsub.f32 %v180, %v215
  %v227 = vsub.f32 %v182, %v215
  %v228 = vsub.f32 %v185, %v215
  %v229 = vsub.f32 %v187, %v215
  %v230 = vsub.f32 %v190, %v215
  %v231 = vsub.f32 %v192, %v215
  %v232 = vmul.f32 %v216, %v216
  %v233 = vmul.f32 %v217, %v217
  %v234 = vmul.f32 %v218, %v218
  %v235 = vmul.f32 %v219, %v219
  %v236 = vmul.f32 %v220, %v220
  %v237 = vmul.f32 %v221, %v221
  %v238 = vmul.f32 %v222, %v222
  %v239 = vmul.f32 %v223, %v223
  %v240 = vmul.f32 %v224, %v224
  %v241 = vmul.f32 %v225, %v225
  %v242 = vmul.f32 %v226, %v226
  %v243 = vmul.f32 %v227, %v227
  %v244 = vmul.f32 %v228, %v228
  %v245 = vmul.f32 %v229, %v229
  %v246 = vmul.f32 %v230, %v230
  %v247 = vmul.f32 %v231, %v231
  %v248 = vadd.f32 %v232, %v233
  %v249 = vadd.f32 %v248, %v234
  %v250 = vadd.f32 %v249, %v235
  %v251 = vadd.f32 %v250, %v236
  %v252 = vadd.f32 %v251, %v237
  %v253 = vadd.f32 %v252, %v238
  %v254 = vadd.f32 %v253, %v239
  %v255 = vadd.f32 %v254, %v240
  %v256 = vadd.f32 %v255, %v241
  %v257 = vadd.f32 %v256, %v242
  %v258 = vadd.f32 %v257, %v243
  %v259 = vadd.f32 %v258, %v244
  %v260 = vadd.f32 %v259, %v245
  %v261 = vadd.f32 %v260, %v246
  %v262 = vadd.f32 %v261, %v247
  %v263 = vrot.slane %v262, 4
  %v264 = vadd.f32 %v262, %v263
  %v265 = vrot.slane %v264, 2
  %v266 = vadd.f32 %v264, %v265
  %v267 = vrot.slane %v266, 1
  %v268 = vadd.f32 %v266, %v267
  %v269 = vmul.f32 %v268, 0.0078125
  %v270 = vadd.f32 %v269, 1e-05
  %v271 = vrsqrt.pop %v270
  %v272 = vmul.f32 %v271, %v270
  %v273 = vmul.f32 %v272, %v271
  %v274 = vmul.f32 0.5, %v273
  %v275 = vsub.f32 1.5, %v274
  %v276 = vmul.f32 %v271, %v275
  %vm277 = vweird.f32 %v270
  %vm278 = vweird.f32 %v271
  %vm279 = vmor %vm277, %vm278
  %v280 = vsel %vm279, %v271, %v276
  %v281 = vmul.f32 %v216, %v280
  %v282 = vmul.f32 %v217, %v280
  %v283 = vmul.f32 %v218, %v280
  %v284 = vmul.f32 %v219, %v280
  %v285 = vmul.f32 %v220, %v280
  %v286 = vmul.f32 %v221, %v280
  %v287 = vmul.f32 %v222, %v280
  %v288 = vmul.f32 %v223, %v280
  %v289 = vmul.f32 %v224, %v280
  %v290 = vmul.f32 %v225, %v280
  %v291 = vmul.f32 %v226, %v280
  %v292 = vmul.f32 %v227, %v280
  %v293 = vmul.f32 %v228, %v280
  %v294 = vmul.f32 %v229, %v280
  %v295 = vmul.f32 %v230, %v280
  %v296 = vmul.f32 %v231, %v280
  %v297 = vld [vmem:[%s2] sm:$0x1]
  %v299 = vperm.slane %v297, 0
  %v301 = vmul.f32 %v281, %v299
  %v302 = vmul.f32 %v282, %v299
  %v303 = vmul.f32 %v283, %v299
  %v304 = vmul.f32 %v284, %v299
  %v305 = vmul.f32 %v285, %v299
  %v306 = vmul.f32 %v286, %v299
  %v307 = vmul.f32 %v287, %v299
  %v308 = vmul.f32 %v288, %v299
  %v309 = vmul.f32 %v289, %v299
  %v310 = vmul.f32 %v290, %v299
  %v311 = vmul.f32 %v291, %v299
  %v312 = vmul.f32 %v292, %v299
  %v313 = vmul.f32 %v293, %v299
  %v314 = vmul.f32 %v294, %v299
  %v315 = vmul.f32 %v295, %v299
  %v316 = vmul.f32 %v296, %v299
  %v317 = vld [vmem:[%s3] sm:$0x1]
  %v319 = vperm.slane %v317, 0
  %v321 = vadd.f32 %v301, %v319
  %v322 = vadd.f32 %v302, %v319
  %v323 = vadd.f32 %v303, %v319
  %v324 = vadd.f32 %v304, %v319
  %v325 = vadd.f32 %v305, %v319
  %v326 = vadd.f32 %v306, %v319
  %v327 = vadd.f32 %v307, %v319
  %v328 = vadd.f32 %v308, %v319
  %v329 = vadd.f32 %v309, %v319
  %v330 = vadd.f32 %v310, %v319
  %v331 = vadd.f32 %v311, %v319
  %v332 = vadd.f32 %v312, %v319
  %v333 = vadd.f32 %v313, %v319
  %v334 = vadd.f32 %v314, %v319
  %v335 = vadd.f32 %v315, %v319
  %v336 = vadd.f32 %v316, %v319
  %337 = vst [vmem:[%s4] sm:$0xff] %v321
  %338 = vst [vmem:[%s4 + $0x8] sm:$0xff] %v322
  %339 = vst [vmem:[%s4 + $0x10] sm:$0xff] %v323
  %340 = vst [vmem:[%s4 + $0x18] sm:$0xff] %v324
  %341 = vst [vmem:[%s4 + $0x20] sm:$0xff] %v325
  %342 = vst [vmem:[%s4 + $0x28] sm:$0xff] %v326
  %343 = vst [vmem:[%s4 + $0x30] sm:$0xff] %v327
  %344 = vst [vmem:[%s4 + $0x38] sm:$0xff] %v328
  %345 = vst [vmem:[%s4 + $0x40] sm:$0xff] %v329
  %346 = vst [vmem:[%s4 + $0x48] sm:$0xff] %v330
  %347 = vst [vmem:[%s4 + $0x50] sm:$0xff] %v331
  %348 = vst [vmem:[%s4 + $0x58] sm:$0xff] %v332
  %349 = vst [vmem:[%s4 + $0x60] sm:$0xff] %v333
  %350 = vst [vmem:[%s4 + $0x68] sm:$0xff] %v334
  %351 = vst [vmem:[%s4 + $0x70] sm:$0xff] %v335
  %352 = vst [vmem:[%s4 + $0x78] sm:$0xff] %v336
  // Predicated region
  $region18: #{forward.6} parent=0 // pred_check
    _
  $region19: #{forward.6} parent=0 // pred_check_branch
    %354 = sbr.rel (0) target = $region21
  $region20: #{forward.6} parent=0 // pred_region
    _
  $region21: #{forward.6} parent=0 // pred_fallthru
    _
  // Predicated region
  $region22: #{forward.6} parent=0 // pred_check
    _
  $region23: #{forward.6} parent=0 // pred_check_branch
    %356 = sbr.rel (0) target = $region25
  $region24: #{forward.6} parent=0 // pred_region
    _
  $region25: #{forward.6} parent=0 // pred_fallthru
    _

// kernel: forward.5
$region0: #{forward.5}
  #allocation0 [shape = 'u32[]', space=smem, size = 0x4, offset = 0x4, fixed_abs, tag = 'smem constant byte address 0x4 - core index']
  #allocation1 [shape = 'u32[72,128]{1,0:T(1,128)}', space=vmem, size = 0x9000, scoped, tag = 'internal scratch']
  %s0 = inlined_call_operand.vmem [shape: bf16[4,2,9,9,128], index: 0, kind: input, shape index: {}]
  %s1 = inlined_call_operand.vmem [shape: bf16[1152,128], index: 1, kind: input, shape index: {}]
  %s2 = inlined_call_operand.vmem [shape: f32[1,128], index: 2, kind: input, shape index: {}]
  %s3 = inlined_call_operand.vmem [shape: f32[1,128], index: 3, kind: input, shape index: {}]
  %s4 = inlined_call_operand.vmem [shape: f32[128,128], index: 4, kind: output, shape index: {}]
  %s5 = sld [smem:[#allocation0]]
  $region26: #{forward.5} parent=0
    _
  %s7 = ssub.s32 1, %s5
  %s8 = scalar_select 0, %s7, %s5
  // Predicated region
  $region2: #{forward.5} parent=0 // pred_check
    _
  $region3: #{forward.5} parent=0 // pred_check_branch
    %10 = sbr.rel (0) target = $region5
  $region4: #{forward.5} parent=0 // pred_region
    _
  $region5: #{forward.5} parent=0 // pred_fallthru
    _
  // Predicated region
  $region6: #{forward.5} parent=0 // pred_check
    _
  $region7: #{forward.5} parent=0 // pred_check_branch
    %12 = sbr.rel (0) target = $region9
  $region8: #{forward.5} parent=0 // pred_region
    _
  $region9: #{forward.5} parent=0 // pred_fallthru
    _
  // Predicated region
  $region10: #{forward.5} parent=0 // pred_check
    _
  $region11: #{forward.5} parent=0 // pred_check_branch
    %14 = sbr.rel (0) target = $region13
  $region12: #{forward.5} parent=0 // pred_region
    _
  $region13: #{forward.5} parent=0 // pred_fallthru
    _
  // Predicated region
  $region14: #{forward.5} parent=0 // pred_check
    _
  $region15: #{forward.5} parent=0 // pred_check_branch
    %16 = sbr.rel (0) target = $region17
  $region16: #{forward.5} parent=0 // pred_region
    _
  $region17: #{forward.5} parent=0 // pred_fallthru
    _
  %v17 = vld [vmem:[%s0] sm:$0xf]
  %v18 = vld [vmem:[%s0 + $0x8] sm:$0xf]
  %v19 = vld [vmem:[%s0 + $0x10] sm:$0xf]
  %v20 = vld [vmem:[%s0 + $0x18] sm:$0xf]
  %v21 = vld [vmem:[%s0 + $0x20] sm:$0xf]
  %v22 = vld [vmem:[%s0 + $0x28] sm:$0xf]
  %v23 = vld [vmem:[%s0 + $0x30] sm:$0xf]
  %v24 = vld [vmem:[%s0 + $0x38] sm:$0xf]
  %v25 = vld [vmem:[%s0 + $0x48] sm:$0xf]
  %v26 = vld [vmem:[%s0 + $0x50] sm:$0xf]
  %v27 = vld [vmem:[%s0 + $0x58] sm:$0xf]
  %v28 = vld [vmem:[%s0 + $0x60] sm:$0xf]
  %v29 = vld [vmem:[%s0 + $0x68] sm:$0xf]
  %v30 = vld [vmem:[%s0 + $0x70] sm:$0xf]
  %v31 = vld [vmem:[%s0 + $0x78] sm:$0xf]
  %v32 = vld [vmem:[%s0 + $0x80] sm:$0xf]
  %v33 = vld [vmem:[%s1] sm:$0xf]
  %v34 = vld [vmem:[%s1 + $0x4] sm:$0xf]
  %v35 = vld [vmem:[%s1 + $0x8] sm:$0xf]
  %v36 = vld [vmem:[%s1 + $0xc] sm:$0xf]
  %v37 = vld [vmem:[%s1 + $0x10] sm:$0xf]
  %v38 = vld [vmem:[%s1 + $0x14] sm:$0xf]
  %v39 = vld [vmem:[%s1 + $0x18] sm:$0xf]
  %v40 = vld [vmem:[%s1 + $0x1c] sm:$0xf]
  %v41 = vld [vmem:[%s1 + $0x20] sm:$0xf]
  %v42 = vld [vmem:[%s1 + $0x24] sm:$0xf]
  %v43 = vld [vmem:[%s1 + $0x28] sm:$0xf]
  %v44 = vld [vmem:[%s1 + $0x2c] sm:$0xf]
  %v45 = vld [vmem:[%s1 + $0x30] sm:$0xf]
  %v46 = vld [vmem:[%s1 + $0x34] sm:$0xf]
  %v47 = vld [vmem:[%s1 + $0x38] sm:$0xf]
  %v48 = vld [vmem:[%s1 + $0x3c] sm:$0xf]
  %s49 = scalar_lea.vmem %s0, 144
  %v50 = vld [vmem:[%s49] sm:$0xf]
  %v51 = vld [vmem:[%s49 + $0x8] sm:$0xf]
  %v52 = vld [vmem:[%s49 + $0x10] sm:$0xf]
  %v53 = vld [vmem:[%s49 + $0x18] sm:$0xf]
  %v54 = vld [vmem:[%s49 + $0x20] sm:$0xf]
  %v55 = vld [vmem:[%s49 + $0x28] sm:$0xf]
  %v56 = vld [vmem:[%s49 + $0x30] sm:$0xf]
  %v57 = vld [vmem:[%s49 + $0x38] sm:$0xf]
  %v58 = vld [vmem:[%s49 + $0x48] sm:$0xf]
  %v59 = vld [vmem:[%s49 + $0x50] sm:$0xf]
  %v60 = vld [vmem:[%s49 + $0x58] sm:$0xf]
  %v61 = vld [vmem:[%s49 + $0x60] sm:$0xf]
  %v62 = vld [vmem:[%s49 + $0x68] sm:$0xf]
  %v63 = vld [vmem:[%s49 + $0x70] sm:$0xf]
  %v64 = vld [vmem:[%s49 + $0x78] sm:$0xf]
  %v65 = vld [vmem:[%s49 + $0x80] sm:$0xf]
  %v66 = vld [vmem:[%s1 + $0x40] sm:$0xf]
  %v67 = vld [vmem:[%s1 + $0x44] sm:$0xf]
  %v68 = vld [vmem:[%s1 + $0x48] sm:$0xf]
  %v69 = vld [vmem:[%s1 + $0x4c] sm:$0xf]
  %v70 = vld [vmem:[%s1 + $0x50] sm:$0xf]
  %v71 = vld [vmem:[%s1 + $0x54] sm:$0xf]
  %v72 = vld [vmem:[%s1 + $0x58] sm:$0xf]
  %v73 = vld [vmem:[%s1 + $0x5c] sm:$0xf]
  %v74 = vld [vmem:[%s1 + $0x60] sm:$0xf]
  %v75 = vld [vmem:[%s1 + $0x64] sm:$0xf]
  %v76 = vld [vmem:[%s1 + $0x68] sm:$0xf]
  %v77 = vld [vmem:[%s1 + $0x6c] sm:$0xf]
  %v78 = vld [vmem:[%s1 + $0x70] sm:$0xf]
  %v79 = vld [vmem:[%s1 + $0x74] sm:$0xf]
  %v80 = vld [vmem:[%s1 + $0x78] sm:$0xf]
  %v81 = vld [vmem:[%s1 + $0x7c] sm:$0xf]
  %v98 = vunpack.c.l.b16 %v50
  %v99 = vunpack.c.l.b16 %v51
  %v100 = vunpack.c.l.b16 %v52
  %v101 = vunpack.c.l.b16 %v53
  %v102 = vunpack.c.l.b16 %v54
  %v103 = vunpack.c.l.b16 %v55
  %v104 = vunpack.c.l.b16 %v56
  %v105 = vunpack.c.l.b16 %v57
  %v106 = vunpack.c.l.b16 %v58
  %v107 = vunpack.c.l.b16 %v59
  %v108 = vunpack.c.l.b16 %v60
  %v109 = vunpack.c.l.b16 %v61
  %v110 = vunpack.c.l.b16 %v62
  %v111 = vunpack.c.l.b16 %v63
  %v112 = vunpack.c.l.b16 %v64
  %v113 = vunpack.c.l.b16 %v65
  %v114 = vpack.c.b16 %v99, %v98
  %v115 = vpack.c.b16 %v101, %v100
  %v116 = vpack.c.b16 %v103, %v102
  %v117 = vpack.c.b16 %v105, %v104
  %v118 = vpack.c.b16 %v107, %v106
  %v119 = vpack.c.b16 %v109, %v108
  %v120 = vpack.c.b16 %v111, %v110
  %v121 = vpack.c.b16 %v113, %v112
  %v146 = vunpack.c.l.b16 %v66
  %v147 = vunpack.c.l.b16 %v67
  %v148 = vunpack.c.l.b16 %v68
  %v149 = vunpack.c.l.b16 %v69
  %v150 = vunpack.c.l.b16 %v70
  %v151 = vunpack.c.l.b16 %v71
  %v152 = vunpack.c.l.b16 %v72
  %v153 = vunpack.c.l.b16 %v73
  %v154 = vunpack.c.l.b16 %v74
  %v155 = vunpack.c.l.b16 %v75
  %v156 = vunpack.c.l.b16 %v76
  %v157 = vunpack.c.l.b16 %v77
  %v158 = vunpack.c.l.b16 %v78
  %v159 = vunpack.c.l.b16 %v79
  %v160 = vunpack.c.l.b16 %v80
  %v161 = vunpack.c.l.b16 %v81
  %v162 = vpack.c.b16 %v147, %v146
  %v163 = vpack.c.b16 %v149, %v148
  %v164 = vpack.c.b16 %v151, %v150
  %v165 = vpack.c.b16 %v153, %v152
  %v166 = vpack.c.b16 %v155, %v154
  %v167 = vpack.c.b16 %v157, %v156
  %v168 = vpack.c.b16 %v159, %v158
  %v169 = vpack.c.b16 %v161, %v160
  %178 = vmatpush.bf16.msra.mxu0 %v169
  %179 = vmatpush.bf16.msra.mxu0 %v168
  %180 = vmatpush.bf16.msra.mxu0 %v167
  %181 = vmatpush.bf16.msra.mxu0 %v166
  %182 = vmatpush.bf16.msra.mxu0 %v165
  %183 = vmatpush.bf16.msra.mxu0 %v164
  %184 = vmatpush.bf16.msra.mxu0 %v163
  %185 = vmatpush.bf16.msra.mxu0 %v162
  %186 = vmatmul.bf16.gmra.mxu0 %v114
  %v187 = vpop.f32.mrf.mxu0
  %v188 = vadd.f32 0.0, %v187
  %v189 = vpop.f32.mrf.mxu0
  %v190 = vadd.f32 0.0, %v189
  %191 = vmatmul.bf16.gmra.mxu0 %v115
  %v192 = vpop.f32.mrf.mxu0
  %v193 = vadd.f32 0.0, %v192
  %v194 = vpop.f32.mrf.mxu0
  %v195 = vadd.f32 0.0, %v194
  %196 = vmatmul.bf16.gmra.mxu0 %v116
  %v197 = vpop.f32.mrf.mxu0
  %v198 = vadd.f32 0.0, %v197
  %v199 = vpop.f32.mrf.mxu0
  %v200 = vadd.f32 0.0, %v199
  %201 = vmatmul.bf16.gmra.mxu0 %v117
  %v202 = vpop.f32.mrf.mxu0
  %v203 = vadd.f32 0.0, %v202
  %v204 = vpop.f32.mrf.mxu0
  %v205 = vadd.f32 0.0, %v204
  %206 = vmatmul.bf16.gmra.mxu0 %v118
  %v207 = vpop.f32.mrf.mxu0
  %v208 = vadd.f32 0.0, %v207
  %v209 = vpop.f32.mrf.mxu0
  %v210 = vadd.f32 0.0, %v209
  %211 = vmatmul.bf16.gmra.mxu0 %v119
  %v212 = vpop.f32.mrf.mxu0
  %v213 = vadd.f32 0.0, %v212
  %v214 = vpop.f32.mrf.mxu0
  %v215 = vadd.f32 0.0, %v214
  %216 = vmatmul.bf16.gmra.mxu0 %v120
  %v217 = vpop.f32.mrf.mxu0
  %v218 = vadd.f32 0.0, %v217
  %v219 = vpop.f32.mrf.mxu0
  %v220 = vadd.f32 0.0, %v219
  %221 = vmatmul.bf16.gmra.mxu0 %v121
  %v222 = vpop.f32.mrf.mxu0
  %v223 = vadd.f32 0.0, %v222
  %v224 = vpop.f32.mrf.mxu0
  %v225 = vadd.f32 0.0, %v224
  %226 = vdwg.mxu0
  %v243 = vunpack.c.l.b16 %v17
  %v244 = vunpack.c.l.b16 %v18
  %v245 = vunpack.c.l.b16 %v19
  %v246 = vunpack.c.l.b16 %v20
  %v247 = vunpack.c.l.b16 %v21
  %v248 = vunpack.c.l.b16 %v22
  %v249 = vunpack.c.l.b16 %v23
  %v250 = vunpack.c.l.b16 %v24
  %v251 = vunpack.c.l.b16 %v25
  %v252 = vunpack.c.l.b16 %v26
  %v253 = vunpack.c.l.b16 %v27
  %v254 = vunpack.c.l.b16 %v28
  %v255 = vunpack.c.l.b16 %v29
  %v256 = vunpack.c.l.b16 %v30
  %v257 = vunpack.c.l.b16 %v31
  %v258 = vunpack.c.l.b16 %v32
  %v259 = vpack.c.b16 %v244, %v243
  %v260 = vpack.c.b16 %v246, %v245
  %v261 = vpack.c.b16 %v248, %v247
  %v262 = vpack.c.b16 %v250, %v249
  %v263 = vpack.c.b16 %v252, %v251
  %v264 = vpack.c.b16 %v254, %v253
  %v265 = vpack.c.b16 %v256, %v255
  %v266 = vpack.c.b16 %v258, %v257
  %v291 = vunpack.c.l.b16 %v33
  %v292 = vunpack.c.l.b16 %v34
  %v293 = vunpack.c.l.b16 %v35
  %v294 = vunpack.c.l.b16 %v36
  %v295 = vunpack.c.l.b16 %v37
  %v296 = vunpack.c.l.b16 %v38
  %v297 = vunpack.c.l.b16 %v39
  %v298 = vunpack.c.l.b16 %v40
  %v299 = vunpack.c.l.b16 %v41
  %v300 = vunpack.c.l.b16 %v42
  %v301 = vunpack.c.l.b16 %v43
  %v302 = vunpack.c.l.b16 %v44
  %v303 = vunpack.c.l.b16 %v45
  %v304 = vunpack.c.l.b16 %v46
  %v305 = vunpack.c.l.b16 %v47
  %v306 = vunpack.c.l.b16 %v48
  %v307 = vpack.c.b16 %v292, %v291
  %v308 = vpack.c.b16 %v294, %v293
  %v309 = vpack.c.b16 %v296, %v295
  %v310 = vpack.c.b16 %v298, %v297
  %v311 = vpack.c.b16 %v300, %v299
  %v312 = vpack.c.b16 %v302, %v301
  %v313 = vpack.c.b16 %v304, %v303
  %v314 = vpack.c.b16 %v306, %v305
  %323 = vmatpush.bf16.msra.mxu0 %v314
  %324 = vmatpush.bf16.msra.mxu0 %v313
  %325 = vmatpush.bf16.msra.mxu0 %v312
  %326 = vmatpush.bf16.msra.mxu0 %v311
  %327 = vmatpush.bf16.msra.mxu0 %v310
  %328 = vmatpush.bf16.msra.mxu0 %v309
  %329 = vmatpush.bf16.msra.mxu0 %v308
  %330 = vmatpush.bf16.msra.mxu0 %v307
  %331 = vmatmul.bf16.gmra.mxu0 %v259
  %v332 = vpop.f32.mrf.mxu0
  %v333 = vadd.f32 %v188, %v332
  %v334 = vpop.f32.mrf.mxu0
  %v335 = vadd.f32 %v190, %v334
  %336 = vmatmul.bf16.gmra.mxu0 %v260
  %v337 = vpop.f32.mrf.mxu0
  %v338 = vadd.f32 %v193, %v337
  %v339 = vpop.f32.mrf.mxu0
  %v340 = vadd.f32 %v195, %v339
  %341 = vmatmul.bf16.gmra.mxu0 %v261
  %v342 = vpop.f32.mrf.mxu0
  %v343 = vadd.f32 %v198, %v342
  %v344 = vpop.f32.mrf.mxu0
  %v345 = vadd.f32 %v200, %v344
  %346 = vmatmul.bf16.gmra.mxu0 %v262
  %v347 = vpop.f32.mrf.mxu0
  %v348 = vadd.f32 %v203, %v347
  %v349 = vpop.f32.mrf.mxu0
  %v350 = vadd.f32 %v205, %v349
  %351 = vmatmul.bf16.gmra.mxu0 %v263
  %v352 = vpop.f32.mrf.mxu0
  %v353 = vadd.f32 %v208, %v352
  %v354 = vpop.f32.mrf.mxu0
  %v355 = vadd.f32 %v210, %v354
  %356 = vmatmul.bf16.gmra.mxu0 %v264
  %v357 = vpop.f32.mrf.mxu0
  %v358 = vadd.f32 %v213, %v357
  %v359 = vpop.f32.mrf.mxu0
  %v360 = vadd.f32 %v215, %v359
  %361 = vmatmul.bf16.gmra.mxu0 %v265
  %v362 = vpop.f32.mrf.mxu0
  %v363 = vadd.f32 %v218, %v362
  %v364 = vpop.f32.mrf.mxu0
  %v365 = vadd.f32 %v220, %v364
  %366 = vmatmul.bf16.gmra.mxu0 %v266
  %v367 = vpop.f32.mrf.mxu0
  %v368 = vadd.f32 %v223, %v367
  %v369 = vpop.f32.mrf.mxu0
  %v370 = vadd.f32 %v225, %v369
  %371 = vdwg.mxu0
  %v372 = vld [vmem:[%s0] sm:$0xf]
  %v373 = vld [vmem:[%s0 + $0x4] sm:$0x1]
  %v374 = vld [vmem:[%s0 + $0x8] sm:$0xf]
  %v375 = vld [vmem:[%s0 + $0xc] sm:$0x1]
  %v376 = vld [vmem:[%s0 + $0x10] sm:$0xf]
  %v377 = vld [vmem:[%s0 + $0x14] sm:$0x1]
  %v378 = vld [vmem:[%s0 + $0x18] sm:$0xf]
  %v379 = vld [vmem:[%s0 + $0x1c] sm:$0x1]
  %v380 = vld [vmem:[%s0 + $0x20] sm:$0xf]
  %v381 = vld [vmem:[%s0 + $0x24] sm:$0x1]
  %v382 = vld [vmem:[%s0 + $0x28] sm:$0xf]
  %v383 = vld [vmem:[%s0 + $0x2c] sm:$0x1]
  %v384 = vld [vmem:[%s0 + $0x30] sm:$0xf]
  %v385 = vld [vmem:[%s0 + $0x34] sm:$0x1]
  %v386 = vld [vmem:[%s0 + $0x38] sm:$0xf]
  %v387 = vld [vmem:[%s0 + $0x3c] sm:$0x1]
  %v388 = vld [vmem:[%s0 + $0x48] sm:$0xf]
  %v389 = vld [vmem:[%s0 + $0x4c] sm:$0x1]
  %v390 = vld [vmem:[%s0 + $0x50] sm:$0xf]
  %v391 = vld [vmem:[%s0 + $0x54] sm:$0x1]
  %v392 = vld [vmem:[%s0 + $0x58] sm:$0xf]
  %v393 = vld [vmem:[%s0 + $0x5c] sm:$0x1]
  %v394 = vld [vmem:[%s0 + $0x60] sm:$0xf]
  %v395 = vld [vmem:[%s0 + $0x64] sm:$0x1]
  %v396 = vld [vmem:[%s0 + $0x68] sm:$0xf]
  %v397 = vld [vmem:[%s0 + $0x6c] sm:$0x1]
  %v398 = vld [vmem:[%s0 + $0x70] sm:$0xf]
  %v399 = vld [vmem:[%s0 + $0x74] sm:$0x1]
  %v400 = vld [vmem:[%s0 + $0x78] sm:$0xf]
  %v401 = vld [vmem:[%s0 + $0x7c] sm:$0x1]
  %v402 = vld [vmem:[%s0 + $0x80] sm:$0xf]
  %v403 = vld [vmem:[%s0 + $0x84] sm:$0x1]
  %vm404 = vsmask.f32 3328
  %vm405 = vsmask.f32 7440
  %vm406 = vmor %vm404, %vm405
  %v408 = vshrl.u32 %v372, 16
  %v410 = vrot.slane %v408, 4
  %v411 = vshll.u32 %v372, 16
  %v413 = vrot.slane %v411, 5
  %v414 = vor.u32 %v410, %v413
  %v415 = vrot.slane %v414, 4
  %v417 = vshll.u32 %v373, 16
  %v419 = vrot.slane %v417, 5
  %v420 = vsel %vm406, %v415, %v419
  %v422 = vshrl.u32 %v374, 16
  %v424 = vrot.slane %v422, 4
  %v425 = vshll.u32 %v374, 16
  %v427 = vrot.slane %v425, 5
  %v428 = vor.u32 %v424, %v427
  %v429 = vrot.slane %v428, 4
  %v431 = vshll.u32 %v375, 16
  %v433 = vrot.slane %v431, 5
  %v434 = vsel %vm406, %v429, %v433
  %v436 = vshrl.u32 %v376, 16
  %v438 = vrot.slane %v436, 4
  %v439 = vshll.u32 %v376, 16
  %v441 = vrot.slane %v439, 5
  %v442 = vor.u32 %v438, %v441
  %v443 = vrot.slane %v442, 4
  %v445 = vshll.u32 %v377, 16
  %v447 = vrot.slane %v445, 5
  %v448 = vsel %vm406, %v443, %v447
  %v450 = vshrl.u32 %v378, 16
  %v452 = vrot.slane %v450, 4
  %v453 = vshll.u32 %v378, 16
  %v455 = vrot.slane %v453, 5
  %v456 = vor.u32 %v452, %v455
  %v457 = vrot.slane %v456, 4
  %v459 = vshll.u32 %v379, 16
  %v461 = vrot.slane %v459, 5
  %v462 = vsel %vm406, %v457, %v461
  %v464 = vshrl.u32 %v380, 16
  %v466 = vrot.slane %v464, 4
  %v467 = vshll.u32 %v380, 16
  %v469 = vrot.slane %v467, 5
  %v470 = vor.u32 %v466, %v469
  %v471 = vrot.slane %v470, 4
  %v473 = vshll.u32 %v381, 16
  %v475 = vrot.slane %v473, 5
  %v476 = vsel %vm406, %v471, %v475
  %v478 = vshrl.u32 %v382, 16
  %v480 = vrot.slane %v478, 4
  %v481 = vshll.u32 %v382, 16
  %v483 = vrot.slane %v481, 5
  %v484 = vor.u32 %v480, %v483
  %v485 = vrot.slane %v484, 4
  %v487 = vshll.u32 %v383, 16
  %v489 = vrot.slane %v487, 5
  %v490 = vsel %vm406, %v485, %v489
  %v492 = vshrl.u32 %v384, 16
  %v494 = vrot.slane %v492, 4
  %v495 = vshll.u32 %v384, 16
  %v497 = vrot.slane %v495, 5
  %v498 = vor.u32 %v494, %v497
  %v499 = vrot.slane %v498, 4
  %v501 = vshll.u32 %v385, 16
  %v503 = vrot.slane %v501, 5
  %v504 = vsel %vm406, %v499, %v503
  %v506 = vshrl.u32 %v386, 16
  %v508 = vrot.slane %v506, 4
  %v509 = vshll.u32 %v386, 16
  %v511 = vrot.slane %v509, 5
  %v512 = vor.u32 %v508, %v511
  %v513 = vrot.slane %v512, 4
  %v515 = vshll.u32 %v387, 16
  %v517 = vrot.slane %v515, 5
  %v518 = vsel %vm406, %v513, %v517
  %v520 = vshrl.u32 %v388, 16
  %v522 = vrot.slane %v520, 4
  %v523 = vshll.u32 %v388, 16
  %v525 = vrot.slane %v523, 5
  %v526 = vor.u32 %v522, %v525
  %v527 = vrot.slane %v526, 4
  %v529 = vshll.u32 %v389, 16
  %v531 = vrot.slane %v529, 5
  %v532 = vsel %vm406, %v527, %v531
  %v534 = vshrl.u32 %v390, 16
  %v536 = vrot.slane %v534, 4
  %v537 = vshll.u32 %v390, 16
  %v539 = vrot.slane %v537, 5
  %v540 = vor.u32 %v536, %v539
  %v541 = vrot.slane %v540, 4
  %v543 = vshll.u32 %v391, 16
  %v545 = vrot.slane %v543, 5
  %v546 = vsel %vm406, %v541, %v545
  %v548 = vshrl.u32 %v392, 16
  %v550 = vrot.slane %v548, 4
  %v551 = vshll.u32 %v392, 16
  %v553 = vrot.slane %v551, 5
  %v554 = vor.u32 %v550, %v553
  %v555 = vrot.slane %v554, 4
  %v557 = vshll.u32 %v393, 16
  %v559 = vrot.slane %v557, 5
  %v560 = vsel %vm406, %v555, %v559
  %v562 = vshrl.u32 %v394, 16
  %v564 = vrot.slane %v562, 4
  %v565 = vshll.u32 %v394, 16
  %v567 = vrot.slane %v565, 5
  %v568 = vor.u32 %v564, %v567
  %v569 = vrot.slane %v568, 4
  %v571 = vshll.u32 %v395, 16
  %v573 = vrot.slane %v571, 5
  %v574 = vsel %vm406, %v569, %v573
  %v576 = vshrl.u32 %v396, 16
  %v578 = vrot.slane %v576, 4
  %v579 = vshll.u32 %v396, 16
  %v581 = vrot.slane %v579, 5
  %v582 = vor.u32 %v578, %v581
  %v583 = vrot.slane %v582, 4
  %v585 = vshll.u32 %v397, 16
  %v587 = vrot.slane %v585, 5
  %v588 = vsel %vm406, %v583, %v587
  %v590 = vshrl.u32 %v398, 16
  %v592 = vrot.slane %v590, 4
  %v593 = vshll.u32 %v398, 16
  %v595 = vrot.slane %v593, 5
  %v596 = vor.u32 %v592, %v595
  %v597 = vrot.slane %v596, 4
  %v599 = vshll.u32 %v399, 16
  %v601 = vrot.slane %v599, 5
  %v602 = vsel %vm406, %v597, %v601
  %v604 = vshrl.u32 %v400, 16
  %v606 = vrot.slane %v604, 4
  %v607 = vshll.u32 %v400, 16
  %v609 = vrot.slane %v607, 5
  %v610 = vor.u32 %v606, %v609
  %v611 = vrot.slane %v610, 4
  %v613 = vshll.u32 %v401, 16
  %v615 = vrot.slane %v613, 5
  %v616 = vsel %vm406, %v611, %v615
  %v618 = vshrl.u32 %v402, 16
  %v620 = vrot.slane %v618, 4
  %v621 = vshll.u32 %v402, 16
  %v623 = vrot.slane %v621, 5
  %v624 = vor.u32 %v620, %v623
  %v625 = vrot.slane %v624, 4
  %v627 = vshll.u32 %v403, 16
  %v629 = vrot.slane %v627, 5
  %v630 = vsel %vm406, %v625, %v629
  %v631 = vld [vmem:[%s1 + $0x80] sm:$0xf]
  %v632 = vld [vmem:[%s1 + $0x84] sm:$0xf]
  %v633 = vld [vmem:[%s1 + $0x88] sm:$0xf]
  %v634 = vld [vmem:[%s1 + $0x8c] sm:$0xf]
  %v635 = vld [vmem:[%s1 + $0x90] sm:$0xf]
  %v636 = vld [vmem:[%s1 + $0x94] sm:$0xf]
  %v637 = vld [vmem:[%s1 + $0x98] sm:$0xf]
  %v638 = vld [vmem:[%s1 + $0x9c] sm:$0xf]
  %v639 = vld [vmem:[%s1 + $0xa0] sm:$0xf]
  %v640 = vld [vmem:[%s1 + $0xa4] sm:$0xf]
  %v641 = vld [vmem:[%s1 + $0xa8] sm:$0xf]
  %v642 = vld [vmem:[%s1 + $0xac] sm:$0xf]
  %v643 = vld [vmem:[%s1 + $0xb0] sm:$0xf]
  %v644 = vld [vmem:[%s1 + $0xb4] sm:$0xf]
  %v645 = vld [vmem:[%s1 + $0xb8] sm:$0xf]
  %v646 = vld [vmem:[%s1 + $0xbc] sm:$0xf]
  %v647 = vunpack.c.l.b16 %v420
  %v648 = vunpack.c.l.b16 %v434
  %v649 = vunpack.c.l.b16 %v448
  %v650 = vunpack.c.l.b16 %v462
  %v651 = vunpack.c.l.b16 %v476
  %v652 = vunpack.c.l.b16 %v490
  %v653 = vunpack.c.l.b16 %v504
  %v654 = vunpack.c.l.b16 %v518
  %v655 = vunpack.c.l.b16 %v532
  %v656 = vunpack.c.l.b16 %v546
  %v657 = vunpack.c.l.b16 %v560
  %v658 = vunpack.c.l.b16 %v574
  %v659 = vunpack.c.l.b16 %v588
  %v660 = vunpack.c.l.b16 %v602
  %v661 = vunpack.c.l.b16 %v616
  %v662 = vunpack.c.l.b16 %v630
  %v663 = vpack.c.b16 %v648, %v647
  %v664 = vpack.c.b16 %v650, %v649
  %v665 = vpack.c.b16 %v652, %v651
  %v666 = vpack.c.b16 %v654, %v653
  %v667 = vpack.c.b16 %v656, %v655
  %v668 = vpack.c.b16 %v658, %v657
  %v669 = vpack.c.b16 %v660, %v659
  %v670 = vpack.c.b16 %v662, %v661
  %v695 = vunpack.c.l.b16 %v631
  %v696 = vunpack.c.l.b16 %v632
  %v697 = vunpack.c.l.b16 %v633
  %v698 = vunpack.c.l.b16 %v634
  %v699 = vunpack.c.l.b16 %v635
  %v700 = vunpack.c.l.b16 %v636
  %v701 = vunpack.c.l.b16 %v637
  %v702 = vunpack.c.l.b16 %v638
  %v703 = vunpack.c.l.b16 %v639
  %v704 = vunpack.c.l.b16 %v640
  %v705 = vunpack.c.l.b16 %v641
  %v706 = vunpack.c.l.b16 %v642
  %v707 = vunpack.c.l.b16 %v643
  %v708 = vunpack.c.l.b16 %v644
  %v709 = vunpack.c.l.b16 %v645
  %v710 = vunpack.c.l.b16 %v646
  %v711 = vpack.c.b16 %v696, %v695
  %v712 = vpack.c.b16 %v698, %v697
  %v713 = vpack.c.b16 %v700, %v699
  %v714 = vpack.c.b16 %v702, %v701
  %v715 = vpack.c.b16 %v704, %v703
  %v716 = vpack.c.b16 %v706, %v705
  %v717 = vpack.c.b16 %v708, %v707
  %v718 = vpack.c.b16 %v710, %v709
  %727 = vmatpush.bf16.msra.mxu0 %v718
  %728 = vmatpush.bf16.msra.mxu0 %v717
  %729 = vmatpush.bf16.msra.mxu0 %v716
  %730 = vmatpush.bf16.msra.mxu0 %v715
  %731 = vmatpush.bf16.msra.mxu0 %v714
  %732 = vmatpush.bf16.msra.mxu0 %v713
  %733 = vmatpush.bf16.msra.mxu0 %v712
  %734 = vmatpush.bf16.msra.mxu0 %v711
  %735 = vmatmul.bf16.gmra.mxu0 %v663
  %v736 = vpop.f32.mrf.mxu0
  %v737 = vadd.f32 0.0, %v736
  %v738 = vpop.f32.mrf.mxu0
  %v739 = vadd.f32 0.0, %v738
  %740 = vmatmul.bf16.gmra.mxu0 %v664
  %v741 = vpop.f32.mrf.mxu0
  %v742 = vadd.f32 0.0, %v741
  %v743 = vpop.f32.mrf.mxu0
  %v744 = vadd.f32 0.0, %v743
  %745 = vmatmul.bf16.gmra.mxu0 %v665
  %v746 = vpop.f32.mrf.mxu0
  %v747 = vadd.f32 0.0, %v746
  %v748 = vpop.f32.mrf.mxu0
  %v749 = vadd.f32 0.0, %v748
  %750 = vmatmul.bf16.gmra.mxu0 %v666
  %v751 = vpop.f32.mrf.mxu0
  %v752 = vadd.f32 0.0, %v751
  %v753 = vpop.f32.mrf.mxu0
  %v754 = vadd.f32 0.0, %v753
  %755 = vmatmul.bf16.gmra.mxu0 %v667
  %v756 = vpop.f32.mrf.mxu0
  %v757 = vadd.f32 0.0, %v756
  %v758 = vpop.f32.mrf.mxu0
  %v759 = vadd.f32 0.0, %v758
  %760 = vmatmul.bf16.gmra.mxu0 %v668
  %v761 = vpop.f32.mrf.mxu0
  %v762 = vadd.f32 0.0, %v761
  %v763 = vpop.f32.mrf.mxu0
  %v764 = vadd.f32 0.0, %v763
  %765 = vmatmul.bf16.gmra.mxu0 %v669
  %v766 = vpop.f32.mrf.mxu0
  %v767 = vadd.f32 0.0, %v766
  %v768 = vpop.f32.mrf.mxu0
  %v769 = vadd.f32 0.0, %v768
  %770 = vmatmul.bf16.gmra.mxu0 %v670
  %v771 = vpop.f32.mrf.mxu0
  %v772 = vadd.f32 0.0, %v771
  %v773 = vpop.f32.mrf.mxu0
  %v774 = vadd.f32 0.0, %v773
  %775 = vdwg.mxu0
  %v776 = vadd.f32 %v333, %v737
  %v777 = vadd.f32 %v335, %v739
  %v778 = vadd.f32 %v338, %v742
  %v779 = vadd.f32 %v340, %v744
  %v780 = vadd.f32 %v343, %v747
  %v781 = vadd.f32 %v345, %v749
  %v782 = vadd.f32 %v348, %v752
  %v783 = vadd.f32 %v350, %v754
  %v784 = vadd.f32 %v353, %v757
  %v785 = vadd.f32 %v355, %v759
  %v786 = vadd.f32 %v358, %v762
  %v787 = vadd.f32 %v360, %v764
  %v788 = vadd.f32 %v363, %v767
  %v789 = vadd.f32 %v365, %v769
  %v790 = vadd.f32 %v368, %v772
  %v791 = vadd.f32 %v370, %v774
  %s792 = scalar_lea.vmem %s0, 288
  %v793 = vld [vmem:[%s792] sm:$0xf]
  %v794 = vld [vmem:[%s792 + $0x8] sm:$0xf]
  %v795 = vld [vmem:[%s792 + $0x10] sm:$0xf]
  %v796 = vld [vmem:[%s792 + $0x18] sm:$0xf]
  %v797 = vld [vmem:[%s792 + $0x20] sm:$0xf]
  %v798 = vld [vmem:[%s792 + $0x28] sm:$0xf]
  %v799 = vld [vmem:[%s792 + $0x30] sm:$0xf]
  %v800 = vld [vmem:[%s792 + $0x38] sm:$0xf]
  %v801 = vld [vmem:[%s792 + $0x48] sm:$0xf]
  %v802 = vld [vmem:[%s792 + $0x50] sm:$0xf]
  %v803 = vld [vmem:[%s792 + $0x58] sm:$0xf]
  %v804 = vld [vmem:[%s792 + $0x60] sm:$0xf]
  %v805 = vld [vmem:[%s792 + $0x68] sm:$0xf]
  %v806 = vld [vmem:[%s792 + $0x70] sm:$0xf]
  %v807 = vld [vmem:[%s792 + $0x78] sm:$0xf]
  %v808 = vld [vmem:[%s792 + $0x80] sm:$0xf]
  %v809 = vld [vmem:[%s1 + $0xc0] sm:$0xf]
  %v810 = vld [vmem:[%s1 + $0xc4] sm:$0xf]
  %v811 = vld [vmem:[%s1 + $0xc8] sm:$0xf]
  %v812 = vld [vmem:[%s1 + $0xcc] sm:$0xf]
  %v813 = vld [vmem:[%s1 + $0xd0] sm:$0xf]
  %v814 = vld [vmem:[%s1 + $0xd4] sm:$0xf]
  %v815 = vld [vmem:[%s1 + $0xd8] sm:$0xf]
  %v816 = vld [vmem:[%s1 + $0xdc] sm:$0xf]
  %v817 = vld [vmem:[%s1 + $0xe0] sm:$0xf]
  %v818 = vld [vmem:[%s1 + $0xe4] sm:$0xf]
  %v819 = vld [vmem:[%s1 + $0xe8] sm:$0xf]
  %v820 = vld [vmem:[%s1 + $0xec] sm:$0xf]
  %v821 = vld [vmem:[%s1 + $0xf0] sm:$0xf]
  %v822 = vld [vmem:[%s1 + $0xf4] sm:$0xf]
  %v823 = vld [vmem:[%s1 + $0xf8] sm:$0xf]
  %v824 = vld [vmem:[%s1 + $0xfc] sm:$0xf]
  %v841 = vunpack.c.l.b16 %v793
  %v842 = vunpack.c.l.b16 %v794
  %v843 = vunpack.c.l.b16 %v795
  %v844 = vunpack.c.l.b16 %v796
  %v845 = vunpack.c.l.b16 %v797
  %v846 = vunpack.c.l.b16 %v798
  %v847 = vunpack.c.l.b16 %v799
  %v848 = vunpack.c.l.b16 %v800
  %v849 = vunpack.c.l.b16 %v801
  %v850 = vunpack.c.l.b16 %v802
  %v851 = vunpack.c.l.b16 %v803
  %v852 = vunpack.c.l.b16 %v804
  %v853 = vunpack.c.l.b16 %v805
  %v854 = vunpack.c.l.b16 %v806
  %v855 = vunpack.c.l.b16 %v807
  %v856 = vunpack.c.l.b16 %v808
  %v857 = vpack.c.b16 %v842, %v841
  %v858 = vpack.c.b16 %v844, %v843
  %v859 = vpack.c.b16 %v846, %v845
  %v860 = vpack.c.b16 %v848, %v847
  %v861 = vpack.c.b16 %v850, %v849
  %v862 = vpack.c.b16 %v852, %v851
  %v863 = vpack.c.b16 %v854, %v853
  %v864 = vpack.c.b16 %v856, %v855
  %v889 = vunpack.c.l.b16 %v809
  %v890 = vunpack.c.l.b16 %v810
  %v891 = vunpack.c.l.b16 %v811
  %v892 = vunpack.c.l.b16 %v812
  %v893 = vunpack.c.l.b16 %v813
  %v894 = vunpack.c.l.b16 %v814
  %v895 = vunpack.c.l.b16 %v815
  %v896 = vunpack.c.l.b16 %v816
  %v897 = vunpack.c.l.b16 %v817
  %v898 = vunpack.c.l.b16 %v818
  %v899 = vunpack.c.l.b16 %v819
  %v900 = vunpack.c.l.b16 %v820
  %v901 = vunpack.c.l.b16 %v821
  %v902 = vunpack.c.l.b16 %v822
  %v903 = vunpack.c.l.b16 %v823
  %v904 = vunpack.c.l.b16 %v824
  %v905 = vpack.c.b16 %v890, %v889
  %v906 = vpack.c.b16 %v892, %v891
  %v907 = vpack.c.b16 %v894, %v893
  %v908 = vpack.c.b16 %v896, %v895
  %v909 = vpack.c.b16 %v898, %v897
  %v910 = vpack.c.b16 %v900, %v899
  %v911 = vpack.c.b16 %v902, %v901
  %v912 = vpack.c.b16 %v904, %v903
  %921 = vmatpush.bf16.msra.mxu0 %v912
  %922 = vmatpush.bf16.msra.mxu0 %v911
  %923 = vmatpush.bf16.msra.mxu0 %v910
  %924 = vmatpush.bf16.msra.mxu0 %v909
  %925 = vmatpush.bf16.msra.mxu0 %v908
  %926 = vmatpush.bf16.msra.mxu0 %v907
  %927 = vmatpush.bf16.msra.mxu0 %v906
  %928 = vmatpush.bf16.msra.mxu0 %v905
  %929 = vmatmul.bf16.gmra.mxu0 %v857
  %v930 = vpop.f32.mrf.mxu0
  %v931 = vadd.f32 0.0, %v930
  %v932 = vpop.f32.mrf.mxu0
  %v933 = vadd.f32 0.0, %v932
  %934 = vmatmul.bf16.gmra.mxu0 %v858
  %v935 = vpop.f32.mrf.mxu0
  %v936 = vadd.f32 0.0, %v935
  %v937 = vpop.f32.mrf.mxu0
  %v938 = vadd.f32 0.0, %v937
  %939 = vmatmul.bf16.gmra.mxu0 %v859
  %v940 = vpop.f32.mrf.mxu0
  %v941 = vadd.f32 0.0, %v940
  %v942 = vpop.f32.mrf.mxu0
  %v943 = vadd.f32 0.0, %v942
  %944 = vmatmul.bf16.gmra.mxu0 %v860
  %v945 = vpop.f32.mrf.mxu0
  %v946 = vadd.f32 0.0, %v945
  %v947 = vpop.f32.mrf.mxu0
  %v948 = vadd.f32 0.0, %v947
  %949 = vmatmul.bf16.gmra.mxu0 %v861
  %v950 = vpop.f32.mrf.mxu0
  %v951 = vadd.f32 0.0, %v950
  %v952 = vpop.f32.mrf.mxu0
  %v953 = vadd.f32 0.0, %v952
  %954 = vmatmul.bf16.gmra.mxu0 %v862
  %v955 = vpop.f32.mrf.mxu0
  %v956 = vadd.f32 0.0, %v955
  %v957 = vpop.f32.mrf.mxu0
  %v958 = vadd.f32 0.0, %v957
  %959 = vmatmul.bf16.gmra.mxu0 %v863
  %v960 = vpop.f32.mrf.mxu0
  %v961 = vadd.f32 0.0, %v960
  %v962 = vpop.f32.mrf.mxu0
  %v963 = vadd.f32 0.0, %v962
  %964 = vmatmul.bf16.gmra.mxu0 %v864
  %v965 = vpop.f32.mrf.mxu0
  %v966 = vadd.f32 0.0, %v965
  %v967 = vpop.f32.mrf.mxu0
  %v968 = vadd.f32 0.0, %v967
  %969 = vdwg.mxu0
  %v970 = vadd.f32 %v776, %v931
  %v971 = vadd.f32 %v777, %v933
  %v972 = vadd.f32 %v778, %v936
  %v973 = vadd.f32 %v779, %v938
  %v974 = vadd.f32 %v780, %v941
  %v975 = vadd.f32 %v781, %v943
  %v976 = vadd.f32 %v782, %v946
  %v977 = vadd.f32 %v783, %v948
  %v978 = vadd.f32 %v784, %v951
  %v979 = vadd.f32 %v785, %v953
  %v980 = vadd.f32 %v786, %v956
  %v981 = vadd.f32 %v787, %v958
  %v982 = vadd.f32 %v788, %v961
  %v983 = vadd.f32 %v789, %v963
  %v984 = vadd.f32 %v790, %v966
  %v985 = vadd.f32 %v791, %v968
  %s986 = scalar_lea.vmem %s0, 432
  %v987 = vld [vmem:[%s986] sm:$0xf]
  %v988 = vld [vmem:[%s986 + $0x8] sm:$0xf]
  %v989 = vld [vmem:[%s986 + $0x10] sm:$0xf]
  %v990 = vld [vmem:[%s986 + $0x18] sm:$0xf]
  %v991 = vld [vmem:[%s986 + $0x20] sm:$0xf]
  %v992 = vld [vmem:[%s986 + $0x28] sm:$0xf]
  %v993 = vld [vmem:[%s986 + $0x30] sm:$0xf]
  %v994 = vld [vmem:[%s986 + $0x38] sm:$0xf]
  %v995 = vld [vmem:[%s986 + $0x48] sm:$0xf]
  %v996 = vld [vmem:[%s986 + $0x50] sm:$0xf]
  %v997 = vld [vmem:[%s986 + $0x58] sm:$0xf]
  %v998 = vld [vmem:[%s986 + $0x60] sm:$0xf]
  %v999 = vld [vmem:[%s986 + $0x68] sm:$0xf]
  %v1000 = vld [vmem:[%s986 + $0x70] sm:$0xf]
  %v1001 = vld [vmem:[%s986 + $0x78] sm:$0xf]
  %v1002 = vld [vmem:[%s986 + $0x80] sm:$0xf]
  %v1003 = vld [vmem:[%s1 + $0x100] sm:$0xf]
  %v1004 = vld [vmem:[%s1 + $0x104] sm:$0xf]
  %v1005 = vld [vmem:[%s1 + $0x108] sm:$0xf]
  %v1006 = vld [vmem:[%s1 + $0x10c] sm:$0xf]
  %v1007 = vld [vmem:[%s1 + $0x110] sm:$0xf]
  %v1008 = vld [vmem:[%s1 + $0x114] sm:$0xf]
  %v1009 = vld [vmem:[%s1 + $0x118] sm:$0xf]
  %v1010 = vld [vmem:[%s1 + $0x11c] sm:$0xf]
  %v1011 = vld [vmem:[%s1 + $0x120] sm:$0xf]
  %v1012 = vld [vmem:[%s1 + $0x124] sm:$0xf]
  %v1013 = vld [vmem:[%s1 + $0x128] sm:$0xf]
  %v1014 = vld [vmem:[%s1 + $0x12c] sm:$0xf]
  %v1015 = vld [vmem:[%s1 + $0x130] sm:$0xf]
  %v1016 = vld [vmem:[%s1 + $0x134] sm:$0xf]
  %v1017 = vld [vmem:[%s1 + $0x138] sm:$0xf]
  %v1018 = vld [vmem:[%s1 + $0x13c] sm:$0xf]
  %v1035 = vunpack.c.l.b16 %v987
  %v1036 = vunpack.c.l.b16 %v988
  %v1037 = vunpack.c.l.b16 %v989
  %v1038 = vunpack.c.l.b16 %v990
  %v1039 = vunpack.c.l.b16 %v991
  %v1040 = vunpack.c.l.b16 %v992
  %v1041 = vunpack.c.l.b16 %v993
  %v1042 = vunpack.c.l.b16 %v994
  %v1043 = vunpack.c.l.b16 %v995
  %v1044 = vunpack.c.l.b16 %v996
  %v1045 = vunpack.c.l.b16 %v997
  %v1046 = vunpack.c.l.b16 %v998
  %v1047 = vunpack.c.l.b16 %v999
  %v1048 = vunpack.c.l.b16 %v1000
  %v1049 = vunpack.c.l.b16 %v1001
  %v1050 = vunpack.c.l.b16 %v1002
  %v1051 = vpack.c.b16 %v1036, %v1035
  %v1052 = vpack.c.b16 %v1038, %v1037
  %v1053 = vpack.c.b16 %v1040, %v1039
  %v1054 = vpack.c.b16 %v1042, %v1041
  %v1055 = vpack.c.b16 %v1044, %v1043
  %v1056 = vpack.c.b16 %v1046, %v1045
  %v1057 = vpack.c.b16 %v1048, %v1047
  %v1058 = vpack.c.b16 %v1050, %v1049
  %v1083 = vunpack.c.l.b16 %v1003
  %v1084 = vunpack.c.l.b16 %v1004
  %v1085 = vunpack.c.l.b16 %v1005
  %v1086 = vunpack.c.l.b16 %v1006
  %v1087 = vunpack.c.l.b16 %v1007
  %v1088 = vunpack.c.l.b16 %v1008
  %v1089 = vunpack.c.l.b16 %v1009
  %v1090 = vunpack.c.l.b16 %v1010
  %v1091 = vunpack.c.l.b16 %v1011
  %v1092 = vunpack.c.l.b16 %v1012
  %v1093 = vunpack.c.l.b16 %v1013
  %v1094 = vunpack.c.l.b16 %v1014
  %v1095 = vunpack.c.l.b16 %v1015
  %v1096 = vunpack.c.l.b16 %v1016
  %v1097 = vunpack.c.l.b16 %v1017
  %v1098 = vunpack.c.l.b16 %v1018
  %v1099 = vpack.c.b16 %v1084, %v1083
  %v1100 = vpack.c.b16 %v1086, %v1085
  %v1101 = vpack.c.b16 %v1088, %v1087
  %v1102 = vpack.c.b16 %v1090, %v1089
  %v1103 = vpack.c.b16 %v1092, %v1091
  %v1104 = vpack.c.b16 %v1094, %v1093
  %v1105 = vpack.c.b16 %v1096, %v1095
  %v1106 = vpack.c.b16 %v1098, %v1097
  %1115 = vmatpush.bf16.msra.mxu0 %v1106
  %1116 = vmatpush.bf16.msra.mxu0 %v1105
  %1117 = vmatpush.bf16.msra.mxu0 %v1104
  %1118 = vmatpush.bf16.msra.mxu0 %v1103
  %1119 = vmatpush.bf16.msra.mxu0 %v1102
  %1120 = vmatpush.bf16.msra.mxu0 %v1101
  %1121 = vmatpush.bf16.msra.mxu0 %v1100
  %1122 = vmatpush.bf16.msra.mxu0 %v1099
  %1123 = vmatmul.bf16.gmra.mxu0 %v1051
  %v1124 = vpop.f32.mrf.mxu0
  %v1125 = vadd.f32 0.0, %v1124
  %v1126 = vpop.f32.mrf.mxu0
  %v1127 = vadd.f32 0.0, %v1126
  %1128 = vmatmul.bf16.gmra.mxu0 %v1052
  %v1129 = vpop.f32.mrf.mxu0
  %v1130 = vadd.f32 0.0, %v1129
  %v1131 = vpop.f32.mrf.mxu0
  %v1132 = vadd.f32 0.0, %v1131
  %1133 = vmatmul.bf16.gmra.mxu0 %v1053
  %v1134 = vpop.f32.mrf.mxu0
  %v1135 = vadd.f32 0.0, %v1134
  %v1136 = vpop.f32.mrf.mxu0
  %v1137 = vadd.f32 0.0, %v1136
  %1138 = vmatmul.bf16.gmra.mxu0 %v1054
  %v1139 = vpop.f32.mrf.mxu0
  %v1140 = vadd.f32 0.0, %v1139
  %v1141 = vpop.f32.mrf.mxu0
  %v1142 = vadd.f32 0.0, %v1141
  %1143 = vmatmul.bf16.gmra.mxu0 %v1055
  %v1144 = vpop.f32.mrf.mxu0
  %v1145 = vadd.f32 0.0, %v1144
  %v1146 = vpop.f32.mrf.mxu0
  %v1147 = vadd.f32 0.0, %v1146
  %1148 = vmatmul.bf16.gmra.mxu0 %v1056
  %v1149 = vpop.f32.mrf.mxu0
  %v1150 = vadd.f32 0.0, %v1149
  %v1151 = vpop.f32.mrf.mxu0
  %v1152 = vadd.f32 0.0, %v1151
  %1153 = vmatmul.bf16.gmra.mxu0 %v1057
  %v1154 = vpop.f32.mrf.mxu0
  %v1155 = vadd.f32 0.0, %v1154
  %v1156 = vpop.f32.mrf.mxu0
  %v1157 = vadd.f32 0.0, %v1156
  %1158 = vmatmul.bf16.gmra.mxu0 %v1058
  %v1159 = vpop.f32.mrf.mxu0
  %v1160 = vadd.f32 0.0, %v1159
  %v1161 = vpop.f32.mrf.mxu0
  %v1162 = vadd.f32 0.0, %v1161
  %1163 = vdwg.mxu0
  %v1164 = vadd.f32 %v970, %v1125
  %v1165 = vadd.f32 %v971, %v1127
  %v1166 = vadd.f32 %v972, %v1130
  %v1167 = vadd.f32 %v973, %v1132
  %v1168 = vadd.f32 %v974, %v1135
  %v1169 = vadd.f32 %v975, %v1137
  %v1170 = vadd.f32 %v976, %v1140
  %v1171 = vadd.f32 %v977, %v1142
  %v1172 = vadd.f32 %v978, %v1145
  %v1173 = vadd.f32 %v979, %v1147
  %v1174 = vadd.f32 %v980, %v1150
  %v1175 = vadd.f32 %v981, %v1152
  %v1176 = vadd.f32 %v982, %v1155
  %v1177 = vadd.f32 %v983, %v1157
  %v1178 = vadd.f32 %v984, %v1160
  %v1179 = vadd.f32 %v985, %v1162
  %v1180 = vld [vmem:[%s792] sm:$0xf]
  %v1181 = vld [vmem:[%s792 + $0x4] sm:$0x1]
  %v1182 = vld [vmem:[%s792 + $0x8] sm:$0xf]
  %v1183 = vld [vmem:[%s792 + $0xc] sm:$0x1]
  %v1184 = vld [vmem:[%s792 + $0x10] sm:$0xf]
  %v1185 = vld [vmem:[%s792 + $0x14] sm:$0x1]
  %v1186 = vld [vmem:[%s792 + $0x18] sm:$0xf]
  %v1187 = vld [vmem:[%s792 + $0x1c] sm:$0x1]
  %v1188 = vld [vmem:[%s792 + $0x20] sm:$0xf]
  %v1189 = vld [vmem:[%s792 + $0x24] sm:$0x1]
  %v1190 = vld [vmem:[%s792 + $0x28] sm:$0xf]
  %v1191 = vld [vmem:[%s792 + $0x2c] sm:$0x1]
  %v1192 = vld [vmem:[%s792 + $0x30] sm:$0xf]
  %v1193 = vld [vmem:[%s792 + $0x34] sm:$0x1]
  %v1194 = vld [vmem:[%s792 + $0x38] sm:$0xf]
  %v1195 = vld [vmem:[%s792 + $0x3c] sm:$0x1]
  %v1196 = vld [vmem:[%s792 + $0x48] sm:$0xf]
  %v1197 = vld [vmem:[%s792 + $0x4c] sm:$0x1]
  %v1198 = vld [vmem:[%s792 + $0x50] sm:$0xf]
  %v1199 = vld [vmem:[%s792 + $0x54] sm:$0x1]
  %v1200 = vld [vmem:[%s792 + $0x58] sm:$0xf]
  %v1201 = vld [vmem:[%s792 + $0x5c] sm:$0x1]
  %v1202 = vld [vmem:[%s792 + $0x60] sm:$0xf]
  %v1203 = vld [vmem:[%s792 + $0x64] sm:$0x1]
  %v1204 = vld [vmem:[%s792 + $0x68] sm:$0xf]
  %v1205 = vld [vmem:[%s792 + $0x6c] sm:$0x1]
  %v1206 = vld [vmem:[%s792 + $0x70] sm:$0xf]
  %v1207 = vld [vmem:[%s792 + $0x74] sm:$0x1]
  %v1208 = vld [vmem:[%s792 + $0x78] sm:$0xf]
  %v1209 = vld [vmem:[%s792 + $0x7c] sm:$0x1]
  %v1210 = vld [vmem:[%s792 + $0x80] sm:$0xf]
  %v1211 = vld [vmem:[%s792 + $0x84] sm:$0x1]
  %v1213 = vshrl.u32 %v1180, 16
  %v1215 = vrot.slane %v1213, 4
  %v1216 = vshll.u32 %v1180, 16
  %v1218 = vrot.slane %v1216, 5
  %v1219 = vor.u32 %v1215, %v1218
  %v1220 = vrot.slane %v1219, 4
  %v1222 = vshll.u32 %v1181, 16
  %v1224 = vrot.slane %v1222, 5
  %v1225 = vsel %vm406, %v1220, %v1224
  %v1227 = vshrl.u32 %v1182, 16
  %v1229 = vrot.slane %v1227, 4
  %v1230 = vshll.u32 %v1182, 16
  %v1232 = vrot.slane %v1230, 5
  %v1233 = vor.u32 %v1229, %v1232
  %v1234 = vrot.slane %v1233, 4
  %v1236 = vshll.u32 %v1183, 16
  %v1238 = vrot.slane %v1236, 5
  %v1239 = vsel %vm406, %v1234, %v1238
  %v1241 = vshrl.u32 %v1184, 16
  %v1243 = vrot.slane %v1241, 4
  %v1244 = vshll.u32 %v1184, 16
  %v1246 = vrot.slane %v1244, 5
  %v1247 = vor.u32 %v1243, %v1246
  %v1248 = vrot.slane %v1247, 4
  %v1250 = vshll.u32 %v1185, 16
  %v1252 = vrot.slane %v1250, 5
  %v1253 = vsel %vm406, %v1248, %v1252
  %v1255 = vshrl.u32 %v1186, 16
  %v1257 = vrot.slane %v1255, 4
  %v1258 = vshll.u32 %v1186, 16
  %v1260 = vrot.slane %v1258, 5
  %v1261 = vor.u32 %v1257, %v1260
  %v1262 = vrot.slane %v1261, 4
  %v1264 = vshll.u32 %v1187, 16
  %v1266 = vrot.slane %v1264, 5
  %v1267 = vsel %vm406, %v1262, %v1266
  %v1269 = vshrl.u32 %v1188, 16
  %v1271 = vrot.slane %v1269, 4
  %v1272 = vshll.u32 %v1188, 16
  %v1274 = vrot.slane %v1272, 5
  %v1275 = vor.u32 %v1271, %v1274
  %v1276 = vrot.slane %v1275, 4
  %v1278 = vshll.u32 %v1189, 16
  %v1280 = vrot.slane %v1278, 5
  %v1281 = vsel %vm406, %v1276, %v1280
  %v1283 = vshrl.u32 %v1190, 16
  %v1285 = vrot.slane %v1283, 4
  %v1286 = vshll.u32 %v1190, 16
  %v1288 = vrot.slane %v1286, 5
  %v1289 = vor.u32 %v1285, %v1288
  %v1290 = vrot.slane %v1289, 4
  %v1292 = vshll.u32 %v1191, 16
  %v1294 = vrot.slane %v1292, 5
  %v1295 = vsel %vm406, %v1290, %v1294
  %v1297 = vshrl.u32 %v1192, 16
  %v1299 = vrot.slane %v1297, 4
  %v1300 = vshll.u32 %v1192, 16
  %v1302 = vrot.slane %v1300, 5
  %v1303 = vor.u32 %v1299, %v1302
  %v1304 = vrot.slane %v1303, 4
  %v1306 = vshll.u32 %v1193, 16
  %v1308 = vrot.slane %v1306, 5
  %v1309 = vsel %vm406, %v1304, %v1308
  %v1311 = vshrl.u32 %v1194, 16
  %v1313 = vrot.slane %v1311, 4
  %v1314 = vshll.u32 %v1194, 16
  %v1316 = vrot.slane %v1314, 5
  %v1317 = vor.u32 %v1313, %v1316
  %v1318 = vrot.slane %v1317, 4
  %v1320 = vshll.u32 %v1195, 16
  %v1322 = vrot.slane %v1320, 5
  %v1323 = vsel %vm406, %v1318, %v1322
  %v1325 = vshrl.u32 %v1196, 16
  %v1327 = vrot.slane %v1325, 4
  %v1328 = vshll.u32 %v1196, 16
  %v1330 = vrot.slane %v1328, 5
  %v1331 = vor.u32 %v1327, %v1330
  %v1332 = vrot.slane %v1331, 4
  %v1334 = vshll.u32 %v1197, 16
  %v1336 = vrot.slane %v1334, 5
  %v1337 = vsel %vm406, %v1332, %v1336
  %v1339 = vshrl.u32 %v1198, 16
  %v1341 = vrot.slane %v1339, 4
  %v1342 = vshll.u32 %v1198, 16
  %v1344 = vrot.slane %v1342, 5
  %v1345 = vor.u32 %v1341, %v1344
  %v1346 = vrot.slane %v1345, 4
  %v1348 = vshll.u32 %v1199, 16
  %v1350 = vrot.slane %v1348, 5
  %v1351 = vsel %vm406, %v1346, %v1350
  %v1353 = vshrl.u32 %v1200, 16
  %v1355 = vrot.slane %v1353, 4
  %v1356 = vshll.u32 %v1200, 16
  %v1358 = vrot.slane %v1356, 5
  %v1359 = vor.u32 %v1355, %v1358
  %v1360 = vrot.slane %v1359, 4
  %v1362 = vshll.u32 %v1201, 16
  %v1364 = vrot.slane %v1362, 5
  %v1365 = vsel %vm406, %v1360, %v1364
  %v1367 = vshrl.u32 %v1202, 16
  %v1369 = vrot.slane %v1367, 4
  %v1370 = vshll.u32 %v1202, 16
  %v1372 = vrot.slane %v1370, 5
  %v1373 = vor.u32 %v1369, %v1372
  %v1374 = vrot.slane %v1373, 4
  %v1376 = vshll.u32 %v1203, 16
  %v1378 = vrot.slane %v1376, 5
  %v1379 = vsel %vm406, %v1374, %v1378
  %v1381 = vshrl.u32 %v1204, 16
  %v1383 = vrot.slane %v1381, 4
  %v1384 = vshll.u32 %v1204, 16
  %v1386 = vrot.slane %v1384, 5
  %v1387 = vor.u32 %v1383, %v1386
  %v1388 = vrot.slane %v1387, 4
  %v1390 = vshll.u32 %v1205, 16
  %v1392 = vrot.slane %v1390, 5
  %v1393 = vsel %vm406, %v1388, %v1392
  %v1395 = vshrl.u32 %v1206, 16
  %v1397 = vrot.slane %v1395, 4
  %v1398 = vshll.u32 %v1206, 16
  %v1400 = vrot.slane %v1398, 5
  %v1401 = vor.u32 %v1397, %v1400
  %v1402 = vrot.slane %v1401, 4
  %v1404 = vshll.u32 %v1207, 16
  %v1406 = vrot.slane %v1404, 5
  %v1407 = vsel %vm406, %v1402, %v1406
  %v1409 = vshrl.u32 %v1208, 16
  %v1411 = vrot.slane %v1409, 4
  %v1412 = vshll.u32 %v1208, 16
  %v1414 = vrot.slane %v1412, 5
  %v1415 = vor.u32 %v1411, %v1414
  %v1416 = vrot.slane %v1415, 4
  %v1418 = vshll.u32 %v1209, 16
  %v1420 = vrot.slane %v1418, 5
  %v1421 = vsel %vm406, %v1416, %v1420
  %v1423 = vshrl.u32 %v1210, 16
  %v1425 = vrot.slane %v1423, 4
  %v1426 = vshll.u32 %v1210, 16
  %v1428 = vrot.slane %v1426, 5
  %v1429 = vor.u32 %v1425, %v1428
  %v1430 = vrot.slane %v1429, 4
  %v1432 = vshll.u32 %v1211, 16
  %v1434 = vrot.slane %v1432, 5
  %v1435 = vsel %vm406, %v1430, %v1434
  %v1436 = vld [vmem:[%s1 + $0x140] sm:$0xf]
  %v1437 = vld [vmem:[%s1 + $0x144] sm:$0xf]
  %v1438 = vld [vmem:[%s1 + $0x148] sm:$0xf]
  %v1439 = vld [vmem:[%s1 + $0x14c] sm:$0xf]
  %v1440 = vld [vmem:[%s1 + $0x150] sm:$0xf]
  %v1441 = vld [vmem:[%s1 + $0x154] sm:$0xf]
  %v1442 = vld [vmem:[%s1 + $0x158] sm:$0xf]
  %v1443 = vld [vmem:[%s1 + $0x15c] sm:$0xf]
  %v1444 = vld [vmem:[%s1 + $0x160] sm:$0xf]
  %v1445 = vld [vmem:[%s1 + $0x164] sm:$0xf]
  %v1446 = vld [vmem:[%s1 + $0x168] sm:$0xf]
  %v1447 = vld [vmem:[%s1 + $0x16c] sm:$0xf]
  %v1448 = vld [vmem:[%s1 + $0x170] sm:$0xf]
  %v1449 = vld [vmem:[%s1 + $0x174] sm:$0xf]
  %v1450 = vld [vmem:[%s1 + $0x178] sm:$0xf]
  %v1451 = vld [vmem:[%s1 + $0x17c] sm:$0xf]
  %v1452 = vunpack.c.l.b16 %v1225
  %v1453 = vunpack.c.l.b16 %v1239
  %v1454 = vunpack.c.l.b16 %v1253
  %v1455 = vunpack.c.l.b16 %v1267
  %v1456 = vunpack.c.l.b16 %v1281
  %v1457 = vunpack.c.l.b16 %v1295
  %v1458 = vunpack.c.l.b16 %v1309
  %v1459 = vunpack.c.l.b16 %v1323
  %v1460 = vunpack.c.l.b16 %v1337
  %v1461 = vunpack.c.l.b16 %v1351
  %v1462 = vunpack.c.l.b16 %v1365
  %v1463 = vunpack.c.l.b16 %v1379
  %v1464 = vunpack.c.l.b16 %v1393
  %v1465 = vunpack.c.l.b16 %v1407
  %v1466 = vunpack.c.l.b16 %v1421
  %v1467 = vunpack.c.l.b16 %v1435
  %v1468 = vpack.c.b16 %v1453, %v1452
  %v1469 = vpack.c.b16 %v1455, %v1454
  %v1470 = vpack.c.b16 %v1457, %v1456
  %v1471 = vpack.c.b16 %v1459, %v1458
  %v1472 = vpack.c.b16 %v1461, %v1460
  %v1473 = vpack.c.b16 %v1463, %v1462
  %v1474 = vpack.c.b16 %v1465, %v1464
  %v1475 = vpack.c.b16 %v1467, %v1466
  %v1500 = vunpack.c.l.b16 %v1436
  %v1501 = vunpack.c.l.b16 %v1437
  %v1502 = vunpack.c.l.b16 %v1438
  %v1503 = vunpack.c.l.b16 %v1439
  %v1504 = vunpack.c.l.b16 %v1440
  %v1505 = vunpack.c.l.b16 %v1441
  %v1506 = vunpack.c.l.b16 %v1442
  %v1507 = vunpack.c.l.b16 %v1443
  %v1508 = vunpack.c.l.b16 %v1444
  %v1509 = vunpack.c.l.b16 %v1445
  %v1510 = vunpack.c.l.b16 %v1446
  %v1511 = vunpack.c.l.b16 %v1447
  %v1512 = vunpack.c.l.b16 %v1448
  %v1513 = vunpack.c.l.b16 %v1449
  %v1514 = vunpack.c.l.b16 %v1450
  %v1515 = vunpack.c.l.b16 %v1451
  %v1516 = vpack.c.b16 %v1501, %v1500
  %v1517 = vpack.c.b16 %v1503, %v1502
  %v1518 = vpack.c.b16 %v1505, %v1504
  %v1519 = vpack.c.b16 %v1507, %v1506
  %v1520 = vpack.c.b16 %v1509, %v1508
  %v1521 = vpack.c.b16 %v1511, %v1510
  %v1522 = vpack.c.b16 %v1513, %v1512
  %v1523 = vpack.c.b16 %v1515, %v1514
  %1532 = vmatpush.bf16.msra.mxu0 %v1523
  %1533 = vmatpush.bf16.msra.mxu0 %v1522
  %1534 = vmatpush.bf16.msra.mxu0 %v1521
  %1535 = vmatpush.bf16.msra.mxu0 %v1520
  %1536 = vmatpush.bf16.msra.mxu0 %v1519
  %1537 = vmatpush.bf16.msra.mxu0 %v1518
  %1538 = vmatpush.bf16.msra.mxu0 %v1517
  %1539 = vmatpush.bf16.msra.mxu0 %v1516
  %1540 = vmatmul.bf16.gmra.mxu0 %v1468
  %v1541 = vpop.f32.mrf.mxu0
  %v1542 = vadd.f32 0.0, %v1541
  %v1543 = vpop.f32.mrf.mxu0
  %v1544 = vadd.f32 0.0, %v1543
  %1545 = vmatmul.bf16.gmra.mxu0 %v1469
  %v1546 = vpop.f32.mrf.mxu0
  %v1547 = vadd.f32 0.0, %v1546
  %v1548 = vpop.f32.mrf.mxu0
  %v1549 = vadd.f32 0.0, %v1548
  %1550 = vmatmul.bf16.gmra.mxu0 %v1470
  %v1551 = vpop.f32.mrf.mxu0
  %v1552 = vadd.f32 0.0, %v1551
  %v1553 = vpop.f32.mrf.mxu0
  %v1554 = vadd.f32 0.0, %v1553
  %1555 = vmatmul.bf16.gmra.mxu0 %v1471
  %v1556 = vpop.f32.mrf.mxu0
  %v1557 = vadd.f32 0.0, %v1556
  %v1558 = vpop.f32.mrf.mxu0
  %v1559 = vadd.f32 0.0, %v1558
  %1560 = vmatmul.bf16.gmra.mxu0 %v1472
  %v1561 = vpop.f32.mrf.mxu0
  %v1562 = vadd.f32 0.0, %v1561
  %v1563 = vpop.f32.mrf.mxu0
  %v1564 = vadd.f32 0.0, %v1563
  %1565 = vmatmul.bf16.gmra.mxu0 %v1473
  %v1566 = vpop.f32.mrf.mxu0
  %v1567 = vadd.f32 0.0, %v1566
  %v1568 = vpop.f32.mrf.mxu0
  %v1569 = vadd.f32 0.0, %v1568
  %1570 = vmatmul.bf16.gmra.mxu0 %v1474
  %v1571 = vpop.f32.mrf.mxu0
  %v1572 = vadd.f32 0.0, %v1571
  %v1573 = vpop.f32.mrf.mxu0
  %v1574 = vadd.f32 0.0, %v1573
  %1575 = vmatmul.bf16.gmra.mxu0 %v1475
  %v1576 = vpop.f32.mrf.mxu0
  %v1577 = vadd.f32 0.0, %v1576
  %v1578 = vpop.f32.mrf.mxu0
  %v1579 = vadd.f32 0.0, %v1578
  %1580 = vdwg.mxu0
  %v1581 = vadd.f32 %v1164, %v1542
  %v1582 = vadd.f32 %v1165, %v1544
  %v1583 = vadd.f32 %v1166, %v1547
  %v1584 = vadd.f32 %v1167, %v1549
  %v1585 = vadd.f32 %v1168, %v1552
  %v1586 = vadd.f32 %v1169, %v1554
  %v1587 = vadd.f32 %v1170, %v1557
  %v1588 = vadd.f32 %v1171, %v1559
  %v1589 = vadd.f32 %v1172, %v1562
  %v1590 = vadd.f32 %v1173, %v1564
  %v1591 = vadd.f32 %v1174, %v1567
  %v1592 = vadd.f32 %v1175, %v1569
  %v1593 = vadd.f32 %v1176, %v1572
  %v1594 = vadd.f32 %v1177, %v1574
  %v1595 = vadd.f32 %v1178, %v1577
  %v1596 = vadd.f32 %v1179, %v1579
  %s1597 = scalar_lea.vmem %s0, 8
  %v1598 = vld [vmem:[%s1597] sm:$0xf]
  %v1599 = vld [vmem:[%s1597 + $0x8] sm:$0xf]
  %v1600 = vld [vmem:[%s1597 + $0x10] sm:$0xf]
  %v1601 = vld [vmem:[%s1597 + $0x18] sm:$0xf]
  %v1602 = vld [vmem:[%s1597 + $0x20] sm:$0xf]
  %v1603 = vld [vmem:[%s1597 + $0x28] sm:$0xf]
  %v1604 = vld [vmem:[%s1597 + $0x30] sm:$0xf]
  %v1605 = vld [vmem:[%s1597 + $0x38] sm:$0xf]
  %v1606 = vld [vmem:[%s1597 + $0x48] sm:$0xf]
  %v1607 = vld [vmem:[%s1597 + $0x50] sm:$0xf]
  %v1608 = vld [vmem:[%s1597 + $0x58] sm:$0xf]
  %v1609 = vld [vmem:[%s1597 + $0x60] sm:$0xf]
  %v1610 = vld [vmem:[%s1597 + $0x68] sm:$0xf]
  %v1611 = vld [vmem:[%s1597 + $0x70] sm:$0xf]
  %v1612 = vld [vmem:[%s1597 + $0x78] sm:$0xf]
  %v1613 = vld [vmem:[%s1597 + $0x80] sm:$0xf]
  %v1614 = vld [vmem:[%s1 + $0x180] sm:$0xf]
  %v1615 = vld [vmem:[%s1 + $0x184] sm:$0xf]
  %v1616 = vld [vmem:[%s1 + $0x188] sm:$0xf]
  %v1617 = vld [vmem:[%s1 + $0x18c] sm:$0xf]
  %v1618 = vld [vmem:[%s1 + $0x190] sm:$0xf]
  %v1619 = vld [vmem:[%s1 + $0x194] sm:$0xf]
  %v1620 = vld [vmem:[%s1 + $0x198] sm:$0xf]
  %v1621 = vld [vmem:[%s1 + $0x19c] sm:$0xf]
  %v1622 = vld [vmem:[%s1 + $0x1a0] sm:$0xf]
  %v1623 = vld [vmem:[%s1 + $0x1a4] sm:$0xf]
  %v1624 = vld [vmem:[%s1 + $0x1a8] sm:$0xf]
  %v1625 = vld [vmem:[%s1 + $0x1ac] sm:$0xf]
  %v1626 = vld [vmem:[%s1 + $0x1b0] sm:$0xf]
  %v1627 = vld [vmem:[%s1 + $0x1b4] sm:$0xf]
  %v1628 = vld [vmem:[%s1 + $0x1b8] sm:$0xf]
  %v1629 = vld [vmem:[%s1 + $0x1bc] sm:$0xf]
  %v1646 = vunpack.c.l.b16 %v1598
  %v1647 = vunpack.c.l.b16 %v1599
  %v1648 = vunpack.c.l.b16 %v1600
  %v1649 = vunpack.c.l.b16 %v1601
  %v1650 = vunpack.c.l.b16 %v1602
  %v1651 = vunpack.c.l.b16 %v1603
  %v1652 = vunpack.c.l.b16 %v1604
  %v1653 = vunpack.c.l.b16 %v1605
  %v1654 = vunpack.c.l.b16 %v1606
  %v1655 = vunpack.c.l.b16 %v1607
  %v1656 = vunpack.c.l.b16 %v1608
  %v1657 = vunpack.c.l.b16 %v1609
  %v1658 = vunpack.c.l.b16 %v1610
  %v1659 = vunpack.c.l.b16 %v1611
  %v1660 = vunpack.c.l.b16 %v1612
  %v1661 = vunpack.c.l.b16 %v1613
  %v1662 = vpack.c.b16 %v1647, %v1646
  %v1663 = vpack.c.b16 %v1649, %v1648
  %v1664 = vpack.c.b16 %v1651, %v1650
  %v1665 = vpack.c.b16 %v1653, %v1652
  %v1666 = vpack.c.b16 %v1655, %v1654
  %v1667 = vpack.c.b16 %v1657, %v1656
  %v1668 = vpack.c.b16 %v1659, %v1658
  %v1669 = vpack.c.b16 %v1661, %v1660
  %v1694 = vunpack.c.l.b16 %v1614
  %v1695 = vunpack.c.l.b16 %v1615
  %v1696 = vunpack.c.l.b16 %v1616
  %v1697 = vunpack.c.l.b16 %v1617
  %v1698 = vunpack.c.l.b16 %v1618
  %v1699 = vunpack.c.l.b16 %v1619
  %v1700 = vunpack.c.l.b16 %v1620
  %v1701 = vunpack.c.l.b16 %v1621
  %v1702 = vunpack.c.l.b16 %v1622
  %v1703 = vunpack.c.l.b16 %v1623
  %v1704 = vunpack.c.l.b16 %v1624
  %v1705 = vunpack.c.l.b16 %v1625
  %v1706 = vunpack.c.l.b16 %v1626
  %v1707 = vunpack.c.l.b16 %v1627
  %v1708 = vunpack.c.l.b16 %v1628
  %v1709 = vunpack.c.l.b16 %v1629
  %v1710 = vpack.c.b16 %v1695, %v1694
  %v1711 = vpack.c.b16 %v1697, %v1696
  %v1712 = vpack.c.b16 %v1699, %v1698
  %v1713 = vpack.c.b16 %v1701, %v1700
  %v1714 = vpack.c.b16 %v1703, %v1702
  %v1715 = vpack.c.b16 %v1705, %v1704
  %v1716 = vpack.c.b16 %v1707, %v1706
  %v1717 = vpack.c.b16 %v1709, %v1708
  %1726 = vmatpush.bf16.msra.mxu0 %v1717
  %1727 = vmatpush.bf16.msra.mxu0 %v1716
  %1728 = vmatpush.bf16.msra.mxu0 %v1715
  %1729 = vmatpush.bf16.msra.mxu0 %v1714
  %1730 = vmatpush.bf16.msra.mxu0 %v1713
  %1731 = vmatpush.bf16.msra.mxu0 %v1712
  %1732 = vmatpush.bf16.msra.mxu0 %v1711
  %1733 = vmatpush.bf16.msra.mxu0 %v1710
  %1734 = vmatmul.bf16.gmra.mxu0 %v1662
  %v1735 = vpop.f32.mrf.mxu0
  %v1736 = vadd.f32 0.0, %v1735
  %v1737 = vpop.f32.mrf.mxu0
  %v1738 = vadd.f32 0.0, %v1737
  %1739 = vmatmul.bf16.gmra.mxu0 %v1663
  %v1740 = vpop.f32.mrf.mxu0
  %v1741 = vadd.f32 0.0, %v1740
  %v1742 = vpop.f32.mrf.mxu0
  %v1743 = vadd.f32 0.0, %v1742
  %1744 = vmatmul.bf16.gmra.mxu0 %v1664
  %v1745 = vpop.f32.mrf.mxu0
  %v1746 = vadd.f32 0.0, %v1745
  %v1747 = vpop.f32.mrf.mxu0
  %v1748 = vadd.f32 0.0, %v1747
  %1749 = vmatmul.bf16.gmra.mxu0 %v1665
  %v1750 = vpop.f32.mrf.mxu0
  %v1751 = vadd.f32 0.0, %v1750
  %v1752 = vpop.f32.mrf.mxu0
  %v1753 = vadd.f32 0.0, %v1752
  %1754 = vmatmul.bf16.gmra.mxu0 %v1666
  %v1755 = vpop.f32.mrf.mxu0
  %v1756 = vadd.f32 0.0, %v1755
  %v1757 = vpop.f32.mrf.mxu0
  %v1758 = vadd.f32 0.0, %v1757
  %1759 = vmatmul.bf16.gmra.mxu0 %v1667
  %v1760 = vpop.f32.mrf.mxu0
  %v1761 = vadd.f32 0.0, %v1760
  %v1762 = vpop.f32.mrf.mxu0
  %v1763 = vadd.f32 0.0, %v1762
  %1764 = vmatmul.bf16.gmra.mxu0 %v1668
  %v1765 = vpop.f32.mrf.mxu0
  %v1766 = vadd.f32 0.0, %v1765
  %v1767 = vpop.f32.mrf.mxu0
  %v1768 = vadd.f32 0.0, %v1767
  %1769 = vmatmul.bf16.gmra.mxu0 %v1669
  %v1770 = vpop.f32.mrf.mxu0
  %v1771 = vadd.f32 0.0, %v1770
  %v1772 = vpop.f32.mrf.mxu0
  %v1773 = vadd.f32 0.0, %v1772
  %1774 = vdwg.mxu0
  %v1775 = vadd.f32 %v1581, %v1736
  %v1776 = vadd.f32 %v1582, %v1738
  %v1777 = vadd.f32 %v1583, %v1741
  %v1778 = vadd.f32 %v1584, %v1743
  %v1779 = vadd.f32 %v1585, %v1746
  %v1780 = vadd.f32 %v1586, %v1748
  %v1781 = vadd.f32 %v1587, %v1751
  %v1782 = vadd.f32 %v1588, %v1753
  %v1783 = vadd.f32 %v1589, %v1756
  %v1784 = vadd.f32 %v1590, %v1758
  %v1785 = vadd.f32 %v1591, %v1761
  %v1786 = vadd.f32 %v1592, %v1763
  %v1787 = vadd.f32 %v1593, %v1766
  %v1788 = vadd.f32 %v1594, %v1768
  %v1789 = vadd.f32 %v1595, %v1771
  %v1790 = vadd.f32 %v1596, %v1773
  %s1791 = scalar_lea.vmem %s0, 152
  %v1792 = vld [vmem:[%s1791] sm:$0xf]
  %v1793 = vld [vmem:[%s1791 + $0x8] sm:$0xf]
  %v1794 = vld [vmem:[%s1791 + $0x10] sm:$0xf]
  %v1795 = vld [vmem:[%s1791 + $0x18] sm:$0xf]
  %v1796 = vld [vmem:[%s1791 + $0x20] sm:$0xf]
  %v1797 = vld [vmem:[%s1791 + $0x28] sm:$0xf]
  %v1798 = vld [vmem:[%s1791 + $0x30] sm:$0xf]
  %v1799 = vld [vmem:[%s1791 + $0x38] sm:$0xf]
  %v1800 = vld [vmem:[%s1791 + $0x48] sm:$0xf]
  %v1801 = vld [vmem:[%s1791 + $0x50] sm:$0xf]
  %v1802 = vld [vmem:[%s1791 + $0x58] sm:$0xf]
  %v1803 = vld [vmem:[%s1791 + $0x60] sm:$0xf]
  %v1804 = vld [vmem:[%s1791 + $0x68] sm:$0xf]
  %v1805 = vld [vmem:[%s1791 + $0x70] sm:$0xf]
  %v1806 = vld [vmem:[%s1791 + $0x78] sm:$0xf]
  %v1807 = vld [vmem:[%s1791 + $0x80] sm:$0xf]
  %v1808 = vld [vmem:[%s1 + $0x1c0] sm:$0xf]
  %v1809 = vld [vmem:[%s1 + $0x1c4] sm:$0xf]
  %v1810 = vld [vmem:[%s1 + $0x1c8] sm:$0xf]
  %v1811 = vld [vmem:[%s1 + $0x1cc] sm:$0xf]
  %v1812 = vld [vmem:[%s1 + $0x1d0] sm:$0xf]
  %v1813 = vld [vmem:[%s1 + $0x1d4] sm:$0xf]
  %v1814 = vld [vmem:[%s1 + $0x1d8] sm:$0xf]
  %v1815 = vld [vmem:[%s1 + $0x1dc] sm:$0xf]
  %v1816 = vld [vmem:[%s1 + $0x1e0] sm:$0xf]
  %v1817 = vld [vmem:[%s1 + $0x1e4] sm:$0xf]
  %v1818 = vld [vmem:[%s1 + $0x1e8] sm:$0xf]
  %v1819 = vld [vmem:[%s1 + $0x1ec] sm:$0xf]
  %v1820 = vld [vmem:[%s1 + $0x1f0] sm:$0xf]
  %v1821 = vld [vmem:[%s1 + $0x1f4] sm:$0xf]
  %v1822 = vld [vmem:[%s1 + $0x1f8] sm:$0xf]
  %v1823 = vld [vmem:[%s1 + $0x1fc] sm:$0xf]
  %v1840 = vunpack.c.l.b16 %v1792
  %v1841 = vunpack.c.l.b16 %v1793
  %v1842 = vunpack.c.l.b16 %v1794
  %v1843 = vunpack.c.l.b16 %v1795
  %v1844 = vunpack.c.l.b16 %v1796
  %v1845 = vunpack.c.l.b16 %v1797
  %v1846 = vunpack.c.l.b16 %v1798
  %v1847 = vunpack.c.l.b16 %v1799
  %v1848 = vunpack.c.l.b16 %v1800
  %v1849 = vunpack.c.l.b16 %v1801
  %v1850 = vunpack.c.l.b16 %v1802
  %v1851 = vunpack.c.l.b16 %v1803
  %v1852 = vunpack.c.l.b16 %v1804
  %v1853 = vunpack.c.l.b16 %v1805
  %v1854 = vunpack.c.l.b16 %v1806
  %v1855 = vunpack.c.l.b16 %v1807
  %v1856 = vpack.c.b16 %v1841, %v1840
  %v1857 = vpack.c.b16 %v1843, %v1842
  %v1858 = vpack.c.b16 %v1845, %v1844
  %v1859 = vpack.c.b16 %v1847, %v1846
  %v1860 = vpack.c.b16 %v1849, %v1848
  %v1861 = vpack.c.b16 %v1851, %v1850
  %v1862 = vpack.c.b16 %v1853, %v1852
  %v1863 = vpack.c.b16 %v1855, %v1854
  %v1888 = vunpack.c.l.b16 %v1808
  %v1889 = vunpack.c.l.b16 %v1809
  %v1890 = vunpack.c.l.b16 %v1810
  %v1891 = vunpack.c.l.b16 %v1811
  %v1892 = vunpack.c.l.b16 %v1812
  %v1893 = vunpack.c.l.b16 %v1813
  %v1894 = vunpack.c.l.b16 %v1814
  %v1895 = vunpack.c.l.b16 %v1815
  %v1896 = vunpack.c.l.b16 %v1816
  %v1897 = vunpack.c.l.b16 %v1817
  %v1898 = vunpack.c.l.b16 %v1818
  %v1899 = vunpack.c.l.b16 %v1819
  %v1900 = vunpack.c.l.b16 %v1820
  %v1901 = vunpack.c.l.b16 %v1821
  %v1902 = vunpack.c.l.b16 %v1822
  %v1903 = vunpack.c.l.b16 %v1823
  %v1904 = vpack.c.b16 %v1889, %v1888
  %v1905 = vpack.c.b16 %v1891, %v1890
  %v1906 = vpack.c.b16 %v1893, %v1892
  %v1907 = vpack.c.b16 %v1895, %v1894
  %v1908 = vpack.c.b16 %v1897, %v1896
  %v1909 = vpack.c.b16 %v1899, %v1898
  %v1910 = vpack.c.b16 %v1901, %v1900
  %v1911 = vpack.c.b16 %v1903, %v1902
  %1920 = vmatpush.bf16.msra.mxu0 %v1911
  %1921 = vmatpush.bf16.msra.mxu0 %v1910
  %1922 = vmatpush.bf16.msra.mxu0 %v1909
  %1923 = vmatpush.bf16.msra.mxu0 %v1908
  %1924 = vmatpush.bf16.msra.mxu0 %v1907
  %1925 = vmatpush.bf16.msra.mxu0 %v1906
  %1926 = vmatpush.bf16.msra.mxu0 %v1905
  %1927 = vmatpush.bf16.msra.mxu0 %v1904
  %1928 = vmatmul.bf16.gmra.mxu0 %v1856
  %v1929 = vpop.f32.mrf.mxu0
  %v1930 = vadd.f32 0.0, %v1929
  %v1931 = vpop.f32.mrf.mxu0
  %v1932 = vadd.f32 0.0, %v1931
  %1933 = vmatmul.bf16.gmra.mxu0 %v1857
  %v1934 = vpop.f32.mrf.mxu0
  %v1935 = vadd.f32 0.0, %v1934
  %v1936 = vpop.f32.mrf.mxu0
  %v1937 = vadd.f32 0.0, %v1936
  %1938 = vmatmul.bf16.gmra.mxu0 %v1858
  %v1939 = vpop.f32.mrf.mxu0
  %v1940 = vadd.f32 0.0, %v1939
  %v1941 = vpop.f32.mrf.mxu0
  %v1942 = vadd.f32 0.0, %v1941
  %1943 = vmatmul.bf16.gmra.mxu0 %v1859
  %v1944 = vpop.f32.mrf.mxu0
  %v1945 = vadd.f32 0.0, %v1944
  %v1946 = vpop.f32.mrf.mxu0
  %v1947 = vadd.f32 0.0, %v1946
  %1948 = vmatmul.bf16.gmra.mxu0 %v1860
  %v1949 = vpop.f32.mrf.mxu0
  %v1950 = vadd.f32 0.0, %v1949
  %v1951 = vpop.f32.mrf.mxu0
  %v1952 = vadd.f32 0.0, %v1951
  %1953 = vmatmul.bf16.gmra.mxu0 %v1861
  %v1954 = vpop.f32.mrf.mxu0
  %v1955 = vadd.f32 0.0, %v1954
  %v1956 = vpop.f32.mrf.mxu0
  %v1957 = vadd.f32 0.0, %v1956
  %1958 = vmatmul.bf16.gmra.mxu0 %v1862
  %v1959 = vpop.f32.mrf.mxu0
  %v1960 = vadd.f32 0.0, %v1959
  %v1961 = vpop.f32.mrf.mxu0
  %v1962 = vadd.f32 0.0, %v1961
  %1963 = vmatmul.bf16.gmra.mxu0 %v1863
  %v1964 = vpop.f32.mrf.mxu0
  %v1965 = vadd.f32 0.0, %v1964
  %v1966 = vpop.f32.mrf.mxu0
  %v1967 = vadd.f32 0.0, %v1966
  %1968 = vdwg.mxu0
  %v1969 = vadd.f32 %v1775, %v1930
  %v1970 = vadd.f32 %v1776, %v1932
  %v1971 = vadd.f32 %v1777, %v1935
  %v1972 = vadd.f32 %v1778, %v1937
  %v1973 = vadd.f32 %v1779, %v1940
  %v1974 = vadd.f32 %v1780, %v1942
  %v1975 = vadd.f32 %v1781, %v1945
  %v1976 = vadd.f32 %v1782, %v1947
  %v1977 = vadd.f32 %v1783, %v1950
  %v1978 = vadd.f32 %v1784, %v1952
  %v1979 = vadd.f32 %v1785, %v1955
  %v1980 = vadd.f32 %v1786, %v1957
  %v1981 = vadd.f32 %v1787, %v1960
  %v1982 = vadd.f32 %v1788, %v1962
  %v1983 = vadd.f32 %v1789, %v1965
  %v1984 = vadd.f32 %v1790, %v1967
  %v1985 = vld [vmem:[%s1597] sm:$0xf]
  %v1986 = vld [vmem:[%s1597 + $0x4] sm:$0x1]
  %v1987 = vld [vmem:[%s1597 + $0x8] sm:$0xf]
  %v1988 = vld [vmem:[%s1597 + $0xc] sm:$0x1]
  %v1989 = vld [vmem:[%s1597 + $0x10] sm:$0xf]
  %v1990 = vld [vmem:[%s1597 + $0x14] sm:$0x1]
  %v1991 = vld [vmem:[%s1597 + $0x18] sm:$0xf]
  %v1992 = vld [vmem:[%s1597 + $0x1c] sm:$0x1]
  %v1993 = vld [vmem:[%s1597 + $0x20] sm:$0xf]
  %v1994 = vld [vmem:[%s1597 + $0x24] sm:$0x1]
  %v1995 = vld [vmem:[%s1597 + $0x28] sm:$0xf]
  %v1996 = vld [vmem:[%s1597 + $0x2c] sm:$0x1]
  %v1997 = vld [vmem:[%s1597 + $0x30] sm:$0xf]
  %v1998 = vld [vmem:[%s1597 + $0x34] sm:$0x1]
  %v1999 = vld [vmem:[%s1597 + $0x38] sm:$0xf]
  %v2000 = vld [vmem:[%s1597 + $0x3c] sm:$0x1]
  %v2001 = vld [vmem:[%s1597 + $0x48] sm:$0xf]
  %v2002 = vld [vmem:[%s1597 + $0x4c] sm:$0x1]
  %v2003 = vld [vmem:[%s1597 + $0x50] sm:$0xf]
  %v2004 = vld [vmem:[%s1597 + $0x54] sm:$0x1]
  %v2005 = vld [vmem:[%s1597 + $0x58] sm:$0xf]
  %v2006 = vld [vmem:[%s1597 + $0x5c] sm:$0x1]
  %v2007 = vld [vmem:[%s1597 + $0x60] sm:$0xf]
  %v2008 = vld [vmem:[%s1597 + $0x64] sm:$0x1]
  %v2009 = vld [vmem:[%s1597 + $0x68] sm:$0xf]
  %v2010 = vld [vmem:[%s1597 + $0x6c] sm:$0x1]
  %v2011 = vld [vmem:[%s1597 + $0x70] sm:$0xf]
  %v2012 = vld [vmem:[%s1597 + $0x74] sm:$0x1]
  %v2013 = vld [vmem:[%s1597 + $0x78] sm:$0xf]
  %v2014 = vld [vmem:[%s1597 + $0x7c] sm:$0x1]
  %v2015 = vld [vmem:[%s1597 + $0x80] sm:$0xf]
  %v2016 = vld [vmem:[%s1597 + $0x84] sm:$0x1]
  %v2018 = vshrl.u32 %v1985, 16
  %v2020 = vrot.slane %v2018, 4
  %v2021 = vshll.u32 %v1985, 16
  %v2023 = vrot.slane %v2021, 5
  %v2024 = vor.u32 %v2020, %v2023
  %v2025 = vrot.slane %v2024, 4
  %v2027 = vshll.u32 %v1986, 16
  %v2029 = vrot.slane %v2027, 5
  %v2030 = vsel %vm406, %v2025, %v2029
  %v2032 = vshrl.u32 %v1987, 16
  %v2034 = vrot.slane %v2032, 4
  %v2035 = vshll.u32 %v1987, 16
  %v2037 = vrot.slane %v2035, 5
  %v2038 = vor.u32 %v2034, %v2037
  %v2039 = vrot.slane %v2038, 4
  %v2041 = vshll.u32 %v1988, 16
  %v2043 = vrot.slane %v2041, 5
  %v2044 = vsel %vm406, %v2039, %v2043
  %v2046 = vshrl.u32 %v1989, 16
  %v2048 = vrot.slane %v2046, 4
  %v2049 = vshll.u32 %v1989, 16
  %v2051 = vrot.slane %v2049, 5
  %v2052 = vor.u32 %v2048, %v2051
  %v2053 = vrot.slane %v2052, 4
  %v2055 = vshll.u32 %v1990, 16
  %v2057 = vrot.slane %v2055, 5
  %v2058 = vsel %vm406, %v2053, %v2057
  %v2060 = vshrl.u32 %v1991, 16
  %v2062 = vrot.slane %v2060, 4
  %v2063 = vshll.u32 %v1991, 16
  %v2065 = vrot.slane %v2063, 5
  %v2066 = vor.u32 %v2062, %v2065
  %v2067 = vrot.slane %v2066, 4
  %v2069 = vshll.u32 %v1992, 16
  %v2071 = vrot.slane %v2069, 5
  %v2072 = vsel %vm406, %v2067, %v2071
  %v2074 = vshrl.u32 %v1993, 16
  %v2076 = vrot.slane %v2074, 4
  %v2077 = vshll.u32 %v1993, 16
  %v2079 = vrot.slane %v2077, 5
  %v2080 = vor.u32 %v2076, %v2079
  %v2081 = vrot.slane %v2080, 4
  %v2083 = vshll.u32 %v1994, 16
  %v2085 = vrot.slane %v2083, 5
  %v2086 = vsel %vm406, %v2081, %v2085
  %v2088 = vshrl.u32 %v1995, 16
  %v2090 = vrot.slane %v2088, 4
  %v2091 = vshll.u32 %v1995, 16
  %v2093 = vrot.slane %v2091, 5
  %v2094 = vor.u32 %v2090, %v2093
  %v2095 = vrot.slane %v2094, 4
  %v2097 = vshll.u32 %v1996, 16
  %v2099 = vrot.slane %v2097, 5
  %v2100 = vsel %vm406, %v2095, %v2099
  %v2102 = vshrl.u32 %v1997, 16
  %v2104 = vrot.slane %v2102, 4
  %v2105 = vshll.u32 %v1997, 16
  %v2107 = vrot.slane %v2105, 5
  %v2108 = vor.u32 %v2104, %v2107
  %v2109 = vrot.slane %v2108, 4
  %v2111 = vshll.u32 %v1998, 16
  %v2113 = vrot.slane %v2111, 5
  %v2114 = vsel %vm406, %v2109, %v2113
  %v2116 = vshrl.u32 %v1999, 16
  %v2118 = vrot.slane %v2116, 4
  %v2119 = vshll.u32 %v1999, 16
  %v2121 = vrot.slane %v2119, 5
  %v2122 = vor.u32 %v2118, %v2121
  %v2123 = vrot.slane %v2122, 4
  %v2125 = vshll.u32 %v2000, 16
  %v2127 = vrot.slane %v2125, 5
  %v2128 = vsel %vm406, %v2123, %v2127
  %v2130 = vshrl.u32 %v2001, 16
  %v2132 = vrot.slane %v2130, 4
  %v2133 = vshll.u32 %v2001, 16
  %v2135 = vrot.slane %v2133, 5
  %v2136 = vor.u32 %v2132, %v2135
  %v2137 = vrot.slane %v2136, 4
  %v2139 = vshll.u32 %v2002, 16
  %v2141 = vrot.slane %v2139, 5
  %v2142 = vsel %vm406, %v2137, %v2141
  %v2144 = vshrl.u32 %v2003, 16
  %v2146 = vrot.slane %v2144, 4
  %v2147 = vshll.u32 %v2003, 16
  %v2149 = vrot.slane %v2147, 5
  %v2150 = vor.u32 %v2146, %v2149
  %v2151 = vrot.slane %v2150, 4
  %v2153 = vshll.u32 %v2004, 16
  %v2155 = vrot.slane %v2153, 5
  %v2156 = vsel %vm406, %v2151, %v2155
  %v2158 = vshrl.u32 %v2005, 16
  %v2160 = vrot.slane %v2158, 4
  %v2161 = vshll.u32 %v2005, 16
  %v2163 = vrot.slane %v2161, 5
  %v2164 = vor.u32 %v2160, %v2163
  %v2165 = vrot.slane %v2164, 4
  %v2167 = vshll.u32 %v2006, 16
  %v2169 = vrot.slane %v2167, 5
  %v2170 = vsel %vm406, %v2165, %v2169
  %v2172 = vshrl.u32 %v2007, 16
  %v2174 = vrot.slane %v2172, 4
  %v2175 = vshll.u32 %v2007, 16
  %v2177 = vrot.slane %v2175, 5
  %v2178 = vor.u32 %v2174, %v2177
  %v2179 = vrot.slane %v2178, 4
  %v2181 = vshll.u32 %v2008, 16
  %v2183 = vrot.slane %v2181, 5
  %v2184 = vsel %vm406, %v2179, %v2183
  %v2186 = vshrl.u32 %v2009, 16
  %v2188 = vrot.slane %v2186, 4
  %v2189 = vshll.u32 %v2009, 16
  %v2191 = vrot.slane %v2189, 5
  %v2192 = vor.u32 %v2188, %v2191
  %v2193 = vrot.slane %v2192, 4
  %v2195 = vshll.u32 %v2010, 16
  %v2197 = vrot.slane %v2195, 5
  %v2198 = vsel %vm406, %v2193, %v2197
  %v2200 = vshrl.u32 %v2011, 16
  %v2202 = vrot.slane %v2200, 4
  %v2203 = vshll.u32 %v2011, 16
  %v2205 = vrot.slane %v2203, 5
  %v2206 = vor.u32 %v2202, %v2205
  %v2207 = vrot.slane %v2206, 4
  %v2209 = vshll.u32 %v2012, 16
  %v2211 = vrot.slane %v2209, 5
  %v2212 = vsel %vm406, %v2207, %v2211
  %v2214 = vshrl.u32 %v2013, 16
  %v2216 = vrot.slane %v2214, 4
  %v2217 = vshll.u32 %v2013, 16
  %v2219 = vrot.slane %v2217, 5
  %v2220 = vor.u32 %v2216, %v2219
  %v2221 = vrot.slane %v2220, 4
  %v2223 = vshll.u32 %v2014, 16
  %v2225 = vrot.slane %v2223, 5
  %v2226 = vsel %vm406, %v2221, %v2225
  %v2228 = vshrl.u32 %v2015, 16
  %v2230 = vrot.slane %v2228, 4
  %v2231 = vshll.u32 %v2015, 16
  %v2233 = vrot.slane %v2231, 5
  %v2234 = vor.u32 %v2230, %v2233
  %v2235 = vrot.slane %v2234, 4
  %v2237 = vshll.u32 %v2016, 16
  %v2239 = vrot.slane %v2237, 5
  %v2240 = vsel %vm406, %v2235, %v2239
  %v2241 = vld [vmem:[%s1 + $0x200] sm:$0xf]
  %v2242 = vld [vmem:[%s1 + $0x204] sm:$0xf]
  %v2243 = vld [vmem:[%s1 + $0x208] sm:$0xf]
  %v2244 = vld [vmem:[%s1 + $0x20c] sm:$0xf]
  %v2245 = vld [vmem:[%s1 + $0x210] sm:$0xf]
  %v2246 = vld [vmem:[%s1 + $0x214] sm:$0xf]
  %v2247 = vld [vmem:[%s1 + $0x218] sm:$0xf]
  %v2248 = vld [vmem:[%s1 + $0x21c] sm:$0xf]
  %v2249 = vld [vmem:[%s1 + $0x220] sm:$0xf]
  %v2250 = vld [vmem:[%s1 + $0x224] sm:$0xf]
  %v2251 = vld [vmem:[%s1 + $0x228] sm:$0xf]
  %v2252 = vld [vmem:[%s1 + $0x22c] sm:$0xf]
  %v2253 = vld [vmem:[%s1 + $0x230] sm:$0xf]
  %v2254 = vld [vmem:[%s1 + $0x234] sm:$0xf]
  %v2255 = vld [vmem:[%s1 + $0x238] sm:$0xf]
  %v2256 = vld [vmem:[%s1 + $0x23c] sm:$0xf]
  %v2257 = vunpack.c.l.b16 %v2030
  %v2258 = vunpack.c.l.b16 %v2044
  %v2259 = vunpack.c.l.b16 %v2058
  %v2260 = vunpack.c.l.b16 %v2072
  %v2261 = vunpack.c.l.b16 %v2086
  %v2262 = vunpack.c.l.b16 %v2100
  %v2263 = vunpack.c.l.b16 %v2114
  %v2264 = vunpack.c.l.b16 %v2128
  %v2265 = vunpack.c.l.b16 %v2142
  %v2266 = vunpack.c.l.b16 %v2156
  %v2267 = vunpack.c.l.b16 %v2170
  %v2268 = vunpack.c.l.b16 %v2184
  %v2269 = vunpack.c.l.b16 %v2198
  %v2270 = vunpack.c.l.b16 %v2212
  %v2271 = vunpack.c.l.b16 %v2226
  %v2272 = vunpack.c.l.b16 %v2240
  %v2273 = vpack.c.b16 %v2258, %v2257
  %v2274 = vpack.c.b16 %v2260, %v2259
  %v2275 = vpack.c.b16 %v2262, %v2261
  %v2276 = vpack.c.b16 %v2264, %v2263
  %v2277 = vpack.c.b16 %v2266, %v2265
  %v2278 = vpack.c.b16 %v2268, %v2267
  %v2279 = vpack.c.b16 %v2270, %v2269
  %v2280 = vpack.c.b16 %v2272, %v2271
  %v2305 = vunpack.c.l.b16 %v2241
  %v2306 = vunpack.c.l.b16 %v2242
  %v2307 = vunpack.c.l.b16 %v2243
  %v2308 = vunpack.c.l.b16 %v2244
  %v2309 = vunpack.c.l.b16 %v2245
  %v2310 = vunpack.c.l.b16 %v2246
  %v2311 = vunpack.c.l.b16 %v2247
  %v2312 = vunpack.c.l.b16 %v2248
  %v2313 = vunpack.c.l.b16 %v2249
  %v2314 = vunpack.c.l.b16 %v2250
  %v2315 = vunpack.c.l.b16 %v2251
  %v2316 = vunpack.c.l.b16 %v2252
  %v2317 = vunpack.c.l.b16 %v2253
  %v2318 = vunpack.c.l.b16 %v2254
  %v2319 = vunpack.c.l.b16 %v2255
  %v2320 = vunpack.c.l.b16 %v2256
  %v2321 = vpack.c.b16 %v2306, %v2305
  %v2322 = vpack.c.b16 %v2308, %v2307
  %v2323 = vpack.c.b16 %v2310, %v2309
  %v2324 = vpack.c.b16 %v2312, %v2311
  %v2325 = vpack.c.b16 %v2314, %v2313
  %v2326 = vpack.c.b16 %v2316, %v2315
  %v2327 = vpack.c.b16 %v2318, %v2317
  %v2328 = vpack.c.b16 %v2320, %v2319
  %2337 = vmatpush.bf16.msra.mxu0 %v2328
  %2338 = vmatpush.bf16.msra.mxu0 %v2327
  %2339 = vmatpush.bf16.msra.mxu0 %v2326
  %2340 = vmatpush.bf16.msra.mxu0 %v2325
  %2341 = vmatpush.bf16.msra.mxu0 %v2324
  %2342 = vmatpush.bf16.msra.mxu0 %v2323
  %2343 = vmatpush.bf16.msra.mxu0 %v2322
  %2344 = vmatpush.bf16.msra.mxu0 %v2321
  %2345 = vmatmul.bf16.gmra.mxu0 %v2273
  %v2346 = vpop.f32.mrf.mxu0
  %v2347 = vadd.f32 0.0, %v2346
  %v2348 = vpop.f32.mrf.mxu0
  %v2349 = vadd.f32 0.0, %v2348
  %2350 = vmatmul.bf16.gmra.mxu0 %v2274
  %v2351 = vpop.f32.mrf.mxu0
  %v2352 = vadd.f32 0.0, %v2351
  %v2353 = vpop.f32.mrf.mxu0
  %v2354 = vadd.f32 0.0, %v2353
  %2355 = vmatmul.bf16.gmra.mxu0 %v2275
  %v2356 = vpop.f32.mrf.mxu0
  %v2357 = vadd.f32 0.0, %v2356
  %v2358 = vpop.f32.mrf.mxu0
  %v2359 = vadd.f32 0.0, %v2358
  %2360 = vmatmul.bf16.gmra.mxu0 %v2276
  %v2361 = vpop.f32.mrf.mxu0
  %v2362 = vadd.f32 0.0, %v2361
  %v2363 = vpop.f32.mrf.mxu0
  %v2364 = vadd.f32 0.0, %v2363
  %2365 = vmatmul.bf16.gmra.mxu0 %v2277
  %v2366 = vpop.f32.mrf.mxu0
  %v2367 = vadd.f32 0.0, %v2366
  %v2368 = vpop.f32.mrf.mxu0
  %v2369 = vadd.f32 0.0, %v2368
  %2370 = vmatmul.bf16.gmra.mxu0 %v2278
  %v2371 = vpop.f32.mrf.mxu0
  %v2372 = vadd.f32 0.0, %v2371
  %v2373 = vpop.f32.mrf.mxu0
  %v2374 = vadd.f32 0.0, %v2373
  %2375 = vmatmul.bf16.gmra.mxu0 %v2279
  %v2376 = vpop.f32.mrf.mxu0
  %v2377 = vadd.f32 0.0, %v2376
  %v2378 = vpop.f32.mrf.mxu0
  %v2379 = vadd.f32 0.0, %v2378
  %2380 = vmatmul.bf16.gmra.mxu0 %v2280
  %v2381 = vpop.f32.mrf.mxu0
  %v2382 = vadd.f32 0.0, %v2381
  %v2383 = vpop.f32.mrf.mxu0
  %v2384 = vadd.f32 0.0, %v2383
  %2385 = vdwg.mxu0
  %v2386 = vadd.f32 %v1969, %v2347
  %v2387 = vadd.f32 %v1970, %v2349
  %v2388 = vadd.f32 %v1971, %v2352
  %v2389 = vadd.f32 %v1972, %v2354
  %v2390 = vadd.f32 %v1973, %v2357
  %v2391 = vadd.f32 %v1974, %v2359
  %v2392 = vadd.f32 %v1975, %v2362
  %v2393 = vadd.f32 %v1976, %v2364
  %v2394 = vadd.f32 %v1977, %v2367
  %v2395 = vadd.f32 %v1978, %v2369
  %v2396 = vadd.f32 %v1979, %v2372
  %v2397 = vadd.f32 %v1980, %v2374
  %v2398 = vadd.f32 %v1981, %v2377
  %v2399 = vadd.f32 %v1982, %v2379
  %v2400 = vadd.f32 %v1983, %v2382
  %v2401 = vadd.f32 %v1984, %v2384
  %v2402 = vadd.f32 %v2386, %v2387
  %v2403 = vadd.f32 %v2402, %v2388
  %v2404 = vadd.f32 %v2403, %v2389
  %v2405 = vadd.f32 %v2404, %v2390
  %v2406 = vadd.f32 %v2405, %v2391
  %v2407 = vadd.f32 %v2406, %v2392
  %v2408 = vadd.f32 %v2407, %v2393
  %v2409 = vadd.f32 %v2408, %v2394
  %v2410 = vadd.f32 %v2409, %v2395
  %v2411 = vadd.f32 %v2410, %v2396
  %v2412 = vadd.f32 %v2411, %v2397
  %v2413 = vadd.f32 %v2412, %v2398
  %v2414 = vadd.f32 %v2413, %v2399
  %v2415 = vadd.f32 %v2414, %v2400
  %v2416 = vadd.f32 %v2415, %v2401
  %v2417 = vrot.slane %v2416, 4
  %v2418 = vadd.f32 %v2416, %v2417
  %v2419 = vrot.slane %v2418, 2
  %v2420 = vadd.f32 %v2418, %v2419
  %v2421 = vrot.slane %v2420, 1
  %v2422 = vadd.f32 %v2420, %v2421
  %v2423 = vmul.f32 %v2422, 0.0078125
  %v2424 = vsub.f32 %v2386, %v2423
  %v2425 = vsub.f32 %v2387, %v2423
  %v2426 = vsub.f32 %v2388, %v2423
  %v2427 = vsub.f32 %v2389, %v2423
  %v2428 = vsub.f32 %v2390, %v2423
  %v2429 = vsub.f32 %v2391, %v2423
  %v2430 = vsub.f32 %v2392, %v2423
  %v2431 = vsub.f32 %v2393, %v2423
  %v2432 = vsub.f32 %v2394, %v2423
  %v2433 = vsub.f32 %v2395, %v2423
  %v2434 = vsub.f32 %v2396, %v2423
  %v2435 = vsub.f32 %v2397, %v2423
  %v2436 = vsub.f32 %v2398, %v2423
  %v2437 = vsub.f32 %v2399, %v2423
  %v2438 = vsub.f32 %v2400, %v2423
  %v2439 = vsub.f32 %v2401, %v2423
  %v2440 = vmul.f32 %v2424, %v2424
  %v2441 = vmul.f32 %v2425, %v2425
  %v2442 = vmul.f32 %v2426, %v2426
  %v2443 = vmul.f32 %v2427, %v2427
  %v2444 = vmul.f32 %v2428, %v2428
  %v2445 = vmul.f32 %v2429, %v2429
  %v2446 = vmul.f32 %v2430, %v2430
  %v2447 = vmul.f32 %v2431, %v2431
  %v2448 = vmul.f32 %v2432, %v2432
  %v2449 = vmul.f32 %v2433, %v2433
  %v2450 = vmul.f32 %v2434, %v2434
  %v2451 = vmul.f32 %v2435, %v2435
  %v2452 = vmul.f32 %v2436, %v2436
  %v2453 = vmul.f32 %v2437, %v2437
  %v2454 = vmul.f32 %v2438, %v2438
  %v2455 = vmul.f32 %v2439, %v2439
  %v2456 = vadd.f32 %v2440, %v2441
  %v2457 = vadd.f32 %v2456, %v2442
  %v2458 = vadd.f32 %v2457, %v2443
  %v2459 = vadd.f32 %v2458, %v2444
  %v2460 = vadd.f32 %v2459, %v2445
  %v2461 = vadd.f32 %v2460, %v2446
  %v2462 = vadd.f32 %v2461, %v2447
  %v2463 = vadd.f32 %v2462, %v2448
  %v2464 = vadd.f32 %v2463, %v2449
  %v2465 = vadd.f32 %v2464, %v2450
  %v2466 = vadd.f32 %v2465, %v2451
  %v2467 = vadd.f32 %v2466, %v2452
  %v2468 = vadd.f32 %v2467, %v2453
  %v2469 = vadd.f32 %v2468, %v2454
  %v2470 = vadd.f32 %v2469, %v2455
  %v2471 = vrot.slane %v2470, 4
  %v2472 = vadd.f32 %v2470, %v2471
  %v2473 = vrot.slane %v2472, 2
  %v2474 = vadd.f32 %v2472, %v2473
  %v2475 = vrot.slane %v2474, 1
  %v2476 = vadd.f32 %v2474, %v2475
  %v2477 = vmul.f32 %v2476, 0.0078125
  %v2478 = vadd.f32 %v2477, 1e-05
  %v2479 = vrsqrt.pop %v2478
  %v2480 = vmul.f32 %v2479, %v2478
  %v2481 = vmul.f32 %v2480, %v2479
  %v2482 = vmul.f32 0.5, %v2481
  %v2483 = vsub.f32 1.5, %v2482
  %v2484 = vmul.f32 %v2479, %v2483
  %vm2485 = vweird.f32 %v2478
  %vm2486 = vweird.f32 %v2479
  %vm2487 = vmor %vm2485, %vm2486
  %v2488 = vsel %vm2487, %v2479, %v2484
  %v2489 = vmul.f32 %v2424, %v2488
  %v2490 = vmul.f32 %v2425, %v2488
  %v2491 = vmul.f32 %v2426, %v2488
  %v2492 = vmul.f32 %v2427, %v2488
  %v2493 = vmul.f32 %v2428, %v2488
  %v2494 = vmul.f32 %v2429, %v2488
  %v2495 = vmul.f32 %v2430, %v2488
  %v2496 = vmul.f32 %v2431, %v2488
  %v2497 = vmul.f32 %v2432, %v2488
  %v2498 = vmul.f32 %v2433, %v2488
  %v2499 = vmul.f32 %v2434, %v2488
  %v2500 = vmul.f32 %v2435, %v2488
  %v2501 = vmul.f32 %v2436, %v2488
  %v2502 = vmul.f32 %v2437, %v2488
  %v2503 = vmul.f32 %v2438, %v2488
  %v2504 = vmul.f32 %v2439, %v2488
  %v2505 = vld [vmem:[%s2] sm:$0x1]
  %v2507 = vperm.slane %v2505, 0
  %v2509 = vmul.f32 %v2489, %v2507
  %v2510 = vmul.f32 %v2490, %v2507
  %v2511 = vmul.f32 %v2491, %v2507
  %v2512 = vmul.f32 %v2492, %v2507
  %v2513 = vmul.f32 %v2493, %v2507
  %v2514 = vmul.f32 %v2494, %v2507
  %v2515 = vmul.f32 %v2495, %v2507
  %v2516 = vmul.f32 %v2496, %v2507
  %v2517 = vmul.f32 %v2497, %v2507
  %v2518 = vmul.f32 %v2498, %v2507
  %v2519 = vmul.f32 %v2499, %v2507
  %v2520 = vmul.f32 %v2500, %v2507
  %v2521 = vmul.f32 %v2501, %v2507
  %v2522 = vmul.f32 %v2502, %v2507
  %v2523 = vmul.f32 %v2503, %v2507
  %v2524 = vmul.f32 %v2504, %v2507
  %v2525 = vld [vmem:[%s3] sm:$0x1]
  %v2527 = vperm.slane %v2525, 0
  %v2529 = vadd.f32 %v2509, %v2527
  %v2530 = vadd.f32 %v2510, %v2527
  %v2531 = vadd.f32 %v2511, %v2527
  %v2532 = vadd.f32 %v2512, %v2527
  %v2533 = vadd.f32 %v2513, %v2527
  %v2534 = vadd.f32 %v2514, %v2527
  %v2535 = vadd.f32 %v2515, %v2527
  %v2536 = vadd.f32 %v2516, %v2527
  %v2537 = vadd.f32 %v2517, %v2527
  %v2538 = vadd.f32 %v2518, %v2527
  %v2539 = vadd.f32 %v2519, %v2527
  %v2540 = vadd.f32 %v2520, %v2527
  %v2541 = vadd.f32 %v2521, %v2527
  %v2542 = vadd.f32 %v2522, %v2527
  %v2543 = vadd.f32 %v2523, %v2527
  %v2544 = vadd.f32 %v2524, %v2527
  %v2545 = vmax.f32 %v2529, 0.0
  %v2546 = vmax.f32 %v2530, 0.0
  %v2547 = vmax.f32 %v2531, 0.0
  %v2548 = vmax.f32 %v2532, 0.0
  %v2549 = vmax.f32 %v2533, 0.0
  %v2550 = vmax.f32 %v2534, 0.0
  %v2551 = vmax.f32 %v2535, 0.0
  %v2552 = vmax.f32 %v2536, 0.0
  %v2553 = vmax.f32 %v2537, 0.0
  %v2554 = vmax.f32 %v2538, 0.0
  %v2555 = vmax.f32 %v2539, 0.0
  %v2556 = vmax.f32 %v2540, 0.0
  %v2557 = vmax.f32 %v2541, 0.0
  %v2558 = vmax.f32 %v2542, 0.0
  %v2559 = vmax.f32 %v2543, 0.0
  %v2560 = vmax.f32 %v2544, 0.0
  %2561 = vst [vmem:[%s4] sm:$0xff] %v2545
  %2562 = vst [vmem:[%s4 + $0x8] sm:$0xff] %v2546
  %2563 = vst [vmem:[%s4 + $0x10] sm:$0xff] %v2547
  %2564 = vst [vmem:[%s4 + $0x18] sm:$0xff] %v2548
  %2565 = vst [vmem:[%s4 + $0x20] sm:$0xff] %v2549
  %2566 = vst [vmem:[%s4 + $0x28] sm:$0xff] %v2550
  %2567 = vst [vmem:[%s4 + $0x30] sm:$0xff] %v2551
  %2568 = vst [vmem:[%s4 + $0x38] sm:$0xff] %v2552
  %2569 = vst [vmem:[%s4 + $0x40] sm:$0xff] %v2553
  %2570 = vst [vmem:[%s4 + $0x48] sm:$0xff] %v2554
  %2571 = vst [vmem:[%s4 + $0x50] sm:$0xff] %v2555
  %2572 = vst [vmem:[%s4 + $0x58] sm:$0xff] %v2556
  %2573 = vst [vmem:[%s4 + $0x60] sm:$0xff] %v2557
  %2574 = vst [vmem:[%s4 + $0x68] sm:$0xff] %v2558
  %2575 = vst [vmem:[%s4 + $0x70] sm:$0xff] %v2559
  %2576 = vst [vmem:[%s4 + $0x78] sm:$0xff] %v2560
  // Predicated region
  $region18: #{forward.5} parent=0 // pred_check
    _
  $region19: #{forward.5} parent=0 // pred_check_branch
    %2578 = sbr.rel (0) target = $region21
  $region20: #{forward.5} parent=0 // pred_region
    _
  $region21: #{forward.5} parent=0 // pred_fallthru
    _
  // Predicated region
  $region22: #{forward.5} parent=0 // pred_check
    _
  $region23: #{forward.5} parent=0 // pred_check_branch
    %2580 = sbr.rel (0) target = $region25
  $region24: #{forward.5} parent=0 // pred_region
    _
  $region25: #{forward.5} parent=0 // pred_fallthru
    _

// kernel: forward.7
$region0: #{forward.7}
  #allocation0 [shape = 'u32[]', space=smem, size = 0x4, offset = 0x4, fixed_abs, tag = 'smem constant byte address 0x4 - core index']
  #allocation1 [shape = 'u32[72,128]{1,0:T(1,128)}', space=vmem, size = 0x9000, scoped, tag = 'internal scratch']
  %s0 = inlined_call_operand.vmem [shape: bf16[1,2,10,10,128], index: 0, kind: input, shape index: {}]
  %s1 = inlined_call_operand.vmem [shape: bf16[1152,128], index: 1, kind: input, shape index: {}]
  %s2 = inlined_call_operand.vmem [shape: f32[1,128], index: 2, kind: input, shape index: {}]
  %s3 = inlined_call_operand.vmem [shape: f32[1,128], index: 3, kind: input, shape index: {}]
  %s4 = inlined_call_operand.vmem [shape: f32[128,128], index: 4, kind: input, shape index: {}]
  %s5 = inlined_call_operand.vmem [shape: f32[128,128], index: 5, kind: output, shape index: {}]
  %s6 = sld [smem:[#allocation0]]
  $region30: #{forward.7} parent=0
    _
  %s8 = ssub.s32 1, %s6
  %s9 = scalar_select 0, %s8, %s6
  // Predicated region
  $region2: #{forward.7} parent=0 // pred_check
    _
  $region3: #{forward.7} parent=0 // pred_check_branch
    %11 = sbr.rel (0) target = $region5
  $region4: #{forward.7} parent=0 // pred_region
    _
  $region5: #{forward.7} parent=0 // pred_fallthru
    _
  // Predicated region
  $region6: #{forward.7} parent=0 // pred_check
    _
  $region7: #{forward.7} parent=0 // pred_check_branch
    %13 = sbr.rel (0) target = $region9
  $region8: #{forward.7} parent=0 // pred_region
    _
  $region9: #{forward.7} parent=0 // pred_fallthru
    _
  // Predicated region
  $region10: #{forward.7} parent=0 // pred_check
    _
  $region11: #{forward.7} parent=0 // pred_check_branch
    %15 = sbr.rel (0) target = $region13
  $region12: #{forward.7} parent=0 // pred_region
    _
  $region13: #{forward.7} parent=0 // pred_fallthru
    _
  // Predicated region
  $region14: #{forward.7} parent=0 // pred_check
    _
  $region15: #{forward.7} parent=0 // pred_check_branch
    %17 = sbr.rel (0) target = $region17
  $region16: #{forward.7} parent=0 // pred_region
    _
  $region17: #{forward.7} parent=0 // pred_fallthru
    _
  // Predicated region
  $region18: #{forward.7} parent=0 // pred_check
    _
  $region19: #{forward.7} parent=0 // pred_check_branch
    %19 = sbr.rel (0) target = $region21
  $region20: #{forward.7} parent=0 // pred_region
    _
  $region21: #{forward.7} parent=0 // pred_fallthru
    _
  %v20 = vld [vmem:[%s0] sm:$0xf]
  %v21 = vld [vmem:[%s0 + $0x8] sm:$0xf]
  %v22 = vld [vmem:[%s0 + $0x10] sm:$0xf]
  %v23 = vld [vmem:[%s0 + $0x18] sm:$0xf]
  %v24 = vld [vmem:[%s0 + $0x20] sm:$0xf]
  %v25 = vld [vmem:[%s0 + $0x28] sm:$0xf]
  %v26 = vld [vmem:[%s0 + $0x30] sm:$0xf]
  %v27 = vld [vmem:[%s0 + $0x38] sm:$0xf]
  %v28 = vld [vmem:[%s0 + $0x50] sm:$0xf]
  %v29 = vld [vmem:[%s0 + $0x58] sm:$0xf]
  %v30 = vld [vmem:[%s0 + $0x60] sm:$0xf]
  %v31 = vld [vmem:[%s0 + $0x68] sm:$0xf]
  %v32 = vld [vmem:[%s0 + $0x70] sm:$0xf]
  %v33 = vld [vmem:[%s0 + $0x78] sm:$0xf]
  %v34 = vld [vmem:[%s0 + $0x80] sm:$0xf]
  %v35 = vld [vmem:[%s0 + $0x88] sm:$0xf]
  %v36 = vld [vmem:[%s1] sm:$0xf]
  %v37 = vld [vmem:[%s1 + $0x4] sm:$0xf]
  %v38 = vld [vmem:[%s1 + $0x8] sm:$0xf]
  %v39 = vld [vmem:[%s1 + $0xc] sm:$0xf]
  %v40 = vld [vmem:[%s1 + $0x10] sm:$0xf]
  %v41 = vld [vmem:[%s1 + $0x14] sm:$0xf]
  %v42 = vld [vmem:[%s1 + $0x18] sm:$0xf]
  %v43 = vld [vmem:[%s1 + $0x1c] sm:$0xf]
  %v44 = vld [vmem:[%s1 + $0x20] sm:$0xf]
  %v45 = vld [vmem:[%s1 + $0x24] sm:$0xf]
  %v46 = vld [vmem:[%s1 + $0x28] sm:$0xf]
  %v47 = vld [vmem:[%s1 + $0x2c] sm:$0xf]
  %v48 = vld [vmem:[%s1 + $0x30] sm:$0xf]
  %v49 = vld [vmem:[%s1 + $0x34] sm:$0xf]
  %v50 = vld [vmem:[%s1 + $0x38] sm:$0xf]
  %v51 = vld [vmem:[%s1 + $0x3c] sm:$0xf]
  %v52 = vld [vmem:[%s0 + $0x4] sm:$0x1]
  %v53 = vld [vmem:[%s0 + $0xc] sm:$0x1]
  %v54 = vld [vmem:[%s0 + $0x14] sm:$0x1]
  %v55 = vld [vmem:[%s0 + $0x1c] sm:$0x1]
  %v56 = vld [vmem:[%s0 + $0x24] sm:$0x1]
  %v57 = vld [vmem:[%s0 + $0x2c] sm:$0x1]
  %v58 = vld [vmem:[%s0 + $0x34] sm:$0x1]
  %v59 = vld [vmem:[%s0 + $0x3c] sm:$0x1]
  %v60 = vld [vmem:[%s0 + $0x54] sm:$0x1]
  %v61 = vld [vmem:[%s0 + $0x5c] sm:$0x1]
  %v62 = vld [vmem:[%s0 + $0x64] sm:$0x1]
  %v63 = vld [vmem:[%s0 + $0x6c] sm:$0x1]
  %v64 = vld [vmem:[%s0 + $0x74] sm:$0x1]
  %v65 = vld [vmem:[%s0 + $0x7c] sm:$0x1]
  %v66 = vld [vmem:[%s0 + $0x84] sm:$0x1]
  %v67 = vld [vmem:[%s0 + $0x8c] sm:$0x1]
  %vm68 = vsmask.f32 3328
  %vm69 = vsmask.f32 7440
  %vm70 = vmor %vm68, %vm69
  %v72 = vshrl.u32 %v20, 16
  %v74 = vrot.slane %v72, 4
  %v75 = vshll.u32 %v20, 16
  %v77 = vrot.slane %v75, 5
  %v78 = vor.u32 %v74, %v77
  %v79 = vrot.slane %v78, 4
  %v81 = vshll.u32 %v52, 16
  %v83 = vrot.slane %v81, 5
  %v84 = vsel %vm70, %v79, %v83
  %v86 = vshrl.u32 %v21, 16
  %v88 = vrot.slane %v86, 4
  %v89 = vshll.u32 %v21, 16
  %v91 = vrot.slane %v89, 5
  %v92 = vor.u32 %v88, %v91
  %v93 = vrot.slane %v92, 4
  %v95 = vshll.u32 %v53, 16
  %v97 = vrot.slane %v95, 5
  %v98 = vsel %vm70, %v93, %v97
  %v100 = vshrl.u32 %v22, 16
  %v102 = vrot.slane %v100, 4
  %v103 = vshll.u32 %v22, 16
  %v105 = vrot.slane %v103, 5
  %v106 = vor.u32 %v102, %v105
  %v107 = vrot.slane %v106, 4
  %v109 = vshll.u32 %v54, 16
  %v111 = vrot.slane %v109, 5
  %v112 = vsel %vm70, %v107, %v111
  %v114 = vshrl.u32 %v23, 16
  %v116 = vrot.slane %v114, 4
  %v117 = vshll.u32 %v23, 16
  %v119 = vrot.slane %v117, 5
  %v120 = vor.u32 %v116, %v119
  %v121 = vrot.slane %v120, 4
  %v123 = vshll.u32 %v55, 16
  %v125 = vrot.slane %v123, 5
  %v126 = vsel %vm70, %v121, %v125
  %v128 = vshrl.u32 %v24, 16
  %v130 = vrot.slane %v128, 4
  %v131 = vshll.u32 %v24, 16
  %v133 = vrot.slane %v131, 5
  %v134 = vor.u32 %v130, %v133
  %v135 = vrot.slane %v134, 4
  %v137 = vshll.u32 %v56, 16
  %v139 = vrot.slane %v137, 5
  %v140 = vsel %vm70, %v135, %v139
  %v142 = vshrl.u32 %v25, 16
  %v144 = vrot.slane %v142, 4
  %v145 = vshll.u32 %v25, 16
  %v147 = vrot.slane %v145, 5
  %v148 = vor.u32 %v144, %v147
  %v149 = vrot.slane %v148, 4
  %v151 = vshll.u32 %v57, 16
  %v153 = vrot.slane %v151, 5
  %v154 = vsel %vm70, %v149, %v153
  %v156 = vshrl.u32 %v26, 16
  %v158 = vrot.slane %v156, 4
  %v159 = vshll.u32 %v26, 16
  %v161 = vrot.slane %v159, 5
  %v162 = vor.u32 %v158, %v161
  %v163 = vrot.slane %v162, 4
  %v165 = vshll.u32 %v58, 16
  %v167 = vrot.slane %v165, 5
  %v168 = vsel %vm70, %v163, %v167
  %v170 = vshrl.u32 %v27, 16
  %v172 = vrot.slane %v170, 4
  %v173 = vshll.u32 %v27, 16
  %v175 = vrot.slane %v173, 5
  %v176 = vor.u32 %v172, %v175
  %v177 = vrot.slane %v176, 4
  %v179 = vshll.u32 %v59, 16
  %v181 = vrot.slane %v179, 5
  %v182 = vsel %vm70, %v177, %v181
  %v184 = vshrl.u32 %v28, 16
  %v186 = vrot.slane %v184, 4
  %v187 = vshll.u32 %v28, 16
  %v189 = vrot.slane %v187, 5
  %v190 = vor.u32 %v186, %v189
  %v191 = vrot.slane %v190, 4
  %v193 = vshll.u32 %v60, 16
  %v195 = vrot.slane %v193, 5
  %v196 = vsel %vm70, %v191, %v195
  %v198 = vshrl.u32 %v29, 16
  %v200 = vrot.slane %v198, 4
  %v201 = vshll.u32 %v29, 16
  %v203 = vrot.slane %v201, 5
  %v204 = vor.u32 %v200, %v203
  %v205 = vrot.slane %v204, 4
  %v207 = vshll.u32 %v61, 16
  %v209 = vrot.slane %v207, 5
  %v210 = vsel %vm70, %v205, %v209
  %v212 = vshrl.u32 %v30, 16
  %v214 = vrot.slane %v212, 4
  %v215 = vshll.u32 %v30, 16
  %v217 = vrot.slane %v215, 5
  %v218 = vor.u32 %v214, %v217
  %v219 = vrot.slane %v218, 4
  %v221 = vshll.u32 %v62, 16
  %v223 = vrot.slane %v221, 5
  %v224 = vsel %vm70, %v219, %v223
  %v226 = vshrl.u32 %v31, 16
  %v228 = vrot.slane %v226, 4
  %v229 = vshll.u32 %v31, 16
  %v231 = vrot.slane %v229, 5
  %v232 = vor.u32 %v228, %v231
  %v233 = vrot.slane %v232, 4
  %v235 = vshll.u32 %v63, 16
  %v237 = vrot.slane %v235, 5
  %v238 = vsel %vm70, %v233, %v237
  %v240 = vshrl.u32 %v32, 16
  %v242 = vrot.slane %v240, 4
  %v243 = vshll.u32 %v32, 16
  %v245 = vrot.slane %v243, 5
  %v246 = vor.u32 %v242, %v245
  %v247 = vrot.slane %v246, 4
  %v249 = vshll.u32 %v64, 16
  %v251 = vrot.slane %v249, 5
  %v252 = vsel %vm70, %v247, %v251
  %v254 = vshrl.u32 %v33, 16
  %v256 = vrot.slane %v254, 4
  %v257 = vshll.u32 %v33, 16
  %v259 = vrot.slane %v257, 5
  %v260 = vor.u32 %v256, %v259
  %v261 = vrot.slane %v260, 4
  %v263 = vshll.u32 %v65, 16
  %v265 = vrot.slane %v263, 5
  %v266 = vsel %vm70, %v261, %v265
  %v268 = vshrl.u32 %v34, 16
  %v270 = vrot.slane %v268, 4
  %v271 = vshll.u32 %v34, 16
  %v273 = vrot.slane %v271, 5
  %v274 = vor.u32 %v270, %v273
  %v275 = vrot.slane %v274, 4
  %v277 = vshll.u32 %v66, 16
  %v279 = vrot.slane %v277, 5
  %v280 = vsel %vm70, %v275, %v279
  %v282 = vshrl.u32 %v35, 16
  %v284 = vrot.slane %v282, 4
  %v285 = vshll.u32 %v35, 16
  %v287 = vrot.slane %v285, 5
  %v288 = vor.u32 %v284, %v287
  %v289 = vrot.slane %v288, 4
  %v291 = vshll.u32 %v67, 16
  %v293 = vrot.slane %v291, 5
  %v294 = vsel %vm70, %v289, %v293
  %v295 = vld [vmem:[%s1 + $0x40] sm:$0xf]
  %v296 = vld [vmem:[%s1 + $0x44] sm:$0xf]
  %v297 = vld [vmem:[%s1 + $0x48] sm:$0xf]
  %v298 = vld [vmem:[%s1 + $0x4c] sm:$0xf]
  %v299 = vld [vmem:[%s1 + $0x50] sm:$0xf]
  %v300 = vld [vmem:[%s1 + $0x54] sm:$0xf]
  %v301 = vld [vmem:[%s1 + $0x58] sm:$0xf]
  %v302 = vld [vmem:[%s1 + $0x5c] sm:$0xf]
  %v303 = vld [vmem:[%s1 + $0x60] sm:$0xf]
  %v304 = vld [vmem:[%s1 + $0x64] sm:$0xf]
  %v305 = vld [vmem:[%s1 + $0x68] sm:$0xf]
  %v306 = vld [vmem:[%s1 + $0x6c] sm:$0xf]
  %v307 = vld [vmem:[%s1 + $0x70] sm:$0xf]
  %v308 = vld [vmem:[%s1 + $0x74] sm:$0xf]
  %v309 = vld [vmem:[%s1 + $0x78] sm:$0xf]
  %v310 = vld [vmem:[%s1 + $0x7c] sm:$0xf]
  %v311 = vunpack.c.l.b16 %v84
  %v312 = vunpack.c.l.b16 %v98
  %v313 = vunpack.c.l.b16 %v112
  %v314 = vunpack.c.l.b16 %v126
  %v315 = vunpack.c.l.b16 %v140
  %v316 = vunpack.c.l.b16 %v154
  %v317 = vunpack.c.l.b16 %v168
  %v318 = vunpack.c.l.b16 %v182
  %v319 = vunpack.c.l.b16 %v196
  %v320 = vunpack.c.l.b16 %v210
  %v321 = vunpack.c.l.b16 %v224
  %v322 = vunpack.c.l.b16 %v238
  %v323 = vunpack.c.l.b16 %v252
  %v324 = vunpack.c.l.b16 %v266
  %v325 = vunpack.c.l.b16 %v280
  %v326 = vunpack.c.l.b16 %v294
  %v327 = vpack.c.b16 %v312, %v311
  %v328 = vpack.c.b16 %v314, %v313
  %v329 = vpack.c.b16 %v316, %v315
  %v330 = vpack.c.b16 %v318, %v317
  %v331 = vpack.c.b16 %v320, %v319
  %v332 = vpack.c.b16 %v322, %v321
  %v333 = vpack.c.b16 %v324, %v323
  %v334 = vpack.c.b16 %v326, %v325
  %v359 = vunpack.c.l.b16 %v295
  %v360 = vunpack.c.l.b16 %v296
  %v361 = vunpack.c.l.b16 %v297
  %v362 = vunpack.c.l.b16 %v298
  %v363 = vunpack.c.l.b16 %v299
  %v364 = vunpack.c.l.b16 %v300
  %v365 = vunpack.c.l.b16 %v301
  %v366 = vunpack.c.l.b16 %v302
  %v367 = vunpack.c.l.b16 %v303
  %v368 = vunpack.c.l.b16 %v304
  %v369 = vunpack.c.l.b16 %v305
  %v370 = vunpack.c.l.b16 %v306
  %v371 = vunpack.c.l.b16 %v307
  %v372 = vunpack.c.l.b16 %v308
  %v373 = vunpack.c.l.b16 %v309
  %v374 = vunpack.c.l.b16 %v310
  %v375 = vpack.c.b16 %v360, %v359
  %v376 = vpack.c.b16 %v362, %v361
  %v377 = vpack.c.b16 %v364, %v363
  %v378 = vpack.c.b16 %v366, %v365
  %v379 = vpack.c.b16 %v368, %v367
  %v380 = vpack.c.b16 %v370, %v369
  %v381 = vpack.c.b16 %v372, %v371
  %v382 = vpack.c.b16 %v374, %v373
  %391 = vmatpush.bf16.msra.mxu0 %v382
  %392 = vmatpush.bf16.msra.mxu0 %v381
  %393 = vmatpush.bf16.msra.mxu0 %v380
  %394 = vmatpush.bf16.msra.mxu0 %v379
  %395 = vmatpush.bf16.msra.mxu0 %v378
  %396 = vmatpush.bf16.msra.mxu0 %v377
  %397 = vmatpush.bf16.msra.mxu0 %v376
  %398 = vmatpush.bf16.msra.mxu0 %v375
  %399 = vmatmul.bf16.gmra.mxu0 %v327
  %v400 = vpop.f32.mrf.mxu0
  %v401 = vadd.f32 0.0, %v400
  %v402 = vpop.f32.mrf.mxu0
  %v403 = vadd.f32 0.0, %v402
  %404 = vmatmul.bf16.gmra.mxu0 %v328
  %v405 = vpop.f32.mrf.mxu0
  %v406 = vadd.f32 0.0, %v405
  %v407 = vpop.f32.mrf.mxu0
  %v408 = vadd.f32 0.0, %v407
  %409 = vmatmul.bf16.gmra.mxu0 %v329
  %v410 = vpop.f32.mrf.mxu0
  %v411 = vadd.f32 0.0, %v410
  %v412 = vpop.f32.mrf.mxu0
  %v413 = vadd.f32 0.0, %v412
  %414 = vmatmul.bf16.gmra.mxu0 %v330
  %v415 = vpop.f32.mrf.mxu0
  %v416 = vadd.f32 0.0, %v415
  %v417 = vpop.f32.mrf.mxu0
  %v418 = vadd.f32 0.0, %v417
  %419 = vmatmul.bf16.gmra.mxu0 %v331
  %v420 = vpop.f32.mrf.mxu0
  %v421 = vadd.f32 0.0, %v420
  %v422 = vpop.f32.mrf.mxu0
  %v423 = vadd.f32 0.0, %v422
  %424 = vmatmul.bf16.gmra.mxu0 %v332
  %v425 = vpop.f32.mrf.mxu0
  %v426 = vadd.f32 0.0, %v425
  %v427 = vpop.f32.mrf.mxu0
  %v428 = vadd.f32 0.0, %v427
  %429 = vmatmul.bf16.gmra.mxu0 %v333
  %v430 = vpop.f32.mrf.mxu0
  %v431 = vadd.f32 0.0, %v430
  %v432 = vpop.f32.mrf.mxu0
  %v433 = vadd.f32 0.0, %v432
  %434 = vmatmul.bf16.gmra.mxu0 %v334
  %v435 = vpop.f32.mrf.mxu0
  %v436 = vadd.f32 0.0, %v435
  %v437 = vpop.f32.mrf.mxu0
  %v438 = vadd.f32 0.0, %v437
  %439 = vdwg.mxu0
  %v456 = vunpack.c.l.b16 %v20
  %v457 = vunpack.c.l.b16 %v21
  %v458 = vunpack.c.l.b16 %v22
  %v459 = vunpack.c.l.b16 %v23
  %v460 = vunpack.c.l.b16 %v24
  %v461 = vunpack.c.l.b16 %v25
  %v462 = vunpack.c.l.b16 %v26
  %v463 = vunpack.c.l.b16 %v27
  %v464 = vunpack.c.l.b16 %v28
  %v465 = vunpack.c.l.b16 %v29
  %v466 = vunpack.c.l.b16 %v30
  %v467 = vunpack.c.l.b16 %v31
  %v468 = vunpack.c.l.b16 %v32
  %v469 = vunpack.c.l.b16 %v33
  %v470 = vunpack.c.l.b16 %v34
  %v471 = vunpack.c.l.b16 %v35
  %v472 = vpack.c.b16 %v457, %v456
  %v473 = vpack.c.b16 %v459, %v458
  %v474 = vpack.c.b16 %v461, %v460
  %v475 = vpack.c.b16 %v463, %v462
  %v476 = vpack.c.b16 %v465, %v464
  %v477 = vpack.c.b16 %v467, %v466
  %v478 = vpack.c.b16 %v469, %v468
  %v479 = vpack.c.b16 %v471, %v470
  %v504 = vunpack.c.l.b16 %v36
  %v505 = vunpack.c.l.b16 %v37
  %v506 = vunpack.c.l.b16 %v38
  %v507 = vunpack.c.l.b16 %v39
  %v508 = vunpack.c.l.b16 %v40
  %v509 = vunpack.c.l.b16 %v41
  %v510 = vunpack.c.l.b16 %v42
  %v511 = vunpack.c.l.b16 %v43
  %v512 = vunpack.c.l.b16 %v44
  %v513 = vunpack.c.l.b16 %v45
  %v514 = vunpack.c.l.b16 %v46
  %v515 = vunpack.c.l.b16 %v47
  %v516 = vunpack.c.l.b16 %v48
  %v517 = vunpack.c.l.b16 %v49
  %v518 = vunpack.c.l.b16 %v50
  %v519 = vunpack.c.l.b16 %v51
  %v520 = vpack.c.b16 %v505, %v504
  %v521 = vpack.c.b16 %v507, %v506
  %v522 = vpack.c.b16 %v509, %v508
  %v523 = vpack.c.b16 %v511, %v510
  %v524 = vpack.c.b16 %v513, %v512
  %v525 = vpack.c.b16 %v515, %v514
  %v526 = vpack.c.b16 %v517, %v516
  %v527 = vpack.c.b16 %v519, %v518
  %536 = vmatpush.bf16.msra.mxu0 %v527
  %537 = vmatpush.bf16.msra.mxu0 %v526
  %538 = vmatpush.bf16.msra.mxu0 %v525
  %539 = vmatpush.bf16.msra.mxu0 %v524
  %540 = vmatpush.bf16.msra.mxu0 %v523
  %541 = vmatpush.bf16.msra.mxu0 %v522
  %542 = vmatpush.bf16.msra.mxu0 %v521
  %543 = vmatpush.bf16.msra.mxu0 %v520
  %544 = vmatmul.bf16.gmra.mxu0 %v472
  %v545 = vpop.f32.mrf.mxu0
  %v546 = vadd.f32 %v401, %v545
  %v547 = vpop.f32.mrf.mxu0
  %v548 = vadd.f32 %v403, %v547
  %549 = vmatmul.bf16.gmra.mxu0 %v473
  %v550 = vpop.f32.mrf.mxu0
  %v551 = vadd.f32 %v406, %v550
  %v552 = vpop.f32.mrf.mxu0
  %v553 = vadd.f32 %v408, %v552
  %554 = vmatmul.bf16.gmra.mxu0 %v474
  %v555 = vpop.f32.mrf.mxu0
  %v556 = vadd.f32 %v411, %v555
  %v557 = vpop.f32.mrf.mxu0
  %v558 = vadd.f32 %v413, %v557
  %559 = vmatmul.bf16.gmra.mxu0 %v475
  %v560 = vpop.f32.mrf.mxu0
  %v561 = vadd.f32 %v416, %v560
  %v562 = vpop.f32.mrf.mxu0
  %v563 = vadd.f32 %v418, %v562
  %564 = vmatmul.bf16.gmra.mxu0 %v476
  %v565 = vpop.f32.mrf.mxu0
  %v566 = vadd.f32 %v421, %v565
  %v567 = vpop.f32.mrf.mxu0
  %v568 = vadd.f32 %v423, %v567
  %569 = vmatmul.bf16.gmra.mxu0 %v477
  %v570 = vpop.f32.mrf.mxu0
  %v571 = vadd.f32 %v426, %v570
  %v572 = vpop.f32.mrf.mxu0
  %v573 = vadd.f32 %v428, %v572
  %574 = vmatmul.bf16.gmra.mxu0 %v478
  %v575 = vpop.f32.mrf.mxu0
  %v576 = vadd.f32 %v431, %v575
  %v577 = vpop.f32.mrf.mxu0
  %v578 = vadd.f32 %v433, %v577
  %579 = vmatmul.bf16.gmra.mxu0 %v479
  %v580 = vpop.f32.mrf.mxu0
  %v581 = vadd.f32 %v436, %v580
  %v582 = vpop.f32.mrf.mxu0
  %v583 = vadd.f32 %v438, %v582
  %584 = vdwg.mxu0
  %v585 = vld [vmem:[%s0] sm:$0xe]
  %v586 = vld [vmem:[%s0 + $0x8] sm:$0xe]
  %v587 = vld [vmem:[%s0 + $0x10] sm:$0xe]
  %v588 = vld [vmem:[%s0 + $0x18] sm:$0xe]
  %v589 = vld [vmem:[%s0 + $0x20] sm:$0xe]
  %v590 = vld [vmem:[%s0 + $0x28] sm:$0xe]
  %v591 = vld [vmem:[%s0 + $0x30] sm:$0xe]
  %v592 = vld [vmem:[%s0 + $0x38] sm:$0xe]
  %v593 = vld [vmem:[%s0 + $0x50] sm:$0xe]
  %v594 = vld [vmem:[%s0 + $0x58] sm:$0xe]
  %v595 = vld [vmem:[%s0 + $0x60] sm:$0xe]
  %v596 = vld [vmem:[%s0 + $0x68] sm:$0xe]
  %v597 = vld [vmem:[%s0 + $0x70] sm:$0xe]
  %v598 = vld [vmem:[%s0 + $0x78] sm:$0xe]
  %v599 = vld [vmem:[%s0 + $0x80] sm:$0xe]
  %v600 = vld [vmem:[%s0 + $0x88] sm:$0xe]
  %vm633 = vcmask 1042432
  %vm634 = vcmask 1046532
  %vm635 = vmor %vm633, %vm634
  %v636 = vrot.slane %v585, 5
  %v637 = vrot.slane %v636, 4
  %v638 = vrot.slane %v52, 5
  %v639 = vsel %vm635, %v637, %v638
  %v640 = vrot.slane %v586, 5
  %v641 = vrot.slane %v640, 4
  %v642 = vrot.slane %v53, 5
  %v643 = vsel %vm635, %v641, %v642
  %v644 = vrot.slane %v587, 5
  %v645 = vrot.slane %v644, 4
  %v646 = vrot.slane %v54, 5
  %v647 = vsel %vm635, %v645, %v646
  %v648 = vrot.slane %v588, 5
  %v649 = vrot.slane %v648, 4
  %v650 = vrot.slane %v55, 5
  %v651 = vsel %vm635, %v649, %v650
  %v652 = vrot.slane %v589, 5
  %v653 = vrot.slane %v652, 4
  %v654 = vrot.slane %v56, 5
  %v655 = vsel %vm635, %v653, %v654
  %v656 = vrot.slane %v590, 5
  %v657 = vrot.slane %v656, 4
  %v658 = vrot.slane %v57, 5
  %v659 = vsel %vm635, %v657, %v658
  %v660 = vrot.slane %v591, 5
  %v661 = vrot.slane %v660, 4
  %v662 = vrot.slane %v58, 5
  %v663 = vsel %vm635, %v661, %v662
  %v664 = vrot.slane %v592, 5
  %v665 = vrot.slane %v664, 4
  %v666 = vrot.slane %v59, 5
  %v667 = vsel %vm635, %v665, %v666
  %v668 = vrot.slane %v593, 5
  %v669 = vrot.slane %v668, 4
  %v670 = vrot.slane %v60, 5
  %v671 = vsel %vm635, %v669, %v670
  %v672 = vrot.slane %v594, 5
  %v673 = vrot.slane %v672, 4
  %v674 = vrot.slane %v61, 5
  %v675 = vsel %vm635, %v673, %v674
  %v676 = vrot.slane %v595, 5
  %v677 = vrot.slane %v676, 4
  %v678 = vrot.slane %v62, 5
  %v679 = vsel %vm635, %v677, %v678
  %v680 = vrot.slane %v596, 5
  %v681 = vrot.slane %v680, 4
  %v682 = vrot.slane %v63, 5
  %v683 = vsel %vm635, %v681, %v682
  %v684 = vrot.slane %v597, 5
  %v685 = vrot.slane %v684, 4
  %v686 = vrot.slane %v64, 5
  %v687 = vsel %vm635, %v685, %v686
  %v688 = vrot.slane %v598, 5
  %v689 = vrot.slane %v688, 4
  %v690 = vrot.slane %v65, 5
  %v691 = vsel %vm635, %v689, %v690
  %v692 = vrot.slane %v599, 5
  %v693 = vrot.slane %v692, 4
  %v694 = vrot.slane %v66, 5
  %v695 = vsel %vm635, %v693, %v694
  %v696 = vrot.slane %v600, 5
  %v697 = vrot.slane %v696, 4
  %v698 = vrot.slane %v67, 5
  %v699 = vsel %vm635, %v697, %v698
  %v700 = vld [vmem:[%s1 + $0x80] sm:$0xf]
  %v701 = vld [vmem:[%s1 + $0x84] sm:$0xf]
  %v702 = vld [vmem:[%s1 + $0x88] sm:$0xf]
  %v703 = vld [vmem:[%s1 + $0x8c] sm:$0xf]
  %v704 = vld [vmem:[%s1 + $0x90] sm:$0xf]
  %v705 = vld [vmem:[%s1 + $0x94] sm:$0xf]
  %v706 = vld [vmem:[%s1 + $0x98] sm:$0xf]
  %v707 = vld [vmem:[%s1 + $0x9c] sm:$0xf]
  %v708 = vld [vmem:[%s1 + $0xa0] sm:$0xf]
  %v709 = vld [vmem:[%s1 + $0xa4] sm:$0xf]
  %v710 = vld [vmem:[%s1 + $0xa8] sm:$0xf]
  %v711 = vld [vmem:[%s1 + $0xac] sm:$0xf]
  %v712 = vld [vmem:[%s1 + $0xb0] sm:$0xf]
  %v713 = vld [vmem:[%s1 + $0xb4] sm:$0xf]
  %v714 = vld [vmem:[%s1 + $0xb8] sm:$0xf]
  %v715 = vld [vmem:[%s1 + $0xbc] sm:$0xf]
  %v716 = vunpack.c.l.b16 %v639
  %v717 = vunpack.c.l.b16 %v643
  %v718 = vunpack.c.l.b16 %v647
  %v719 = vunpack.c.l.b16 %v651
  %v720 = vunpack.c.l.b16 %v655
  %v721 = vunpack.c.l.b16 %v659
  %v722 = vunpack.c.l.b16 %v663
  %v723 = vunpack.c.l.b16 %v667
  %v724 = vunpack.c.l.b16 %v671
  %v725 = vunpack.c.l.b16 %v675
  %v726 = vunpack.c.l.b16 %v679
  %v727 = vunpack.c.l.b16 %v683
  %v728 = vunpack.c.l.b16 %v687
  %v729 = vunpack.c.l.b16 %v691
  %v730 = vunpack.c.l.b16 %v695
  %v731 = vunpack.c.l.b16 %v699
  %v732 = vpack.c.b16 %v717, %v716
  %v733 = vpack.c.b16 %v719, %v718
  %v734 = vpack.c.b16 %v721, %v720
  %v735 = vpack.c.b16 %v723, %v722
  %v736 = vpack.c.b16 %v725, %v724
  %v737 = vpack.c.b16 %v727, %v726
  %v738 = vpack.c.b16 %v729, %v728
  %v739 = vpack.c.b16 %v731, %v730
  %v764 = vunpack.c.l.b16 %v700
  %v765 = vunpack.c.l.b16 %v701
  %v766 = vunpack.c.l.b16 %v702
  %v767 = vunpack.c.l.b16 %v703
  %v768 = vunpack.c.l.b16 %v704
  %v769 = vunpack.c.l.b16 %v705
  %v770 = vunpack.c.l.b16 %v706
  %v771 = vunpack.c.l.b16 %v707
  %v772 = vunpack.c.l.b16 %v708
  %v773 = vunpack.c.l.b16 %v709
  %v774 = vunpack.c.l.b16 %v710
  %v775 = vunpack.c.l.b16 %v711
  %v776 = vunpack.c.l.b16 %v712
  %v777 = vunpack.c.l.b16 %v713
  %v778 = vunpack.c.l.b16 %v714
  %v779 = vunpack.c.l.b16 %v715
  %v780 = vpack.c.b16 %v765, %v764
  %v781 = vpack.c.b16 %v767, %v766
  %v782 = vpack.c.b16 %v769, %v768
  %v783 = vpack.c.b16 %v771, %v770
  %v784 = vpack.c.b16 %v773, %v772
  %v785 = vpack.c.b16 %v775, %v774
  %v786 = vpack.c.b16 %v777, %v776
  %v787 = vpack.c.b16 %v779, %v778
  %796 = vmatpush.bf16.msra.mxu0 %v787
  %797 = vmatpush.bf16.msra.mxu0 %v786
  %798 = vmatpush.bf16.msra.mxu0 %v785
  %799 = vmatpush.bf16.msra.mxu0 %v784
  %800 = vmatpush.bf16.msra.mxu0 %v783
  %801 = vmatpush.bf16.msra.mxu0 %v782
  %802 = vmatpush.bf16.msra.mxu0 %v781
  %803 = vmatpush.bf16.msra.mxu0 %v780
  %804 = vmatmul.bf16.gmra.mxu0 %v732
  %v805 = vpop.f32.mrf.mxu0
  %v806 = vadd.f32 0.0, %v805
  %v807 = vpop.f32.mrf.mxu0
  %v808 = vadd.f32 0.0, %v807
  %809 = vmatmul.bf16.gmra.mxu0 %v733
  %v810 = vpop.f32.mrf.mxu0
  %v811 = vadd.f32 0.0, %v810
  %v812 = vpop.f32.mrf.mxu0
  %v813 = vadd.f32 0.0, %v812
  %814 = vmatmul.bf16.gmra.mxu0 %v734
  %v815 = vpop.f32.mrf.mxu0
  %v816 = vadd.f32 0.0, %v815
  %v817 = vpop.f32.mrf.mxu0
  %v818 = vadd.f32 0.0, %v817
  %819 = vmatmul.bf16.gmra.mxu0 %v735
  %v820 = vpop.f32.mrf.mxu0
  %v821 = vadd.f32 0.0, %v820
  %v822 = vpop.f32.mrf.mxu0
  %v823 = vadd.f32 0.0, %v822
  %824 = vmatmul.bf16.gmra.mxu0 %v736
  %v825 = vpop.f32.mrf.mxu0
  %v826 = vadd.f32 0.0, %v825
  %v827 = vpop.f32.mrf.mxu0
  %v828 = vadd.f32 0.0, %v827
  %829 = vmatmul.bf16.gmra.mxu0 %v737
  %v830 = vpop.f32.mrf.mxu0
  %v831 = vadd.f32 0.0, %v830
  %v832 = vpop.f32.mrf.mxu0
  %v833 = vadd.f32 0.0, %v832
  %834 = vmatmul.bf16.gmra.mxu0 %v738
  %v835 = vpop.f32.mrf.mxu0
  %v836 = vadd.f32 0.0, %v835
  %v837 = vpop.f32.mrf.mxu0
  %v838 = vadd.f32 0.0, %v837
  %839 = vmatmul.bf16.gmra.mxu0 %v739
  %v840 = vpop.f32.mrf.mxu0
  %v841 = vadd.f32 0.0, %v840
  %v842 = vpop.f32.mrf.mxu0
  %v843 = vadd.f32 0.0, %v842
  %844 = vdwg.mxu0
  %v845 = vadd.f32 %v546, %v806
  %v846 = vadd.f32 %v548, %v808
  %v847 = vadd.f32 %v551, %v811
  %v848 = vadd.f32 %v553, %v813
  %v849 = vadd.f32 %v556, %v816
  %v850 = vadd.f32 %v558, %v818
  %v851 = vadd.f32 %v561, %v821
  %v852 = vadd.f32 %v563, %v823
  %v853 = vadd.f32 %v566, %v826
  %v854 = vadd.f32 %v568, %v828
  %v855 = vadd.f32 %v571, %v831
  %v856 = vadd.f32 %v573, %v833
  %v857 = vadd.f32 %v576, %v836
  %v858 = vadd.f32 %v578, %v838
  %v859 = vadd.f32 %v581, %v841
  %v860 = vadd.f32 %v583, %v843
  %s861 = scalar_lea.vmem %s0, 8
  %v862 = vld [vmem:[%s861] sm:$0xf]
  %v863 = vld [vmem:[%s861 + $0x8] sm:$0xf]
  %v864 = vld [vmem:[%s861 + $0x10] sm:$0xf]
  %v865 = vld [vmem:[%s861 + $0x18] sm:$0xf]
  %v866 = vld [vmem:[%s861 + $0x20] sm:$0xf]
  %v867 = vld [vmem:[%s861 + $0x28] sm:$0xf]
  %v868 = vld [vmem:[%s861 + $0x30] sm:$0xf]
  %v869 = vld [vmem:[%s861 + $0x38] sm:$0xf]
  %v870 = vld [vmem:[%s861 + $0x50] sm:$0xf]
  %v871 = vld [vmem:[%s861 + $0x58] sm:$0xf]
  %v872 = vld [vmem:[%s861 + $0x60] sm:$0xf]
  %v873 = vld [vmem:[%s861 + $0x68] sm:$0xf]
  %v874 = vld [vmem:[%s861 + $0x70] sm:$0xf]
  %v875 = vld [vmem:[%s861 + $0x78] sm:$0xf]
  %v876 = vld [vmem:[%s861 + $0x80] sm:$0xf]
  %v877 = vld [vmem:[%s861 + $0x88] sm:$0xf]
  %v878 = vld [vmem:[%s1 + $0xc0] sm:$0xf]
  %v879 = vld [vmem:[%s1 + $0xc4] sm:$0xf]
  %v880 = vld [vmem:[%s1 + $0xc8] sm:$0xf]
  %v881 = vld [vmem:[%s1 + $0xcc] sm:$0xf]
  %v882 = vld [vmem:[%s1 + $0xd0] sm:$0xf]
  %v883 = vld [vmem:[%s1 + $0xd4] sm:$0xf]
  %v884 = vld [vmem:[%s1 + $0xd8] sm:$0xf]
  %v885 = vld [vmem:[%s1 + $0xdc] sm:$0xf]
  %v886 = vld [vmem:[%s1 + $0xe0] sm:$0xf]
  %v887 = vld [vmem:[%s1 + $0xe4] sm:$0xf]
  %v888 = vld [vmem:[%s1 + $0xe8] sm:$0xf]
  %v889 = vld [vmem:[%s1 + $0xec] sm:$0xf]
  %v890 = vld [vmem:[%s1 + $0xf0] sm:$0xf]
  %v891 = vld [vmem:[%s1 + $0xf4] sm:$0xf]
  %v892 = vld [vmem:[%s1 + $0xf8] sm:$0xf]
  %v893 = vld [vmem:[%s1 + $0xfc] sm:$0xf]
  %v910 = vunpack.c.l.b16 %v862
  %v911 = vunpack.c.l.b16 %v863
  %v912 = vunpack.c.l.b16 %v864
  %v913 = vunpack.c.l.b16 %v865
  %v914 = vunpack.c.l.b16 %v866
  %v915 = vunpack.c.l.b16 %v867
  %v916 = vunpack.c.l.b16 %v868
  %v917 = vunpack.c.l.b16 %v869
  %v918 = vunpack.c.l.b16 %v870
  %v919 = vunpack.c.l.b16 %v871
  %v920 = vunpack.c.l.b16 %v872
  %v921 = vunpack.c.l.b16 %v873
  %v922 = vunpack.c.l.b16 %v874
  %v923 = vunpack.c.l.b16 %v875
  %v924 = vunpack.c.l.b16 %v876
  %v925 = vunpack.c.l.b16 %v877
  %v926 = vpack.c.b16 %v911, %v910
  %v927 = vpack.c.b16 %v913, %v912
  %v928 = vpack.c.b16 %v915, %v914
  %v929 = vpack.c.b16 %v917, %v916
  %v930 = vpack.c.b16 %v919, %v918
  %v931 = vpack.c.b16 %v921, %v920
  %v932 = vpack.c.b16 %v923, %v922
  %v933 = vpack.c.b16 %v925, %v924
  %v958 = vunpack.c.l.b16 %v878
  %v959 = vunpack.c.l.b16 %v879
  %v960 = vunpack.c.l.b16 %v880
  %v961 = vunpack.c.l.b16 %v881
  %v962 = vunpack.c.l.b16 %v882
  %v963 = vunpack.c.l.b16 %v883
  %v964 = vunpack.c.l.b16 %v884
  %v965 = vunpack.c.l.b16 %v885
  %v966 = vunpack.c.l.b16 %v886
  %v967 = vunpack.c.l.b16 %v887
  %v968 = vunpack.c.l.b16 %v888
  %v969 = vunpack.c.l.b16 %v889
  %v970 = vunpack.c.l.b16 %v890
  %v971 = vunpack.c.l.b16 %v891
  %v972 = vunpack.c.l.b16 %v892
  %v973 = vunpack.c.l.b16 %v893
  %v974 = vpack.c.b16 %v959, %v958
  %v975 = vpack.c.b16 %v961, %v960
  %v976 = vpack.c.b16 %v963, %v962
  %v977 = vpack.c.b16 %v965, %v964
  %v978 = vpack.c.b16 %v967, %v966
  %v979 = vpack.c.b16 %v969, %v968
  %v980 = vpack.c.b16 %v971, %v970
  %v981 = vpack.c.b16 %v973, %v972
  %990 = vmatpush.bf16.msra.mxu0 %v981
  %991 = vmatpush.bf16.msra.mxu0 %v980
  %992 = vmatpush.bf16.msra.mxu0 %v979
  %993 = vmatpush.bf16.msra.mxu0 %v978
  %994 = vmatpush.bf16.msra.mxu0 %v977
  %995 = vmatpush.bf16.msra.mxu0 %v976
  %996 = vmatpush.bf16.msra.mxu0 %v975
  %997 = vmatpush.bf16.msra.mxu0 %v974
  %998 = vmatmul.bf16.gmra.mxu0 %v926
  %v999 = vpop.f32.mrf.mxu0
  %v1000 = vadd.f32 0.0, %v999
  %v1001 = vpop.f32.mrf.mxu0
  %v1002 = vadd.f32 0.0, %v1001
  %1003 = vmatmul.bf16.gmra.mxu0 %v927
  %v1004 = vpop.f32.mrf.mxu0
  %v1005 = vadd.f32 0.0, %v1004
  %v1006 = vpop.f32.mrf.mxu0
  %v1007 = vadd.f32 0.0, %v1006
  %1008 = vmatmul.bf16.gmra.mxu0 %v928
  %v1009 = vpop.f32.mrf.mxu0
  %v1010 = vadd.f32 0.0, %v1009
  %v1011 = vpop.f32.mrf.mxu0
  %v1012 = vadd.f32 0.0, %v1011
  %1013 = vmatmul.bf16.gmra.mxu0 %v929
  %v1014 = vpop.f32.mrf.mxu0
  %v1015 = vadd.f32 0.0, %v1014
  %v1016 = vpop.f32.mrf.mxu0
  %v1017 = vadd.f32 0.0, %v1016
  %1018 = vmatmul.bf16.gmra.mxu0 %v930
  %v1019 = vpop.f32.mrf.mxu0
  %v1020 = vadd.f32 0.0, %v1019
  %v1021 = vpop.f32.mrf.mxu0
  %v1022 = vadd.f32 0.0, %v1021
  %1023 = vmatmul.bf16.gmra.mxu0 %v931
  %v1024 = vpop.f32.mrf.mxu0
  %v1025 = vadd.f32 0.0, %v1024
  %v1026 = vpop.f32.mrf.mxu0
  %v1027 = vadd.f32 0.0, %v1026
  %1028 = vmatmul.bf16.gmra.mxu0 %v932
  %v1029 = vpop.f32.mrf.mxu0
  %v1030 = vadd.f32 0.0, %v1029
  %v1031 = vpop.f32.mrf.mxu0
  %v1032 = vadd.f32 0.0, %v1031
  %1033 = vmatmul.bf16.gmra.mxu0 %v933
  %v1034 = vpop.f32.mrf.mxu0
  %v1035 = vadd.f32 0.0, %v1034
  %v1036 = vpop.f32.mrf.mxu0
  %v1037 = vadd.f32 0.0, %v1036
  %1038 = vdwg.mxu0
  %v1039 = vadd.f32 %v845, %v1000
  %v1040 = vadd.f32 %v846, %v1002
  %v1041 = vadd.f32 %v847, %v1005
  %v1042 = vadd.f32 %v848, %v1007
  %v1043 = vadd.f32 %v849, %v1010
  %v1044 = vadd.f32 %v850, %v1012
  %v1045 = vadd.f32 %v851, %v1015
  %v1046 = vadd.f32 %v852, %v1017
  %v1047 = vadd.f32 %v853, %v1020
  %v1048 = vadd.f32 %v854, %v1022
  %v1049 = vadd.f32 %v855, %v1025
  %v1050 = vadd.f32 %v856, %v1027
  %v1051 = vadd.f32 %v857, %v1030
  %v1052 = vadd.f32 %v858, %v1032
  %v1053 = vadd.f32 %v859, %v1035
  %v1054 = vadd.f32 %v860, %v1037
  %v1055 = vld [vmem:[%s861] sm:$0xf]
  %v1056 = vld [vmem:[%s861 + $0x4] sm:$0x1]
  %v1057 = vld [vmem:[%s861 + $0x8] sm:$0xf]
  %v1058 = vld [vmem:[%s861 + $0xc] sm:$0x1]
  %v1059 = vld [vmem:[%s861 + $0x10] sm:$0xf]
  %v1060 = vld [vmem:[%s861 + $0x14] sm:$0x1]
  %v1061 = vld [vmem:[%s861 + $0x18] sm:$0xf]
  %v1062 = vld [vmem:[%s861 + $0x1c] sm:$0x1]
  %v1063 = vld [vmem:[%s861 + $0x20] sm:$0xf]
  %v1064 = vld [vmem:[%s861 + $0x24] sm:$0x1]
  %v1065 = vld [vmem:[%s861 + $0x28] sm:$0xf]
  %v1066 = vld [vmem:[%s861 + $0x2c] sm:$0x1]
  %v1067 = vld [vmem:[%s861 + $0x30] sm:$0xf]
  %v1068 = vld [vmem:[%s861 + $0x34] sm:$0x1]
  %v1069 = vld [vmem:[%s861 + $0x38] sm:$0xf]
  %v1070 = vld [vmem:[%s861 + $0x3c] sm:$0x1]
  %v1071 = vld [vmem:[%s861 + $0x50] sm:$0xf]
  %v1072 = vld [vmem:[%s861 + $0x54] sm:$0x1]
  %v1073 = vld [vmem:[%s861 + $0x58] sm:$0xf]
  %v1074 = vld [vmem:[%s861 + $0x5c] sm:$0x1]
  %v1075 = vld [vmem:[%s861 + $0x60] sm:$0xf]
  %v1076 = vld [vmem:[%s861 + $0x64] sm:$0x1]
  %v1077 = vld [vmem:[%s861 + $0x68] sm:$0xf]
  %v1078 = vld [vmem:[%s861 + $0x6c] sm:$0x1]
  %v1079 = vld [vmem:[%s861 + $0x70] sm:$0xf]
  %v1080 = vld [vmem:[%s861 + $0x74] sm:$0x1]
  %v1081 = vld [vmem:[%s861 + $0x78] sm:$0xf]
  %v1082 = vld [vmem:[%s861 + $0x7c] sm:$0x1]
  %v1083 = vld [vmem:[%s861 + $0x80] sm:$0xf]
  %v1084 = vld [vmem:[%s861 + $0x84] sm:$0x1]
  %v1085 = vld [vmem:[%s861 + $0x88] sm:$0xf]
  %v1086 = vld [vmem:[%s861 + $0x8c] sm:$0x1]
  %v1088 = vshrl.u32 %v1055, 16
  %v1090 = vrot.slane %v1088, 4
  %v1091 = vshll.u32 %v1055, 16
  %v1093 = vrot.slane %v1091, 5
  %v1094 = vor.u32 %v1090, %v1093
  %v1095 = vrot.slane %v1094, 4
  %v1097 = vshll.u32 %v1056, 16
  %v1099 = vrot.slane %v1097, 5
  %v1100 = vsel %vm70, %v1095, %v1099
  %v1102 = vshrl.u32 %v1057, 16
  %v1104 = vrot.slane %v1102, 4
  %v1105 = vshll.u32 %v1057, 16
  %v1107 = vrot.slane %v1105, 5
  %v1108 = vor.u32 %v1104, %v1107
  %v1109 = vrot.slane %v1108, 4
  %v1111 = vshll.u32 %v1058, 16
  %v1113 = vrot.slane %v1111, 5
  %v1114 = vsel %vm70, %v1109, %v1113
  %v1116 = vshrl.u32 %v1059, 16
  %v1118 = vrot.slane %v1116, 4
  %v1119 = vshll.u32 %v1059, 16
  %v1121 = vrot.slane %v1119, 5
  %v1122 = vor.u32 %v1118, %v1121
  %v1123 = vrot.slane %v1122, 4
  %v1125 = vshll.u32 %v1060, 16
  %v1127 = vrot.slane %v1125, 5
  %v1128 = vsel %vm70, %v1123, %v1127
  %v1130 = vshrl.u32 %v1061, 16
  %v1132 = vrot.slane %v1130, 4
  %v1133 = vshll.u32 %v1061, 16
  %v1135 = vrot.slane %v1133, 5
  %v1136 = vor.u32 %v1132, %v1135
  %v1137 = vrot.slane %v1136, 4
  %v1139 = vshll.u32 %v1062, 16
  %v1141 = vrot.slane %v1139, 5
  %v1142 = vsel %vm70, %v1137, %v1141
  %v1144 = vshrl.u32 %v1063, 16
  %v1146 = vrot.slane %v1144, 4
  %v1147 = vshll.u32 %v1063, 16
  %v1149 = vrot.slane %v1147, 5
  %v1150 = vor.u32 %v1146, %v1149
  %v1151 = vrot.slane %v1150, 4
  %v1153 = vshll.u32 %v1064, 16
  %v1155 = vrot.slane %v1153, 5
  %v1156 = vsel %vm70, %v1151, %v1155
  %v1158 = vshrl.u32 %v1065, 16
  %v1160 = vrot.slane %v1158, 4
  %v1161 = vshll.u32 %v1065, 16
  %v1163 = vrot.slane %v1161, 5
  %v1164 = vor.u32 %v1160, %v1163
  %v1165 = vrot.slane %v1164, 4
  %v1167 = vshll.u32 %v1066, 16
  %v1169 = vrot.slane %v1167, 5
  %v1170 = vsel %vm70, %v1165, %v1169
  %v1172 = vshrl.u32 %v1067, 16
  %v1174 = vrot.slane %v1172, 4
  %v1175 = vshll.u32 %v1067, 16
  %v1177 = vrot.slane %v1175, 5
  %v1178 = vor.u32 %v1174, %v1177
  %v1179 = vrot.slane %v1178, 4
  %v1181 = vshll.u32 %v1068, 16
  %v1183 = vrot.slane %v1181, 5
  %v1184 = vsel %vm70, %v1179, %v1183
  %v1186 = vshrl.u32 %v1069, 16
  %v1188 = vrot.slane %v1186, 4
  %v1189 = vshll.u32 %v1069, 16
  %v1191 = vrot.slane %v1189, 5
  %v1192 = vor.u32 %v1188, %v1191
  %v1193 = vrot.slane %v1192, 4
  %v1195 = vshll.u32 %v1070, 16
  %v1197 = vrot.slane %v1195, 5
  %v1198 = vsel %vm70, %v1193, %v1197
  %v1200 = vshrl.u32 %v1071, 16
  %v1202 = vrot.slane %v1200, 4
  %v1203 = vshll.u32 %v1071, 16
  %v1205 = vrot.slane %v1203, 5
  %v1206 = vor.u32 %v1202, %v1205
  %v1207 = vrot.slane %v1206, 4
  %v1209 = vshll.u32 %v1072, 16
  %v1211 = vrot.slane %v1209, 5
  %v1212 = vsel %vm70, %v1207, %v1211
  %v1214 = vshrl.u32 %v1073, 16
  %v1216 = vrot.slane %v1214, 4
  %v1217 = vshll.u32 %v1073, 16
  %v1219 = vrot.slane %v1217, 5
  %v1220 = vor.u32 %v1216, %v1219
  %v1221 = vrot.slane %v1220, 4
  %v1223 = vshll.u32 %v1074, 16
  %v1225 = vrot.slane %v1223, 5
  %v1226 = vsel %vm70, %v1221, %v1225
  %v1228 = vshrl.u32 %v1075, 16
  %v1230 = vrot.slane %v1228, 4
  %v1231 = vshll.u32 %v1075, 16
  %v1233 = vrot.slane %v1231, 5
  %v1234 = vor.u32 %v1230, %v1233
  %v1235 = vrot.slane %v1234, 4
  %v1237 = vshll.u32 %v1076, 16
  %v1239 = vrot.slane %v1237, 5
  %v1240 = vsel %vm70, %v1235, %v1239
  %v1242 = vshrl.u32 %v1077, 16
  %v1244 = vrot.slane %v1242, 4
  %v1245 = vshll.u32 %v1077, 16
  %v1247 = vrot.slane %v1245, 5
  %v1248 = vor.u32 %v1244, %v1247
  %v1249 = vrot.slane %v1248, 4
  %v1251 = vshll.u32 %v1078, 16
  %v1253 = vrot.slane %v1251, 5
  %v1254 = vsel %vm70, %v1249, %v1253
  %v1256 = vshrl.u32 %v1079, 16
  %v1258 = vrot.slane %v1256, 4
  %v1259 = vshll.u32 %v1079, 16
  %v1261 = vrot.slane %v1259, 5
  %v1262 = vor.u32 %v1258, %v1261
  %v1263 = vrot.slane %v1262, 4
  %v1265 = vshll.u32 %v1080, 16
  %v1267 = vrot.slane %v1265, 5
  %v1268 = vsel %vm70, %v1263, %v1267
  %v1270 = vshrl.u32 %v1081, 16
  %v1272 = vrot.slane %v1270, 4
  %v1273 = vshll.u32 %v1081, 16
  %v1275 = vrot.slane %v1273, 5
  %v1276 = vor.u32 %v1272, %v1275
  %v1277 = vrot.slane %v1276, 4
  %v1279 = vshll.u32 %v1082, 16
  %v1281 = vrot.slane %v1279, 5
  %v1282 = vsel %vm70, %v1277, %v1281
  %v1284 = vshrl.u32 %v1083, 16
  %v1286 = vrot.slane %v1284, 4
  %v1287 = vshll.u32 %v1083, 16
  %v1289 = vrot.slane %v1287, 5
  %v1290 = vor.u32 %v1286, %v1289
  %v1291 = vrot.slane %v1290, 4
  %v1293 = vshll.u32 %v1084, 16
  %v1295 = vrot.slane %v1293, 5
  %v1296 = vsel %vm70, %v1291, %v1295
  %v1298 = vshrl.u32 %v1085, 16
  %v1300 = vrot.slane %v1298, 4
  %v1301 = vshll.u32 %v1085, 16
  %v1303 = vrot.slane %v1301, 5
  %v1304 = vor.u32 %v1300, %v1303
  %v1305 = vrot.slane %v1304, 4
  %v1307 = vshll.u32 %v1086, 16
  %v1309 = vrot.slane %v1307, 5
  %v1310 = vsel %vm70, %v1305, %v1309
  %v1311 = vld [vmem:[%s1 + $0x100] sm:$0xf]
  %v1312 = vld [vmem:[%s1 + $0x104] sm:$0xf]
  %v1313 = vld [vmem:[%s1 + $0x108] sm:$0xf]
  %v1314 = vld [vmem:[%s1 + $0x10c] sm:$0xf]
  %v1315 = vld [vmem:[%s1 + $0x110] sm:$0xf]
  %v1316 = vld [vmem:[%s1 + $0x114] sm:$0xf]
  %v1317 = vld [vmem:[%s1 + $0x118] sm:$0xf]
  %v1318 = vld [vmem:[%s1 + $0x11c] sm:$0xf]
  %v1319 = vld [vmem:[%s1 + $0x120] sm:$0xf]
  %v1320 = vld [vmem:[%s1 + $0x124] sm:$0xf]
  %v1321 = vld [vmem:[%s1 + $0x128] sm:$0xf]
  %v1322 = vld [vmem:[%s1 + $0x12c] sm:$0xf]
  %v1323 = vld [vmem:[%s1 + $0x130] sm:$0xf]
  %v1324 = vld [vmem:[%s1 + $0x134] sm:$0xf]
  %v1325 = vld [vmem:[%s1 + $0x138] sm:$0xf]
  %v1326 = vld [vmem:[%s1 + $0x13c] sm:$0xf]
  %v1327 = vunpack.c.l.b16 %v1100
  %v1328 = vunpack.c.l.b16 %v1114
  %v1329 = vunpack.c.l.b16 %v1128
  %v1330 = vunpack.c.l.b16 %v1142
  %v1331 = vunpack.c.l.b16 %v1156
  %v1332 = vunpack.c.l.b16 %v1170
  %v1333 = vunpack.c.l.b16 %v1184
  %v1334 = vunpack.c.l.b16 %v1198
  %v1335 = vunpack.c.l.b16 %v1212
  %v1336 = vunpack.c.l.b16 %v1226
  %v1337 = vunpack.c.l.b16 %v1240
  %v1338 = vunpack.c.l.b16 %v1254
  %v1339 = vunpack.c.l.b16 %v1268
  %v1340 = vunpack.c.l.b16 %v1282
  %v1341 = vunpack.c.l.b16 %v1296
  %v1342 = vunpack.c.l.b16 %v1310
  %v1343 = vpack.c.b16 %v1328, %v1327
  %v1344 = vpack.c.b16 %v1330, %v1329
  %v1345 = vpack.c.b16 %v1332, %v1331
  %v1346 = vpack.c.b16 %v1334, %v1333
  %v1347 = vpack.c.b16 %v1336, %v1335
  %v1348 = vpack.c.b16 %v1338, %v1337
  %v1349 = vpack.c.b16 %v1340, %v1339
  %v1350 = vpack.c.b16 %v1342, %v1341
  %v1375 = vunpack.c.l.b16 %v1311
  %v1376 = vunpack.c.l.b16 %v1312
  %v1377 = vunpack.c.l.b16 %v1313
  %v1378 = vunpack.c.l.b16 %v1314
  %v1379 = vunpack.c.l.b16 %v1315
  %v1380 = vunpack.c.l.b16 %v1316
  %v1381 = vunpack.c.l.b16 %v1317
  %v1382 = vunpack.c.l.b16 %v1318
  %v1383 = vunpack.c.l.b16 %v1319
  %v1384 = vunpack.c.l.b16 %v1320
  %v1385 = vunpack.c.l.b16 %v1321
  %v1386 = vunpack.c.l.b16 %v1322
  %v1387 = vunpack.c.l.b16 %v1323
  %v1388 = vunpack.c.l.b16 %v1324
  %v1389 = vunpack.c.l.b16 %v1325
  %v1390 = vunpack.c.l.b16 %v1326
  %v1391 = vpack.c.b16 %v1376, %v1375
  %v1392 = vpack.c.b16 %v1378, %v1377
  %v1393 = vpack.c.b16 %v1380, %v1379
  %v1394 = vpack.c.b16 %v1382, %v1381
  %v1395 = vpack.c.b16 %v1384, %v1383
  %v1396 = vpack.c.b16 %v1386, %v1385
  %v1397 = vpack.c.b16 %v1388, %v1387
  %v1398 = vpack.c.b16 %v1390, %v1389
  %1407 = vmatpush.bf16.msra.mxu0 %v1398
  %1408 = vmatpush.bf16.msra.mxu0 %v1397
  %1409 = vmatpush.bf16.msra.mxu0 %v1396
  %1410 = vmatpush.bf16.msra.mxu0 %v1395
  %1411 = vmatpush.bf16.msra.mxu0 %v1394
  %1412 = vmatpush.bf16.msra.mxu0 %v1393
  %1413 = vmatpush.bf16.msra.mxu0 %v1392
  %1414 = vmatpush.bf16.msra.mxu0 %v1391
  %1415 = vmatmul.bf16.gmra.mxu0 %v1343
  %v1416 = vpop.f32.mrf.mxu0
  %v1417 = vadd.f32 0.0, %v1416
  %v1418 = vpop.f32.mrf.mxu0
  %v1419 = vadd.f32 0.0, %v1418
  %1420 = vmatmul.bf16.gmra.mxu0 %v1344
  %v1421 = vpop.f32.mrf.mxu0
  %v1422 = vadd.f32 0.0, %v1421
  %v1423 = vpop.f32.mrf.mxu0
  %v1424 = vadd.f32 0.0, %v1423
  %1425 = vmatmul.bf16.gmra.mxu0 %v1345
  %v1426 = vpop.f32.mrf.mxu0
  %v1427 = vadd.f32 0.0, %v1426
  %v1428 = vpop.f32.mrf.mxu0
  %v1429 = vadd.f32 0.0, %v1428
  %1430 = vmatmul.bf16.gmra.mxu0 %v1346
  %v1431 = vpop.f32.mrf.mxu0
  %v1432 = vadd.f32 0.0, %v1431
  %v1433 = vpop.f32.mrf.mxu0
  %v1434 = vadd.f32 0.0, %v1433
  %1435 = vmatmul.bf16.gmra.mxu0 %v1347
  %v1436 = vpop.f32.mrf.mxu0
  %v1437 = vadd.f32 0.0, %v1436
  %v1438 = vpop.f32.mrf.mxu0
  %v1439 = vadd.f32 0.0, %v1438
  %1440 = vmatmul.bf16.gmra.mxu0 %v1348
  %v1441 = vpop.f32.mrf.mxu0
  %v1442 = vadd.f32 0.0, %v1441
  %v1443 = vpop.f32.mrf.mxu0
  %v1444 = vadd.f32 0.0, %v1443
  %1445 = vmatmul.bf16.gmra.mxu0 %v1349
  %v1446 = vpop.f32.mrf.mxu0
  %v1447 = vadd.f32 0.0, %v1446
  %v1448 = vpop.f32.mrf.mxu0
  %v1449 = vadd.f32 0.0, %v1448
  %1450 = vmatmul.bf16.gmra.mxu0 %v1350
  %v1451 = vpop.f32.mrf.mxu0
  %v1452 = vadd.f32 0.0, %v1451
  %v1453 = vpop.f32.mrf.mxu0
  %v1454 = vadd.f32 0.0, %v1453
  %1455 = vdwg.mxu0
  %v1456 = vadd.f32 %v1039, %v1417
  %v1457 = vadd.f32 %v1040, %v1419
  %v1458 = vadd.f32 %v1041, %v1422
  %v1459 = vadd.f32 %v1042, %v1424
  %v1460 = vadd.f32 %v1043, %v1427
  %v1461 = vadd.f32 %v1044, %v1429
  %v1462 = vadd.f32 %v1045, %v1432
  %v1463 = vadd.f32 %v1046, %v1434
  %v1464 = vadd.f32 %v1047, %v1437
  %v1465 = vadd.f32 %v1048, %v1439
  %v1466 = vadd.f32 %v1049, %v1442
  %v1467 = vadd.f32 %v1050, %v1444
  %v1468 = vadd.f32 %v1051, %v1447
  %v1469 = vadd.f32 %v1052, %v1449
  %v1470 = vadd.f32 %v1053, %v1452
  %v1471 = vadd.f32 %v1054, %v1454
  %v1472 = vld [vmem:[%s861] sm:$0xe]
  %v1473 = vld [vmem:[%s861 + $0x8] sm:$0xe]
  %v1474 = vld [vmem:[%s861 + $0x10] sm:$0xe]
  %v1475 = vld [vmem:[%s861 + $0x18] sm:$0xe]
  %v1476 = vld [vmem:[%s861 + $0x20] sm:$0xe]
  %v1477 = vld [vmem:[%s861 + $0x28] sm:$0xe]
  %v1478 = vld [vmem:[%s861 + $0x30] sm:$0xe]
  %v1479 = vld [vmem:[%s861 + $0x38] sm:$0xe]
  %v1480 = vld [vmem:[%s861 + $0x50] sm:$0xe]
  %v1481 = vld [vmem:[%s861 + $0x58] sm:$0xe]
  %v1482 = vld [vmem:[%s861 + $0x60] sm:$0xe]
  %v1483 = vld [vmem:[%s861 + $0x68] sm:$0xe]
  %v1484 = vld [vmem:[%s861 + $0x70] sm:$0xe]
  %v1485 = vld [vmem:[%s861 + $0x78] sm:$0xe]
  %v1486 = vld [vmem:[%s861 + $0x80] sm:$0xe]
  %v1487 = vld [vmem:[%s861 + $0x88] sm:$0xe]
  %v1520 = vrot.slane %v1472, 5
  %v1521 = vrot.slane %v1520, 4
  %v1522 = vrot.slane %v1056, 5
  %v1523 = vsel %vm635, %v1521, %v1522
  %v1524 = vrot.slane %v1473, 5
  %v1525 = vrot.slane %v1524, 4
  %v1526 = vrot.slane %v1058, 5
  %v1527 = vsel %vm635, %v1525, %v1526
  %v1528 = vrot.slane %v1474, 5
  %v1529 = vrot.slane %v1528, 4
  %v1530 = vrot.slane %v1060, 5
  %v1531 = vsel %vm635, %v1529, %v1530
  %v1532 = vrot.slane %v1475, 5
  %v1533 = vrot.slane %v1532, 4
  %v1534 = vrot.slane %v1062, 5
  %v1535 = vsel %vm635, %v1533, %v1534
  %v1536 = vrot.slane %v1476, 5
  %v1537 = vrot.slane %v1536, 4
  %v1538 = vrot.slane %v1064, 5
  %v1539 = vsel %vm635, %v1537, %v1538
  %v1540 = vrot.slane %v1477, 5
  %v1541 = vrot.slane %v1540, 4
  %v1542 = vrot.slane %v1066, 5
  %v1543 = vsel %vm635, %v1541, %v1542
  %v1544 = vrot.slane %v1478, 5
  %v1545 = vrot.slane %v1544, 4
  %v1546 = vrot.slane %v1068, 5
  %v1547 = vsel %vm635, %v1545, %v1546
  %v1548 = vrot.slane %v1479, 5
  %v1549 = vrot.slane %v1548, 4
  %v1550 = vrot.slane %v1070, 5
  %v1551 = vsel %vm635, %v1549, %v1550
  %v1552 = vrot.slane %v1480, 5
  %v1553 = vrot.slane %v1552, 4
  %v1554 = vrot.slane %v1072, 5
  %v1555 = vsel %vm635, %v1553, %v1554
  %v1556 = vrot.slane %v1481, 5
  %v1557 = vrot.slane %v1556, 4
  %v1558 = vrot.slane %v1074, 5
  %v1559 = vsel %vm635, %v1557, %v1558
  %v1560 = vrot.slane %v1482, 5
  %v1561 = vrot.slane %v1560, 4
  %v1562 = vrot.slane %v1076, 5
  %v1563 = vsel %vm635, %v1561, %v1562
  %v1564 = vrot.slane %v1483, 5
  %v1565 = vrot.slane %v1564, 4
  %v1566 = vrot.slane %v1078, 5
  %v1567 = vsel %vm635, %v1565, %v1566
  %v1568 = vrot.slane %v1484, 5
  %v1569 = vrot.slane %v1568, 4
  %v1570 = vrot.slane %v1080, 5
  %v1571 = vsel %vm635, %v1569, %v1570
  %v1572 = vrot.slane %v1485, 5
  %v1573 = vrot.slane %v1572, 4
  %v1574 = vrot.slane %v1082, 5
  %v1575 = vsel %vm635, %v1573, %v1574
  %v1576 = vrot.slane %v1486, 5
  %v1577 = vrot.slane %v1576, 4
  %v1578 = vrot.slane %v1084, 5
  %v1579 = vsel %vm635, %v1577, %v1578
  %v1580 = vrot.slane %v1487, 5
  %v1581 = vrot.slane %v1580, 4
  %v1582 = vrot.slane %v1086, 5
  %v1583 = vsel %vm635, %v1581, %v1582
  %v1584 = vld [vmem:[%s1 + $0x140] sm:$0xf]
  %v1585 = vld [vmem:[%s1 + $0x144] sm:$0xf]
  %v1586 = vld [vmem:[%s1 + $0x148] sm:$0xf]
  %v1587 = vld [vmem:[%s1 + $0x14c] sm:$0xf]
  %v1588 = vld [vmem:[%s1 + $0x150] sm:$0xf]
  %v1589 = vld [vmem:[%s1 + $0x154] sm:$0xf]
  %v1590 = vld [vmem:[%s1 + $0x158] sm:$0xf]
  %v1591 = vld [vmem:[%s1 + $0x15c] sm:$0xf]
  %v1592 = vld [vmem:[%s1 + $0x160] sm:$0xf]
  %v1593 = vld [vmem:[%s1 + $0x164] sm:$0xf]
  %v1594 = vld [vmem:[%s1 + $0x168] sm:$0xf]
  %v1595 = vld [vmem:[%s1 + $0x16c] sm:$0xf]
  %v1596 = vld [vmem:[%s1 + $0x170] sm:$0xf]
  %v1597 = vld [vmem:[%s1 + $0x174] sm:$0xf]
  %v1598 = vld [vmem:[%s1 + $0x178] sm:$0xf]
  %v1599 = vld [vmem:[%s1 + $0x17c] sm:$0xf]
  %v1600 = vunpack.c.l.b16 %v1523
  %v1601 = vunpack.c.l.b16 %v1527
  %v1602 = vunpack.c.l.b16 %v1531
  %v1603 = vunpack.c.l.b16 %v1535
  %v1604 = vunpack.c.l.b16 %v1539
  %v1605 = vunpack.c.l.b16 %v1543
  %v1606 = vunpack.c.l.b16 %v1547
  %v1607 = vunpack.c.l.b16 %v1551
  %v1608 = vunpack.c.l.b16 %v1555
  %v1609 = vunpack.c.l.b16 %v1559
  %v1610 = vunpack.c.l.b16 %v1563
  %v1611 = vunpack.c.l.b16 %v1567
  %v1612 = vunpack.c.l.b16 %v1571
  %v1613 = vunpack.c.l.b16 %v1575
  %v1614 = vunpack.c.l.b16 %v1579
  %v1615 = vunpack.c.l.b16 %v1583
  %v1616 = vpack.c.b16 %v1601, %v1600
  %v1617 = vpack.c.b16 %v1603, %v1602
  %v1618 = vpack.c.b16 %v1605, %v1604
  %v1619 = vpack.c.b16 %v1607, %v1606
  %v1620 = vpack.c.b16 %v1609, %v1608
  %v1621 = vpack.c.b16 %v1611, %v1610
  %v1622 = vpack.c.b16 %v1613, %v1612
  %v1623 = vpack.c.b16 %v1615, %v1614
  %v1648 = vunpack.c.l.b16 %v1584
  %v1649 = vunpack.c.l.b16 %v1585
  %v1650 = vunpack.c.l.b16 %v1586
  %v1651 = vunpack.c.l.b16 %v1587
  %v1652 = vunpack.c.l.b16 %v1588
  %v1653 = vunpack.c.l.b16 %v1589
  %v1654 = vunpack.c.l.b16 %v1590
  %v1655 = vunpack.c.l.b16 %v1591
  %v1656 = vunpack.c.l.b16 %v1592
  %v1657 = vunpack.c.l.b16 %v1593
  %v1658 = vunpack.c.l.b16 %v1594
  %v1659 = vunpack.c.l.b16 %v1595
  %v1660 = vunpack.c.l.b16 %v1596
  %v1661 = vunpack.c.l.b16 %v1597
  %v1662 = vunpack.c.l.b16 %v1598
  %v1663 = vunpack.c.l.b16 %v1599
  %v1664 = vpack.c.b16 %v1649, %v1648
  %v1665 = vpack.c.b16 %v1651, %v1650
  %v1666 = vpack.c.b16 %v1653, %v1652
  %v1667 = vpack.c.b16 %v1655, %v1654
  %v1668 = vpack.c.b16 %v1657, %v1656
  %v1669 = vpack.c.b16 %v1659, %v1658
  %v1670 = vpack.c.b16 %v1661, %v1660
  %v1671 = vpack.c.b16 %v1663, %v1662
  %1680 = vmatpush.bf16.msra.mxu0 %v1671
  %1681 = vmatpush.bf16.msra.mxu0 %v1670
  %1682 = vmatpush.bf16.msra.mxu0 %v1669
  %1683 = vmatpush.bf16.msra.mxu0 %v1668
  %1684 = vmatpush.bf16.msra.mxu0 %v1667
  %1685 = vmatpush.bf16.msra.mxu0 %v1666
  %1686 = vmatpush.bf16.msra.mxu0 %v1665
  %1687 = vmatpush.bf16.msra.mxu0 %v1664
  %1688 = vmatmul.bf16.gmra.mxu0 %v1616
  %v1689 = vpop.f32.mrf.mxu0
  %v1690 = vadd.f32 0.0, %v1689
  %v1691 = vpop.f32.mrf.mxu0
  %v1692 = vadd.f32 0.0, %v1691
  %1693 = vmatmul.bf16.gmra.mxu0 %v1617
  %v1694 = vpop.f32.mrf.mxu0
  %v1695 = vadd.f32 0.0, %v1694
  %v1696 = vpop.f32.mrf.mxu0
  %v1697 = vadd.f32 0.0, %v1696
  %1698 = vmatmul.bf16.gmra.mxu0 %v1618
  %v1699 = vpop.f32.mrf.mxu0
  %v1700 = vadd.f32 0.0, %v1699
  %v1701 = vpop.f32.mrf.mxu0
  %v1702 = vadd.f32 0.0, %v1701
  %1703 = vmatmul.bf16.gmra.mxu0 %v1619
  %v1704 = vpop.f32.mrf.mxu0
  %v1705 = vadd.f32 0.0, %v1704
  %v1706 = vpop.f32.mrf.mxu0
  %v1707 = vadd.f32 0.0, %v1706
  %1708 = vmatmul.bf16.gmra.mxu0 %v1620
  %v1709 = vpop.f32.mrf.mxu0
  %v1710 = vadd.f32 0.0, %v1709
  %v1711 = vpop.f32.mrf.mxu0
  %v1712 = vadd.f32 0.0, %v1711
  %1713 = vmatmul.bf16.gmra.mxu0 %v1621
  %v1714 = vpop.f32.mrf.mxu0
  %v1715 = vadd.f32 0.0, %v1714
  %v1716 = vpop.f32.mrf.mxu0
  %v1717 = vadd.f32 0.0, %v1716
  %1718 = vmatmul.bf16.gmra.mxu0 %v1622
  %v1719 = vpop.f32.mrf.mxu0
  %v1720 = vadd.f32 0.0, %v1719
  %v1721 = vpop.f32.mrf.mxu0
  %v1722 = vadd.f32 0.0, %v1721
  %1723 = vmatmul.bf16.gmra.mxu0 %v1623
  %v1724 = vpop.f32.mrf.mxu0
  %v1725 = vadd.f32 0.0, %v1724
  %v1726 = vpop.f32.mrf.mxu0
  %v1727 = vadd.f32 0.0, %v1726
  %1728 = vdwg.mxu0
  %v1729 = vadd.f32 %v1456, %v1690
  %v1730 = vadd.f32 %v1457, %v1692
  %v1731 = vadd.f32 %v1458, %v1695
  %v1732 = vadd.f32 %v1459, %v1697
  %v1733 = vadd.f32 %v1460, %v1700
  %v1734 = vadd.f32 %v1461, %v1702
  %v1735 = vadd.f32 %v1462, %v1705
  %v1736 = vadd.f32 %v1463, %v1707
  %v1737 = vadd.f32 %v1464, %v1710
  %v1738 = vadd.f32 %v1465, %v1712
  %v1739 = vadd.f32 %v1466, %v1715
  %v1740 = vadd.f32 %v1467, %v1717
  %v1741 = vadd.f32 %v1468, %v1720
  %v1742 = vadd.f32 %v1469, %v1722
  %v1743 = vadd.f32 %v1470, %v1725
  %v1744 = vadd.f32 %v1471, %v1727
  %s1745 = scalar_lea.vmem %s0, 16
  %v1746 = vld [vmem:[%s1745] sm:$0xf]
  %v1747 = vld [vmem:[%s1745 + $0x8] sm:$0xf]
  %v1748 = vld [vmem:[%s1745 + $0x10] sm:$0xf]
  %v1749 = vld [vmem:[%s1745 + $0x18] sm:$0xf]
  %v1750 = vld [vmem:[%s1745 + $0x20] sm:$0xf]
  %v1751 = vld [vmem:[%s1745 + $0x28] sm:$0xf]
  %v1752 = vld [vmem:[%s1745 + $0x30] sm:$0xf]
  %v1753 = vld [vmem:[%s1745 + $0x38] sm:$0xf]
  %v1754 = vld [vmem:[%s1745 + $0x50] sm:$0xf]
  %v1755 = vld [vmem:[%s1745 + $0x58] sm:$0xf]
  %v1756 = vld [vmem:[%s1745 + $0x60] sm:$0xf]
  %v1757 = vld [vmem:[%s1745 + $0x68] sm:$0xf]
  %v1758 = vld [vmem:[%s1745 + $0x70] sm:$0xf]
  %v1759 = vld [vmem:[%s1745 + $0x78] sm:$0xf]
  %v1760 = vld [vmem:[%s1745 + $0x80] sm:$0xf]
  %v1761 = vld [vmem:[%s1745 + $0x88] sm:$0xf]
  %v1762 = vld [vmem:[%s1 + $0x180] sm:$0xf]
  %v1763 = vld [vmem:[%s1 + $0x184] sm:$0xf]
  %v1764 = vld [vmem:[%s1 + $0x188] sm:$0xf]
  %v1765 = vld [vmem:[%s1 + $0x18c] sm:$0xf]
  %v1766 = vld [vmem:[%s1 + $0x190] sm:$0xf]
  %v1767 = vld [vmem:[%s1 + $0x194] sm:$0xf]
  %v1768 = vld [vmem:[%s1 + $0x198] sm:$0xf]
  %v1769 = vld [vmem:[%s1 + $0x19c] sm:$0xf]
  %v1770 = vld [vmem:[%s1 + $0x1a0] sm:$0xf]
  %v1771 = vld [vmem:[%s1 + $0x1a4] sm:$0xf]
  %v1772 = vld [vmem:[%s1 + $0x1a8] sm:$0xf]
  %v1773 = vld [vmem:[%s1 + $0x1ac] sm:$0xf]
  %v1774 = vld [vmem:[%s1 + $0x1b0] sm:$0xf]
  %v1775 = vld [vmem:[%s1 + $0x1b4] sm:$0xf]
  %v1776 = vld [vmem:[%s1 + $0x1b8] sm:$0xf]
  %v1777 = vld [vmem:[%s1 + $0x1bc] sm:$0xf]
  %v1794 = vunpack.c.l.b16 %v1746
  %v1795 = vunpack.c.l.b16 %v1747
  %v1796 = vunpack.c.l.b16 %v1748
  %v1797 = vunpack.c.l.b16 %v1749
  %v1798 = vunpack.c.l.b16 %v1750
  %v1799 = vunpack.c.l.b16 %v1751
  %v1800 = vunpack.c.l.b16 %v1752
  %v1801 = vunpack.c.l.b16 %v1753
  %v1802 = vunpack.c.l.b16 %v1754
  %v1803 = vunpack.c.l.b16 %v1755
  %v1804 = vunpack.c.l.b16 %v1756
  %v1805 = vunpack.c.l.b16 %v1757
  %v1806 = vunpack.c.l.b16 %v1758
  %v1807 = vunpack.c.l.b16 %v1759
  %v1808 = vunpack.c.l.b16 %v1760
  %v1809 = vunpack.c.l.b16 %v1761
  %v1810 = vpack.c.b16 %v1795, %v1794
  %v1811 = vpack.c.b16 %v1797, %v1796
  %v1812 = vpack.c.b16 %v1799, %v1798
  %v1813 = vpack.c.b16 %v1801, %v1800
  %v1814 = vpack.c.b16 %v1803, %v1802
  %v1815 = vpack.c.b16 %v1805, %v1804
  %v1816 = vpack.c.b16 %v1807, %v1806
  %v1817 = vpack.c.b16 %v1809, %v1808
  %v1842 = vunpack.c.l.b16 %v1762
  %v1843 = vunpack.c.l.b16 %v1763
  %v1844 = vunpack.c.l.b16 %v1764
  %v1845 = vunpack.c.l.b16 %v1765
  %v1846 = vunpack.c.l.b16 %v1766
  %v1847 = vunpack.c.l.b16 %v1767
  %v1848 = vunpack.c.l.b16 %v1768
  %v1849 = vunpack.c.l.b16 %v1769
  %v1850 = vunpack.c.l.b16 %v1770
  %v1851 = vunpack.c.l.b16 %v1771
  %v1852 = vunpack.c.l.b16 %v1772
  %v1853 = vunpack.c.l.b16 %v1773
  %v1854 = vunpack.c.l.b16 %v1774
  %v1855 = vunpack.c.l.b16 %v1775
  %v1856 = vunpack.c.l.b16 %v1776
  %v1857 = vunpack.c.l.b16 %v1777
  %v1858 = vpack.c.b16 %v1843, %v1842
  %v1859 = vpack.c.b16 %v1845, %v1844
  %v1860 = vpack.c.b16 %v1847, %v1846
  %v1861 = vpack.c.b16 %v1849, %v1848
  %v1862 = vpack.c.b16 %v1851, %v1850
  %v1863 = vpack.c.b16 %v1853, %v1852
  %v1864 = vpack.c.b16 %v1855, %v1854
  %v1865 = vpack.c.b16 %v1857, %v1856
  %1874 = vmatpush.bf16.msra.mxu0 %v1865
  %1875 = vmatpush.bf16.msra.mxu0 %v1864
  %1876 = vmatpush.bf16.msra.mxu0 %v1863
  %1877 = vmatpush.bf16.msra.mxu0 %v1862
  %1878 = vmatpush.bf16.msra.mxu0 %v1861
  %1879 = vmatpush.bf16.msra.mxu0 %v1860
  %1880 = vmatpush.bf16.msra.mxu0 %v1859
  %1881 = vmatpush.bf16.msra.mxu0 %v1858
  %1882 = vmatmul.bf16.gmra.mxu0 %v1810
  %v1883 = vpop.f32.mrf.mxu0
  %v1884 = vadd.f32 0.0, %v1883
  %v1885 = vpop.f32.mrf.mxu0
  %v1886 = vadd.f32 0.0, %v1885
  %1887 = vmatmul.bf16.gmra.mxu0 %v1811
  %v1888 = vpop.f32.mrf.mxu0
  %v1889 = vadd.f32 0.0, %v1888
  %v1890 = vpop.f32.mrf.mxu0
  %v1891 = vadd.f32 0.0, %v1890
  %1892 = vmatmul.bf16.gmra.mxu0 %v1812
  %v1893 = vpop.f32.mrf.mxu0
  %v1894 = vadd.f32 0.0, %v1893
  %v1895 = vpop.f32.mrf.mxu0
  %v1896 = vadd.f32 0.0, %v1895
  %1897 = vmatmul.bf16.gmra.mxu0 %v1813
  %v1898 = vpop.f32.mrf.mxu0
  %v1899 = vadd.f32 0.0, %v1898
  %v1900 = vpop.f32.mrf.mxu0
  %v1901 = vadd.f32 0.0, %v1900
  %1902 = vmatmul.bf16.gmra.mxu0 %v1814
  %v1903 = vpop.f32.mrf.mxu0
  %v1904 = vadd.f32 0.0, %v1903
  %v1905 = vpop.f32.mrf.mxu0
  %v1906 = vadd.f32 0.0, %v1905
  %1907 = vmatmul.bf16.gmra.mxu0 %v1815
  %v1908 = vpop.f32.mrf.mxu0
  %v1909 = vadd.f32 0.0, %v1908
  %v1910 = vpop.f32.mrf.mxu0
  %v1911 = vadd.f32 0.0, %v1910
  %1912 = vmatmul.bf16.gmra.mxu0 %v1816
  %v1913 = vpop.f32.mrf.mxu0
  %v1914 = vadd.f32 0.0, %v1913
  %v1915 = vpop.f32.mrf.mxu0
  %v1916 = vadd.f32 0.0, %v1915
  %1917 = vmatmul.bf16.gmra.mxu0 %v1817
  %v1918 = vpop.f32.mrf.mxu0
  %v1919 = vadd.f32 0.0, %v1918
  %v1920 = vpop.f32.mrf.mxu0
  %v1921 = vadd.f32 0.0, %v1920
  %1922 = vdwg.mxu0
  %v1923 = vadd.f32 %v1729, %v1884
  %v1924 = vadd.f32 %v1730, %v1886
  %v1925 = vadd.f32 %v1731, %v1889
  %v1926 = vadd.f32 %v1732, %v1891
  %v1927 = vadd.f32 %v1733, %v1894
  %v1928 = vadd.f32 %v1734, %v1896
  %v1929 = vadd.f32 %v1735, %v1899
  %v1930 = vadd.f32 %v1736, %v1901
  %v1931 = vadd.f32 %v1737, %v1904
  %v1932 = vadd.f32 %v1738, %v1906
  %v1933 = vadd.f32 %v1739, %v1909
  %v1934 = vadd.f32 %v1740, %v1911
  %v1935 = vadd.f32 %v1741, %v1914
  %v1936 = vadd.f32 %v1742, %v1916
  %v1937 = vadd.f32 %v1743, %v1919
  %v1938 = vadd.f32 %v1744, %v1921
  %v1939 = vld [vmem:[%s1745] sm:$0xf]
  %v1940 = vld [vmem:[%s1745 + $0x4] sm:$0x1]
  %v1941 = vld [vmem:[%s1745 + $0x8] sm:$0xf]
  %v1942 = vld [vmem:[%s1745 + $0xc] sm:$0x1]
  %v1943 = vld [vmem:[%s1745 + $0x10] sm:$0xf]
  %v1944 = vld [vmem:[%s1745 + $0x14] sm:$0x1]
  %v1945 = vld [vmem:[%s1745 + $0x18] sm:$0xf]
  %v1946 = vld [vmem:[%s1745 + $0x1c] sm:$0x1]
  %v1947 = vld [vmem:[%s1745 + $0x20] sm:$0xf]
  %v1948 = vld [vmem:[%s1745 + $0x24] sm:$0x1]
  %v1949 = vld [vmem:[%s1745 + $0x28] sm:$0xf]
  %v1950 = vld [vmem:[%s1745 + $0x2c] sm:$0x1]
  %v1951 = vld [vmem:[%s1745 + $0x30] sm:$0xf]
  %v1952 = vld [vmem:[%s1745 + $0x34] sm:$0x1]
  %v1953 = vld [vmem:[%s1745 + $0x38] sm:$0xf]
  %v1954 = vld [vmem:[%s1745 + $0x3c] sm:$0x1]
  %v1955 = vld [vmem:[%s1745 + $0x50] sm:$0xf]
  %v1956 = vld [vmem:[%s1745 + $0x54] sm:$0x1]
  %v1957 = vld [vmem:[%s1745 + $0x58] sm:$0xf]
  %v1958 = vld [vmem:[%s1745 + $0x5c] sm:$0x1]
  %v1959 = vld [vmem:[%s1745 + $0x60] sm:$0xf]
  %v1960 = vld [vmem:[%s1745 + $0x64] sm:$0x1]
  %v1961 = vld [vmem:[%s1745 + $0x68] sm:$0xf]
  %v1962 = vld [vmem:[%s1745 + $0x6c] sm:$0x1]
  %v1963 = vld [vmem:[%s1745 + $0x70] sm:$0xf]
  %v1964 = vld [vmem:[%s1745 + $0x74] sm:$0x1]
  %v1965 = vld [vmem:[%s1745 + $0x78] sm:$0xf]
  %v1966 = vld [vmem:[%s1745 + $0x7c] sm:$0x1]
  %v1967 = vld [vmem:[%s1745 + $0x80] sm:$0xf]
  %v1968 = vld [vmem:[%s1745 + $0x84] sm:$0x1]
  %v1969 = vld [vmem:[%s1745 + $0x88] sm:$0xf]
  %v1970 = vld [vmem:[%s1745 + $0x8c] sm:$0x1]
  %v1972 = vshrl.u32 %v1939, 16
  %v1974 = vrot.slane %v1972, 4
  %v1975 = vshll.u32 %v1939, 16
  %v1977 = vrot.slane %v1975, 5
  %v1978 = vor.u32 %v1974, %v1977
  %v1979 = vrot.slane %v1978, 4
  %v1981 = vshll.u32 %v1940, 16
  %v1983 = vrot.slane %v1981, 5
  %v1984 = vsel %vm70, %v1979, %v1983
  %v1986 = vshrl.u32 %v1941, 16
  %v1988 = vrot.slane %v1986, 4
  %v1989 = vshll.u32 %v1941, 16
  %v1991 = vrot.slane %v1989, 5
  %v1992 = vor.u32 %v1988, %v1991
  %v1993 = vrot.slane %v1992, 4
  %v1995 = vshll.u32 %v1942, 16
  %v1997 = vrot.slane %v1995, 5
  %v1998 = vsel %vm70, %v1993, %v1997
  %v2000 = vshrl.u32 %v1943, 16
  %v2002 = vrot.slane %v2000, 4
  %v2003 = vshll.u32 %v1943, 16
  %v2005 = vrot.slane %v2003, 5
  %v2006 = vor.u32 %v2002, %v2005
  %v2007 = vrot.slane %v2006, 4
  %v2009 = vshll.u32 %v1944, 16
  %v2011 = vrot.slane %v2009, 5
  %v2012 = vsel %vm70, %v2007, %v2011
  %v2014 = vshrl.u32 %v1945, 16
  %v2016 = vrot.slane %v2014, 4
  %v2017 = vshll.u32 %v1945, 16
  %v2019 = vrot.slane %v2017, 5
  %v2020 = vor.u32 %v2016, %v2019
  %v2021 = vrot.slane %v2020, 4
  %v2023 = vshll.u32 %v1946, 16
  %v2025 = vrot.slane %v2023, 5
  %v2026 = vsel %vm70, %v2021, %v2025
  %v2028 = vshrl.u32 %v1947, 16
  %v2030 = vrot.slane %v2028, 4
  %v2031 = vshll.u32 %v1947, 16
  %v2033 = vrot.slane %v2031, 5
  %v2034 = vor.u32 %v2030, %v2033
  %v2035 = vrot.slane %v2034, 4
  %v2037 = vshll.u32 %v1948, 16
  %v2039 = vrot.slane %v2037, 5
  %v2040 = vsel %vm70, %v2035, %v2039
  %v2042 = vshrl.u32 %v1949, 16
  %v2044 = vrot.slane %v2042, 4
  %v2045 = vshll.u32 %v1949, 16
  %v2047 = vrot.slane %v2045, 5
  %v2048 = vor.u32 %v2044, %v2047
  %v2049 = vrot.slane %v2048, 4
  %v2051 = vshll.u32 %v1950, 16
  %v2053 = vrot.slane %v2051, 5
  %v2054 = vsel %vm70, %v2049, %v2053
  %v2056 = vshrl.u32 %v1951, 16
  %v2058 = vrot.slane %v2056, 4
  %v2059 = vshll.u32 %v1951, 16
  %v2061 = vrot.slane %v2059, 5
  %v2062 = vor.u32 %v2058, %v2061
  %v2063 = vrot.slane %v2062, 4
  %v2065 = vshll.u32 %v1952, 16
  %v2067 = vrot.slane %v2065, 5
  %v2068 = vsel %vm70, %v2063, %v2067
  %v2070 = vshrl.u32 %v1953, 16
  %v2072 = vrot.slane %v2070, 4
  %v2073 = vshll.u32 %v1953, 16
  %v2075 = vrot.slane %v2073, 5
  %v2076 = vor.u32 %v2072, %v2075
  %v2077 = vrot.slane %v2076, 4
  %v2079 = vshll.u32 %v1954, 16
  %v2081 = vrot.slane %v2079, 5
  %v2082 = vsel %vm70, %v2077, %v2081
  %v2084 = vshrl.u32 %v1955, 16
  %v2086 = vrot.slane %v2084, 4
  %v2087 = vshll.u32 %v1955, 16
  %v2089 = vrot.slane %v2087, 5
  %v2090 = vor.u32 %v2086, %v2089
  %v2091 = vrot.slane %v2090, 4
  %v2093 = vshll.u32 %v1956, 16
  %v2095 = vrot.slane %v2093, 5
  %v2096 = vsel %vm70, %v2091, %v2095
  %v2098 = vshrl.u32 %v1957, 16
  %v2100 = vrot.slane %v2098, 4
  %v2101 = vshll.u32 %v1957, 16
  %v2103 = vrot.slane %v2101, 5
  %v2104 = vor.u32 %v2100, %v2103
  %v2105 = vrot.slane %v2104, 4
  %v2107 = vshll.u32 %v1958, 16
  %v2109 = vrot.slane %v2107, 5
  %v2110 = vsel %vm70, %v2105, %v2109
  %v2112 = vshrl.u32 %v1959, 16
  %v2114 = vrot.slane %v2112, 4
  %v2115 = vshll.u32 %v1959, 16
  %v2117 = vrot.slane %v2115, 5
  %v2118 = vor.u32 %v2114, %v2117
  %v2119 = vrot.slane %v2118, 4
  %v2121 = vshll.u32 %v1960, 16
  %v2123 = vrot.slane %v2121, 5
  %v2124 = vsel %vm70, %v2119, %v2123
  %v2126 = vshrl.u32 %v1961, 16
  %v2128 = vrot.slane %v2126, 4
  %v2129 = vshll.u32 %v1961, 16
  %v2131 = vrot.slane %v2129, 5
  %v2132 = vor.u32 %v2128, %v2131
  %v2133 = vrot.slane %v2132, 4
  %v2135 = vshll.u32 %v1962, 16
  %v2137 = vrot.slane %v2135, 5
  %v2138 = vsel %vm70, %v2133, %v2137
  %v2140 = vshrl.u32 %v1963, 16
  %v2142 = vrot.slane %v2140, 4
  %v2143 = vshll.u32 %v1963, 16
  %v2145 = vrot.slane %v2143, 5
  %v2146 = vor.u32 %v2142, %v2145
  %v2147 = vrot.slane %v2146, 4
  %v2149 = vshll.u32 %v1964, 16
  %v2151 = vrot.slane %v2149, 5
  %v2152 = vsel %vm70, %v2147, %v2151
  %v2154 = vshrl.u32 %v1965, 16
  %v2156 = vrot.slane %v2154, 4
  %v2157 = vshll.u32 %v1965, 16
  %v2159 = vrot.slane %v2157, 5
  %v2160 = vor.u32 %v2156, %v2159
  %v2161 = vrot.slane %v2160, 4
  %v2163 = vshll.u32 %v1966, 16
  %v2165 = vrot.slane %v2163, 5
  %v2166 = vsel %vm70, %v2161, %v2165
  %v2168 = vshrl.u32 %v1967, 16
  %v2170 = vrot.slane %v2168, 4
  %v2171 = vshll.u32 %v1967, 16
  %v2173 = vrot.slane %v2171, 5
  %v2174 = vor.u32 %v2170, %v2173
  %v2175 = vrot.slane %v2174, 4
  %v2177 = vshll.u32 %v1968, 16
  %v2179 = vrot.slane %v2177, 5
  %v2180 = vsel %vm70, %v2175, %v2179
  %v2182 = vshrl.u32 %v1969, 16
  %v2184 = vrot.slane %v2182, 4
  %v2185 = vshll.u32 %v1969, 16
  %v2187 = vrot.slane %v2185, 5
  %v2188 = vor.u32 %v2184, %v2187
  %v2189 = vrot.slane %v2188, 4
  %v2191 = vshll.u32 %v1970, 16
  %v2193 = vrot.slane %v2191, 5
  %v2194 = vsel %vm70, %v2189, %v2193
  %v2195 = vld [vmem:[%s1 + $0x1c0] sm:$0xf]
  %v2196 = vld [vmem:[%s1 + $0x1c4] sm:$0xf]
  %v2197 = vld [vmem:[%s1 + $0x1c8] sm:$0xf]
  %v2198 = vld [vmem:[%s1 + $0x1cc] sm:$0xf]
  %v2199 = vld [vmem:[%s1 + $0x1d0] sm:$0xf]
  %v2200 = vld [vmem:[%s1 + $0x1d4] sm:$0xf]
  %v2201 = vld [vmem:[%s1 + $0x1d8] sm:$0xf]
  %v2202 = vld [vmem:[%s1 + $0x1dc] sm:$0xf]
  %v2203 = vld [vmem:[%s1 + $0x1e0] sm:$0xf]
  %v2204 = vld [vmem:[%s1 + $0x1e4] sm:$0xf]
  %v2205 = vld [vmem:[%s1 + $0x1e8] sm:$0xf]
  %v2206 = vld [vmem:[%s1 + $0x1ec] sm:$0xf]
  %v2207 = vld [vmem:[%s1 + $0x1f0] sm:$0xf]
  %v2208 = vld [vmem:[%s1 + $0x1f4] sm:$0xf]
  %v2209 = vld [vmem:[%s1 + $0x1f8] sm:$0xf]
  %v2210 = vld [vmem:[%s1 + $0x1fc] sm:$0xf]
  %v2211 = vunpack.c.l.b16 %v1984
  %v2212 = vunpack.c.l.b16 %v1998
  %v2213 = vunpack.c.l.b16 %v2012
  %v2214 = vunpack.c.l.b16 %v2026
  %v2215 = vunpack.c.l.b16 %v2040
  %v2216 = vunpack.c.l.b16 %v2054
  %v2217 = vunpack.c.l.b16 %v2068
  %v2218 = vunpack.c.l.b16 %v2082
  %v2219 = vunpack.c.l.b16 %v2096
  %v2220 = vunpack.c.l.b16 %v2110
  %v2221 = vunpack.c.l.b16 %v2124
  %v2222 = vunpack.c.l.b16 %v2138
  %v2223 = vunpack.c.l.b16 %v2152
  %v2224 = vunpack.c.l.b16 %v2166
  %v2225 = vunpack.c.l.b16 %v2180
  %v2226 = vunpack.c.l.b16 %v2194
  %v2227 = vpack.c.b16 %v2212, %v2211
  %v2228 = vpack.c.b16 %v2214, %v2213
  %v2229 = vpack.c.b16 %v2216, %v2215
  %v2230 = vpack.c.b16 %v2218, %v2217
  %v2231 = vpack.c.b16 %v2220, %v2219
  %v2232 = vpack.c.b16 %v2222, %v2221
  %v2233 = vpack.c.b16 %v2224, %v2223
  %v2234 = vpack.c.b16 %v2226, %v2225
  %v2259 = vunpack.c.l.b16 %v2195
  %v2260 = vunpack.c.l.b16 %v2196
  %v2261 = vunpack.c.l.b16 %v2197
  %v2262 = vunpack.c.l.b16 %v2198
  %v2263 = vunpack.c.l.b16 %v2199
  %v2264 = vunpack.c.l.b16 %v2200
  %v2265 = vunpack.c.l.b16 %v2201
  %v2266 = vunpack.c.l.b16 %v2202
  %v2267 = vunpack.c.l.b16 %v2203
  %v2268 = vunpack.c.l.b16 %v2204
  %v2269 = vunpack.c.l.b16 %v2205
  %v2270 = vunpack.c.l.b16 %v2206
  %v2271 = vunpack.c.l.b16 %v2207
  %v2272 = vunpack.c.l.b16 %v2208
  %v2273 = vunpack.c.l.b16 %v2209
  %v2274 = vunpack.c.l.b16 %v2210
  %v2275 = vpack.c.b16 %v2260, %v2259
  %v2276 = vpack.c.b16 %v2262, %v2261
  %v2277 = vpack.c.b16 %v2264, %v2263
  %v2278 = vpack.c.b16 %v2266, %v2265
  %v2279 = vpack.c.b16 %v2268, %v2267
  %v2280 = vpack.c.b16 %v2270, %v2269
  %v2281 = vpack.c.b16 %v2272, %v2271
  %v2282 = vpack.c.b16 %v2274, %v2273
  %2291 = vmatpush.bf16.msra.mxu0 %v2282
  %2292 = vmatpush.bf16.msra.mxu0 %v2281
  %2293 = vmatpush.bf16.msra.mxu0 %v2280
  %2294 = vmatpush.bf16.msra.mxu0 %v2279
  %2295 = vmatpush.bf16.msra.mxu0 %v2278
  %2296 = vmatpush.bf16.msra.mxu0 %v2277
  %2297 = vmatpush.bf16.msra.mxu0 %v2276
  %2298 = vmatpush.bf16.msra.mxu0 %v2275
  %2299 = vmatmul.bf16.gmra.mxu0 %v2227
  %v2300 = vpop.f32.mrf.mxu0
  %v2301 = vadd.f32 0.0, %v2300
  %v2302 = vpop.f32.mrf.mxu0
  %v2303 = vadd.f32 0.0, %v2302
  %2304 = vmatmul.bf16.gmra.mxu0 %v2228
  %v2305 = vpop.f32.mrf.mxu0
  %v2306 = vadd.f32 0.0, %v2305
  %v2307 = vpop.f32.mrf.mxu0
  %v2308 = vadd.f32 0.0, %v2307
  %2309 = vmatmul.bf16.gmra.mxu0 %v2229
  %v2310 = vpop.f32.mrf.mxu0
  %v2311 = vadd.f32 0.0, %v2310
  %v2312 = vpop.f32.mrf.mxu0
  %v2313 = vadd.f32 0.0, %v2312
  %2314 = vmatmul.bf16.gmra.mxu0 %v2230
  %v2315 = vpop.f32.mrf.mxu0
  %v2316 = vadd.f32 0.0, %v2315
  %v2317 = vpop.f32.mrf.mxu0
  %v2318 = vadd.f32 0.0, %v2317
  %2319 = vmatmul.bf16.gmra.mxu0 %v2231
  %v2320 = vpop.f32.mrf.mxu0
  %v2321 = vadd.f32 0.0, %v2320
  %v2322 = vpop.f32.mrf.mxu0
  %v2323 = vadd.f32 0.0, %v2322
  %2324 = vmatmul.bf16.gmra.mxu0 %v2232
  %v2325 = vpop.f32.mrf.mxu0
  %v2326 = vadd.f32 0.0, %v2325
  %v2327 = vpop.f32.mrf.mxu0
  %v2328 = vadd.f32 0.0, %v2327
  %2329 = vmatmul.bf16.gmra.mxu0 %v2233
  %v2330 = vpop.f32.mrf.mxu0
  %v2331 = vadd.f32 0.0, %v2330
  %v2332 = vpop.f32.mrf.mxu0
  %v2333 = vadd.f32 0.0, %v2332
  %2334 = vmatmul.bf16.gmra.mxu0 %v2234
  %v2335 = vpop.f32.mrf.mxu0
  %v2336 = vadd.f32 0.0, %v2335
  %v2337 = vpop.f32.mrf.mxu0
  %v2338 = vadd.f32 0.0, %v2337
  %2339 = vdwg.mxu0
  %v2340 = vadd.f32 %v1923, %v2301
  %v2341 = vadd.f32 %v1924, %v2303
  %v2342 = vadd.f32 %v1925, %v2306
  %v2343 = vadd.f32 %v1926, %v2308
  %v2344 = vadd.f32 %v1927, %v2311
  %v2345 = vadd.f32 %v1928, %v2313
  %v2346 = vadd.f32 %v1929, %v2316
  %v2347 = vadd.f32 %v1930, %v2318
  %v2348 = vadd.f32 %v1931, %v2321
  %v2349 = vadd.f32 %v1932, %v2323
  %v2350 = vadd.f32 %v1933, %v2326
  %v2351 = vadd.f32 %v1934, %v2328
  %v2352 = vadd.f32 %v1935, %v2331
  %v2353 = vadd.f32 %v1936, %v2333
  %v2354 = vadd.f32 %v1937, %v2336
  %v2355 = vadd.f32 %v1938, %v2338
  %v2356 = vld [vmem:[%s1745] sm:$0xe]
  %v2357 = vld [vmem:[%s1745 + $0x8] sm:$0xe]
  %v2358 = vld [vmem:[%s1745 + $0x10] sm:$0xe]
  %v2359 = vld [vmem:[%s1745 + $0x18] sm:$0xe]
  %v2360 = vld [vmem:[%s1745 + $0x20] sm:$0xe]
  %v2361 = vld [vmem:[%s1745 + $0x28] sm:$0xe]
  %v2362 = vld [vmem:[%s1745 + $0x30] sm:$0xe]
  %v2363 = vld [vmem:[%s1745 + $0x38] sm:$0xe]
  %v2364 = vld [vmem:[%s1745 + $0x50] sm:$0xe]
  %v2365 = vld [vmem:[%s1745 + $0x58] sm:$0xe]
  %v2366 = vld [vmem:[%s1745 + $0x60] sm:$0xe]
  %v2367 = vld [vmem:[%s1745 + $0x68] sm:$0xe]
  %v2368 = vld [vmem:[%s1745 + $0x70] sm:$0xe]
  %v2369 = vld [vmem:[%s1745 + $0x78] sm:$0xe]
  %v2370 = vld [vmem:[%s1745 + $0x80] sm:$0xe]
  %v2371 = vld [vmem:[%s1745 + $0x88] sm:$0xe]
  %v2404 = vrot.slane %v2356, 5
  %v2405 = vrot.slane %v2404, 4
  %v2406 = vrot.slane %v1940, 5
  %v2407 = vsel %vm635, %v2405, %v2406
  %v2408 = vrot.slane %v2357, 5
  %v2409 = vrot.slane %v2408, 4
  %v2410 = vrot.slane %v1942, 5
  %v2411 = vsel %vm635, %v2409, %v2410
  %v2412 = vrot.slane %v2358, 5
  %v2413 = vrot.slane %v2412, 4
  %v2414 = vrot.slane %v1944, 5
  %v2415 = vsel %vm635, %v2413, %v2414
  %v2416 = vrot.slane %v2359, 5
  %v2417 = vrot.slane %v2416, 4
  %v2418 = vrot.slane %v1946, 5
  %v2419 = vsel %vm635, %v2417, %v2418
  %v2420 = vrot.slane %v2360, 5
  %v2421 = vrot.slane %v2420, 4
  %v2422 = vrot.slane %v1948, 5
  %v2423 = vsel %vm635, %v2421, %v2422
  %v2424 = vrot.slane %v2361, 5
  %v2425 = vrot.slane %v2424, 4
  %v2426 = vrot.slane %v1950, 5
  %v2427 = vsel %vm635, %v2425, %v2426
  %v2428 = vrot.slane %v2362, 5
  %v2429 = vrot.slane %v2428, 4
  %v2430 = vrot.slane %v1952, 5
  %v2431 = vsel %vm635, %v2429, %v2430
  %v2432 = vrot.slane %v2363, 5
  %v2433 = vrot.slane %v2432, 4
  %v2434 = vrot.slane %v1954, 5
  %v2435 = vsel %vm635, %v2433, %v2434
  %v2436 = vrot.slane %v2364, 5
  %v2437 = vrot.slane %v2436, 4
  %v2438 = vrot.slane %v1956, 5
  %v2439 = vsel %vm635, %v2437, %v2438
  %v2440 = vrot.slane %v2365, 5
  %v2441 = vrot.slane %v2440, 4
  %v2442 = vrot.slane %v1958, 5
  %v2443 = vsel %vm635, %v2441, %v2442
  %v2444 = vrot.slane %v2366, 5
  %v2445 = vrot.slane %v2444, 4
  %v2446 = vrot.slane %v1960, 5
  %v2447 = vsel %vm635, %v2445, %v2446
  %v2448 = vrot.slane %v2367, 5
  %v2449 = vrot.slane %v2448, 4
  %v2450 = vrot.slane %v1962, 5
  %v2451 = vsel %vm635, %v2449, %v2450
  %v2452 = vrot.slane %v2368, 5
  %v2453 = vrot.slane %v2452, 4
  %v2454 = vrot.slane %v1964, 5
  %v2455 = vsel %vm635, %v2453, %v2454
  %v2456 = vrot.slane %v2369, 5
  %v2457 = vrot.slane %v2456, 4
  %v2458 = vrot.slane %v1966, 5
  %v2459 = vsel %vm635, %v2457, %v2458
  %v2460 = vrot.slane %v2370, 5
  %v2461 = vrot.slane %v2460, 4
  %v2462 = vrot.slane %v1968, 5
  %v2463 = vsel %vm635, %v2461, %v2462
  %v2464 = vrot.slane %v2371, 5
  %v2465 = vrot.slane %v2464, 4
  %v2466 = vrot.slane %v1970, 5
  %v2467 = vsel %vm635, %v2465, %v2466
  %v2468 = vld [vmem:[%s1 + $0x200] sm:$0xf]
  %v2469 = vld [vmem:[%s1 + $0x204] sm:$0xf]
  %v2470 = vld [vmem:[%s1 + $0x208] sm:$0xf]
  %v2471 = vld [vmem:[%s1 + $0x20c] sm:$0xf]
  %v2472 = vld [vmem:[%s1 + $0x210] sm:$0xf]
  %v2473 = vld [vmem:[%s1 + $0x214] sm:$0xf]
  %v2474 = vld [vmem:[%s1 + $0x218] sm:$0xf]
  %v2475 = vld [vmem:[%s1 + $0x21c] sm:$0xf]
  %v2476 = vld [vmem:[%s1 + $0x220] sm:$0xf]
  %v2477 = vld [vmem:[%s1 + $0x224] sm:$0xf]
  %v2478 = vld [vmem:[%s1 + $0x228] sm:$0xf]
  %v2479 = vld [vmem:[%s1 + $0x22c] sm:$0xf]
  %v2480 = vld [vmem:[%s1 + $0x230] sm:$0xf]
  %v2481 = vld [vmem:[%s1 + $0x234] sm:$0xf]
  %v2482 = vld [vmem:[%s1 + $0x238] sm:$0xf]
  %v2483 = vld [vmem:[%s1 + $0x23c] sm:$0xf]
  %v2484 = vunpack.c.l.b16 %v2407
  %v2485 = vunpack.c.l.b16 %v2411
  %v2486 = vunpack.c.l.b16 %v2415
  %v2487 = vunpack.c.l.b16 %v2419
  %v2488 = vunpack.c.l.b16 %v2423
  %v2489 = vunpack.c.l.b16 %v2427
  %v2490 = vunpack.c.l.b16 %v2431
  %v2491 = vunpack.c.l.b16 %v2435
  %v2492 = vunpack.c.l.b16 %v2439
  %v2493 = vunpack.c.l.b16 %v2443
  %v2494 = vunpack.c.l.b16 %v2447
  %v2495 = vunpack.c.l.b16 %v2451
  %v2496 = vunpack.c.l.b16 %v2455
  %v2497 = vunpack.c.l.b16 %v2459
  %v2498 = vunpack.c.l.b16 %v2463
  %v2499 = vunpack.c.l.b16 %v2467
  %v2500 = vpack.c.b16 %v2485, %v2484
  %v2501 = vpack.c.b16 %v2487, %v2486
  %v2502 = vpack.c.b16 %v2489, %v2488
  %v2503 = vpack.c.b16 %v2491, %v2490
  %v2504 = vpack.c.b16 %v2493, %v2492
  %v2505 = vpack.c.b16 %v2495, %v2494
  %v2506 = vpack.c.b16 %v2497, %v2496
  %v2507 = vpack.c.b16 %v2499, %v2498
  %v2532 = vunpack.c.l.b16 %v2468
  %v2533 = vunpack.c.l.b16 %v2469
  %v2534 = vunpack.c.l.b16 %v2470
  %v2535 = vunpack.c.l.b16 %v2471
  %v2536 = vunpack.c.l.b16 %v2472
  %v2537 = vunpack.c.l.b16 %v2473
  %v2538 = vunpack.c.l.b16 %v2474
  %v2539 = vunpack.c.l.b16 %v2475
  %v2540 = vunpack.c.l.b16 %v2476
  %v2541 = vunpack.c.l.b16 %v2477
  %v2542 = vunpack.c.l.b16 %v2478
  %v2543 = vunpack.c.l.b16 %v2479
  %v2544 = vunpack.c.l.b16 %v2480
  %v2545 = vunpack.c.l.b16 %v2481
  %v2546 = vunpack.c.l.b16 %v2482
  %v2547 = vunpack.c.l.b16 %v2483
  %v2548 = vpack.c.b16 %v2533, %v2532
  %v2549 = vpack.c.b16 %v2535, %v2534
  %v2550 = vpack.c.b16 %v2537, %v2536
  %v2551 = vpack.c.b16 %v2539, %v2538
  %v2552 = vpack.c.b16 %v2541, %v2540
  %v2553 = vpack.c.b16 %v2543, %v2542
  %v2554 = vpack.c.b16 %v2545, %v2544
  %v2555 = vpack.c.b16 %v2547, %v2546
  %2564 = vmatpush.bf16.msra.mxu0 %v2555
  %2565 = vmatpush.bf16.msra.mxu0 %v2554
  %2566 = vmatpush.bf16.msra.mxu0 %v2553
  %2567 = vmatpush.bf16.msra.mxu0 %v2552
  %2568 = vmatpush.bf16.msra.mxu0 %v2551
  %2569 = vmatpush.bf16.msra.mxu0 %v2550
  %2570 = vmatpush.bf16.msra.mxu0 %v2549
  %2571 = vmatpush.bf16.msra.mxu0 %v2548
  %2572 = vmatmul.bf16.gmra.mxu0 %v2500
  %v2573 = vpop.f32.mrf.mxu0
  %v2574 = vadd.f32 0.0, %v2573
  %v2575 = vpop.f32.mrf.mxu0
  %v2576 = vadd.f32 0.0, %v2575
  %2577 = vmatmul.bf16.gmra.mxu0 %v2501
  %v2578 = vpop.f32.mrf.mxu0
  %v2579 = vadd.f32 0.0, %v2578
  %v2580 = vpop.f32.mrf.mxu0
  %v2581 = vadd.f32 0.0, %v2580
  %2582 = vmatmul.bf16.gmra.mxu0 %v2502
  %v2583 = vpop.f32.mrf.mxu0
  %v2584 = vadd.f32 0.0, %v2583
  %v2585 = vpop.f32.mrf.mxu0
  %v2586 = vadd.f32 0.0, %v2585
  %2587 = vmatmul.bf16.gmra.mxu0 %v2503
  %v2588 = vpop.f32.mrf.mxu0
  %v2589 = vadd.f32 0.0, %v2588
  %v2590 = vpop.f32.mrf.mxu0
  %v2591 = vadd.f32 0.0, %v2590
  %2592 = vmatmul.bf16.gmra.mxu0 %v2504
  %v2593 = vpop.f32.mrf.mxu0
  %v2594 = vadd.f32 0.0, %v2593
  %v2595 = vpop.f32.mrf.mxu0
  %v2596 = vadd.f32 0.0, %v2595
  %2597 = vmatmul.bf16.gmra.mxu0 %v2505
  %v2598 = vpop.f32.mrf.mxu0
  %v2599 = vadd.f32 0.0, %v2598
  %v2600 = vpop.f32.mrf.mxu0
  %v2601 = vadd.f32 0.0, %v2600
  %2602 = vmatmul.bf16.gmra.mxu0 %v2506
  %v2603 = vpop.f32.mrf.mxu0
  %v2604 = vadd.f32 0.0, %v2603
  %v2605 = vpop.f32.mrf.mxu0
  %v2606 = vadd.f32 0.0, %v2605
  %2607 = vmatmul.bf16.gmra.mxu0 %v2507
  %v2608 = vpop.f32.mrf.mxu0
  %v2609 = vadd.f32 0.0, %v2608
  %v2610 = vpop.f32.mrf.mxu0
  %v2611 = vadd.f32 0.0, %v2610
  %2612 = vdwg.mxu0
  %v2613 = vadd.f32 %v2340, %v2574
  %v2614 = vadd.f32 %v2341, %v2576
  %v2615 = vadd.f32 %v2342, %v2579
  %v2616 = vadd.f32 %v2343, %v2581
  %v2617 = vadd.f32 %v2344, %v2584
  %v2618 = vadd.f32 %v2345, %v2586
  %v2619 = vadd.f32 %v2346, %v2589
  %v2620 = vadd.f32 %v2347, %v2591
  %v2621 = vadd.f32 %v2348, %v2594
  %v2622 = vadd.f32 %v2349, %v2596
  %v2623 = vadd.f32 %v2350, %v2599
  %v2624 = vadd.f32 %v2351, %v2601
  %v2625 = vadd.f32 %v2352, %v2604
  %v2626 = vadd.f32 %v2353, %v2606
  %v2627 = vadd.f32 %v2354, %v2609
  %v2628 = vadd.f32 %v2355, %v2611
  %v2629 = vadd.f32 %v2613, %v2614
  %v2630 = vadd.f32 %v2629, %v2615
  %v2631 = vadd.f32 %v2630, %v2616
  %v2632 = vadd.f32 %v2631, %v2617
  %v2633 = vadd.f32 %v2632, %v2618
  %v2634 = vadd.f32 %v2633, %v2619
  %v2635 = vadd.f32 %v2634, %v2620
  %v2636 = vadd.f32 %v2635, %v2621
  %v2637 = vadd.f32 %v2636, %v2622
  %v2638 = vadd.f32 %v2637, %v2623
  %v2639 = vadd.f32 %v2638, %v2624
  %v2640 = vadd.f32 %v2639, %v2625
  %v2641 = vadd.f32 %v2640, %v2626
  %v2642 = vadd.f32 %v2641, %v2627
  %v2643 = vadd.f32 %v2642, %v2628
  %v2644 = vrot.slane %v2643, 4
  %v2645 = vadd.f32 %v2643, %v2644
  %v2646 = vrot.slane %v2645, 2
  %v2647 = vadd.f32 %v2645, %v2646
  %v2648 = vrot.slane %v2647, 1
  %v2649 = vadd.f32 %v2647, %v2648
  %v2650 = vmul.f32 %v2649, 0.0078125
  %v2651 = vsub.f32 %v2613, %v2650
  %v2652 = vsub.f32 %v2614, %v2650
  %v2653 = vsub.f32 %v2615, %v2650
  %v2654 = vsub.f32 %v2616, %v2650
  %v2655 = vsub.f32 %v2617, %v2650
  %v2656 = vsub.f32 %v2618, %v2650
  %v2657 = vsub.f32 %v2619, %v2650
  %v2658 = vsub.f32 %v2620, %v2650
  %v2659 = vsub.f32 %v2621, %v2650
  %v2660 = vsub.f32 %v2622, %v2650
  %v2661 = vsub.f32 %v2623, %v2650
  %v2662 = vsub.f32 %v2624, %v2650
  %v2663 = vsub.f32 %v2625, %v2650
  %v2664 = vsub.f32 %v2626, %v2650
  %v2665 = vsub.f32 %v2627, %v2650
  %v2666 = vsub.f32 %v2628, %v2650
  %v2667 = vmul.f32 %v2651, %v2651
  %v2668 = vmul.f32 %v2652, %v2652
  %v2669 = vmul.f32 %v2653, %v2653
  %v2670 = vmul.f32 %v2654, %v2654
  %v2671 = vmul.f32 %v2655, %v2655
  %v2672 = vmul.f32 %v2656, %v2656
  %v2673 = vmul.f32 %v2657, %v2657
  %v2674 = vmul.f32 %v2658, %v2658
  %v2675 = vmul.f32 %v2659, %v2659
  %v2676 = vmul.f32 %v2660, %v2660
  %v2677 = vmul.f32 %v2661, %v2661
  %v2678 = vmul.f32 %v2662, %v2662
  %v2679 = vmul.f32 %v2663, %v2663
  %v2680 = vmul.f32 %v2664, %v2664
  %v2681 = vmul.f32 %v2665, %v2665
  %v2682 = vmul.f32 %v2666, %v2666
  %v2683 = vadd.f32 %v2667, %v2668
  %v2684 = vadd.f32 %v2683, %v2669
  %v2685 = vadd.f32 %v2684, %v2670
  %v2686 = vadd.f32 %v2685, %v2671
  %v2687 = vadd.f32 %v2686, %v2672
  %v2688 = vadd.f32 %v2687, %v2673
  %v2689 = vadd.f32 %v2688, %v2674
  %v2690 = vadd.f32 %v2689, %v2675
  %v2691 = vadd.f32 %v2690, %v2676
  %v2692 = vadd.f32 %v2691, %v2677
  %v2693 = vadd.f32 %v2692, %v2678
  %v2694 = vadd.f32 %v2693, %v2679
  %v2695 = vadd.f32 %v2694, %v2680
  %v2696 = vadd.f32 %v2695, %v2681
  %v2697 = vadd.f32 %v2696, %v2682
  %v2698 = vrot.slane %v2697, 4
  %v2699 = vadd.f32 %v2697, %v2698
  %v2700 = vrot.slane %v2699, 2
  %v2701 = vadd.f32 %v2699, %v2700
  %v2702 = vrot.slane %v2701, 1
  %v2703 = vadd.f32 %v2701, %v2702
  %v2704 = vmul.f32 %v2703, 0.0078125
  %v2705 = vadd.f32 %v2704, 1e-05
  %v2706 = vrsqrt.pop %v2705
  %v2707 = vmul.f32 %v2706, %v2705
  %v2708 = vmul.f32 %v2707, %v2706
  %v2709 = vmul.f32 0.5, %v2708
  %v2710 = vsub.f32 1.5, %v2709
  %v2711 = vmul.f32 %v2706, %v2710
  %vm2712 = vweird.f32 %v2705
  %vm2713 = vweird.f32 %v2706
  %vm2714 = vmor %vm2712, %vm2713
  %v2715 = vsel %vm2714, %v2706, %v2711
  %v2716 = vmul.f32 %v2651, %v2715
  %v2717 = vmul.f32 %v2652, %v2715
  %v2718 = vmul.f32 %v2653, %v2715
  %v2719 = vmul.f32 %v2654, %v2715
  %v2720 = vmul.f32 %v2655, %v2715
  %v2721 = vmul.f32 %v2656, %v2715
  %v2722 = vmul.f32 %v2657, %v2715
  %v2723 = vmul.f32 %v2658, %v2715
  %v2724 = vmul.f32 %v2659, %v2715
  %v2725 = vmul.f32 %v2660, %v2715
  %v2726 = vmul.f32 %v2661, %v2715
  %v2727 = vmul.f32 %v2662, %v2715
  %v2728 = vmul.f32 %v2663, %v2715
  %v2729 = vmul.f32 %v2664, %v2715
  %v2730 = vmul.f32 %v2665, %v2715
  %v2731 = vmul.f32 %v2666, %v2715
  %v2732 = vld [vmem:[%s2] sm:$0x1]
  %v2734 = vperm.slane %v2732, 0
  %v2736 = vmul.f32 %v2716, %v2734
  %v2737 = vmul.f32 %v2717, %v2734
  %v2738 = vmul.f32 %v2718, %v2734
  %v2739 = vmul.f32 %v2719, %v2734
  %v2740 = vmul.f32 %v2720, %v2734
  %v2741 = vmul.f32 %v2721, %v2734
  %v2742 = vmul.f32 %v2722, %v2734
  %v2743 = vmul.f32 %v2723, %v2734
  %v2744 = vmul.f32 %v2724, %v2734
  %v2745 = vmul.f32 %v2725, %v2734
  %v2746 = vmul.f32 %v2726, %v2734
  %v2747 = vmul.f32 %v2727, %v2734
  %v2748 = vmul.f32 %v2728, %v2734
  %v2749 = vmul.f32 %v2729, %v2734
  %v2750 = vmul.f32 %v2730, %v2734
  %v2751 = vmul.f32 %v2731, %v2734
  %v2752 = vld [vmem:[%s3] sm:$0x1]
  %v2754 = vperm.slane %v2752, 0
  %v2756 = vadd.f32 %v2736, %v2754
  %v2757 = vadd.f32 %v2737, %v2754
  %v2758 = vadd.f32 %v2738, %v2754
  %v2759 = vadd.f32 %v2739, %v2754
  %v2760 = vadd.f32 %v2740, %v2754
  %v2761 = vadd.f32 %v2741, %v2754
  %v2762 = vadd.f32 %v2742, %v2754
  %v2763 = vadd.f32 %v2743, %v2754
  %v2764 = vadd.f32 %v2744, %v2754
  %v2765 = vadd.f32 %v2745, %v2754
  %v2766 = vadd.f32 %v2746, %v2754
  %v2767 = vadd.f32 %v2747, %v2754
  %v2768 = vadd.f32 %v2748, %v2754
  %v2769 = vadd.f32 %v2749, %v2754
  %v2770 = vadd.f32 %v2750, %v2754
  %v2771 = vadd.f32 %v2751, %v2754
  %v2772 = vld [vmem:[%s4] sm:$0xff]
  %v2773 = vld [vmem:[%s4 + $0x8] sm:$0xff]
  %v2774 = vld [vmem:[%s4 + $0x10] sm:$0xff]
  %v2775 = vld [vmem:[%s4 + $0x18] sm:$0xff]
  %v2776 = vld [vmem:[%s4 + $0x20] sm:$0xff]
  %v2777 = vld [vmem:[%s4 + $0x28] sm:$0xff]
  %v2778 = vld [vmem:[%s4 + $0x30] sm:$0xff]
  %v2779 = vld [vmem:[%s4 + $0x38] sm:$0xff]
  %v2780 = vld [vmem:[%s4 + $0x40] sm:$0xff]
  %v2781 = vld [vmem:[%s4 + $0x48] sm:$0xff]
  %v2782 = vld [vmem:[%s4 + $0x50] sm:$0xff]
  %v2783 = vld [vmem:[%s4 + $0x58] sm:$0xff]
  %v2784 = vld [vmem:[%s4 + $0x60] sm:$0xff]
  %v2785 = vld [vmem:[%s4 + $0x68] sm:$0xff]
  %v2786 = vld [vmem:[%s4 + $0x70] sm:$0xff]
  %v2787 = vld [vmem:[%s4 + $0x78] sm:$0xff]
  %v2788 = vadd.f32 %v2756, %v2772
  %v2789 = vadd.f32 %v2757, %v2773
  %v2790 = vadd.f32 %v2758, %v2774
  %v2791 = vadd.f32 %v2759, %v2775
  %v2792 = vadd.f32 %v2760, %v2776
  %v2793 = vadd.f32 %v2761, %v2777
  %v2794 = vadd.f32 %v2762, %v2778
  %v2795 = vadd.f32 %v2763, %v2779
  %v2796 = vadd.f32 %v2764, %v2780
  %v2797 = vadd.f32 %v2765, %v2781
  %v2798 = vadd.f32 %v2766, %v2782
  %v2799 = vadd.f32 %v2767, %v2783
  %v2800 = vadd.f32 %v2768, %v2784
  %v2801 = vadd.f32 %v2769, %v2785
  %v2802 = vadd.f32 %v2770, %v2786
  %v2803 = vadd.f32 %v2771, %v2787
  %v2804 = vmax.f32 %v2788, 0.0
  %v2805 = vmax.f32 %v2789, 0.0
  %v2806 = vmax.f32 %v2790, 0.0
  %v2807 = vmax.f32 %v2791, 0.0
  %v2808 = vmax.f32 %v2792, 0.0
  %v2809 = vmax.f32 %v2793, 0.0
  %v2810 = vmax.f32 %v2794, 0.0
  %v2811 = vmax.f32 %v2795, 0.0
  %v2812 = vmax.f32 %v2796, 0.0
  %v2813 = vmax.f32 %v2797, 0.0
  %v2814 = vmax.f32 %v2798, 0.0
  %v2815 = vmax.f32 %v2799, 0.0
  %v2816 = vmax.f32 %v2800, 0.0
  %v2817 = vmax.f32 %v2801, 0.0
  %v2818 = vmax.f32 %v2802, 0.0
  %v2819 = vmax.f32 %v2803, 0.0
  %2820 = vst [vmem:[%s5] sm:$0xff] %v2804
  %2821 = vst [vmem:[%s5 + $0x8] sm:$0xff] %v2805
  %2822 = vst [vmem:[%s5 + $0x10] sm:$0xff] %v2806
  %2823 = vst [vmem:[%s5 + $0x18] sm:$0xff] %v2807
  %2824 = vst [vmem:[%s5 + $0x20] sm:$0xff] %v2808
  %2825 = vst [vmem:[%s5 + $0x28] sm:$0xff] %v2809
  %2826 = vst [vmem:[%s5 + $0x30] sm:$0xff] %v2810
  %2827 = vst [vmem:[%s5 + $0x38] sm:$0xff] %v2811
  %2828 = vst [vmem:[%s5 + $0x40] sm:$0xff] %v2812
  %2829 = vst [vmem:[%s5 + $0x48] sm:$0xff] %v2813
  %2830 = vst [vmem:[%s5 + $0x50] sm:$0xff] %v2814
  %2831 = vst [vmem:[%s5 + $0x58] sm:$0xff] %v2815
  %2832 = vst [vmem:[%s5 + $0x60] sm:$0xff] %v2816
  %2833 = vst [vmem:[%s5 + $0x68] sm:$0xff] %v2817
  %2834 = vst [vmem:[%s5 + $0x70] sm:$0xff] %v2818
  %2835 = vst [vmem:[%s5 + $0x78] sm:$0xff] %v2819
  // Predicated region
  $region22: #{forward.7} parent=0 // pred_check
    _
  $region23: #{forward.7} parent=0 // pred_check_branch
    %2837 = sbr.rel (0) target = $region25
  $region24: #{forward.7} parent=0 // pred_region
    _
  $region25: #{forward.7} parent=0 // pred_fallthru
    _
  // Predicated region
  $region26: #{forward.7} parent=0 // pred_check
    _
  $region27: #{forward.7} parent=0 // pred_check_branch
    %2839 = sbr.rel (0) target = $region29
  $region28: #{forward.7} parent=0 // pred_region
    _
  $region29: #{forward.7} parent=0 // pred_fallthru
    _

// kernel: forward.8
$region0: #{forward.8}
  #allocation0 [shape = 'u32[]', space=smem, size = 0x4, offset = 0x4, fixed_abs, tag = 'smem constant byte address 0x4 - core index']
  #allocation1 [shape = 'u32[72,128]{1,0:T(1,128)}', space=vmem, size = 0x9000, scoped, tag = 'internal scratch']
  %s0 = inlined_call_operand.vmem [shape: bf16[1,2,10,10,128], index: 0, kind: input, shape index: {}]
  %s1 = inlined_call_operand.vmem [shape: bf16[1152,128], index: 1, kind: input, shape index: {}]
  %s2 = inlined_call_operand.vmem [shape: f32[1,128], index: 2, kind: input, shape index: {}]
  %s3 = inlined_call_operand.vmem [shape: f32[1,128], index: 3, kind: input, shape index: {}]
  %s4 = inlined_call_operand.vmem [shape: f32[128,128], index: 4, kind: output, shape index: {}]
  %s5 = sld [smem:[#allocation0]]
  $region26: #{forward.8} parent=0
    _
  %s7 = ssub.s32 1, %s5
  %s8 = scalar_select 0, %s7, %s5
  // Predicated region
  $region2: #{forward.8} parent=0 // pred_check
    _
  $region3: #{forward.8} parent=0 // pred_check_branch
    %10 = sbr.rel (0) target = $region5
  $region4: #{forward.8} parent=0 // pred_region
    _
  $region5: #{forward.8} parent=0 // pred_fallthru
    _
  // Predicated region
  $region6: #{forward.8} parent=0 // pred_check
    _
  $region7: #{forward.8} parent=0 // pred_check_branch
    %12 = sbr.rel (0) target = $region9
  $region8: #{forward.8} parent=0 // pred_region
    _
  $region9: #{forward.8} parent=0 // pred_fallthru
    _
  // Predicated region
  $region10: #{forward.8} parent=0 // pred_check
    _
  $region11: #{forward.8} parent=0 // pred_check_branch
    %14 = sbr.rel (0) target = $region13
  $region12: #{forward.8} parent=0 // pred_region
    _
  $region13: #{forward.8} parent=0 // pred_fallthru
    _
  // Predicated region
  $region14: #{forward.8} parent=0 // pred_check
    _
  $region15: #{forward.8} parent=0 // pred_check_branch
    %16 = sbr.rel (0) target = $region17
  $region16: #{forward.8} parent=0 // pred_region
    _
  $region17: #{forward.8} parent=0 // pred_fallthru
    _
  %v17 = vld [vmem:[%s0] sm:$0xf]
  %v18 = vld [vmem:[%s0 + $0x8] sm:$0xf]
  %v19 = vld [vmem:[%s0 + $0x10] sm:$0xf]
  %v20 = vld [vmem:[%s0 + $0x18] sm:$0xf]
  %v21 = vld [vmem:[%s0 + $0x20] sm:$0xf]
  %v22 = vld [vmem:[%s0 + $0x28] sm:$0xf]
  %v23 = vld [vmem:[%s0 + $0x30] sm:$0xf]
  %v24 = vld [vmem:[%s0 + $0x38] sm:$0xf]
  %v25 = vld [vmem:[%s0 + $0x50] sm:$0xf]
  %v26 = vld [vmem:[%s0 + $0x58] sm:$0xf]
  %v27 = vld [vmem:[%s0 + $0x60] sm:$0xf]
  %v28 = vld [vmem:[%s0 + $0x68] sm:$0xf]
  %v29 = vld [vmem:[%s0 + $0x70] sm:$0xf]
  %v30 = vld [vmem:[%s0 + $0x78] sm:$0xf]
  %v31 = vld [vmem:[%s0 + $0x80] sm:$0xf]
  %v32 = vld [vmem:[%s0 + $0x88] sm:$0xf]
  %v33 = vld [vmem:[%s1] sm:$0xf]
  %v34 = vld [vmem:[%s1 + $0x4] sm:$0xf]
  %v35 = vld [vmem:[%s1 + $0x8] sm:$0xf]
  %v36 = vld [vmem:[%s1 + $0xc] sm:$0xf]
  %v37 = vld [vmem:[%s1 + $0x10] sm:$0xf]
  %v38 = vld [vmem:[%s1 + $0x14] sm:$0xf]
  %v39 = vld [vmem:[%s1 + $0x18] sm:$0xf]
  %v40 = vld [vmem:[%s1 + $0x1c] sm:$0xf]
  %v41 = vld [vmem:[%s1 + $0x20] sm:$0xf]
  %v42 = vld [vmem:[%s1 + $0x24] sm:$0xf]
  %v43 = vld [vmem:[%s1 + $0x28] sm:$0xf]
  %v44 = vld [vmem:[%s1 + $0x2c] sm:$0xf]
  %v45 = vld [vmem:[%s1 + $0x30] sm:$0xf]
  %v46 = vld [vmem:[%s1 + $0x34] sm:$0xf]
  %v47 = vld [vmem:[%s1 + $0x38] sm:$0xf]
  %v48 = vld [vmem:[%s1 + $0x3c] sm:$0xf]
  %v49 = vld [vmem:[%s0 + $0x4] sm:$0x1]
  %v50 = vld [vmem:[%s0 + $0xc] sm:$0x1]
  %v51 = vld [vmem:[%s0 + $0x14] sm:$0x1]
  %v52 = vld [vmem:[%s0 + $0x1c] sm:$0x1]
  %v53 = vld [vmem:[%s0 + $0x24] sm:$0x1]
  %v54 = vld [vmem:[%s0 + $0x2c] sm:$0x1]
  %v55 = vld [vmem:[%s0 + $0x34] sm:$0x1]
  %v56 = vld [vmem:[%s0 + $0x3c] sm:$0x1]
  %v57 = vld [vmem:[%s0 + $0x54] sm:$0x1]
  %v58 = vld [vmem:[%s0 + $0x5c] sm:$0x1]
  %v59 = vld [vmem:[%s0 + $0x64] sm:$0x1]
  %v60 = vld [vmem:[%s0 + $0x6c] sm:$0x1]
  %v61 = vld [vmem:[%s0 + $0x74] sm:$0x1]
  %v62 = vld [vmem:[%s0 + $0x7c] sm:$0x1]
  %v63 = vld [vmem:[%s0 + $0x84] sm:$0x1]
  %v64 = vld [vmem:[%s0 + $0x8c] sm:$0x1]
  %vm65 = vsmask.f32 3328
  %vm66 = vsmask.f32 7440
  %vm67 = vmor %vm65, %vm66
  %v69 = vshrl.u32 %v17, 16
  %v71 = vrot.slane %v69, 4
  %v72 = vshll.u32 %v17, 16
  %v74 = vrot.slane %v72, 5
  %v75 = vor.u32 %v71, %v74
  %v76 = vrot.slane %v75, 4
  %v78 = vshll.u32 %v49, 16
  %v80 = vrot.slane %v78, 5
  %v81 = vsel %vm67, %v76, %v80
  %v83 = vshrl.u32 %v18, 16
  %v85 = vrot.slane %v83, 4
  %v86 = vshll.u32 %v18, 16
  %v88 = vrot.slane %v86, 5
  %v89 = vor.u32 %v85, %v88
  %v90 = vrot.slane %v89, 4
  %v92 = vshll.u32 %v50, 16
  %v94 = vrot.slane %v92, 5
  %v95 = vsel %vm67, %v90, %v94
  %v97 = vshrl.u32 %v19, 16
  %v99 = vrot.slane %v97, 4
  %v100 = vshll.u32 %v19, 16
  %v102 = vrot.slane %v100, 5
  %v103 = vor.u32 %v99, %v102
  %v104 = vrot.slane %v103, 4
  %v106 = vshll.u32 %v51, 16
  %v108 = vrot.slane %v106, 5
  %v109 = vsel %vm67, %v104, %v108
  %v111 = vshrl.u32 %v20, 16
  %v113 = vrot.slane %v111, 4
  %v114 = vshll.u32 %v20, 16
  %v116 = vrot.slane %v114, 5
  %v117 = vor.u32 %v113, %v116
  %v118 = vrot.slane %v117, 4
  %v120 = vshll.u32 %v52, 16
  %v122 = vrot.slane %v120, 5
  %v123 = vsel %vm67, %v118, %v122
  %v125 = vshrl.u32 %v21, 16
  %v127 = vrot.slane %v125, 4
  %v128 = vshll.u32 %v21, 16
  %v130 = vrot.slane %v128, 5
  %v131 = vor.u32 %v127, %v130
  %v132 = vrot.slane %v131, 4
  %v134 = vshll.u32 %v53, 16
  %v136 = vrot.slane %v134, 5
  %v137 = vsel %vm67, %v132, %v136
  %v139 = vshrl.u32 %v22, 16
  %v141 = vrot.slane %v139, 4
  %v142 = vshll.u32 %v22, 16
  %v144 = vrot.slane %v142, 5
  %v145 = vor.u32 %v141, %v144
  %v146 = vrot.slane %v145, 4
  %v148 = vshll.u32 %v54, 16
  %v150 = vrot.slane %v148, 5
  %v151 = vsel %vm67, %v146, %v150
  %v153 = vshrl.u32 %v23, 16
  %v155 = vrot.slane %v153, 4
  %v156 = vshll.u32 %v23, 16
  %v158 = vrot.slane %v156, 5
  %v159 = vor.u32 %v155, %v158
  %v160 = vrot.slane %v159, 4
  %v162 = vshll.u32 %v55, 16
  %v164 = vrot.slane %v162, 5
  %v165 = vsel %vm67, %v160, %v164
  %v167 = vshrl.u32 %v24, 16
  %v169 = vrot.slane %v167, 4
  %v170 = vshll.u32 %v24, 16
  %v172 = vrot.slane %v170, 5
  %v173 = vor.u32 %v169, %v172
  %v174 = vrot.slane %v173, 4
  %v176 = vshll.u32 %v56, 16
  %v178 = vrot.slane %v176, 5
  %v179 = vsel %vm67, %v174, %v178
  %v181 = vshrl.u32 %v25, 16
  %v183 = vrot.slane %v181, 4
  %v184 = vshll.u32 %v25, 16
  %v186 = vrot.slane %v184, 5
  %v187 = vor.u32 %v183, %v186
  %v188 = vrot.slane %v187, 4
  %v190 = vshll.u32 %v57, 16
  %v192 = vrot.slane %v190, 5
  %v193 = vsel %vm67, %v188, %v192
  %v195 = vshrl.u32 %v26, 16
  %v197 = vrot.slane %v195, 4
  %v198 = vshll.u32 %v26, 16
  %v200 = vrot.slane %v198, 5
  %v201 = vor.u32 %v197, %v200
  %v202 = vrot.slane %v201, 4
  %v204 = vshll.u32 %v58, 16
  %v206 = vrot.slane %v204, 5
  %v207 = vsel %vm67, %v202, %v206
  %v209 = vshrl.u32 %v27, 16
  %v211 = vrot.slane %v209, 4
  %v212 = vshll.u32 %v27, 16
  %v214 = vrot.slane %v212, 5
  %v215 = vor.u32 %v211, %v214
  %v216 = vrot.slane %v215, 4
  %v218 = vshll.u32 %v59, 16
  %v220 = vrot.slane %v218, 5
  %v221 = vsel %vm67, %v216, %v220
  %v223 = vshrl.u32 %v28, 16
  %v225 = vrot.slane %v223, 4
  %v226 = vshll.u32 %v28, 16
  %v228 = vrot.slane %v226, 5
  %v229 = vor.u32 %v225, %v228
  %v230 = vrot.slane %v229, 4
  %v232 = vshll.u32 %v60, 16
  %v234 = vrot.slane %v232, 5
  %v235 = vsel %vm67, %v230, %v234
  %v237 = vshrl.u32 %v29, 16
  %v239 = vrot.slane %v237, 4
  %v240 = vshll.u32 %v29, 16
  %v242 = vrot.slane %v240, 5
  %v243 = vor.u32 %v239, %v242
  %v244 = vrot.slane %v243, 4
  %v246 = vshll.u32 %v61, 16
  %v248 = vrot.slane %v246, 5
  %v249 = vsel %vm67, %v244, %v248
  %v251 = vshrl.u32 %v30, 16
  %v253 = vrot.slane %v251, 4
  %v254 = vshll.u32 %v30, 16
  %v256 = vrot.slane %v254, 5
  %v257 = vor.u32 %v253, %v256
  %v258 = vrot.slane %v257, 4
  %v260 = vshll.u32 %v62, 16
  %v262 = vrot.slane %v260, 5
  %v263 = vsel %vm67, %v258, %v262
  %v265 = vshrl.u32 %v31, 16
  %v267 = vrot.slane %v265, 4
  %v268 = vshll.u32 %v31, 16
  %v270 = vrot.slane %v268, 5
  %v271 = vor.u32 %v267, %v270
  %v272 = vrot.slane %v271, 4
  %v274 = vshll.u32 %v63, 16
  %v276 = vrot.slane %v274, 5
  %v277 = vsel %vm67, %v272, %v276
  %v279 = vshrl.u32 %v32, 16
  %v281 = vrot.slane %v279, 4
  %v282 = vshll.u32 %v32, 16
  %v284 = vrot.slane %v282, 5
  %v285 = vor.u32 %v281, %v284
  %v286 = vrot.slane %v285, 4
  %v288 = vshll.u32 %v64, 16
  %v290 = vrot.slane %v288, 5
  %v291 = vsel %vm67, %v286, %v290
  %v292 = vld [vmem:[%s1 + $0x40] sm:$0xf]
  %v293 = vld [vmem:[%s1 + $0x44] sm:$0xf]
  %v294 = vld [vmem:[%s1 + $0x48] sm:$0xf]
  %v295 = vld [vmem:[%s1 + $0x4c] sm:$0xf]
  %v296 = vld [vmem:[%s1 + $0x50] sm:$0xf]
  %v297 = vld [vmem:[%s1 + $0x54] sm:$0xf]
  %v298 = vld [vmem:[%s1 + $0x58] sm:$0xf]
  %v299 = vld [vmem:[%s1 + $0x5c] sm:$0xf]
  %v300 = vld [vmem:[%s1 + $0x60] sm:$0xf]
  %v301 = vld [vmem:[%s1 + $0x64] sm:$0xf]
  %v302 = vld [vmem:[%s1 + $0x68] sm:$0xf]
  %v303 = vld [vmem:[%s1 + $0x6c] sm:$0xf]
  %v304 = vld [vmem:[%s1 + $0x70] sm:$0xf]
  %v305 = vld [vmem:[%s1 + $0x74] sm:$0xf]
  %v306 = vld [vmem:[%s1 + $0x78] sm:$0xf]
  %v307 = vld [vmem:[%s1 + $0x7c] sm:$0xf]
  %v308 = vunpack.c.l.b16 %v81
  %v309 = vunpack.c.l.b16 %v95
  %v310 = vunpack.c.l.b16 %v109
  %v311 = vunpack.c.l.b16 %v123
  %v312 = vunpack.c.l.b16 %v137
  %v313 = vunpack.c.l.b16 %v151
  %v314 = vunpack.c.l.b16 %v165
  %v315 = vunpack.c.l.b16 %v179
  %v316 = vunpack.c.l.b16 %v193
  %v317 = vunpack.c.l.b16 %v207
  %v318 = vunpack.c.l.b16 %v221
  %v319 = vunpack.c.l.b16 %v235
  %v320 = vunpack.c.l.b16 %v249
  %v321 = vunpack.c.l.b16 %v263
  %v322 = vunpack.c.l.b16 %v277
  %v323 = vunpack.c.l.b16 %v291
  %v324 = vpack.c.b16 %v309, %v308
  %v325 = vpack.c.b16 %v311, %v310
  %v326 = vpack.c.b16 %v313, %v312
  %v327 = vpack.c.b16 %v315, %v314
  %v328 = vpack.c.b16 %v317, %v316
  %v329 = vpack.c.b16 %v319, %v318
  %v330 = vpack.c.b16 %v321, %v320
  %v331 = vpack.c.b16 %v323, %v322
  %v356 = vunpack.c.l.b16 %v292
  %v357 = vunpack.c.l.b16 %v293
  %v358 = vunpack.c.l.b16 %v294
  %v359 = vunpack.c.l.b16 %v295
  %v360 = vunpack.c.l.b16 %v296
  %v361 = vunpack.c.l.b16 %v297
  %v362 = vunpack.c.l.b16 %v298
  %v363 = vunpack.c.l.b16 %v299
  %v364 = vunpack.c.l.b16 %v300
  %v365 = vunpack.c.l.b16 %v301
  %v366 = vunpack.c.l.b16 %v302
  %v367 = vunpack.c.l.b16 %v303
  %v368 = vunpack.c.l.b16 %v304
  %v369 = vunpack.c.l.b16 %v305
  %v370 = vunpack.c.l.b16 %v306
  %v371 = vunpack.c.l.b16 %v307
  %v372 = vpack.c.b16 %v357, %v356
  %v373 = vpack.c.b16 %v359, %v358
  %v374 = vpack.c.b16 %v361, %v360
  %v375 = vpack.c.b16 %v363, %v362
  %v376 = vpack.c.b16 %v365, %v364
  %v377 = vpack.c.b16 %v367, %v366
  %v378 = vpack.c.b16 %v369, %v368
  %v379 = vpack.c.b16 %v371, %v370
  %388 = vmatpush.bf16.msra.mxu0 %v379
  %389 = vmatpush.bf16.msra.mxu0 %v378
  %390 = vmatpush.bf16.msra.mxu0 %v377
  %391 = vmatpush.bf16.msra.mxu0 %v376
  %392 = vmatpush.bf16.msra.mxu0 %v375
  %393 = vmatpush.bf16.msra.mxu0 %v374
  %394 = vmatpush.bf16.msra.mxu0 %v373
  %395 = vmatpush.bf16.msra.mxu0 %v372
  %396 = vmatmul.bf16.gmra.mxu0 %v324
  %v397 = vpop.f32.mrf.mxu0
  %v398 = vadd.f32 0.0, %v397
  %v399 = vpop.f32.mrf.mxu0
  %v400 = vadd.f32 0.0, %v399
  %401 = vmatmul.bf16.gmra.mxu0 %v325
  %v402 = vpop.f32.mrf.mxu0
  %v403 = vadd.f32 0.0, %v402
  %v404 = vpop.f32.mrf.mxu0
  %v405 = vadd.f32 0.0, %v404
  %406 = vmatmul.bf16.gmra.mxu0 %v326
  %v407 = vpop.f32.mrf.mxu0
  %v408 = vadd.f32 0.0, %v407
  %v409 = vpop.f32.mrf.mxu0
  %v410 = vadd.f32 0.0, %v409
  %411 = vmatmul.bf16.gmra.mxu0 %v327
  %v412 = vpop.f32.mrf.mxu0
  %v413 = vadd.f32 0.0, %v412
  %v414 = vpop.f32.mrf.mxu0
  %v415 = vadd.f32 0.0, %v414
  %416 = vmatmul.bf16.gmra.mxu0 %v328
  %v417 = vpop.f32.mrf.mxu0
  %v418 = vadd.f32 0.0, %v417
  %v419 = vpop.f32.mrf.mxu0
  %v420 = vadd.f32 0.0, %v419
  %421 = vmatmul.bf16.gmra.mxu0 %v329
  %v422 = vpop.f32.mrf.mxu0
  %v423 = vadd.f32 0.0, %v422
  %v424 = vpop.f32.mrf.mxu0
  %v425 = vadd.f32 0.0, %v424
  %426 = vmatmul.bf16.gmra.mxu0 %v330
  %v427 = vpop.f32.mrf.mxu0
  %v428 = vadd.f32 0.0, %v427
  %v429 = vpop.f32.mrf.mxu0
  %v430 = vadd.f32 0.0, %v429
  %431 = vmatmul.bf16.gmra.mxu0 %v331
  %v432 = vpop.f32.mrf.mxu0
  %v433 = vadd.f32 0.0, %v432
  %v434 = vpop.f32.mrf.mxu0
  %v435 = vadd.f32 0.0, %v434
  %436 = vdwg.mxu0
  %v453 = vunpack.c.l.b16 %v17
  %v454 = vunpack.c.l.b16 %v18
  %v455 = vunpack.c.l.b16 %v19
  %v456 = vunpack.c.l.b16 %v20
  %v457 = vunpack.c.l.b16 %v21
  %v458 = vunpack.c.l.b16 %v22
  %v459 = vunpack.c.l.b16 %v23
  %v460 = vunpack.c.l.b16 %v24
  %v461 = vunpack.c.l.b16 %v25
  %v462 = vunpack.c.l.b16 %v26
  %v463 = vunpack.c.l.b16 %v27
  %v464 = vunpack.c.l.b16 %v28
  %v465 = vunpack.c.l.b16 %v29
  %v466 = vunpack.c.l.b16 %v30
  %v467 = vunpack.c.l.b16 %v31
  %v468 = vunpack.c.l.b16 %v32
  %v469 = vpack.c.b16 %v454, %v453
  %v470 = vpack.c.b16 %v456, %v455
  %v471 = vpack.c.b16 %v458, %v457
  %v472 = vpack.c.b16 %v460, %v459
  %v473 = vpack.c.b16 %v462, %v461
  %v474 = vpack.c.b16 %v464, %v463
  %v475 = vpack.c.b16 %v466, %v465
  %v476 = vpack.c.b16 %v468, %v467
  %v501 = vunpack.c.l.b16 %v33
  %v502 = vunpack.c.l.b16 %v34
  %v503 = vunpack.c.l.b16 %v35
  %v504 = vunpack.c.l.b16 %v36
  %v505 = vunpack.c.l.b16 %v37
  %v506 = vunpack.c.l.b16 %v38
  %v507 = vunpack.c.l.b16 %v39
  %v508 = vunpack.c.l.b16 %v40
  %v509 = vunpack.c.l.b16 %v41
  %v510 = vunpack.c.l.b16 %v42
  %v511 = vunpack.c.l.b16 %v43
  %v512 = vunpack.c.l.b16 %v44
  %v513 = vunpack.c.l.b16 %v45
  %v514 = vunpack.c.l.b16 %v46
  %v515 = vunpack.c.l.b16 %v47
  %v516 = vunpack.c.l.b16 %v48
  %v517 = vpack.c.b16 %v502, %v501
  %v518 = vpack.c.b16 %v504, %v503
  %v519 = vpack.c.b16 %v506, %v505
  %v520 = vpack.c.b16 %v508, %v507
  %v521 = vpack.c.b16 %v510, %v509
  %v522 = vpack.c.b16 %v512, %v511
  %v523 = vpack.c.b16 %v514, %v513
  %v524 = vpack.c.b16 %v516, %v515
  %533 = vmatpush.bf16.msra.mxu0 %v524
  %534 = vmatpush.bf16.msra.mxu0 %v523
  %535 = vmatpush.bf16.msra.mxu0 %v522
  %536 = vmatpush.bf16.msra.mxu0 %v521
  %537 = vmatpush.bf16.msra.mxu0 %v520
  %538 = vmatpush.bf16.msra.mxu0 %v519
  %539 = vmatpush.bf16.msra.mxu0 %v518
  %540 = vmatpush.bf16.msra.mxu0 %v517
  %541 = vmatmul.bf16.gmra.mxu0 %v469
  %v542 = vpop.f32.mrf.mxu0
  %v543 = vadd.f32 %v398, %v542
  %v544 = vpop.f32.mrf.mxu0
  %v545 = vadd.f32 %v400, %v544
  %546 = vmatmul.bf16.gmra.mxu0 %v470
  %v547 = vpop.f32.mrf.mxu0
  %v548 = vadd.f32 %v403, %v547
  %v549 = vpop.f32.mrf.mxu0
  %v550 = vadd.f32 %v405, %v549
  %551 = vmatmul.bf16.gmra.mxu0 %v471
  %v552 = vpop.f32.mrf.mxu0
  %v553 = vadd.f32 %v408, %v552
  %v554 = vpop.f32.mrf.mxu0
  %v555 = vadd.f32 %v410, %v554
  %556 = vmatmul.bf16.gmra.mxu0 %v472
  %v557 = vpop.f32.mrf.mxu0
  %v558 = vadd.f32 %v413, %v557
  %v559 = vpop.f32.mrf.mxu0
  %v560 = vadd.f32 %v415, %v559
  %561 = vmatmul.bf16.gmra.mxu0 %v473
  %v562 = vpop.f32.mrf.mxu0
  %v563 = vadd.f32 %v418, %v562
  %v564 = vpop.f32.mrf.mxu0
  %v565 = vadd.f32 %v420, %v564
  %566 = vmatmul.bf16.gmra.mxu0 %v474
  %v567 = vpop.f32.mrf.mxu0
  %v568 = vadd.f32 %v423, %v567
  %v569 = vpop.f32.mrf.mxu0
  %v570 = vadd.f32 %v425, %v569
  %571 = vmatmul.bf16.gmra.mxu0 %v475
  %v572 = vpop.f32.mrf.mxu0
  %v573 = vadd.f32 %v428, %v572
  %v574 = vpop.f32.mrf.mxu0
  %v575 = vadd.f32 %v430, %v574
  %576 = vmatmul.bf16.gmra.mxu0 %v476
  %v577 = vpop.f32.mrf.mxu0
  %v578 = vadd.f32 %v433, %v577
  %v579 = vpop.f32.mrf.mxu0
  %v580 = vadd.f32 %v435, %v579
  %581 = vdwg.mxu0
  %v582 = vld [vmem:[%s0] sm:$0xe]
  %v583 = vld [vmem:[%s0 + $0x8] sm:$0xe]
  %v584 = vld [vmem:[%s0 + $0x10] sm:$0xe]
  %v585 = vld [vmem:[%s0 + $0x18] sm:$0xe]
  %v586 = vld [vmem:[%s0 + $0x20] sm:$0xe]
  %v587 = vld [vmem:[%s0 + $0x28] sm:$0xe]
  %v588 = vld [vmem:[%s0 + $0x30] sm:$0xe]
  %v589 = vld [vmem:[%s0 + $0x38] sm:$0xe]
  %v590 = vld [vmem:[%s0 + $0x50] sm:$0xe]
  %v591 = vld [vmem:[%s0 + $0x58] sm:$0xe]
  %v592 = vld [vmem:[%s0 + $0x60] sm:$0xe]
  %v593 = vld [vmem:[%s0 + $0x68] sm:$0xe]
  %v594 = vld [vmem:[%s0 + $0x70] sm:$0xe]
  %v595 = vld [vmem:[%s0 + $0x78] sm:$0xe]
  %v596 = vld [vmem:[%s0 + $0x80] sm:$0xe]
  %v597 = vld [vmem:[%s0 + $0x88] sm:$0xe]
  %vm630 = vcmask 1042432
  %vm631 = vcmask 1046532
  %vm632 = vmor %vm630, %vm631
  %v633 = vrot.slane %v582, 5
  %v634 = vrot.slane %v633, 4
  %v635 = vrot.slane %v49, 5
  %v636 = vsel %vm632, %v634, %v635
  %v637 = vrot.slane %v583, 5
  %v638 = vrot.slane %v637, 4
  %v639 = vrot.slane %v50, 5
  %v640 = vsel %vm632, %v638, %v639
  %v641 = vrot.slane %v584, 5
  %v642 = vrot.slane %v641, 4
  %v643 = vrot.slane %v51, 5
  %v644 = vsel %vm632, %v642, %v643
  %v645 = vrot.slane %v585, 5
  %v646 = vrot.slane %v645, 4
  %v647 = vrot.slane %v52, 5
  %v648 = vsel %vm632, %v646, %v647
  %v649 = vrot.slane %v586, 5
  %v650 = vrot.slane %v649, 4
  %v651 = vrot.slane %v53, 5
  %v652 = vsel %vm632, %v650, %v651
  %v653 = vrot.slane %v587, 5
  %v654 = vrot.slane %v653, 4
  %v655 = vrot.slane %v54, 5
  %v656 = vsel %vm632, %v654, %v655
  %v657 = vrot.slane %v588, 5
  %v658 = vrot.slane %v657, 4
  %v659 = vrot.slane %v55, 5
  %v660 = vsel %vm632, %v658, %v659
  %v661 = vrot.slane %v589, 5
  %v662 = vrot.slane %v661, 4
  %v663 = vrot.slane %v56, 5
  %v664 = vsel %vm632, %v662, %v663
  %v665 = vrot.slane %v590, 5
  %v666 = vrot.slane %v665, 4
  %v667 = vrot.slane %v57, 5
  %v668 = vsel %vm632, %v666, %v667
  %v669 = vrot.slane %v591, 5
  %v670 = vrot.slane %v669, 4
  %v671 = vrot.slane %v58, 5
  %v672 = vsel %vm632, %v670, %v671
  %v673 = vrot.slane %v592, 5
  %v674 = vrot.slane %v673, 4
  %v675 = vrot.slane %v59, 5
  %v676 = vsel %vm632, %v674, %v675
  %v677 = vrot.slane %v593, 5
  %v678 = vrot.slane %v677, 4
  %v679 = vrot.slane %v60, 5
  %v680 = vsel %vm632, %v678, %v679
  %v681 = vrot.slane %v594, 5
  %v682 = vrot.slane %v681, 4
  %v683 = vrot.slane %v61, 5
  %v684 = vsel %vm632, %v682, %v683
  %v685 = vrot.slane %v595, 5
  %v686 = vrot.slane %v685, 4
  %v687 = vrot.slane %v62, 5
  %v688 = vsel %vm632, %v686, %v687
  %v689 = vrot.slane %v596, 5
  %v690 = vrot.slane %v689, 4
  %v691 = vrot.slane %v63, 5
  %v692 = vsel %vm632, %v690, %v691
  %v693 = vrot.slane %v597, 5
  %v694 = vrot.slane %v693, 4
  %v695 = vrot.slane %v64, 5
  %v696 = vsel %vm632, %v694, %v695
  %v697 = vld [vmem:[%s1 + $0x80] sm:$0xf]
  %v698 = vld [vmem:[%s1 + $0x84] sm:$0xf]
  %v699 = vld [vmem:[%s1 + $0x88] sm:$0xf]
  %v700 = vld [vmem:[%s1 + $0x8c] sm:$0xf]
  %v701 = vld [vmem:[%s1 + $0x90] sm:$0xf]
  %v702 = vld [vmem:[%s1 + $0x94] sm:$0xf]
  %v703 = vld [vmem:[%s1 + $0x98] sm:$0xf]
  %v704 = vld [vmem:[%s1 + $0x9c] sm:$0xf]
  %v705 = vld [vmem:[%s1 + $0xa0] sm:$0xf]
  %v706 = vld [vmem:[%s1 + $0xa4] sm:$0xf]
  %v707 = vld [vmem:[%s1 + $0xa8] sm:$0xf]
  %v708 = vld [vmem:[%s1 + $0xac] sm:$0xf]
  %v709 = vld [vmem:[%s1 + $0xb0] sm:$0xf]
  %v710 = vld [vmem:[%s1 + $0xb4] sm:$0xf]
  %v711 = vld [vmem:[%s1 + $0xb8] sm:$0xf]
  %v712 = vld [vmem:[%s1 + $0xbc] sm:$0xf]
  %v713 = vunpack.c.l.b16 %v636
  %v714 = vunpack.c.l.b16 %v640
  %v715 = vunpack.c.l.b16 %v644
  %v716 = vunpack.c.l.b16 %v648
  %v717 = vunpack.c.l.b16 %v652
  %v718 = vunpack.c.l.b16 %v656
  %v719 = vunpack.c.l.b16 %v660
  %v720 = vunpack.c.l.b16 %v664
  %v721 = vunpack.c.l.b16 %v668
  %v722 = vunpack.c.l.b16 %v672
  %v723 = vunpack.c.l.b16 %v676
  %v724 = vunpack.c.l.b16 %v680
  %v725 = vunpack.c.l.b16 %v684
  %v726 = vunpack.c.l.b16 %v688
  %v727 = vunpack.c.l.b16 %v692
  %v728 = vunpack.c.l.b16 %v696
  %v729 = vpack.c.b16 %v714, %v713
  %v730 = vpack.c.b16 %v716, %v715
  %v731 = vpack.c.b16 %v718, %v717
  %v732 = vpack.c.b16 %v720, %v719
  %v733 = vpack.c.b16 %v722, %v721
  %v734 = vpack.c.b16 %v724, %v723
  %v735 = vpack.c.b16 %v726, %v725
  %v736 = vpack.c.b16 %v728, %v727
  %v761 = vunpack.c.l.b16 %v697
  %v762 = vunpack.c.l.b16 %v698
  %v763 = vunpack.c.l.b16 %v699
  %v764 = vunpack.c.l.b16 %v700
  %v765 = vunpack.c.l.b16 %v701
  %v766 = vunpack.c.l.b16 %v702
  %v767 = vunpack.c.l.b16 %v703
  %v768 = vunpack.c.l.b16 %v704
  %v769 = vunpack.c.l.b16 %v705
  %v770 = vunpack.c.l.b16 %v706
  %v771 = vunpack.c.l.b16 %v707
  %v772 = vunpack.c.l.b16 %v708
  %v773 = vunpack.c.l.b16 %v709
  %v774 = vunpack.c.l.b16 %v710
  %v775 = vunpack.c.l.b16 %v711
  %v776 = vunpack.c.l.b16 %v712
  %v777 = vpack.c.b16 %v762, %v761
  %v778 = vpack.c.b16 %v764, %v763
  %v779 = vpack.c.b16 %v766, %v765
  %v780 = vpack.c.b16 %v768, %v767
  %v781 = vpack.c.b16 %v770, %v769
  %v782 = vpack.c.b16 %v772, %v771
  %v783 = vpack.c.b16 %v774, %v773
  %v784 = vpack.c.b16 %v776, %v775
  %793 = vmatpush.bf16.msra.mxu0 %v784
  %794 = vmatpush.bf16.msra.mxu0 %v783
  %795 = vmatpush.bf16.msra.mxu0 %v782
  %796 = vmatpush.bf16.msra.mxu0 %v781
  %797 = vmatpush.bf16.msra.mxu0 %v780
  %798 = vmatpush.bf16.msra.mxu0 %v779
  %799 = vmatpush.bf16.msra.mxu0 %v778
  %800 = vmatpush.bf16.msra.mxu0 %v777
  %801 = vmatmul.bf16.gmra.mxu0 %v729
  %v802 = vpop.f32.mrf.mxu0
  %v803 = vadd.f32 0.0, %v802
  %v804 = vpop.f32.mrf.mxu0
  %v805 = vadd.f32 0.0, %v804
  %806 = vmatmul.bf16.gmra.mxu0 %v730
  %v807 = vpop.f32.mrf.mxu0
  %v808 = vadd.f32 0.0, %v807
  %v809 = vpop.f32.mrf.mxu0
  %v810 = vadd.f32 0.0, %v809
  %811 = vmatmul.bf16.gmra.mxu0 %v731
  %v812 = vpop.f32.mrf.mxu0
  %v813 = vadd.f32 0.0, %v812
  %v814 = vpop.f32.mrf.mxu0
  %v815 = vadd.f32 0.0, %v814
  %816 = vmatmul.bf16.gmra.mxu0 %v732
  %v817 = vpop.f32.mrf.mxu0
  %v818 = vadd.f32 0.0, %v817
  %v819 = vpop.f32.mrf.mxu0
  %v820 = vadd.f32 0.0, %v819
  %821 = vmatmul.bf16.gmra.mxu0 %v733
  %v822 = vpop.f32.mrf.mxu0
  %v823 = vadd.f32 0.0, %v822
  %v824 = vpop.f32.mrf.mxu0
  %v825 = vadd.f32 0.0, %v824
  %826 = vmatmul.bf16.gmra.mxu0 %v734
  %v827 = vpop.f32.mrf.mxu0
  %v828 = vadd.f32 0.0, %v827
  %v829 = vpop.f32.mrf.mxu0
  %v830 = vadd.f32 0.0, %v829
  %831 = vmatmul.bf16.gmra.mxu0 %v735
  %v832 = vpop.f32.mrf.mxu0
  %v833 = vadd.f32 0.0, %v832
  %v834 = vpop.f32.mrf.mxu0
  %v835 = vadd.f32 0.0, %v834
  %836 = vmatmul.bf16.gmra.mxu0 %v736
  %v837 = vpop.f32.mrf.mxu0
  %v838 = vadd.f32 0.0, %v837
  %v839 = vpop.f32.mrf.mxu0
  %v840 = vadd.f32 0.0, %v839
  %841 = vdwg.mxu0
  %v842 = vadd.f32 %v543, %v803
  %v843 = vadd.f32 %v545, %v805
  %v844 = vadd.f32 %v548, %v808
  %v845 = vadd.f32 %v550, %v810
  %v846 = vadd.f32 %v553, %v813
  %v847 = vadd.f32 %v555, %v815
  %v848 = vadd.f32 %v558, %v818
  %v849 = vadd.f32 %v560, %v820
  %v850 = vadd.f32 %v563, %v823
  %v851 = vadd.f32 %v565, %v825
  %v852 = vadd.f32 %v568, %v828
  %v853 = vadd.f32 %v570, %v830
  %v854 = vadd.f32 %v573, %v833
  %v855 = vadd.f32 %v575, %v835
  %v856 = vadd.f32 %v578, %v838
  %v857 = vadd.f32 %v580, %v840
  %s858 = scalar_lea.vmem %s0, 8
  %v859 = vld [vmem:[%s858] sm:$0xf]
  %v860 = vld [vmem:[%s858 + $0x8] sm:$0xf]
  %v861 = vld [vmem:[%s858 + $0x10] sm:$0xf]
  %v862 = vld [vmem:[%s858 + $0x18] sm:$0xf]
  %v863 = vld [vmem:[%s858 + $0x20] sm:$0xf]
  %v864 = vld [vmem:[%s858 + $0x28] sm:$0xf]
  %v865 = vld [vmem:[%s858 + $0x30] sm:$0xf]
  %v866 = vld [vmem:[%s858 + $0x38] sm:$0xf]
  %v867 = vld [vmem:[%s858 + $0x50] sm:$0xf]
  %v868 = vld [vmem:[%s858 + $0x58] sm:$0xf]
  %v869 = vld [vmem:[%s858 + $0x60] sm:$0xf]
  %v870 = vld [vmem:[%s858 + $0x68] sm:$0xf]
  %v871 = vld [vmem:[%s858 + $0x70] sm:$0xf]
  %v872 = vld [vmem:[%s858 + $0x78] sm:$0xf]
  %v873 = vld [vmem:[%s858 + $0x80] sm:$0xf]
  %v874 = vld [vmem:[%s858 + $0x88] sm:$0xf]
  %v875 = vld [vmem:[%s1 + $0xc0] sm:$0xf]
  %v876 = vld [vmem:[%s1 + $0xc4] sm:$0xf]
  %v877 = vld [vmem:[%s1 + $0xc8] sm:$0xf]
  %v878 = vld [vmem:[%s1 + $0xcc] sm:$0xf]
  %v879 = vld [vmem:[%s1 + $0xd0] sm:$0xf]
  %v880 = vld [vmem:[%s1 + $0xd4] sm:$0xf]
  %v881 = vld [vmem:[%s1 + $0xd8] sm:$0xf]
  %v882 = vld [vmem:[%s1 + $0xdc] sm:$0xf]
  %v883 = vld [vmem:[%s1 + $0xe0] sm:$0xf]
  %v884 = vld [vmem:[%s1 + $0xe4] sm:$0xf]
  %v885 = vld [vmem:[%s1 + $0xe8] sm:$0xf]
  %v886 = vld [vmem:[%s1 + $0xec] sm:$0xf]
  %v887 = vld [vmem:[%s1 + $0xf0] sm:$0xf]
  %v888 = vld [vmem:[%s1 + $0xf4] sm:$0xf]
  %v889 = vld [vmem:[%s1 + $0xf8] sm:$0xf]
  %v890 = vld [vmem:[%s1 + $0xfc] sm:$0xf]
  %v907 = vunpack.c.l.b16 %v859
  %v908 = vunpack.c.l.b16 %v860
  %v909 = vunpack.c.l.b16 %v861
  %v910 = vunpack.c.l.b16 %v862
  %v911 = vunpack.c.l.b16 %v863
  %v912 = vunpack.c.l.b16 %v864
  %v913 = vunpack.c.l.b16 %v865
  %v914 = vunpack.c.l.b16 %v866
  %v915 = vunpack.c.l.b16 %v867
  %v916 = vunpack.c.l.b16 %v868
  %v917 = vunpack.c.l.b16 %v869
  %v918 = vunpack.c.l.b16 %v870
  %v919 = vunpack.c.l.b16 %v871
  %v920 = vunpack.c.l.b16 %v872
  %v921 = vunpack.c.l.b16 %v873
  %v922 = vunpack.c.l.b16 %v874
  %v923 = vpack.c.b16 %v908, %v907
  %v924 = vpack.c.b16 %v910, %v909
  %v925 = vpack.c.b16 %v912, %v911
  %v926 = vpack.c.b16 %v914, %v913
  %v927 = vpack.c.b16 %v916, %v915
  %v928 = vpack.c.b16 %v918, %v917
  %v929 = vpack.c.b16 %v920, %v919
  %v930 = vpack.c.b16 %v922, %v921
  %v955 = vunpack.c.l.b16 %v875
  %v956 = vunpack.c.l.b16 %v876
  %v957 = vunpack.c.l.b16 %v877
  %v958 = vunpack.c.l.b16 %v878
  %v959 = vunpack.c.l.b16 %v879
  %v960 = vunpack.c.l.b16 %v880
  %v961 = vunpack.c.l.b16 %v881
  %v962 = vunpack.c.l.b16 %v882
  %v963 = vunpack.c.l.b16 %v883
  %v964 = vunpack.c.l.b16 %v884
  %v965 = vunpack.c.l.b16 %v885
  %v966 = vunpack.c.l.b16 %v886
  %v967 = vunpack.c.l.b16 %v887
  %v968 = vunpack.c.l.b16 %v888
  %v969 = vunpack.c.l.b16 %v889
  %v970 = vunpack.c.l.b16 %v890
  %v971 = vpack.c.b16 %v956, %v955
  %v972 = vpack.c.b16 %v958, %v957
  %v973 = vpack.c.b16 %v960, %v959
  %v974 = vpack.c.b16 %v962, %v961
  %v975 = vpack.c.b16 %v964, %v963
  %v976 = vpack.c.b16 %v966, %v965
  %v977 = vpack.c.b16 %v968, %v967
  %v978 = vpack.c.b16 %v970, %v969
  %987 = vmatpush.bf16.msra.mxu0 %v978
  %988 = vmatpush.bf16.msra.mxu0 %v977
  %989 = vmatpush.bf16.msra.mxu0 %v976
  %990 = vmatpush.bf16.msra.mxu0 %v975
  %991 = vmatpush.bf16.msra.mxu0 %v974
  %992 = vmatpush.bf16.msra.mxu0 %v973
  %993 = vmatpush.bf16.msra.mxu0 %v972
  %994 = vmatpush.bf16.msra.mxu0 %v971
  %995 = vmatmul.bf16.gmra.mxu0 %v923
  %v996 = vpop.f32.mrf.mxu0
  %v997 = vadd.f32 0.0, %v996
  %v998 = vpop.f32.mrf.mxu0
  %v999 = vadd.f32 0.0, %v998
  %1000 = vmatmul.bf16.gmra.mxu0 %v924
  %v1001 = vpop.f32.mrf.mxu0
  %v1002 = vadd.f32 0.0, %v1001
  %v1003 = vpop.f32.mrf.mxu0
  %v1004 = vadd.f32 0.0, %v1003
  %1005 = vmatmul.bf16.gmra.mxu0 %v925
  %v1006 = vpop.f32.mrf.mxu0
  %v1007 = vadd.f32 0.0, %v1006
  %v1008 = vpop.f32.mrf.mxu0
  %v1009 = vadd.f32 0.0, %v1008
  %1010 = vmatmul.bf16.gmra.mxu0 %v926
  %v1011 = vpop.f32.mrf.mxu0
  %v1012 = vadd.f32 0.0, %v1011
  %v1013 = vpop.f32.mrf.mxu0
  %v1014 = vadd.f32 0.0, %v1013
  %1015 = vmatmul.bf16.gmra.mxu0 %v927
  %v1016 = vpop.f32.mrf.mxu0
  %v1017 = vadd.f32 0.0, %v1016
  %v1018 = vpop.f32.mrf.mxu0
  %v1019 = vadd.f32 0.0, %v1018
  %1020 = vmatmul.bf16.gmra.mxu0 %v928
  %v1021 = vpop.f32.mrf.mxu0
  %v1022 = vadd.f32 0.0, %v1021
  %v1023 = vpop.f32.mrf.mxu0
  %v1024 = vadd.f32 0.0, %v1023
  %1025 = vmatmul.bf16.gmra.mxu0 %v929
  %v1026 = vpop.f32.mrf.mxu0
  %v1027 = vadd.f32 0.0, %v1026
  %v1028 = vpop.f32.mrf.mxu0
  %v1029 = vadd.f32 0.0, %v1028
  %1030 = vmatmul.bf16.gmra.mxu0 %v930
  %v1031 = vpop.f32.mrf.mxu0
  %v1032 = vadd.f32 0.0, %v1031
  %v1033 = vpop.f32.mrf.mxu0
  %v1034 = vadd.f32 0.0, %v1033
  %1035 = vdwg.mxu0
  %v1036 = vadd.f32 %v842, %v997
  %v1037 = vadd.f32 %v843, %v999
  %v1038 = vadd.f32 %v844, %v1002
  %v1039 = vadd.f32 %v845, %v1004
  %v1040 = vadd.f32 %v846, %v1007
  %v1041 = vadd.f32 %v847, %v1009
  %v1042 = vadd.f32 %v848, %v1012
  %v1043 = vadd.f32 %v849, %v1014
  %v1044 = vadd.f32 %v850, %v1017
  %v1045 = vadd.f32 %v851, %v1019
  %v1046 = vadd.f32 %v852, %v1022
  %v1047 = vadd.f32 %v853, %v1024
  %v1048 = vadd.f32 %v854, %v1027
  %v1049 = vadd.f32 %v855, %v1029
  %v1050 = vadd.f32 %v856, %v1032
  %v1051 = vadd.f32 %v857, %v1034
  %v1052 = vld [vmem:[%s858] sm:$0xf]
  %v1053 = vld [vmem:[%s858 + $0x4] sm:$0x1]
  %v1054 = vld [vmem:[%s858 + $0x8] sm:$0xf]
  %v1055 = vld [vmem:[%s858 + $0xc] sm:$0x1]
  %v1056 = vld [vmem:[%s858 + $0x10] sm:$0xf]
  %v1057 = vld [vmem:[%s858 + $0x14] sm:$0x1]
  %v1058 = vld [vmem:[%s858 + $0x18] sm:$0xf]
  %v1059 = vld [vmem:[%s858 + $0x1c] sm:$0x1]
  %v1060 = vld [vmem:[%s858 + $0x20] sm:$0xf]
  %v1061 = vld [vmem:[%s858 + $0x24] sm:$0x1]
  %v1062 = vld [vmem:[%s858 + $0x28] sm:$0xf]
  %v1063 = vld [vmem:[%s858 + $0x2c] sm:$0x1]
  %v1064 = vld [vmem:[%s858 + $0x30] sm:$0xf]
  %v1065 = vld [vmem:[%s858 + $0x34] sm:$0x1]
  %v1066 = vld [vmem:[%s858 + $0x38] sm:$0xf]
  %v1067 = vld [vmem:[%s858 + $0x3c] sm:$0x1]
  %v1068 = vld [vmem:[%s858 + $0x50] sm:$0xf]
  %v1069 = vld [vmem:[%s858 + $0x54] sm:$0x1]
  %v1070 = vld [vmem:[%s858 + $0x58] sm:$0xf]
  %v1071 = vld [vmem:[%s858 + $0x5c] sm:$0x1]
  %v1072 = vld [vmem:[%s858 + $0x60] sm:$0xf]
  %v1073 = vld [vmem:[%s858 + $0x64] sm:$0x1]
  %v1074 = vld [vmem:[%s858 + $0x68] sm:$0xf]
  %v1075 = vld [vmem:[%s858 + $0x6c] sm:$0x1]
  %v1076 = vld [vmem:[%s858 + $0x70] sm:$0xf]
  %v1077 = vld [vmem:[%s858 + $0x74] sm:$0x1]
  %v1078 = vld [vmem:[%s858 + $0x78] sm:$0xf]
  %v1079 = vld [vmem:[%s858 + $0x7c] sm:$0x1]
  %v1080 = vld [vmem:[%s858 + $0x80] sm:$0xf]
  %v1081 = vld [vmem:[%s858 + $0x84] sm:$0x1]
  %v1082 = vld [vmem:[%s858 + $0x88] sm:$0xf]
  %v1083 = vld [vmem:[%s858 + $0x8c] sm:$0x1]
  %v1085 = vshrl.u32 %v1052, 16
  %v1087 = vrot.slane %v1085, 4
  %v1088 = vshll.u32 %v1052, 16
  %v1090 = vrot.slane %v1088, 5
  %v1091 = vor.u32 %v1087, %v1090
  %v1092 = vrot.slane %v1091, 4
  %v1094 = vshll.u32 %v1053, 16
  %v1096 = vrot.slane %v1094, 5
  %v1097 = vsel %vm67, %v1092, %v1096
  %v1099 = vshrl.u32 %v1054, 16
  %v1101 = vrot.slane %v1099, 4
  %v1102 = vshll.u32 %v1054, 16
  %v1104 = vrot.slane %v1102, 5
  %v1105 = vor.u32 %v1101, %v1104
  %v1106 = vrot.slane %v1105, 4
  %v1108 = vshll.u32 %v1055, 16
  %v1110 = vrot.slane %v1108, 5
  %v1111 = vsel %vm67, %v1106, %v1110
  %v1113 = vshrl.u32 %v1056, 16
  %v1115 = vrot.slane %v1113, 4
  %v1116 = vshll.u32 %v1056, 16
  %v1118 = vrot.slane %v1116, 5
  %v1119 = vor.u32 %v1115, %v1118
  %v1120 = vrot.slane %v1119, 4
  %v1122 = vshll.u32 %v1057, 16
  %v1124 = vrot.slane %v1122, 5
  %v1125 = vsel %vm67, %v1120, %v1124
  %v1127 = vshrl.u32 %v1058, 16
  %v1129 = vrot.slane %v1127, 4
  %v1130 = vshll.u32 %v1058, 16
  %v1132 = vrot.slane %v1130, 5
  %v1133 = vor.u32 %v1129, %v1132
  %v1134 = vrot.slane %v1133, 4
  %v1136 = vshll.u32 %v1059, 16
  %v1138 = vrot.slane %v1136, 5
  %v1139 = vsel %vm67, %v1134, %v1138
  %v1141 = vshrl.u32 %v1060, 16
  %v1143 = vrot.slane %v1141, 4
  %v1144 = vshll.u32 %v1060, 16
  %v1146 = vrot.slane %v1144, 5
  %v1147 = vor.u32 %v1143, %v1146
  %v1148 = vrot.slane %v1147, 4
  %v1150 = vshll.u32 %v1061, 16
  %v1152 = vrot.slane %v1150, 5
  %v1153 = vsel %vm67, %v1148, %v1152
  %v1155 = vshrl.u32 %v1062, 16
  %v1157 = vrot.slane %v1155, 4
  %v1158 = vshll.u32 %v1062, 16
  %v1160 = vrot.slane %v1158, 5
  %v1161 = vor.u32 %v1157, %v1160
  %v1162 = vrot.slane %v1161, 4
  %v1164 = vshll.u32 %v1063, 16
  %v1166 = vrot.slane %v1164, 5
  %v1167 = vsel %vm67, %v1162, %v1166
  %v1169 = vshrl.u32 %v1064, 16
  %v1171 = vrot.slane %v1169, 4
  %v1172 = vshll.u32 %v1064, 16
  %v1174 = vrot.slane %v1172, 5
  %v1175 = vor.u32 %v1171, %v1174
  %v1176 = vrot.slane %v1175, 4
  %v1178 = vshll.u32 %v1065, 16
  %v1180 = vrot.slane %v1178, 5
  %v1181 = vsel %vm67, %v1176, %v1180
  %v1183 = vshrl.u32 %v1066, 16
  %v1185 = vrot.slane %v1183, 4
  %v1186 = vshll.u32 %v1066, 16
  %v1188 = vrot.slane %v1186, 5
  %v1189 = vor.u32 %v1185, %v1188
  %v1190 = vrot.slane %v1189, 4
  %v1192 = vshll.u32 %v1067, 16
  %v1194 = vrot.slane %v1192, 5
  %v1195 = vsel %vm67, %v1190, %v1194
  %v1197 = vshrl.u32 %v1068, 16
  %v1199 = vrot.slane %v1197, 4
  %v1200 = vshll.u32 %v1068, 16
  %v1202 = vrot.slane %v1200, 5
  %v1203 = vor.u32 %v1199, %v1202
  %v1204 = vrot.slane %v1203, 4
  %v1206 = vshll.u32 %v1069, 16
  %v1208 = vrot.slane %v1206, 5
  %v1209 = vsel %vm67, %v1204, %v1208
  %v1211 = vshrl.u32 %v1070, 16
  %v1213 = vrot.slane %v1211, 4
  %v1214 = vshll.u32 %v1070, 16
  %v1216 = vrot.slane %v1214, 5
  %v1217 = vor.u32 %v1213, %v1216
  %v1218 = vrot.slane %v1217, 4
  %v1220 = vshll.u32 %v1071, 16
  %v1222 = vrot.slane %v1220, 5
  %v1223 = vsel %vm67, %v1218, %v1222
  %v1225 = vshrl.u32 %v1072, 16
  %v1227 = vrot.slane %v1225, 4
  %v1228 = vshll.u32 %v1072, 16
  %v1230 = vrot.slane %v1228, 5
  %v1231 = vor.u32 %v1227, %v1230
  %v1232 = vrot.slane %v1231, 4
  %v1234 = vshll.u32 %v1073, 16
  %v1236 = vrot.slane %v1234, 5
  %v1237 = vsel %vm67, %v1232, %v1236
  %v1239 = vshrl.u32 %v1074, 16
  %v1241 = vrot.slane %v1239, 4
  %v1242 = vshll.u32 %v1074, 16
  %v1244 = vrot.slane %v1242, 5
  %v1245 = vor.u32 %v1241, %v1244
  %v1246 = vrot.slane %v1245, 4
  %v1248 = vshll.u32 %v1075, 16
  %v1250 = vrot.slane %v1248, 5
  %v1251 = vsel %vm67, %v1246, %v1250
  %v1253 = vshrl.u32 %v1076, 16
  %v1255 = vrot.slane %v1253, 4
  %v1256 = vshll.u32 %v1076, 16
  %v1258 = vrot.slane %v1256, 5
  %v1259 = vor.u32 %v1255, %v1258
  %v1260 = vrot.slane %v1259, 4
  %v1262 = vshll.u32 %v1077, 16
  %v1264 = vrot.slane %v1262, 5
  %v1265 = vsel %vm67, %v1260, %v1264
  %v1267 = vshrl.u32 %v1078, 16
  %v1269 = vrot.slane %v1267, 4
  %v1270 = vshll.u32 %v1078, 16
  %v1272 = vrot.slane %v1270, 5
  %v1273 = vor.u32 %v1269, %v1272
  %v1274 = vrot.slane %v1273, 4
  %v1276 = vshll.u32 %v1079, 16
  %v1278 = vrot.slane %v1276, 5
  %v1279 = vsel %vm67, %v1274, %v1278
  %v1281 = vshrl.u32 %v1080, 16
  %v1283 = vrot.slane %v1281, 4
  %v1284 = vshll.u32 %v1080, 16
  %v1286 = vrot.slane %v1284, 5
  %v1287 = vor.u32 %v1283, %v1286
  %v1288 = vrot.slane %v1287, 4
  %v1290 = vshll.u32 %v1081, 16
  %v1292 = vrot.slane %v1290, 5
  %v1293 = vsel %vm67, %v1288, %v1292
  %v1295 = vshrl.u32 %v1082, 16
  %v1297 = vrot.slane %v1295, 4
  %v1298 = vshll.u32 %v1082, 16
  %v1300 = vrot.slane %v1298, 5
  %v1301 = vor.u32 %v1297, %v1300
  %v1302 = vrot.slane %v1301, 4
  %v1304 = vshll.u32 %v1083, 16
  %v1306 = vrot.slane %v1304, 5
  %v1307 = vsel %vm67, %v1302, %v1306
  %v1308 = vld [vmem:[%s1 + $0x100] sm:$0xf]
  %v1309 = vld [vmem:[%s1 + $0x104] sm:$0xf]
  %v1310 = vld [vmem:[%s1 + $0x108] sm:$0xf]
  %v1311 = vld [vmem:[%s1 + $0x10c] sm:$0xf]
  %v1312 = vld [vmem:[%s1 + $0x110] sm:$0xf]
  %v1313 = vld [vmem:[%s1 + $0x114] sm:$0xf]
  %v1314 = vld [vmem:[%s1 + $0x118] sm:$0xf]
  %v1315 = vld [vmem:[%s1 + $0x11c] sm:$0xf]
  %v1316 = vld [vmem:[%s1 + $0x120] sm:$0xf]
  %v1317 = vld [vmem:[%s1 + $0x124] sm:$0xf]
  %v1318 = vld [vmem:[%s1 + $0x128] sm:$0xf]
  %v1319 = vld [vmem:[%s1 + $0x12c] sm:$0xf]
  %v1320 = vld [vmem:[%s1 + $0x130] sm:$0xf]
  %v1321 = vld [vmem:[%s1 + $0x134] sm:$0xf]
  %v1322 = vld [vmem:[%s1 + $0x138] sm:$0xf]
  %v1323 = vld [vmem:[%s1 + $0x13c] sm:$0xf]
  %v1324 = vunpack.c.l.b16 %v1097
  %v1325 = vunpack.c.l.b16 %v1111
  %v1326 = vunpack.c.l.b16 %v1125
  %v1327 = vunpack.c.l.b16 %v1139
  %v1328 = vunpack.c.l.b16 %v1153
  %v1329 = vunpack.c.l.b16 %v1167
  %v1330 = vunpack.c.l.b16 %v1181
  %v1331 = vunpack.c.l.b16 %v1195
  %v1332 = vunpack.c.l.b16 %v1209
  %v1333 = vunpack.c.l.b16 %v1223
  %v1334 = vunpack.c.l.b16 %v1237
  %v1335 = vunpack.c.l.b16 %v1251
  %v1336 = vunpack.c.l.b16 %v1265
  %v1337 = vunpack.c.l.b16 %v1279
  %v1338 = vunpack.c.l.b16 %v1293
  %v1339 = vunpack.c.l.b16 %v1307
  %v1340 = vpack.c.b16 %v1325, %v1324
  %v1341 = vpack.c.b16 %v1327, %v1326
  %v1342 = vpack.c.b16 %v1329, %v1328
  %v1343 = vpack.c.b16 %v1331, %v1330
  %v1344 = vpack.c.b16 %v1333, %v1332
  %v1345 = vpack.c.b16 %v1335, %v1334
  %v1346 = vpack.c.b16 %v1337, %v1336
  %v1347 = vpack.c.b16 %v1339, %v1338
  %v1372 = vunpack.c.l.b16 %v1308
  %v1373 = vunpack.c.l.b16 %v1309
  %v1374 = vunpack.c.l.b16 %v1310
  %v1375 = vunpack.c.l.b16 %v1311
  %v1376 = vunpack.c.l.b16 %v1312
  %v1377 = vunpack.c.l.b16 %v1313
  %v1378 = vunpack.c.l.b16 %v1314
  %v1379 = vunpack.c.l.b16 %v1315
  %v1380 = vunpack.c.l.b16 %v1316
  %v1381 = vunpack.c.l.b16 %v1317
  %v1382 = vunpack.c.l.b16 %v1318
  %v1383 = vunpack.c.l.b16 %v1319
  %v1384 = vunpack.c.l.b16 %v1320
  %v1385 = vunpack.c.l.b16 %v1321
  %v1386 = vunpack.c.l.b16 %v1322
  %v1387 = vunpack.c.l.b16 %v1323
  %v1388 = vpack.c.b16 %v1373, %v1372
  %v1389 = vpack.c.b16 %v1375, %v1374
  %v1390 = vpack.c.b16 %v1377, %v1376
  %v1391 = vpack.c.b16 %v1379, %v1378
  %v1392 = vpack.c.b16 %v1381, %v1380
  %v1393 = vpack.c.b16 %v1383, %v1382
  %v1394 = vpack.c.b16 %v1385, %v1384
  %v1395 = vpack.c.b16 %v1387, %v1386
  %1404 = vmatpush.bf16.msra.mxu0 %v1395
  %1405 = vmatpush.bf16.msra.mxu0 %v1394
  %1406 = vmatpush.bf16.msra.mxu0 %v1393
  %1407 = vmatpush.bf16.msra.mxu0 %v1392
  %1408 = vmatpush.bf16.msra.mxu0 %v1391
  %1409 = vmatpush.bf16.msra.mxu0 %v1390
  %1410 = vmatpush.bf16.msra.mxu0 %v1389
  %1411 = vmatpush.bf16.msra.mxu0 %v1388
  %1412 = vmatmul.bf16.gmra.mxu0 %v1340
  %v1413 = vpop.f32.mrf.mxu0
  %v1414 = vadd.f32 0.0, %v1413
  %v1415 = vpop.f32.mrf.mxu0
  %v1416 = vadd.f32 0.0, %v1415
  %1417 = vmatmul.bf16.gmra.mxu0 %v1341
  %v1418 = vpop.f32.mrf.mxu0
  %v1419 = vadd.f32 0.0, %v1418
  %v1420 = vpop.f32.mrf.mxu0
  %v1421 = vadd.f32 0.0, %v1420
  %1422 = vmatmul.bf16.gmra.mxu0 %v1342
  %v1423 = vpop.f32.mrf.mxu0
  %v1424 = vadd.f32 0.0, %v1423
  %v1425 = vpop.f32.mrf.mxu0
  %v1426 = vadd.f32 0.0, %v1425
  %1427 = vmatmul.bf16.gmra.mxu0 %v1343
  %v1428 = vpop.f32.mrf.mxu0
  %v1429 = vadd.f32 0.0, %v1428
  %v1430 = vpop.f32.mrf.mxu0
  %v1431 = vadd.f32 0.0, %v1430
  %1432 = vmatmul.bf16.gmra.mxu0 %v1344
  %v1433 = vpop.f32.mrf.mxu0
  %v1434 = vadd.f32 0.0, %v1433
  %v1435 = vpop.f32.mrf.mxu0
  %v1436 = vadd.f32 0.0, %v1435
  %1437 = vmatmul.bf16.gmra.mxu0 %v1345
  %v1438 = vpop.f32.mrf.mxu0
  %v1439 = vadd.f32 0.0, %v1438
  %v1440 = vpop.f32.mrf.mxu0
  %v1441 = vadd.f32 0.0, %v1440
  %1442 = vmatmul.bf16.gmra.mxu0 %v1346
  %v1443 = vpop.f32.mrf.mxu0
  %v1444 = vadd.f32 0.0, %v1443
  %v1445 = vpop.f32.mrf.mxu0
  %v1446 = vadd.f32 0.0, %v1445
  %1447 = vmatmul.bf16.gmra.mxu0 %v1347
  %v1448 = vpop.f32.mrf.mxu0
  %v1449 = vadd.f32 0.0, %v1448
  %v1450 = vpop.f32.mrf.mxu0
  %v1451 = vadd.f32 0.0, %v1450
  %1452 = vdwg.mxu0
  %v1453 = vadd.f32 %v1036, %v1414
  %v1454 = vadd.f32 %v1037, %v1416
  %v1455 = vadd.f32 %v1038, %v1419
  %v1456 = vadd.f32 %v1039, %v1421
  %v1457 = vadd.f32 %v1040, %v1424
  %v1458 = vadd.f32 %v1041, %v1426
  %v1459 = vadd.f32 %v1042, %v1429
  %v1460 = vadd.f32 %v1043, %v1431
  %v1461 = vadd.f32 %v1044, %v1434
  %v1462 = vadd.f32 %v1045, %v1436
  %v1463 = vadd.f32 %v1046, %v1439
  %v1464 = vadd.f32 %v1047, %v1441
  %v1465 = vadd.f32 %v1048, %v1444
  %v1466 = vadd.f32 %v1049, %v1446
  %v1467 = vadd.f32 %v1050, %v1449
  %v1468 = vadd.f32 %v1051, %v1451
  %v1469 = vld [vmem:[%s858] sm:$0xe]
  %v1470 = vld [vmem:[%s858 + $0x8] sm:$0xe]
  %v1471 = vld [vmem:[%s858 + $0x10] sm:$0xe]
  %v1472 = vld [vmem:[%s858 + $0x18] sm:$0xe]
  %v1473 = vld [vmem:[%s858 + $0x20] sm:$0xe]
  %v1474 = vld [vmem:[%s858 + $0x28] sm:$0xe]
  %v1475 = vld [vmem:[%s858 + $0x30] sm:$0xe]
  %v1476 = vld [vmem:[%s858 + $0x38] sm:$0xe]
  %v1477 = vld [vmem:[%s858 + $0x50] sm:$0xe]
  %v1478 = vld [vmem:[%s858 + $0x58] sm:$0xe]
  %v1479 = vld [vmem:[%s858 + $0x60] sm:$0xe]
  %v1480 = vld [vmem:[%s858 + $0x68] sm:$0xe]
  %v1481 = vld [vmem:[%s858 + $0x70] sm:$0xe]
  %v1482 = vld [vmem:[%s858 + $0x78] sm:$0xe]
  %v1483 = vld [vmem:[%s858 + $0x80] sm:$0xe]
  %v1484 = vld [vmem:[%s858 + $0x88] sm:$0xe]
  %v1517 = vrot.slane %v1469, 5
  %v1518 = vrot.slane %v1517, 4
  %v1519 = vrot.slane %v1053, 5
  %v1520 = vsel %vm632, %v1518, %v1519
  %v1521 = vrot.slane %v1470, 5
  %v1522 = vrot.slane %v1521, 4
  %v1523 = vrot.slane %v1055, 5
  %v1524 = vsel %vm632, %v1522, %v1523
  %v1525 = vrot.slane %v1471, 5
  %v1526 = vrot.slane %v1525, 4
  %v1527 = vrot.slane %v1057, 5
  %v1528 = vsel %vm632, %v1526, %v1527
  %v1529 = vrot.slane %v1472, 5
  %v1530 = vrot.slane %v1529, 4
  %v1531 = vrot.slane %v1059, 5
  %v1532 = vsel %vm632, %v1530, %v1531
  %v1533 = vrot.slane %v1473, 5
  %v1534 = vrot.slane %v1533, 4
  %v1535 = vrot.slane %v1061, 5
  %v1536 = vsel %vm632, %v1534, %v1535
  %v1537 = vrot.slane %v1474, 5
  %v1538 = vrot.slane %v1537, 4
  %v1539 = vrot.slane %v1063, 5
  %v1540 = vsel %vm632, %v1538, %v1539
  %v1541 = vrot.slane %v1475, 5
  %v1542 = vrot.slane %v1541, 4
  %v1543 = vrot.slane %v1065, 5
  %v1544 = vsel %vm632, %v1542, %v1543
  %v1545 = vrot.slane %v1476, 5
  %v1546 = vrot.slane %v1545, 4
  %v1547 = vrot.slane %v1067, 5
  %v1548 = vsel %vm632, %v1546, %v1547
  %v1549 = vrot.slane %v1477, 5
  %v1550 = vrot.slane %v1549, 4
  %v1551 = vrot.slane %v1069, 5
  %v1552 = vsel %vm632, %v1550, %v1551
  %v1553 = vrot.slane %v1478, 5
  %v1554 = vrot.slane %v1553, 4
  %v1555 = vrot.slane %v1071, 5
  %v1556 = vsel %vm632, %v1554, %v1555
  %v1557 = vrot.slane %v1479, 5
  %v1558 = vrot.slane %v1557, 4
  %v1559 = vrot.slane %v1073, 5
  %v1560 = vsel %vm632, %v1558, %v1559
  %v1561 = vrot.slane %v1480, 5
  %v1562 = vrot.slane %v1561, 4
  %v1563 = vrot.slane %v1075, 5
  %v1564 = vsel %vm632, %v1562, %v1563
  %v1565 = vrot.slane %v1481, 5
  %v1566 = vrot.slane %v1565, 4
  %v1567 = vrot.slane %v1077, 5
  %v1568 = vsel %vm632, %v1566, %v1567
  %v1569 = vrot.slane %v1482, 5
  %v1570 = vrot.slane %v1569, 4
  %v1571 = vrot.slane %v1079, 5
  %v1572 = vsel %vm632, %v1570, %v1571
  %v1573 = vrot.slane %v1483, 5
  %v1574 = vrot.slane %v1573, 4
  %v1575 = vrot.slane %v1081, 5
  %v1576 = vsel %vm632, %v1574, %v1575
  %v1577 = vrot.slane %v1484, 5
  %v1578 = vrot.slane %v1577, 4
  %v1579 = vrot.slane %v1083, 5
  %v1580 = vsel %vm632, %v1578, %v1579
  %v1581 = vld [vmem:[%s1 + $0x140] sm:$0xf]
  %v1582 = vld [vmem:[%s1 + $0x144] sm:$0xf]
  %v1583 = vld [vmem:[%s1 + $0x148] sm:$0xf]
  %v1584 = vld [vmem:[%s1 + $0x14c] sm:$0xf]
  %v1585 = vld [vmem:[%s1 + $0x150] sm:$0xf]
  %v1586 = vld [vmem:[%s1 + $0x154] sm:$0xf]
  %v1587 = vld [vmem:[%s1 + $0x158] sm:$0xf]
  %v1588 = vld [vmem:[%s1 + $0x15c] sm:$0xf]
  %v1589 = vld [vmem:[%s1 + $0x160] sm:$0xf]
  %v1590 = vld [vmem:[%s1 + $0x164] sm:$0xf]
  %v1591 = vld [vmem:[%s1 + $0x168] sm:$0xf]
  %v1592 = vld [vmem:[%s1 + $0x16c] sm:$0xf]
  %v1593 = vld [vmem:[%s1 + $0x170] sm:$0xf]
  %v1594 = vld [vmem:[%s1 + $0x174] sm:$0xf]
  %v1595 = vld [vmem:[%s1 + $0x178] sm:$0xf]
  %v1596 = vld [vmem:[%s1 + $0x17c] sm:$0xf]
  %v1597 = vunpack.c.l.b16 %v1520
  %v1598 = vunpack.c.l.b16 %v1524
  %v1599 = vunpack.c.l.b16 %v1528
  %v1600 = vunpack.c.l.b16 %v1532
  %v1601 = vunpack.c.l.b16 %v1536
  %v1602 = vunpack.c.l.b16 %v1540
  %v1603 = vunpack.c.l.b16 %v1544
  %v1604 = vunpack.c.l.b16 %v1548
  %v1605 = vunpack.c.l.b16 %v1552
  %v1606 = vunpack.c.l.b16 %v1556
  %v1607 = vunpack.c.l.b16 %v1560
  %v1608 = vunpack.c.l.b16 %v1564
  %v1609 = vunpack.c.l.b16 %v1568
  %v1610 = vunpack.c.l.b16 %v1572
  %v1611 = vunpack.c.l.b16 %v1576
  %v1612 = vunpack.c.l.b16 %v1580
  %v1613 = vpack.c.b16 %v1598, %v1597
  %v1614 = vpack.c.b16 %v1600, %v1599
  %v1615 = vpack.c.b16 %v1602, %v1601
  %v1616 = vpack.c.b16 %v1604, %v1603
  %v1617 = vpack.c.b16 %v1606, %v1605
  %v1618 = vpack.c.b16 %v1608, %v1607
  %v1619 = vpack.c.b16 %v1610, %v1609
  %v1620 = vpack.c.b16 %v1612, %v1611
  %v1645 = vunpack.c.l.b16 %v1581
  %v1646 = vunpack.c.l.b16 %v1582
  %v1647 = vunpack.c.l.b16 %v1583
  %v1648 = vunpack.c.l.b16 %v1584
  %v1649 = vunpack.c.l.b16 %v1585
  %v1650 = vunpack.c.l.b16 %v1586
  %v1651 = vunpack.c.l.b16 %v1587
  %v1652 = vunpack.c.l.b16 %v1588
  %v1653 = vunpack.c.l.b16 %v1589
  %v1654 = vunpack.c.l.b16 %v1590
  %v1655 = vunpack.c.l.b16 %v1591
  %v1656 = vunpack.c.l.b16 %v1592
  %v1657 = vunpack.c.l.b16 %v1593
  %v1658 = vunpack.c.l.b16 %v1594
  %v1659 = vunpack.c.l.b16 %v1595
  %v1660 = vunpack.c.l.b16 %v1596
  %v1661 = vpack.c.b16 %v1646, %v1645
  %v1662 = vpack.c.b16 %v1648, %v1647
  %v1663 = vpack.c.b16 %v1650, %v1649
  %v1664 = vpack.c.b16 %v1652, %v1651
  %v1665 = vpack.c.b16 %v1654, %v1653
  %v1666 = vpack.c.b16 %v1656, %v1655
  %v1667 = vpack.c.b16 %v1658, %v1657
  %v1668 = vpack.c.b16 %v1660, %v1659
  %1677 = vmatpush.bf16.msra.mxu0 %v1668
  %1678 = vmatpush.bf16.msra.mxu0 %v1667
  %1679 = vmatpush.bf16.msra.mxu0 %v1666
  %1680 = vmatpush.bf16.msra.mxu0 %v1665
  %1681 = vmatpush.bf16.msra.mxu0 %v1664
  %1682 = vmatpush.bf16.msra.mxu0 %v1663
  %1683 = vmatpush.bf16.msra.mxu0 %v1662
  %1684 = vmatpush.bf16.msra.mxu0 %v1661
  %1685 = vmatmul.bf16.gmra.mxu0 %v1613
  %v1686 = vpop.f32.mrf.mxu0
  %v1687 = vadd.f32 0.0, %v1686
  %v1688 = vpop.f32.mrf.mxu0
  %v1689 = vadd.f32 0.0, %v1688
  %1690 = vmatmul.bf16.gmra.mxu0 %v1614
  %v1691 = vpop.f32.mrf.mxu0
  %v1692 = vadd.f32 0.0, %v1691
  %v1693 = vpop.f32.mrf.mxu0
  %v1694 = vadd.f32 0.0, %v1693
  %1695 = vmatmul.bf16.gmra.mxu0 %v1615
  %v1696 = vpop.f32.mrf.mxu0
  %v1697 = vadd.f32 0.0, %v1696
  %v1698 = vpop.f32.mrf.mxu0
  %v1699 = vadd.f32 0.0, %v1698
  %1700 = vmatmul.bf16.gmra.mxu0 %v1616
  %v1701 = vpop.f32.mrf.mxu0
  %v1702 = vadd.f32 0.0, %v1701
  %v1703 = vpop.f32.mrf.mxu0
  %v1704 = vadd.f32 0.0, %v1703
  %1705 = vmatmul.bf16.gmra.mxu0 %v1617
  %v1706 = vpop.f32.mrf.mxu0
  %v1707 = vadd.f32 0.0, %v1706
  %v1708 = vpop.f32.mrf.mxu0
  %v1709 = vadd.f32 0.0, %v1708
  %1710 = vmatmul.bf16.gmra.mxu0 %v1618
  %v1711 = vpop.f32.mrf.mxu0
  %v1712 = vadd.f32 0.0, %v1711
  %v1713 = vpop.f32.mrf.mxu0
  %v1714 = vadd.f32 0.0, %v1713
  %1715 = vmatmul.bf16.gmra.mxu0 %v1619
  %v1716 = vpop.f32.mrf.mxu0
  %v1717 = vadd.f32 0.0, %v1716
  %v1718 = vpop.f32.mrf.mxu0
  %v1719 = vadd.f32 0.0, %v1718
  %1720 = vmatmul.bf16.gmra.mxu0 %v1620
  %v1721 = vpop.f32.mrf.mxu0
  %v1722 = vadd.f32 0.0, %v1721
  %v1723 = vpop.f32.mrf.mxu0
  %v1724 = vadd.f32 0.0, %v1723
  %1725 = vdwg.mxu0
  %v1726 = vadd.f32 %v1453, %v1687
  %v1727 = vadd.f32 %v1454, %v1689
  %v1728 = vadd.f32 %v1455, %v1692
  %v1729 = vadd.f32 %v1456, %v1694
  %v1730 = vadd.f32 %v1457, %v1697
  %v1731 = vadd.f32 %v1458, %v1699
  %v1732 = vadd.f32 %v1459, %v1702
  %v1733 = vadd.f32 %v1460, %v1704
  %v1734 = vadd.f32 %v1461, %v1707
  %v1735 = vadd.f32 %v1462, %v1709
  %v1736 = vadd.f32 %v1463, %v1712
  %v1737 = vadd.f32 %v1464, %v1714
  %v1738 = vadd.f32 %v1465, %v1717
  %v1739 = vadd.f32 %v1466, %v1719
  %v1740 = vadd.f32 %v1467, %v1722
  %v1741 = vadd.f32 %v1468, %v1724
  %s1742 = scalar_lea.vmem %s0, 16
  %v1743 = vld [vmem:[%s1742] sm:$0xf]
  %v1744 = vld [vmem:[%s1742 + $0x8] sm:$0xf]
  %v1745 = vld [vmem:[%s1742 + $0x10] sm:$0xf]
  %v1746 = vld [vmem:[%s1742 + $0x18] sm:$0xf]
  %v1747 = vld [vmem:[%s1742 + $0x20] sm:$0xf]
  %v1748 = vld [vmem:[%s1742 + $0x28] sm:$0xf]
  %v1749 = vld [vmem:[%s1742 + $0x30] sm:$0xf]
  %v1750 = vld [vmem:[%s1742 + $0x38] sm:$0xf]
  %v1751 = vld [vmem:[%s1742 + $0x50] sm:$0xf]
  %v1752 = vld [vmem:[%s1742 + $0x58] sm:$0xf]
  %v1753 = vld [vmem:[%s1742 + $0x60] sm:$0xf]
  %v1754 = vld [vmem:[%s1742 + $0x68] sm:$0xf]
  %v1755 = vld [vmem:[%s1742 + $0x70] sm:$0xf]
  %v1756 = vld [vmem:[%s1742 + $0x78] sm:$0xf]
  %v1757 = vld [vmem:[%s1742 + $0x80] sm:$0xf]
  %v1758 = vld [vmem:[%s1742 + $0x88] sm:$0xf]
  %v1759 = vld [vmem:[%s1 + $0x180] sm:$0xf]
  %v1760 = vld [vmem:[%s1 + $0x184] sm:$0xf]
  %v1761 = vld [vmem:[%s1 + $0x188] sm:$0xf]
  %v1762 = vld [vmem:[%s1 + $0x18c] sm:$0xf]
  %v1763 = vld [vmem:[%s1 + $0x190] sm:$0xf]
  %v1764 = vld [vmem:[%s1 + $0x194] sm:$0xf]
  %v1765 = vld [vmem:[%s1 + $0x198] sm:$0xf]
  %v1766 = vld [vmem:[%s1 + $0x19c] sm:$0xf]
  %v1767 = vld [vmem:[%s1 + $0x1a0] sm:$0xf]
  %v1768 = vld [vmem:[%s1 + $0x1a4] sm:$0xf]
  %v1769 = vld [vmem:[%s1 + $0x1a8] sm:$0xf]
  %v1770 = vld [vmem:[%s1 + $0x1ac] sm:$0xf]
  %v1771 = vld [vmem:[%s1 + $0x1b0] sm:$0xf]
  %v1772 = vld [vmem:[%s1 + $0x1b4] sm:$0xf]
  %v1773 = vld [vmem:[%s1 + $0x1b8] sm:$0xf]
  %v1774 = vld [vmem:[%s1 + $0x1bc] sm:$0xf]
  %v1791 = vunpack.c.l.b16 %v1743
  %v1792 = vunpack.c.l.b16 %v1744
  %v1793 = vunpack.c.l.b16 %v1745
  %v1794 = vunpack.c.l.b16 %v1746
  %v1795 = vunpack.c.l.b16 %v1747
  %v1796 = vunpack.c.l.b16 %v1748
  %v1797 = vunpack.c.l.b16 %v1749
  %v1798 = vunpack.c.l.b16 %v1750
  %v1799 = vunpack.c.l.b16 %v1751
  %v1800 = vunpack.c.l.b16 %v1752
  %v1801 = vunpack.c.l.b16 %v1753
  %v1802 = vunpack.c.l.b16 %v1754
  %v1803 = vunpack.c.l.b16 %v1755
  %v1804 = vunpack.c.l.b16 %v1756
  %v1805 = vunpack.c.l.b16 %v1757
  %v1806 = vunpack.c.l.b16 %v1758
  %v1807 = vpack.c.b16 %v1792, %v1791
  %v1808 = vpack.c.b16 %v1794, %v1793
  %v1809 = vpack.c.b16 %v1796, %v1795
  %v1810 = vpack.c.b16 %v1798, %v1797
  %v1811 = vpack.c.b16 %v1800, %v1799
  %v1812 = vpack.c.b16 %v1802, %v1801
  %v1813 = vpack.c.b16 %v1804, %v1803
  %v1814 = vpack.c.b16 %v1806, %v1805
  %v1839 = vunpack.c.l.b16 %v1759
  %v1840 = vunpack.c.l.b16 %v1760
  %v1841 = vunpack.c.l.b16 %v1761
  %v1842 = vunpack.c.l.b16 %v1762
  %v1843 = vunpack.c.l.b16 %v1763
  %v1844 = vunpack.c.l.b16 %v1764
  %v1845 = vunpack.c.l.b16 %v1765
  %v1846 = vunpack.c.l.b16 %v1766
  %v1847 = vunpack.c.l.b16 %v1767
  %v1848 = vunpack.c.l.b16 %v1768
  %v1849 = vunpack.c.l.b16 %v1769
  %v1850 = vunpack.c.l.b16 %v1770
  %v1851 = vunpack.c.l.b16 %v1771
  %v1852 = vunpack.c.l.b16 %v1772
  %v1853 = vunpack.c.l.b16 %v1773
  %v1854 = vunpack.c.l.b16 %v1774
  %v1855 = vpack.c.b16 %v1840, %v1839
  %v1856 = vpack.c.b16 %v1842, %v1841
  %v1857 = vpack.c.b16 %v1844, %v1843
  %v1858 = vpack.c.b16 %v1846, %v1845
  %v1859 = vpack.c.b16 %v1848, %v1847
  %v1860 = vpack.c.b16 %v1850, %v1849
  %v1861 = vpack.c.b16 %v1852, %v1851
  %v1862 = vpack.c.b16 %v1854, %v1853
  %1871 = vmatpush.bf16.msra.mxu0 %v1862
  %1872 = vmatpush.bf16.msra.mxu0 %v1861
  %1873 = vmatpush.bf16.msra.mxu0 %v1860
  %1874 = vmatpush.bf16.msra.mxu0 %v1859
  %1875 = vmatpush.bf16.msra.mxu0 %v1858
  %1876 = vmatpush.bf16.msra.mxu0 %v1857
  %1877 = vmatpush.bf16.msra.mxu0 %v1856
  %1878 = vmatpush.bf16.msra.mxu0 %v1855
  %1879 = vmatmul.bf16.gmra.mxu0 %v1807
  %v1880 = vpop.f32.mrf.mxu0
  %v1881 = vadd.f32 0.0, %v1880
  %v1882 = vpop.f32.mrf.mxu0
  %v1883 = vadd.f32 0.0, %v1882
  %1884 = vmatmul.bf16.gmra.mxu0 %v1808
  %v1885 = vpop.f32.mrf.mxu0
  %v1886 = vadd.f32 0.0, %v1885
  %v1887 = vpop.f32.mrf.mxu0
  %v1888 = vadd.f32 0.0, %v1887
  %1889 = vmatmul.bf16.gmra.mxu0 %v1809
  %v1890 = vpop.f32.mrf.mxu0
  %v1891 = vadd.f32 0.0, %v1890
  %v1892 = vpop.f32.mrf.mxu0
  %v1893 = vadd.f32 0.0, %v1892
  %1894 = vmatmul.bf16.gmra.mxu0 %v1810
  %v1895 = vpop.f32.mrf.mxu0
  %v1896 = vadd.f32 0.0, %v1895
  %v1897 = vpop.f32.mrf.mxu0
  %v1898 = vadd.f32 0.0, %v1897
  %1899 = vmatmul.bf16.gmra.mxu0 %v1811
  %v1900 = vpop.f32.mrf.mxu0
  %v1901 = vadd.f32 0.0, %v1900
  %v1902 = vpop.f32.mrf.mxu0
  %v1903 = vadd.f32 0.0, %v1902
  %1904 = vmatmul.bf16.gmra.mxu0 %v1812
  %v1905 = vpop.f32.mrf.mxu0
  %v1906 = vadd.f32 0.0, %v1905
  %v1907 = vpop.f32.mrf.mxu0
  %v1908 = vadd.f32 0.0, %v1907
  %1909 = vmatmul.bf16.gmra.mxu0 %v1813
  %v1910 = vpop.f32.mrf.mxu0
  %v1911 = vadd.f32 0.0, %v1910
  %v1912 = vpop.f32.mrf.mxu0
  %v1913 = vadd.f32 0.0, %v1912
  %1914 = vmatmul.bf16.gmra.mxu0 %v1814
  %v1915 = vpop.f32.mrf.mxu0
  %v1916 = vadd.f32 0.0, %v1915
  %v1917 = vpop.f32.mrf.mxu0
  %v1918 = vadd.f32 0.0, %v1917
  %1919 = vdwg.mxu0
  %v1920 = vadd.f32 %v1726, %v1881
  %v1921 = vadd.f32 %v1727, %v1883
  %v1922 = vadd.f32 %v1728, %v1886
  %v1923 = vadd.f32 %v1729, %v1888
  %v1924 = vadd.f32 %v1730, %v1891
  %v1925 = vadd.f32 %v1731, %v1893
  %v1926 = vadd.f32 %v1732, %v1896
  %v1927 = vadd.f32 %v1733, %v1898
  %v1928 = vadd.f32 %v1734, %v1901
  %v1929 = vadd.f32 %v1735, %v1903
  %v1930 = vadd.f32 %v1736, %v1906
  %v1931 = vadd.f32 %v1737, %v1908
  %v1932 = vadd.f32 %v1738, %v1911
  %v1933 = vadd.f32 %v1739, %v1913
  %v1934 = vadd.f32 %v1740, %v1916
  %v1935 = vadd.f32 %v1741, %v1918
  %v1936 = vld [vmem:[%s1742] sm:$0xf]
  %v1937 = vld [vmem:[%s1742 + $0x4] sm:$0x1]
  %v1938 = vld [vmem:[%s1742 + $0x8] sm:$0xf]
  %v1939 = vld [vmem:[%s1742 + $0xc] sm:$0x1]
  %v1940 = vld [vmem:[%s1742 + $0x10] sm:$0xf]
  %v1941 = vld [vmem:[%s1742 + $0x14] sm:$0x1]
  %v1942 = vld [vmem:[%s1742 + $0x18] sm:$0xf]
  %v1943 = vld [vmem:[%s1742 + $0x1c] sm:$0x1]
  %v1944 = vld [vmem:[%s1742 + $0x20] sm:$0xf]
  %v1945 = vld [vmem:[%s1742 + $0x24] sm:$0x1]
  %v1946 = vld [vmem:[%s1742 + $0x28] sm:$0xf]
  %v1947 = vld [vmem:[%s1742 + $0x2c] sm:$0x1]
  %v1948 = vld [vmem:[%s1742 + $0x30] sm:$0xf]
  %v1949 = vld [vmem:[%s1742 + $0x34] sm:$0x1]
  %v1950 = vld [vmem:[%s1742 + $0x38] sm:$0xf]
  %v1951 = vld [vmem:[%s1742 + $0x3c] sm:$0x1]
  %v1952 = vld [vmem:[%s1742 + $0x50] sm:$0xf]
  %v1953 = vld [vmem:[%s1742 + $0x54] sm:$0x1]
  %v1954 = vld [vmem:[%s1742 + $0x58] sm:$0xf]
  %v1955 = vld [vmem:[%s1742 + $0x5c] sm:$0x1]
  %v1956 = vld [vmem:[%s1742 + $0x60] sm:$0xf]
  %v1957 = vld [vmem:[%s1742 + $0x64] sm:$0x1]
  %v1958 = vld [vmem:[%s1742 + $0x68] sm:$0xf]
  %v1959 = vld [vmem:[%s1742 + $0x6c] sm:$0x1]
  %v1960 = vld [vmem:[%s1742 + $0x70] sm:$0xf]
  %v1961 = vld [vmem:[%s1742 + $0x74] sm:$0x1]
  %v1962 = vld [vmem:[%s1742 + $0x78] sm:$0xf]
  %v1963 = vld [vmem:[%s1742 + $0x7c] sm:$0x1]
  %v1964 = vld [vmem:[%s1742 + $0x80] sm:$0xf]
  %v1965 = vld [vmem:[%s1742 + $0x84] sm:$0x1]
  %v1966 = vld [vmem:[%s1742 + $0x88] sm:$0xf]
  %v1967 = vld [vmem:[%s1742 + $0x8c] sm:$0x1]
  %v1969 = vshrl.u32 %v1936, 16
  %v1971 = vrot.slane %v1969, 4
  %v1972 = vshll.u32 %v1936, 16
  %v1974 = vrot.slane %v1972, 5
  %v1975 = vor.u32 %v1971, %v1974
  %v1976 = vrot.slane %v1975, 4
  %v1978 = vshll.u32 %v1937, 16
  %v1980 = vrot.slane %v1978, 5
  %v1981 = vsel %vm67, %v1976, %v1980
  %v1983 = vshrl.u32 %v1938, 16
  %v1985 = vrot.slane %v1983, 4
  %v1986 = vshll.u32 %v1938, 16
  %v1988 = vrot.slane %v1986, 5
  %v1989 = vor.u32 %v1985, %v1988
  %v1990 = vrot.slane %v1989, 4
  %v1992 = vshll.u32 %v1939, 16
  %v1994 = vrot.slane %v1992, 5
  %v1995 = vsel %vm67, %v1990, %v1994
  %v1997 = vshrl.u32 %v1940, 16
  %v1999 = vrot.slane %v1997, 4
  %v2000 = vshll.u32 %v1940, 16
  %v2002 = vrot.slane %v2000, 5
  %v2003 = vor.u32 %v1999, %v2002
  %v2004 = vrot.slane %v2003, 4
  %v2006 = vshll.u32 %v1941, 16
  %v2008 = vrot.slane %v2006, 5
  %v2009 = vsel %vm67, %v2004, %v2008
  %v2011 = vshrl.u32 %v1942, 16
  %v2013 = vrot.slane %v2011, 4
  %v2014 = vshll.u32 %v1942, 16
  %v2016 = vrot.slane %v2014, 5
  %v2017 = vor.u32 %v2013, %v2016
  %v2018 = vrot.slane %v2017, 4
  %v2020 = vshll.u32 %v1943, 16
  %v2022 = vrot.slane %v2020, 5
  %v2023 = vsel %vm67, %v2018, %v2022
  %v2025 = vshrl.u32 %v1944, 16
  %v2027 = vrot.slane %v2025, 4
  %v2028 = vshll.u32 %v1944, 16
  %v2030 = vrot.slane %v2028, 5
  %v2031 = vor.u32 %v2027, %v2030
  %v2032 = vrot.slane %v2031, 4
  %v2034 = vshll.u32 %v1945, 16
  %v2036 = vrot.slane %v2034, 5
  %v2037 = vsel %vm67, %v2032, %v2036
  %v2039 = vshrl.u32 %v1946, 16
  %v2041 = vrot.slane %v2039, 4
  %v2042 = vshll.u32 %v1946, 16
  %v2044 = vrot.slane %v2042, 5
  %v2045 = vor.u32 %v2041, %v2044
  %v2046 = vrot.slane %v2045, 4
  %v2048 = vshll.u32 %v1947, 16
  %v2050 = vrot.slane %v2048, 5
  %v2051 = vsel %vm67, %v2046, %v2050
  %v2053 = vshrl.u32 %v1948, 16
  %v2055 = vrot.slane %v2053, 4
  %v2056 = vshll.u32 %v1948, 16
  %v2058 = vrot.slane %v2056, 5
  %v2059 = vor.u32 %v2055, %v2058
  %v2060 = vrot.slane %v2059, 4
  %v2062 = vshll.u32 %v1949, 16
  %v2064 = vrot.slane %v2062, 5
  %v2065 = vsel %vm67, %v2060, %v2064
  %v2067 = vshrl.u32 %v1950, 16
  %v2069 = vrot.slane %v2067, 4
  %v2070 = vshll.u32 %v1950, 16
  %v2072 = vrot.slane %v2070, 5
  %v2073 = vor.u32 %v2069, %v2072
  %v2074 = vrot.slane %v2073, 4
  %v2076 = vshll.u32 %v1951, 16
  %v2078 = vrot.slane %v2076, 5
  %v2079 = vsel %vm67, %v2074, %v2078
  %v2081 = vshrl.u32 %v1952, 16
  %v2083 = vrot.slane %v2081, 4
  %v2084 = vshll.u32 %v1952, 16
  %v2086 = vrot.slane %v2084, 5
  %v2087 = vor.u32 %v2083, %v2086
  %v2088 = vrot.slane %v2087, 4
  %v2090 = vshll.u32 %v1953, 16
  %v2092 = vrot.slane %v2090, 5
  %v2093 = vsel %vm67, %v2088, %v2092
  %v2095 = vshrl.u32 %v1954, 16
  %v2097 = vrot.slane %v2095, 4
  %v2098 = vshll.u32 %v1954, 16
  %v2100 = vrot.slane %v2098, 5
  %v2101 = vor.u32 %v2097, %v2100
  %v2102 = vrot.slane %v2101, 4
  %v2104 = vshll.u32 %v1955, 16
  %v2106 = vrot.slane %v2104, 5
  %v2107 = vsel %vm67, %v2102, %v2106
  %v2109 = vshrl.u32 %v1956, 16
  %v2111 = vrot.slane %v2109, 4
  %v2112 = vshll.u32 %v1956, 16
  %v2114 = vrot.slane %v2112, 5
  %v2115 = vor.u32 %v2111, %v2114
  %v2116 = vrot.slane %v2115, 4
  %v2118 = vshll.u32 %v1957, 16
  %v2120 = vrot.slane %v2118, 5
  %v2121 = vsel %vm67, %v2116, %v2120
  %v2123 = vshrl.u32 %v1958, 16
  %v2125 = vrot.slane %v2123, 4
  %v2126 = vshll.u32 %v1958, 16
  %v2128 = vrot.slane %v2126, 5
  %v2129 = vor.u32 %v2125, %v2128
  %v2130 = vrot.slane %v2129, 4
  %v2132 = vshll.u32 %v1959, 16
  %v2134 = vrot.slane %v2132, 5
  %v2135 = vsel %vm67, %v2130, %v2134
  %v2137 = vshrl.u32 %v1960, 16
  %v2139 = vrot.slane %v2137, 4
  %v2140 = vshll.u32 %v1960, 16
  %v2142 = vrot.slane %v2140, 5
  %v2143 = vor.u32 %v2139, %v2142
  %v2144 = vrot.slane %v2143, 4
  %v2146 = vshll.u32 %v1961, 16
  %v2148 = vrot.slane %v2146, 5
  %v2149 = vsel %vm67, %v2144, %v2148
  %v2151 = vshrl.u32 %v1962, 16
  %v2153 = vrot.slane %v2151, 4
  %v2154 = vshll.u32 %v1962, 16
  %v2156 = vrot.slane %v2154, 5
  %v2157 = vor.u32 %v2153, %v2156
  %v2158 = vrot.slane %v2157, 4
  %v2160 = vshll.u32 %v1963, 16
  %v2162 = vrot.slane %v2160, 5
  %v2163 = vsel %vm67, %v2158, %v2162
  %v2165 = vshrl.u32 %v1964, 16
  %v2167 = vrot.slane %v2165, 4
  %v2168 = vshll.u32 %v1964, 16
  %v2170 = vrot.slane %v2168, 5
  %v2171 = vor.u32 %v2167, %v2170
  %v2172 = vrot.slane %v2171, 4
  %v2174 = vshll.u32 %v1965, 16
  %v2176 = vrot.slane %v2174, 5
  %v2177 = vsel %vm67, %v2172, %v2176
  %v2179 = vshrl.u32 %v1966, 16
  %v2181 = vrot.slane %v2179, 4
  %v2182 = vshll.u32 %v1966, 16
  %v2184 = vrot.slane %v2182, 5
  %v2185 = vor.u32 %v2181, %v2184
  %v2186 = vrot.slane %v2185, 4
  %v2188 = vshll.u32 %v1967, 16
  %v2190 = vrot.slane %v2188, 5
  %v2191 = vsel %vm67, %v2186, %v2190
  %v2192 = vld [vmem:[%s1 + $0x1c0] sm:$0xf]
  %v2193 = vld [vmem:[%s1 + $0x1c4] sm:$0xf]
  %v2194 = vld [vmem:[%s1 + $0x1c8] sm:$0xf]
  %v2195 = vld [vmem:[%s1 + $0x1cc] sm:$0xf]
  %v2196 = vld [vmem:[%s1 + $0x1d0] sm:$0xf]
  %v2197 = vld [vmem:[%s1 + $0x1d4] sm:$0xf]
  %v2198 = vld [vmem:[%s1 + $0x1d8] sm:$0xf]
  %v2199 = vld [vmem:[%s1 + $0x1dc] sm:$0xf]
  %v2200 = vld [vmem:[%s1 + $0x1e0] sm:$0xf]
  %v2201 = vld [vmem:[%s1 + $0x1e4] sm:$0xf]
  %v2202 = vld [vmem:[%s1 + $0x1e8] sm:$0xf]
  %v2203 = vld [vmem:[%s1 + $0x1ec] sm:$0xf]
  %v2204 = vld [vmem:[%s1 + $0x1f0] sm:$0xf]
  %v2205 = vld [vmem:[%s1 + $0x1f4] sm:$0xf]
  %v2206 = vld [vmem:[%s1 + $0x1f8] sm:$0xf]
  %v2207 = vld [vmem:[%s1 + $0x1fc] sm:$0xf]
  %v2208 = vunpack.c.l.b16 %v1981
  %v2209 = vunpack.c.l.b16 %v1995
  %v2210 = vunpack.c.l.b16 %v2009
  %v2211 = vunpack.c.l.b16 %v2023
  %v2212 = vunpack.c.l.b16 %v2037
  %v2213 = vunpack.c.l.b16 %v2051
  %v2214 = vunpack.c.l.b16 %v2065
  %v2215 = vunpack.c.l.b16 %v2079
  %v2216 = vunpack.c.l.b16 %v2093
  %v2217 = vunpack.c.l.b16 %v2107
  %v2218 = vunpack.c.l.b16 %v2121
  %v2219 = vunpack.c.l.b16 %v2135
  %v2220 = vunpack.c.l.b16 %v2149
  %v2221 = vunpack.c.l.b16 %v2163
  %v2222 = vunpack.c.l.b16 %v2177
  %v2223 = vunpack.c.l.b16 %v2191
  %v2224 = vpack.c.b16 %v2209, %v2208
  %v2225 = vpack.c.b16 %v2211, %v2210
  %v2226 = vpack.c.b16 %v2213, %v2212
  %v2227 = vpack.c.b16 %v2215, %v2214
  %v2228 = vpack.c.b16 %v2217, %v2216
  %v2229 = vpack.c.b16 %v2219, %v2218
  %v2230 = vpack.c.b16 %v2221, %v2220
  %v2231 = vpack.c.b16 %v2223, %v2222
  %v2256 = vunpack.c.l.b16 %v2192
  %v2257 = vunpack.c.l.b16 %v2193
  %v2258 = vunpack.c.l.b16 %v2194
  %v2259 = vunpack.c.l.b16 %v2195
  %v2260 = vunpack.c.l.b16 %v2196
  %v2261 = vunpack.c.l.b16 %v2197
  %v2262 = vunpack.c.l.b16 %v2198
  %v2263 = vunpack.c.l.b16 %v2199
  %v2264 = vunpack.c.l.b16 %v2200
  %v2265 = vunpack.c.l.b16 %v2201
  %v2266 = vunpack.c.l.b16 %v2202
  %v2267 = vunpack.c.l.b16 %v2203
  %v2268 = vunpack.c.l.b16 %v2204
  %v2269 = vunpack.c.l.b16 %v2205
  %v2270 = vunpack.c.l.b16 %v2206
  %v2271 = vunpack.c.l.b16 %v2207
  %v2272 = vpack.c.b16 %v2257, %v2256
  %v2273 = vpack.c.b16 %v2259, %v2258
  %v2274 = vpack.c.b16 %v2261, %v2260
  %v2275 = vpack.c.b16 %v2263, %v2262
  %v2276 = vpack.c.b16 %v2265, %v2264
  %v2277 = vpack.c.b16 %v2267, %v2266
  %v2278 = vpack.c.b16 %v2269, %v2268
  %v2279 = vpack.c.b16 %v2271, %v2270
  %2288 = vmatpush.bf16.msra.mxu0 %v2279
  %2289 = vmatpush.bf16.msra.mxu0 %v2278
  %2290 = vmatpush.bf16.msra.mxu0 %v2277
  %2291 = vmatpush.bf16.msra.mxu0 %v2276
  %2292 = vmatpush.bf16.msra.mxu0 %v2275
  %2293 = vmatpush.bf16.msra.mxu0 %v2274
  %2294 = vmatpush.bf16.msra.mxu0 %v2273
  %2295 = vmatpush.bf16.msra.mxu0 %v2272
  %2296 = vmatmul.bf16.gmra.mxu0 %v2224
  %v2297 = vpop.f32.mrf.mxu0
  %v2298 = vadd.f32 0.0, %v2297
  %v2299 = vpop.f32.mrf.mxu0
  %v2300 = vadd.f32 0.0, %v2299
  %2301 = vmatmul.bf16.gmra.mxu0 %v2225
  %v2302 = vpop.f32.mrf.mxu0
  %v2303 = vadd.f32 0.0, %v2302
  %v2304 = vpop.f32.mrf.mxu0
  %v2305 = vadd.f32 0.0, %v2304
  %2306 = vmatmul.bf16.gmra.mxu0 %v2226
  %v2307 = vpop.f32.mrf.mxu0
  %v2308 = vadd.f32 0.0, %v2307
  %v2309 = vpop.f32.mrf.mxu0
  %v2310 = vadd.f32 0.0, %v2309
  %2311 = vmatmul.bf16.gmra.mxu0 %v2227
  %v2312 = vpop.f32.mrf.mxu0
  %v2313 = vadd.f32 0.0, %v2312
  %v2314 = vpop.f32.mrf.mxu0
  %v2315 = vadd.f32 0.0, %v2314
  %2316 = vmatmul.bf16.gmra.mxu0 %v2228
  %v2317 = vpop.f32.mrf.mxu0
  %v2318 = vadd.f32 0.0, %v2317
  %v2319 = vpop.f32.mrf.mxu0
  %v2320 = vadd.f32 0.0, %v2319
  %2321 = vmatmul.bf16.gmra.mxu0 %v2229
  %v2322 = vpop.f32.mrf.mxu0
  %v2323 = vadd.f32 0.0, %v2322
  %v2324 = vpop.f32.mrf.mxu0
  %v2325 = vadd.f32 0.0, %v2324
  %2326 = vmatmul.bf16.gmra.mxu0 %v2230
  %v2327 = vpop.f32.mrf.mxu0
  %v2328 = vadd.f32 0.0, %v2327
  %v2329 = vpop.f32.mrf.mxu0
  %v2330 = vadd.f32 0.0, %v2329
  %2331 = vmatmul.bf16.gmra.mxu0 %v2231
  %v2332 = vpop.f32.mrf.mxu0
  %v2333 = vadd.f32 0.0, %v2332
  %v2334 = vpop.f32.mrf.mxu0
  %v2335 = vadd.f32 0.0, %v2334
  %2336 = vdwg.mxu0
  %v2337 = vadd.f32 %v1920, %v2298
  %v2338 = vadd.f32 %v1921, %v2300
  %v2339 = vadd.f32 %v1922, %v2303
  %v2340 = vadd.f32 %v1923, %v2305
  %v2341 = vadd.f32 %v1924, %v2308
  %v2342 = vadd.f32 %v1925, %v2310
  %v2343 = vadd.f32 %v1926, %v2313
  %v2344 = vadd.f32 %v1927, %v2315
  %v2345 = vadd.f32 %v1928, %v2318
  %v2346 = vadd.f32 %v1929, %v2320
  %v2347 = vadd.f32 %v1930, %v2323
  %v2348 = vadd.f32 %v1931, %v2325
  %v2349 = vadd.f32 %v1932, %v2328
  %v2350 = vadd.f32 %v1933, %v2330
  %v2351 = vadd.f32 %v1934, %v2333
  %v2352 = vadd.f32 %v1935, %v2335
  %v2353 = vld [vmem:[%s1742] sm:$0xe]
  %v2354 = vld [vmem:[%s1742 + $0x8] sm:$0xe]
  %v2355 = vld [vmem:[%s1742 + $0x10] sm:$0xe]
  %v2356 = vld [vmem:[%s1742 + $0x18] sm:$0xe]
  %v2357 = vld [vmem:[%s1742 + $0x20] sm:$0xe]
  %v2358 = vld [vmem:[%s1742 + $0x28] sm:$0xe]
  %v2359 = vld [vmem:[%s1742 + $0x30] sm:$0xe]
  %v2360 = vld [vmem:[%s1742 + $0x38] sm:$0xe]
  %v2361 = vld [vmem:[%s1742 + $0x50] sm:$0xe]
  %v2362 = vld [vmem:[%s1742 + $0x58] sm:$0xe]
  %v2363 = vld [vmem:[%s1742 + $0x60] sm:$0xe]
  %v2364 = vld [vmem:[%s1742 + $0x68] sm:$0xe]
  %v2365 = vld [vmem:[%s1742 + $0x70] sm:$0xe]
  %v2366 = vld [vmem:[%s1742 + $0x78] sm:$0xe]
  %v2367 = vld [vmem:[%s1742 + $0x80] sm:$0xe]
  %v2368 = vld [vmem:[%s1742 + $0x88] sm:$0xe]
  %v2401 = vrot.slane %v2353, 5
  %v2402 = vrot.slane %v2401, 4
  %v2403 = vrot.slane %v1937, 5
  %v2404 = vsel %vm632, %v2402, %v2403
  %v2405 = vrot.slane %v2354, 5
  %v2406 = vrot.slane %v2405, 4
  %v2407 = vrot.slane %v1939, 5
  %v2408 = vsel %vm632, %v2406, %v2407
  %v2409 = vrot.slane %v2355, 5
  %v2410 = vrot.slane %v2409, 4
  %v2411 = vrot.slane %v1941, 5
  %v2412 = vsel %vm632, %v2410, %v2411
  %v2413 = vrot.slane %v2356, 5
  %v2414 = vrot.slane %v2413, 4
  %v2415 = vrot.slane %v1943, 5
  %v2416 = vsel %vm632, %v2414, %v2415
  %v2417 = vrot.slane %v2357, 5
  %v2418 = vrot.slane %v2417, 4
  %v2419 = vrot.slane %v1945, 5
  %v2420 = vsel %vm632, %v2418, %v2419
  %v2421 = vrot.slane %v2358, 5
  %v2422 = vrot.slane %v2421, 4
  %v2423 = vrot.slane %v1947, 5
  %v2424 = vsel %vm632, %v2422, %v2423
  %v2425 = vrot.slane %v2359, 5
  %v2426 = vrot.slane %v2425, 4
  %v2427 = vrot.slane %v1949, 5
  %v2428 = vsel %vm632, %v2426, %v2427
  %v2429 = vrot.slane %v2360, 5
  %v2430 = vrot.slane %v2429, 4
  %v2431 = vrot.slane %v1951, 5
  %v2432 = vsel %vm632, %v2430, %v2431
  %v2433 = vrot.slane %v2361, 5
  %v2434 = vrot.slane %v2433, 4
  %v2435 = vrot.slane %v1953, 5
  %v2436 = vsel %vm632, %v2434, %v2435
  %v2437 = vrot.slane %v2362, 5
  %v2438 = vrot.slane %v2437, 4
  %v2439 = vrot.slane %v1955, 5
  %v2440 = vsel %vm632, %v2438, %v2439
  %v2441 = vrot.slane %v2363, 5
  %v2442 = vrot.slane %v2441, 4
  %v2443 = vrot.slane %v1957, 5
  %v2444 = vsel %vm632, %v2442, %v2443
  %v2445 = vrot.slane %v2364, 5
  %v2446 = vrot.slane %v2445, 4
  %v2447 = vrot.slane %v1959, 5
  %v2448 = vsel %vm632, %v2446, %v2447
  %v2449 = vrot.slane %v2365, 5
  %v2450 = vrot.slane %v2449, 4
  %v2451 = vrot.slane %v1961, 5
  %v2452 = vsel %vm632, %v2450, %v2451
  %v2453 = vrot.slane %v2366, 5
  %v2454 = vrot.slane %v2453, 4
  %v2455 = vrot.slane %v1963, 5
  %v2456 = vsel %vm632, %v2454, %v2455
  %v2457 = vrot.slane %v2367, 5
  %v2458 = vrot.slane %v2457, 4
  %v2459 = vrot.slane %v1965, 5
  %v2460 = vsel %vm632, %v2458, %v2459
  %v2461 = vrot.slane %v2368, 5
  %v2462 = vrot.slane %v2461, 4
  %v2463 = vrot.slane %v1967, 5
  %v2464 = vsel %vm632, %v2462, %v2463
  %v2465 = vld [vmem:[%s1 + $0x200] sm:$0xf]
  %v2466 = vld [vmem:[%s1 + $0x204] sm:$0xf]
  %v2467 = vld [vmem:[%s1 + $0x208] sm:$0xf]
  %v2468 = vld [vmem:[%s1 + $0x20c] sm:$0xf]
  %v2469 = vld [vmem:[%s1 + $0x210] sm:$0xf]
  %v2470 = vld [vmem:[%s1 + $0x214] sm:$0xf]
  %v2471 = vld [vmem:[%s1 + $0x218] sm:$0xf]
  %v2472 = vld [vmem:[%s1 + $0x21c] sm:$0xf]
  %v2473 = vld [vmem:[%s1 + $0x220] sm:$0xf]
  %v2474 = vld [vmem:[%s1 + $0x224] sm:$0xf]
  %v2475 = vld [vmem:[%s1 + $0x228] sm:$0xf]
  %v2476 = vld [vmem:[%s1 + $0x22c] sm:$0xf]
  %v2477 = vld [vmem:[%s1 + $0x230] sm:$0xf]
  %v2478 = vld [vmem:[%s1 + $0x234] sm:$0xf]
  %v2479 = vld [vmem:[%s1 + $0x238] sm:$0xf]
  %v2480 = vld [vmem:[%s1 + $0x23c] sm:$0xf]
  %v2481 = vunpack.c.l.b16 %v2404
  %v2482 = vunpack.c.l.b16 %v2408
  %v2483 = vunpack.c.l.b16 %v2412
  %v2484 = vunpack.c.l.b16 %v2416
  %v2485 = vunpack.c.l.b16 %v2420
  %v2486 = vunpack.c.l.b16 %v2424
  %v2487 = vunpack.c.l.b16 %v2428
  %v2488 = vunpack.c.l.b16 %v2432
  %v2489 = vunpack.c.l.b16 %v2436
  %v2490 = vunpack.c.l.b16 %v2440
  %v2491 = vunpack.c.l.b16 %v2444
  %v2492 = vunpack.c.l.b16 %v2448
  %v2493 = vunpack.c.l.b16 %v2452
  %v2494 = vunpack.c.l.b16 %v2456
  %v2495 = vunpack.c.l.b16 %v2460
  %v2496 = vunpack.c.l.b16 %v2464
  %v2497 = vpack.c.b16 %v2482, %v2481
  %v2498 = vpack.c.b16 %v2484, %v2483
  %v2499 = vpack.c.b16 %v2486, %v2485
  %v2500 = vpack.c.b16 %v2488, %v2487
  %v2501 = vpack.c.b16 %v2490, %v2489
  %v2502 = vpack.c.b16 %v2492, %v2491
  %v2503 = vpack.c.b16 %v2494, %v2493
  %v2504 = vpack.c.b16 %v2496, %v2495
  %v2529 = vunpack.c.l.b16 %v2465
  %v2530 = vunpack.c.l.b16 %v2466
  %v2531 = vunpack.c.l.b16 %v2467
  %v2532 = vunpack.c.l.b16 %v2468
  %v2533 = vunpack.c.l.b16 %v2469
  %v2534 = vunpack.c.l.b16 %v2470
  %v2535 = vunpack.c.l.b16 %v2471
  %v2536 = vunpack.c.l.b16 %v2472
  %v2537 = vunpack.c.l.b16 %v2473
  %v2538 = vunpack.c.l.b16 %v2474
  %v2539 = vunpack.c.l.b16 %v2475
  %v2540 = vunpack.c.l.b16 %v2476
  %v2541 = vunpack.c.l.b16 %v2477
  %v2542 = vunpack.c.l.b16 %v2478
  %v2543 = vunpack.c.l.b16 %v2479
  %v2544 = vunpack.c.l.b16 %v2480
  %v2545 = vpack.c.b16 %v2530, %v2529
  %v2546 = vpack.c.b16 %v2532, %v2531
  %v2547 = vpack.c.b16 %v2534, %v2533
  %v2548 = vpack.c.b16 %v2536, %v2535
  %v2549 = vpack.c.b16 %v2538, %v2537
  %v2550 = vpack.c.b16 %v2540, %v2539
  %v2551 = vpack.c.b16 %v2542, %v2541
  %v2552 = vpack.c.b16 %v2544, %v2543
  %2561 = vmatpush.bf16.msra.mxu0 %v2552
  %2562 = vmatpush.bf16.msra.mxu0 %v2551
  %2563 = vmatpush.bf16.msra.mxu0 %v2550
  %2564 = vmatpush.bf16.msra.mxu0 %v2549
  %2565 = vmatpush.bf16.msra.mxu0 %v2548
  %2566 = vmatpush.bf16.msra.mxu0 %v2547
  %2567 = vmatpush.bf16.msra.mxu0 %v2546
  %2568 = vmatpush.bf16.msra.mxu0 %v2545
  %2569 = vmatmul.bf16.gmra.mxu0 %v2497
  %v2570 = vpop.f32.mrf.mxu0
  %v2571 = vadd.f32 0.0, %v2570
  %v2572 = vpop.f32.mrf.mxu0
  %v2573 = vadd.f32 0.0, %v2572
  %2574 = vmatmul.bf16.gmra.mxu0 %v2498
  %v2575 = vpop.f32.mrf.mxu0
  %v2576 = vadd.f32 0.0, %v2575
  %v2577 = vpop.f32.mrf.mxu0
  %v2578 = vadd.f32 0.0, %v2577
  %2579 = vmatmul.bf16.gmra.mxu0 %v2499
  %v2580 = vpop.f32.mrf.mxu0
  %v2581 = vadd.f32 0.0, %v2580
  %v2582 = vpop.f32.mrf.mxu0
  %v2583 = vadd.f32 0.0, %v2582
  %2584 = vmatmul.bf16.gmra.mxu0 %v2500
  %v2585 = vpop.f32.mrf.mxu0
  %v2586 = vadd.f32 0.0, %v2585
  %v2587 = vpop.f32.mrf.mxu0
  %v2588 = vadd.f32 0.0, %v2587
  %2589 = vmatmul.bf16.gmra.mxu0 %v2501
  %v2590 = vpop.f32.mrf.mxu0
  %v2591 = vadd.f32 0.0, %v2590
  %v2592 = vpop.f32.mrf.mxu0
  %v2593 = vadd.f32 0.0, %v2592
  %2594 = vmatmul.bf16.gmra.mxu0 %v2502
  %v2595 = vpop.f32.mrf.mxu0
  %v2596 = vadd.f32 0.0, %v2595
  %v2597 = vpop.f32.mrf.mxu0
  %v2598 = vadd.f32 0.0, %v2597
  %2599 = vmatmul.bf16.gmra.mxu0 %v2503
  %v2600 = vpop.f32.mrf.mxu0
  %v2601 = vadd.f32 0.0, %v2600
  %v2602 = vpop.f32.mrf.mxu0
  %v2603 = vadd.f32 0.0, %v2602
  %2604 = vmatmul.bf16.gmra.mxu0 %v2504
  %v2605 = vpop.f32.mrf.mxu0
  %v2606 = vadd.f32 0.0, %v2605
  %v2607 = vpop.f32.mrf.mxu0
  %v2608 = vadd.f32 0.0, %v2607
  %2609 = vdwg.mxu0
  %v2610 = vadd.f32 %v2337, %v2571
  %v2611 = vadd.f32 %v2338, %v2573
  %v2612 = vadd.f32 %v2339, %v2576
  %v2613 = vadd.f32 %v2340, %v2578
  %v2614 = vadd.f32 %v2341, %v2581
  %v2615 = vadd.f32 %v2342, %v2583
  %v2616 = vadd.f32 %v2343, %v2586
  %v2617 = vadd.f32 %v2344, %v2588
  %v2618 = vadd.f32 %v2345, %v2591
  %v2619 = vadd.f32 %v2346, %v2593
  %v2620 = vadd.f32 %v2347, %v2596
  %v2621 = vadd.f32 %v2348, %v2598
  %v2622 = vadd.f32 %v2349, %v2601
  %v2623 = vadd.f32 %v2350, %v2603
  %v2624 = vadd.f32 %v2351, %v2606
  %v2625 = vadd.f32 %v2352, %v2608
  %v2626 = vadd.f32 %v2610, %v2611
  %v2627 = vadd.f32 %v2626, %v2612
  %v2628 = vadd.f32 %v2627, %v2613
  %v2629 = vadd.f32 %v2628, %v2614
  %v2630 = vadd.f32 %v2629, %v2615
  %v2631 = vadd.f32 %v2630, %v2616
  %v2632 = vadd.f32 %v2631, %v2617
  %v2633 = vadd.f32 %v2632, %v2618
  %v2634 = vadd.f32 %v2633, %v2619
  %v2635 = vadd.f32 %v2634, %v2620
  %v2636 = vadd.f32 %v2635, %v2621
  %v2637 = vadd.f32 %v2636, %v2622
  %v2638 = vadd.f32 %v2637, %v2623
  %v2639 = vadd.f32 %v2638, %v2624
  %v2640 = vadd.f32 %v2639, %v2625
  %v2641 = vrot.slane %v2640, 4
  %v2642 = vadd.f32 %v2640, %v2641
  %v2643 = vrot.slane %v2642, 2
  %v2644 = vadd.f32 %v2642, %v2643
  %v2645 = vrot.slane %v2644, 1
  %v2646 = vadd.f32 %v2644, %v2645
  %v2647 = vmul.f32 %v2646, 0.0078125
  %v2648 = vsub.f32 %v2610, %v2647
  %v2649 = vsub.f32 %v2611, %v2647
  %v2650 = vsub.f32 %v2612, %v2647
  %v2651 = vsub.f32 %v2613, %v2647
  %v2652 = vsub.f32 %v2614, %v2647
  %v2653 = vsub.f32 %v2615, %v2647
  %v2654 = vsub.f32 %v2616, %v2647
  %v2655 = vsub.f32 %v2617, %v2647
  %v2656 = vsub.f32 %v2618, %v2647
  %v2657 = vsub.f32 %v2619, %v2647
  %v2658 = vsub.f32 %v2620, %v2647
  %v2659 = vsub.f32 %v2621, %v2647
  %v2660 = vsub.f32 %v2622, %v2647
  %v2661 = vsub.f32 %v2623, %v2647
  %v2662 = vsub.f32 %v2624, %v2647
  %v2663 = vsub.f32 %v2625, %v2647
  %v2664 = vmul.f32 %v2648, %v2648
  %v2665 = vmul.f32 %v2649, %v2649
  %v2666 = vmul.f32 %v2650, %v2650
  %v2667 = vmul.f32 %v2651, %v2651
  %v2668 = vmul.f32 %v2652, %v2652
  %v2669 = vmul.f32 %v2653, %v2653
  %v2670 = vmul.f32 %v2654, %v2654
  %v2671 = vmul.f32 %v2655, %v2655
  %v2672 = vmul.f32 %v2656, %v2656
  %v2673 = vmul.f32 %v2657, %v2657
  %v2674 = vmul.f32 %v2658, %v2658
  %v2675 = vmul.f32 %v2659, %v2659
  %v2676 = vmul.f32 %v2660, %v2660
  %v2677 = vmul.f32 %v2661, %v2661
  %v2678 = vmul.f32 %v2662, %v2662
  %v2679 = vmul.f32 %v2663, %v2663
  %v2680 = vadd.f32 %v2664, %v2665
  %v2681 = vadd.f32 %v2680, %v2666
  %v2682 = vadd.f32 %v2681, %v2667
  %v2683 = vadd.f32 %v2682, %v2668
  %v2684 = vadd.f32 %v2683, %v2669
  %v2685 = vadd.f32 %v2684, %v2670
  %v2686 = vadd.f32 %v2685, %v2671
  %v2687 = vadd.f32 %v2686, %v2672
  %v2688 = vadd.f32 %v2687, %v2673
  %v2689 = vadd.f32 %v2688, %v2674
  %v2690 = vadd.f32 %v2689, %v2675
  %v2691 = vadd.f32 %v2690, %v2676
  %v2692 = vadd.f32 %v2691, %v2677
  %v2693 = vadd.f32 %v2692, %v2678
  %v2694 = vadd.f32 %v2693, %v2679
  %v2695 = vrot.slane %v2694, 4
  %v2696 = vadd.f32 %v2694, %v2695
  %v2697 = vrot.slane %v2696, 2
  %v2698 = vadd.f32 %v2696, %v2697
  %v2699 = vrot.slane %v2698, 1
  %v2700 = vadd.f32 %v2698, %v2699
  %v2701 = vmul.f32 %v2700, 0.0078125
  %v2702 = vadd.f32 %v2701, 1e-05
  %v2703 = vrsqrt.pop %v2702
  %v2704 = vmul.f32 %v2703, %v2702
  %v2705 = vmul.f32 %v2704, %v2703
  %v2706 = vmul.f32 0.5, %v2705
  %v2707 = vsub.f32 1.5, %v2706
  %v2708 = vmul.f32 %v2703, %v2707
  %vm2709 = vweird.f32 %v2702
  %vm2710 = vweird.f32 %v2703
  %vm2711 = vmor %vm2709, %vm2710
  %v2712 = vsel %vm2711, %v2703, %v2708
  %v2713 = vmul.f32 %v2648, %v2712
  %v2714 = vmul.f32 %v2649, %v2712
  %v2715 = vmul.f32 %v2650, %v2712
  %v2716 = vmul.f32 %v2651, %v2712
  %v2717 = vmul.f32 %v2652, %v2712
  %v2718 = vmul.f32 %v2653, %v2712
  %v2719 = vmul.f32 %v2654, %v2712
  %v2720 = vmul.f32 %v2655, %v2712
  %v2721 = vmul.f32 %v2656, %v2712
  %v2722 = vmul.f32 %v2657, %v2712
  %v2723 = vmul.f32 %v2658, %v2712
  %v2724 = vmul.f32 %v2659, %v2712
  %v2725 = vmul.f32 %v2660, %v2712
  %v2726 = vmul.f32 %v2661, %v2712
  %v2727 = vmul.f32 %v2662, %v2712
  %v2728 = vmul.f32 %v2663, %v2712
  %v2729 = vld [vmem:[%s2] sm:$0x1]
  %v2731 = vperm.slane %v2729, 0
  %v2733 = vmul.f32 %v2713, %v2731
  %v2734 = vmul.f32 %v2714, %v2731
  %v2735 = vmul.f32 %v2715, %v2731
  %v2736 = vmul.f32 %v2716, %v2731
  %v2737 = vmul.f32 %v2717, %v2731
  %v2738 = vmul.f32 %v2718, %v2731
  %v2739 = vmul.f32 %v2719, %v2731
  %v2740 = vmul.f32 %v2720, %v2731
  %v2741 = vmul.f32 %v2721, %v2731
  %v2742 = vmul.f32 %v2722, %v2731
  %v2743 = vmul.f32 %v2723, %v2731
  %v2744 = vmul.f32 %v2724, %v2731
  %v2745 = vmul.f32 %v2725, %v2731
  %v2746 = vmul.f32 %v2726, %v2731
  %v2747 = vmul.f32 %v2727, %v2731
  %v2748 = vmul.f32 %v2728, %v2731
  %v2749 = vld [vmem:[%s3] sm:$0x1]
  %v2751 = vperm.slane %v2749, 0
  %v2753 = vadd.f32 %v2733, %v2751
  %v2754 = vadd.f32 %v2734, %v2751
  %v2755 = vadd.f32 %v2735, %v2751
  %v2756 = vadd.f32 %v2736, %v2751
  %v2757 = vadd.f32 %v2737, %v2751
  %v2758 = vadd.f32 %v2738, %v2751
  %v2759 = vadd.f32 %v2739, %v2751
  %v2760 = vadd.f32 %v2740, %v2751
  %v2761 = vadd.f32 %v2741, %v2751
  %v2762 = vadd.f32 %v2742, %v2751
  %v2763 = vadd.f32 %v2743, %v2751
  %v2764 = vadd.f32 %v2744, %v2751
  %v2765 = vadd.f32 %v2745, %v2751
  %v2766 = vadd.f32 %v2746, %v2751
  %v2767 = vadd.f32 %v2747, %v2751
  %v2768 = vadd.f32 %v2748, %v2751
  %v2769 = vmax.f32 %v2753, 0.0
  %v2770 = vmax.f32 %v2754, 0.0
  %v2771 = vmax.f32 %v2755, 0.0
  %v2772 = vmax.f32 %v2756, 0.0
  %v2773 = vmax.f32 %v2757, 0.0
  %v2774 = vmax.f32 %v2758, 0.0
  %v2775 = vmax.f32 %v2759, 0.0
  %v2776 = vmax.f32 %v2760, 0.0
  %v2777 = vmax.f32 %v2761, 0.0
  %v2778 = vmax.f32 %v2762, 0.0
  %v2779 = vmax.f32 %v2763, 0.0
  %v2780 = vmax.f32 %v2764, 0.0
  %v2781 = vmax.f32 %v2765, 0.0
  %v2782 = vmax.f32 %v2766, 0.0
  %v2783 = vmax.f32 %v2767, 0.0
  %v2784 = vmax.f32 %v2768, 0.0
  %2785 = vst [vmem:[%s4] sm:$0xff] %v2769
  %2786 = vst [vmem:[%s4 + $0x8] sm:$0xff] %v2770
  %2787 = vst [vmem:[%s4 + $0x10] sm:$0xff] %v2771
  %2788 = vst [vmem:[%s4 + $0x18] sm:$0xff] %v2772
  %2789 = vst [vmem:[%s4 + $0x20] sm:$0xff] %v2773
  %2790 = vst [vmem:[%s4 + $0x28] sm:$0xff] %v2774
  %2791 = vst [vmem:[%s4 + $0x30] sm:$0xff] %v2775
  %2792 = vst [vmem:[%s4 + $0x38] sm:$0xff] %v2776
  %2793 = vst [vmem:[%s4 + $0x40] sm:$0xff] %v2777
  %2794 = vst [vmem:[%s4 + $0x48] sm:$0xff] %v2778
  %2795 = vst [vmem:[%s4 + $0x50] sm:$0xff] %v2779
  %2796 = vst [vmem:[%s4 + $0x58] sm:$0xff] %v2780
  %2797 = vst [vmem:[%s4 + $0x60] sm:$0xff] %v2781
  %2798 = vst [vmem:[%s4 + $0x68] sm:$0xff] %v2782
  %2799 = vst [vmem:[%s4 + $0x70] sm:$0xff] %v2783
  %2800 = vst [vmem:[%s4 + $0x78] sm:$0xff] %v2784
  // Predicated region
  $region18: #{forward.8} parent=0 // pred_check
    _
  $region19: #{forward.8} parent=0 // pred_check_branch
    %2802 = sbr.rel (0) target = $region21
  $region20: #{forward.8} parent=0 // pred_region
    _
  $region21: #{forward.8} parent=0 // pred_fallthru
    _
  // Predicated region
  $region22: #{forward.8} parent=0 // pred_check
    _
  $region23: #{forward.8} parent=0 // pred_check_branch
    %2804 = sbr.rel (0) target = $region25
  $region24: #{forward.8} parent=0 // pred_region
    _
  $region25: #{forward.8} parent=0 // pred_fallthru
    _

// kernel: forward.9
$region0: #{forward.9}
  #allocation0 [shape = 'u32[]', space=smem, size = 0x4, offset = 0x4, fixed_abs, tag = 'smem constant byte address 0x4 - core index']
  #allocation1 [shape = 'u32[72,128]{1,0:T(1,128)}', space=vmem, size = 0x9000, scoped, tag = 'internal scratch']
  %s0 = inlined_call_operand.vmem [shape: bf16[1,2,10,10,128], index: 0, kind: input, shape index: {}]
  %s1 = inlined_call_operand.vmem [shape: bf16[1152,128], index: 1, kind: input, shape index: {}]
  %s2 = inlined_call_operand.vmem [shape: f32[1,128], index: 2, kind: input, shape index: {}]
  %s3 = inlined_call_operand.vmem [shape: f32[1,128], index: 3, kind: input, shape index: {}]
  %s4 = inlined_call_operand.vmem [shape: f32[128,128], index: 4, kind: input, shape index: {}]
  %s5 = inlined_call_operand.hbm [shape: f32[128,128], index: 5, kind: output, shape index: {}]
  %s6 = sld [smem:[#allocation0]]
  $region30: #{forward.9} parent=0
    _
  %s8 = ssub.s32 1, %s6
  %s9 = scalar_select 0, %s8, %s6
  $region1: #{forward.9} parent=0
    #allocation2 [shape = 'u8[65536]{0}', space=vmem, size = 0x10000, scoped, tag = 'output window, operand 0, single buffered']
    #allocation3 [shape = 's32[1]{0}', space=sflag, size = 0x4, scoped, tag = 'scoped memory for forward.9']
    %10 = vsyncpa [#allocation3], 0
    // Predicated region
    $region2: #{forward.9} parent=1 // pred_check
      _
    $region3: #{forward.9} parent=1 // pred_check_branch
      %12 = sbr.rel (0) target = $region5
    $region4: #{forward.9} parent=1 // pred_region
      _
    $region5: #{forward.9} parent=1 // pred_fallthru
      _
    // Predicated region
    $region6: #{forward.9} parent=1 // pred_check
      _
    $region7: #{forward.9} parent=1 // pred_check_branch
      %14 = sbr.rel (0) target = $region9
    $region8: #{forward.9} parent=1 // pred_region
      _
    $region9: #{forward.9} parent=1 // pred_fallthru
      _
    // Predicated region
    $region10: #{forward.9} parent=1 // pred_check
      _
    $region11: #{forward.9} parent=1 // pred_check_branch
      %16 = sbr.rel (0) target = $region13
    $region12: #{forward.9} parent=1 // pred_region
      _
    $region13: #{forward.9} parent=1 // pred_fallthru
      _
    // Predicated region
    $region14: #{forward.9} parent=1 // pred_check
      _
    $region15: #{forward.9} parent=1 // pred_check_branch
      %18 = sbr.rel (0) target = $region17
    $region16: #{forward.9} parent=1 // pred_region
      _
    $region17: #{forward.9} parent=1 // pred_fallthru
      _
    // Predicated region
    $region18: #{forward.9} parent=1 // pred_check
      _
    $region19: #{forward.9} parent=1 // pred_check_branch
      %20 = sbr.rel (0) target = $region21
    $region20: #{forward.9} parent=1 // pred_region
      _
    $region21: #{forward.9} parent=1 // pred_fallthru
      _
    %v21 = vld [vmem:[%s0] sm:$0xf]
    %v22 = vld [vmem:[%s0 + $0x8] sm:$0xf]
    %v23 = vld [vmem:[%s0 + $0x10] sm:$0xf]
    %v24 = vld [vmem:[%s0 + $0x18] sm:$0xf]
    %v25 = vld [vmem:[%s0 + $0x20] sm:$0xf]
    %v26 = vld [vmem:[%s0 + $0x28] sm:$0xf]
    %v27 = vld [vmem:[%s0 + $0x30] sm:$0xf]
    %v28 = vld [vmem:[%s0 + $0x38] sm:$0xf]
    %v29 = vld [vmem:[%s0 + $0x50] sm:$0xf]
    %v30 = vld [vmem:[%s0 + $0x58] sm:$0xf]
    %v31 = vld [vmem:[%s0 + $0x60] sm:$0xf]
    %v32 = vld [vmem:[%s0 + $0x68] sm:$0xf]
    %v33 = vld [vmem:[%s0 + $0x70] sm:$0xf]
    %v34 = vld [vmem:[%s0 + $0x78] sm:$0xf]
    %v35 = vld [vmem:[%s0 + $0x80] sm:$0xf]
    %v36 = vld [vmem:[%s0 + $0x88] sm:$0xf]
    %v37 = vld [vmem:[%s1] sm:$0xf]
    %v38 = vld [vmem:[%s1 + $0x4] sm:$0xf]
    %v39 = vld [vmem:[%s1 + $0x8] sm:$0xf]
    %v40 = vld [vmem:[%s1 + $0xc] sm:$0xf]
    %v41 = vld [vmem:[%s1 + $0x10] sm:$0xf]
    %v42 = vld [vmem:[%s1 + $0x14] sm:$0xf]
    %v43 = vld [vmem:[%s1 + $0x18] sm:$0xf]
    %v44 = vld [vmem:[%s1 + $0x1c] sm:$0xf]
    %v45 = vld [vmem:[%s1 + $0x20] sm:$0xf]
    %v46 = vld [vmem:[%s1 + $0x24] sm:$0xf]
    %v47 = vld [vmem:[%s1 + $0x28] sm:$0xf]
    %v48 = vld [vmem:[%s1 + $0x2c] sm:$0xf]
    %v49 = vld [vmem:[%s1 + $0x30] sm:$0xf]
    %v50 = vld [vmem:[%s1 + $0x34] sm:$0xf]
    %v51 = vld [vmem:[%s1 + $0x38] sm:$0xf]
    %v52 = vld [vmem:[%s1 + $0x3c] sm:$0xf]
    %v53 = vld [vmem:[%s0 + $0x4] sm:$0x1]
    %v54 = vld [vmem:[%s0 + $0xc] sm:$0x1]
    %v55 = vld [vmem:[%s0 + $0x14] sm:$0x1]
    %v56 = vld [vmem:[%s0 + $0x1c] sm:$0x1]
    %v57 = vld [vmem:[%s0 + $0x24] sm:$0x1]
    %v58 = vld [vmem:[%s0 + $0x2c] sm:$0x1]
    %v59 = vld [vmem:[%s0 + $0x34] sm:$0x1]
    %v60 = vld [vmem:[%s0 + $0x3c] sm:$0x1]
    %v61 = vld [vmem:[%s0 + $0x54] sm:$0x1]
    %v62 = vld [vmem:[%s0 + $0x5c] sm:$0x1]
    %v63 = vld [vmem:[%s0 + $0x64] sm:$0x1]
    %v64 = vld [vmem:[%s0 + $0x6c] sm:$0x1]
    %v65 = vld [vmem:[%s0 + $0x74] sm:$0x1]
    %v66 = vld [vmem:[%s0 + $0x7c] sm:$0x1]
    %v67 = vld [vmem:[%s0 + $0x84] sm:$0x1]
    %v68 = vld [vmem:[%s0 + $0x8c] sm:$0x1]
    %vm69 = vsmask.f32 3328
    %vm70 = vsmask.f32 7440
    %vm71 = vmor %vm69, %vm70
    %v73 = vshrl.u32 %v21, 16
    %v75 = vrot.slane %v73, 4
    %v76 = vshll.u32 %v21, 16
    %v78 = vrot.slane %v76, 5
    %v79 = vor.u32 %v75, %v78
    %v80 = vrot.slane %v79, 4
    %v82 = vshll.u32 %v53, 16
    %v84 = vrot.slane %v82, 5
    %v85 = vsel %vm71, %v80, %v84
    %v87 = vshrl.u32 %v22, 16
    %v89 = vrot.slane %v87, 4
    %v90 = vshll.u32 %v22, 16
    %v92 = vrot.slane %v90, 5
    %v93 = vor.u32 %v89, %v92
    %v94 = vrot.slane %v93, 4
    %v96 = vshll.u32 %v54, 16
    %v98 = vrot.slane %v96, 5
    %v99 = vsel %vm71, %v94, %v98
    %v101 = vshrl.u32 %v23, 16
    %v103 = vrot.slane %v101, 4
    %v104 = vshll.u32 %v23, 16
    %v106 = vrot.slane %v104, 5
    %v107 = vor.u32 %v103, %v106
    %v108 = vrot.slane %v107, 4
    %v110 = vshll.u32 %v55, 16
    %v112 = vrot.slane %v110, 5
    %v113 = vsel %vm71, %v108, %v112
    %v115 = vshrl.u32 %v24, 16
    %v117 = vrot.slane %v115, 4
    %v118 = vshll.u32 %v24, 16
    %v120 = vrot.slane %v118, 5
    %v121 = vor.u32 %v117, %v120
    %v122 = vrot.slane %v121, 4
    %v124 = vshll.u32 %v56, 16
    %v126 = vrot.slane %v124, 5
    %v127 = vsel %vm71, %v122, %v126
    %v129 = vshrl.u32 %v25, 16
    %v131 = vrot.slane %v129, 4
    %v132 = vshll.u32 %v25, 16
    %v134 = vrot.slane %v132, 5
    %v135 = vor.u32 %v131, %v134
    %v136 = vrot.slane %v135, 4
    %v138 = vshll.u32 %v57, 16
    %v140 = vrot.slane %v138, 5
    %v141 = vsel %vm71, %v136, %v140
    %v143 = vshrl.u32 %v26, 16
    %v145 = vrot.slane %v143, 4
    %v146 = vshll.u32 %v26, 16
    %v148 = vrot.slane %v146, 5
    %v149 = vor.u32 %v145, %v148
    %v150 = vrot.slane %v149, 4
    %v152 = vshll.u32 %v58, 16
    %v154 = vrot.slane %v152, 5
    %v155 = vsel %vm71, %v150, %v154
    %v157 = vshrl.u32 %v27, 16
    %v159 = vrot.slane %v157, 4
    %v160 = vshll.u32 %v27, 16
    %v162 = vrot.slane %v160, 5
    %v163 = vor.u32 %v159, %v162
    %v164 = vrot.slane %v163, 4
    %v166 = vshll.u32 %v59, 16
    %v168 = vrot.slane %v166, 5
    %v169 = vsel %vm71, %v164, %v168
    %v171 = vshrl.u32 %v28, 16
    %v173 = vrot.slane %v171, 4
    %v174 = vshll.u32 %v28, 16
    %v176 = vrot.slane %v174, 5
    %v177 = vor.u32 %v173, %v176
    %v178 = vrot.slane %v177, 4
    %v180 = vshll.u32 %v60, 16
    %v182 = vrot.slane %v180, 5
    %v183 = vsel %vm71, %v178, %v182
    %v185 = vshrl.u32 %v29, 16
    %v187 = vrot.slane %v185, 4
    %v188 = vshll.u32 %v29, 16
    %v190 = vrot.slane %v188, 5
    %v191 = vor.u32 %v187, %v190
    %v192 = vrot.slane %v191, 4
    %v194 = vshll.u32 %v61, 16
    %v196 = vrot.slane %v194, 5
    %v197 = vsel %vm71, %v192, %v196
    %v199 = vshrl.u32 %v30, 16
    %v201 = vrot.slane %v199, 4
    %v202 = vshll.u32 %v30, 16
    %v204 = vrot.slane %v202, 5
    %v205 = vor.u32 %v201, %v204
    %v206 = vrot.slane %v205, 4
    %v208 = vshll.u32 %v62, 16
    %v210 = vrot.slane %v208, 5
    %v211 = vsel %vm71, %v206, %v210
    %v213 = vshrl.u32 %v31, 16
    %v215 = vrot.slane %v213, 4
    %v216 = vshll.u32 %v31, 16
    %v218 = vrot.slane %v216, 5
    %v219 = vor.u32 %v215, %v218
    %v220 = vrot.slane %v219, 4
    %v222 = vshll.u32 %v63, 16
    %v224 = vrot.slane %v222, 5
    %v225 = vsel %vm71, %v220, %v224
    %v227 = vshrl.u32 %v32, 16
    %v229 = vrot.slane %v227, 4
    %v230 = vshll.u32 %v32, 16
    %v232 = vrot.slane %v230, 5
    %v233 = vor.u32 %v229, %v232
    %v234 = vrot.slane %v233, 4
    %v236 = vshll.u32 %v64, 16
    %v238 = vrot.slane %v236, 5
    %v239 = vsel %vm71, %v234, %v238
    %v241 = vshrl.u32 %v33, 16
    %v243 = vrot.slane %v241, 4
    %v244 = vshll.u32 %v33, 16
    %v246 = vrot.slane %v244, 5
    %v247 = vor.u32 %v243, %v246
    %v248 = vrot.slane %v247, 4
    %v250 = vshll.u32 %v65, 16
    %v252 = vrot.slane %v250, 5
    %v253 = vsel %vm71, %v248, %v252
    %v255 = vshrl.u32 %v34, 16
    %v257 = vrot.slane %v255, 4
    %v258 = vshll.u32 %v34, 16
    %v260 = vrot.slane %v258, 5
    %v261 = vor.u32 %v257, %v260
    %v262 = vrot.slane %v261, 4
    %v264 = vshll.u32 %v66, 16
    %v266 = vrot.slane %v264, 5
    %v267 = vsel %vm71, %v262, %v266
    %v269 = vshrl.u32 %v35, 16
    %v271 = vrot.slane %v269, 4
    %v272 = vshll.u32 %v35, 16
    %v274 = vrot.slane %v272, 5
    %v275 = vor.u32 %v271, %v274
    %v276 = vrot.slane %v275, 4
    %v278 = vshll.u32 %v67, 16
    %v280 = vrot.slane %v278, 5
    %v281 = vsel %vm71, %v276, %v280
    %v283 = vshrl.u32 %v36, 16
    %v285 = vrot.slane %v283, 4
    %v286 = vshll.u32 %v36, 16
    %v288 = vrot.slane %v286, 5
    %v289 = vor.u32 %v285, %v288
    %v290 = vrot.slane %v289, 4
    %v292 = vshll.u32 %v68, 16
    %v294 = vrot.slane %v292, 5
    %v295 = vsel %vm71, %v290, %v294
    %v296 = vld [vmem:[%s1 + $0x40] sm:$0xf]
    %v297 = vld [vmem:[%s1 + $0x44] sm:$0xf]
    %v298 = vld [vmem:[%s1 + $0x48] sm:$0xf]
    %v299 = vld [vmem:[%s1 + $0x4c] sm:$0xf]
    %v300 = vld [vmem:[%s1 + $0x50] sm:$0xf]
    %v301 = vld [vmem:[%s1 + $0x54] sm:$0xf]
    %v302 = vld [vmem:[%s1 + $0x58] sm:$0xf]
    %v303 = vld [vmem:[%s1 + $0x5c] sm:$0xf]
    %v304 = vld [vmem:[%s1 + $0x60] sm:$0xf]
    %v305 = vld [vmem:[%s1 + $0x64] sm:$0xf]
    %v306 = vld [vmem:[%s1 + $0x68] sm:$0xf]
    %v307 = vld [vmem:[%s1 + $0x6c] sm:$0xf]
    %v308 = vld [vmem:[%s1 + $0x70] sm:$0xf]
    %v309 = vld [vmem:[%s1 + $0x74] sm:$0xf]
    %v310 = vld [vmem:[%s1 + $0x78] sm:$0xf]
    %v311 = vld [vmem:[%s1 + $0x7c] sm:$0xf]
    %v312 = vunpack.c.l.b16 %v85
    %v313 = vunpack.c.l.b16 %v99
    %v314 = vunpack.c.l.b16 %v113
    %v315 = vunpack.c.l.b16 %v127
    %v316 = vunpack.c.l.b16 %v141
    %v317 = vunpack.c.l.b16 %v155
    %v318 = vunpack.c.l.b16 %v169
    %v319 = vunpack.c.l.b16 %v183
    %v320 = vunpack.c.l.b16 %v197
    %v321 = vunpack.c.l.b16 %v211
    %v322 = vunpack.c.l.b16 %v225
    %v323 = vunpack.c.l.b16 %v239
    %v324 = vunpack.c.l.b16 %v253
    %v325 = vunpack.c.l.b16 %v267
    %v326 = vunpack.c.l.b16 %v281
    %v327 = vunpack.c.l.b16 %v295
    %v328 = vpack.c.b16 %v313, %v312
    %v329 = vpack.c.b16 %v315, %v314
    %v330 = vpack.c.b16 %v317, %v316
    %v331 = vpack.c.b16 %v319, %v318
    %v332 = vpack.c.b16 %v321, %v320
    %v333 = vpack.c.b16 %v323, %v322
    %v334 = vpack.c.b16 %v325, %v324
    %v335 = vpack.c.b16 %v327, %v326
    %v360 = vunpack.c.l.b16 %v296
    %v361 = vunpack.c.l.b16 %v297
    %v362 = vunpack.c.l.b16 %v298
    %v363 = vunpack.c.l.b16 %v299
    %v364 = vunpack.c.l.b16 %v300
    %v365 = vunpack.c.l.b16 %v301
    %v366 = vunpack.c.l.b16 %v302
    %v367 = vunpack.c.l.b16 %v303
    %v368 = vunpack.c.l.b16 %v304
    %v369 = vunpack.c.l.b16 %v305
    %v370 = vunpack.c.l.b16 %v306
    %v371 = vunpack.c.l.b16 %v307
    %v372 = vunpack.c.l.b16 %v308
    %v373 = vunpack.c.l.b16 %v309
    %v374 = vunpack.c.l.b16 %v310
    %v375 = vunpack.c.l.b16 %v311
    %v376 = vpack.c.b16 %v361, %v360
    %v377 = vpack.c.b16 %v363, %v362
    %v378 = vpack.c.b16 %v365, %v364
    %v379 = vpack.c.b16 %v367, %v366
    %v380 = vpack.c.b16 %v369, %v368
    %v381 = vpack.c.b16 %v371, %v370
    %v382 = vpack.c.b16 %v373, %v372
    %v383 = vpack.c.b16 %v375, %v374
    %392 = vmatpush.bf16.msra.mxu0 %v383
    %393 = vmatpush.bf16.msra.mxu0 %v382
    %394 = vmatpush.bf16.msra.mxu0 %v381
    %395 = vmatpush.bf16.msra.mxu0 %v380
    %396 = vmatpush.bf16.msra.mxu0 %v379
    %397 = vmatpush.bf16.msra.mxu0 %v378
    %398 = vmatpush.bf16.msra.mxu0 %v377
    %399 = vmatpush.bf16.msra.mxu0 %v376
    %400 = vmatmul.bf16.gmra.mxu0 %v328
    %v401 = vpop.f32.mrf.mxu0
    %v402 = vadd.f32 0.0, %v401
    %v403 = vpop.f32.mrf.mxu0
    %v404 = vadd.f32 0.0, %v403
    %405 = vmatmul.bf16.gmra.mxu0 %v329
    %v406 = vpop.f32.mrf.mxu0
    %v407 = vadd.f32 0.0, %v406
    %v408 = vpop.f32.mrf.mxu0
    %v409 = vadd.f32 0.0, %v408
    %410 = vmatmul.bf16.gmra.mxu0 %v330
    %v411 = vpop.f32.mrf.mxu0
    %v412 = vadd.f32 0.0, %v411
    %v413 = vpop.f32.mrf.mxu0
    %v414 = vadd.f32 0.0, %v413
    %415 = vmatmul.bf16.gmra.mxu0 %v331
    %v416 = vpop.f32.mrf.mxu0
    %v417 = vadd.f32 0.0, %v416
    %v418 = vpop.f32.mrf.mxu0
    %v419 = vadd.f32 0.0, %v418
    %420 = vmatmul.bf16.gmra.mxu0 %v332
    %v421 = vpop.f32.mrf.mxu0
    %v422 = vadd.f32 0.0, %v421
    %v423 = vpop.f32.mrf.mxu0
    %v424 = vadd.f32 0.0, %v423
    %425 = vmatmul.bf16.gmra.mxu0 %v333
    %v426 = vpop.f32.mrf.mxu0
    %v427 = vadd.f32 0.0, %v426
    %v428 = vpop.f32.mrf.mxu0
    %v429 = vadd.f32 0.0, %v428
    %430 = vmatmul.bf16.gmra.mxu0 %v334
    %v431 = vpop.f32.mrf.mxu0
    %v432 = vadd.f32 0.0, %v431
    %v433 = vpop.f32.mrf.mxu0
    %v434 = vadd.f32 0.0, %v433
    %435 = vmatmul.bf16.gmra.mxu0 %v335
    %v436 = vpop.f32.mrf.mxu0
    %v437 = vadd.f32 0.0, %v436
    %v438 = vpop.f32.mrf.mxu0
    %v439 = vadd.f32 0.0, %v438
    %440 = vdwg.mxu0
    %v457 = vunpack.c.l.b16 %v21
    %v458 = vunpack.c.l.b16 %v22
    %v459 = vunpack.c.l.b16 %v23
    %v460 = vunpack.c.l.b16 %v24
    %v461 = vunpack.c.l.b16 %v25
    %v462 = vunpack.c.l.b16 %v26
    %v463 = vunpack.c.l.b16 %v27
    %v464 = vunpack.c.l.b16 %v28
    %v465 = vunpack.c.l.b16 %v29
    %v466 = vunpack.c.l.b16 %v30
    %v467 = vunpack.c.l.b16 %v31
    %v468 = vunpack.c.l.b16 %v32
    %v469 = vunpack.c.l.b16 %v33
    %v470 = vunpack.c.l.b16 %v34
    %v471 = vunpack.c.l.b16 %v35
    %v472 = vunpack.c.l.b16 %v36
    %v473 = vpack.c.b16 %v458, %v457
    %v474 = vpack.c.b16 %v460, %v459
    %v475 = vpack.c.b16 %v462, %v461
    %v476 = vpack.c.b16 %v464, %v463
    %v477 = vpack.c.b16 %v466, %v465
    %v478 = vpack.c.b16 %v468, %v467
    %v479 = vpack.c.b16 %v470, %v469
    %v480 = vpack.c.b16 %v472, %v471
    %v505 = vunpack.c.l.b16 %v37
    %v506 = vunpack.c.l.b16 %v38
    %v507 = vunpack.c.l.b16 %v39
    %v508 = vunpack.c.l.b16 %v40
    %v509 = vunpack.c.l.b16 %v41
    %v510 = vunpack.c.l.b16 %v42
    %v511 = vunpack.c.l.b16 %v43
    %v512 = vunpack.c.l.b16 %v44
    %v513 = vunpack.c.l.b16 %v45
    %v514 = vunpack.c.l.b16 %v46
    %v515 = vunpack.c.l.b16 %v47
    %v516 = vunpack.c.l.b16 %v48
    %v517 = vunpack.c.l.b16 %v49
    %v518 = vunpack.c.l.b16 %v50
    %v519 = vunpack.c.l.b16 %v51
    %v520 = vunpack.c.l.b16 %v52
    %v521 = vpack.c.b16 %v506, %v505
    %v522 = vpack.c.b16 %v508, %v507
    %v523 = vpack.c.b16 %v510, %v509
    %v524 = vpack.c.b16 %v512, %v511
    %v525 = vpack.c.b16 %v514, %v513
    %v526 = vpack.c.b16 %v516, %v515
    %v527 = vpack.c.b16 %v518, %v517
    %v528 = vpack.c.b16 %v520, %v519
    %537 = vmatpush.bf16.msra.mxu0 %v528
    %538 = vmatpush.bf16.msra.mxu0 %v527
    %539 = vmatpush.bf16.msra.mxu0 %v526
    %540 = vmatpush.bf16.msra.mxu0 %v525
    %541 = vmatpush.bf16.msra.mxu0 %v524
    %542 = vmatpush.bf16.msra.mxu0 %v523
    %543 = vmatpush.bf16.msra.mxu0 %v522
    %544 = vmatpush.bf16.msra.mxu0 %v521
    %545 = vmatmul.bf16.gmra.mxu0 %v473
    %v546 = vpop.f32.mrf.mxu0
    %v547 = vadd.f32 %v402, %v546
    %v548 = vpop.f32.mrf.mxu0
    %v549 = vadd.f32 %v404, %v548
    %550 = vmatmul.bf16.gmra.mxu0 %v474
    %v551 = vpop.f32.mrf.mxu0
    %v552 = vadd.f32 %v407, %v551
    %v553 = vpop.f32.mrf.mxu0
    %v554 = vadd.f32 %v409, %v553
    %555 = vmatmul.bf16.gmra.mxu0 %v475
    %v556 = vpop.f32.mrf.mxu0
    %v557 = vadd.f32 %v412, %v556
    %v558 = vpop.f32.mrf.mxu0
    %v559 = vadd.f32 %v414, %v558
    %560 = vmatmul.bf16.gmra.mxu0 %v476
    %v561 = vpop.f32.mrf.mxu0
    %v562 = vadd.f32 %v417, %v561
    %v563 = vpop.f32.mrf.mxu0
    %v564 = vadd.f32 %v419, %v563
    %565 = vmatmul.bf16.gmra.mxu0 %v477
    %v566 = vpop.f32.mrf.mxu0
    %v567 = vadd.f32 %v422, %v566
    %v568 = vpop.f32.mrf.mxu0
    %v569 = vadd.f32 %v424, %v568
    %570 = vmatmul.bf16.gmra.mxu0 %v478
    %v571 = vpop.f32.mrf.mxu0
    %v572 = vadd.f32 %v427, %v571
    %v573 = vpop.f32.mrf.mxu0
    %v574 = vadd.f32 %v429, %v573
    %575 = vmatmul.bf16.gmra.mxu0 %v479
    %v576 = vpop.f32.mrf.mxu0
    %v577 = vadd.f32 %v432, %v576
    %v578 = vpop.f32.mrf.mxu0
    %v579 = vadd.f32 %v434, %v578
    %580 = vmatmul.bf16.gmra.mxu0 %v480
    %v581 = vpop.f32.mrf.mxu0
    %v582 = vadd.f32 %v437, %v581
    %v583 = vpop.f32.mrf.mxu0
    %v584 = vadd.f32 %v439, %v583
    %585 = vdwg.mxu0
    %v586 = vld [vmem:[%s0] sm:$0xe]
    %v587 = vld [vmem:[%s0 + $0x8] sm:$0xe]
    %v588 = vld [vmem:[%s0 + $0x10] sm:$0xe]
    %v589 = vld [vmem:[%s0 + $0x18] sm:$0xe]
    %v590 = vld [vmem:[%s0 + $0x20] sm:$0xe]
    %v591 = vld [vmem:[%s0 + $0x28] sm:$0xe]
    %v592 = vld [vmem:[%s0 + $0x30] sm:$0xe]
    %v593 = vld [vmem:[%s0 + $0x38] sm:$0xe]
    %v594 = vld [vmem:[%s0 + $0x50] sm:$0xe]
    %v595 = vld [vmem:[%s0 + $0x58] sm:$0xe]
    %v596 = vld [vmem:[%s0 + $0x60] sm:$0xe]
    %v597 = vld [vmem:[%s0 + $0x68] sm:$0xe]
    %v598 = vld [vmem:[%s0 + $0x70] sm:$0xe]
    %v599 = vld [vmem:[%s0 + $0x78] sm:$0xe]
    %v600 = vld [vmem:[%s0 + $0x80] sm:$0xe]
    %v601 = vld [vmem:[%s0 + $0x88] sm:$0xe]
    %vm634 = vcmask 1042432
    %vm635 = vcmask 1046532
    %vm636 = vmor %vm634, %vm635
    %v637 = vrot.slane %v586, 5
    %v638 = vrot.slane %v637, 4
    %v639 = vrot.slane %v53, 5
    %v640 = vsel %vm636, %v638, %v639
    %v641 = vrot.slane %v587, 5
    %v642 = vrot.slane %v641, 4
    %v643 = vrot.slane %v54, 5
    %v644 = vsel %vm636, %v642, %v643
    %v645 = vrot.slane %v588, 5
    %v646 = vrot.slane %v645, 4
    %v647 = vrot.slane %v55, 5
    %v648 = vsel %vm636, %v646, %v647
    %v649 = vrot.slane %v589, 5
    %v650 = vrot.slane %v649, 4
    %v651 = vrot.slane %v56, 5
    %v652 = vsel %vm636, %v650, %v651
    %v653 = vrot.slane %v590, 5
    %v654 = vrot.slane %v653, 4
    %v655 = vrot.slane %v57, 5
    %v656 = vsel %vm636, %v654, %v655
    %v657 = vrot.slane %v591, 5
    %v658 = vrot.slane %v657, 4
    %v659 = vrot.slane %v58, 5
    %v660 = vsel %vm636, %v658, %v659
    %v661 = vrot.slane %v592, 5
    %v662 = vrot.slane %v661, 4
    %v663 = vrot.slane %v59, 5
    %v664 = vsel %vm636, %v662, %v663
    %v665 = vrot.slane %v593, 5
    %v666 = vrot.slane %v665, 4
    %v667 = vrot.slane %v60, 5
    %v668 = vsel %vm636, %v666, %v667
    %v669 = vrot.slane %v594, 5
    %v670 = vrot.slane %v669, 4
    %v671 = vrot.slane %v61, 5
    %v672 = vsel %vm636, %v670, %v671
    %v673 = vrot.slane %v595, 5
    %v674 = vrot.slane %v673, 4
    %v675 = vrot.slane %v62, 5
    %v676 = vsel %vm636, %v674, %v675
    %v677 = vrot.slane %v596, 5
    %v678 = vrot.slane %v677, 4
    %v679 = vrot.slane %v63, 5
    %v680 = vsel %vm636, %v678, %v679
    %v681 = vrot.slane %v597, 5
    %v682 = vrot.slane %v681, 4
    %v683 = vrot.slane %v64, 5
    %v684 = vsel %vm636, %v682, %v683
    %v685 = vrot.slane %v598, 5
    %v686 = vrot.slane %v685, 4
    %v687 = vrot.slane %v65, 5
    %v688 = vsel %vm636, %v686, %v687
    %v689 = vrot.slane %v599, 5
    %v690 = vrot.slane %v689, 4
    %v691 = vrot.slane %v66, 5
    %v692 = vsel %vm636, %v690, %v691
    %v693 = vrot.slane %v600, 5
    %v694 = vrot.slane %v693, 4
    %v695 = vrot.slane %v67, 5
    %v696 = vsel %vm636, %v694, %v695
    %v697 = vrot.slane %v601, 5
    %v698 = vrot.slane %v697, 4
    %v699 = vrot.slane %v68, 5
    %v700 = vsel %vm636, %v698, %v699
    %v701 = vld [vmem:[%s1 + $0x80] sm:$0xf]
    %v702 = vld [vmem:[%s1 + $0x84] sm:$0xf]
    %v703 = vld [vmem:[%s1 + $0x88] sm:$0xf]
    %v704 = vld [vmem:[%s1 + $0x8c] sm:$0xf]
    %v705 = vld [vmem:[%s1 + $0x90] sm:$0xf]
    %v706 = vld [vmem:[%s1 + $0x94] sm:$0xf]
    %v707 = vld [vmem:[%s1 + $0x98] sm:$0xf]
    %v708 = vld [vmem:[%s1 + $0x9c] sm:$0xf]
    %v709 = vld [vmem:[%s1 + $0xa0] sm:$0xf]
    %v710 = vld [vmem:[%s1 + $0xa4] sm:$0xf]
    %v711 = vld [vmem:[%s1 + $0xa8] sm:$0xf]
    %v712 = vld [vmem:[%s1 + $0xac] sm:$0xf]
    %v713 = vld [vmem:[%s1 + $0xb0] sm:$0xf]
    %v714 = vld [vmem:[%s1 + $0xb4] sm:$0xf]
    %v715 = vld [vmem:[%s1 + $0xb8] sm:$0xf]
    %v716 = vld [vmem:[%s1 + $0xbc] sm:$0xf]
    %v717 = vunpack.c.l.b16 %v640
    %v718 = vunpack.c.l.b16 %v644
    %v719 = vunpack.c.l.b16 %v648
    %v720 = vunpack.c.l.b16 %v652
    %v721 = vunpack.c.l.b16 %v656
    %v722 = vunpack.c.l.b16 %v660
    %v723 = vunpack.c.l.b16 %v664
    %v724 = vunpack.c.l.b16 %v668
    %v725 = vunpack.c.l.b16 %v672
    %v726 = vunpack.c.l.b16 %v676
    %v727 = vunpack.c.l.b16 %v680
    %v728 = vunpack.c.l.b16 %v684
    %v729 = vunpack.c.l.b16 %v688
    %v730 = vunpack.c.l.b16 %v692
    %v731 = vunpack.c.l.b16 %v696
    %v732 = vunpack.c.l.b16 %v700
    %v733 = vpack.c.b16 %v718, %v717
    %v734 = vpack.c.b16 %v720, %v719
    %v735 = vpack.c.b16 %v722, %v721
    %v736 = vpack.c.b16 %v724, %v723
    %v737 = vpack.c.b16 %v726, %v725
    %v738 = vpack.c.b16 %v728, %v727
    %v739 = vpack.c.b16 %v730, %v729
    %v740 = vpack.c.b16 %v732, %v731
    %v765 = vunpack.c.l.b16 %v701
    %v766 = vunpack.c.l.b16 %v702
    %v767 = vunpack.c.l.b16 %v703
    %v768 = vunpack.c.l.b16 %v704
    %v769 = vunpack.c.l.b16 %v705
    %v770 = vunpack.c.l.b16 %v706
    %v771 = vunpack.c.l.b16 %v707
    %v772 = vunpack.c.l.b16 %v708
    %v773 = vunpack.c.l.b16 %v709
    %v774 = vunpack.c.l.b16 %v710
    %v775 = vunpack.c.l.b16 %v711
    %v776 = vunpack.c.l.b16 %v712
    %v777 = vunpack.c.l.b16 %v713
    %v778 = vunpack.c.l.b16 %v714
    %v779 = vunpack.c.l.b16 %v715
    %v780 = vunpack.c.l.b16 %v716
    %v781 = vpack.c.b16 %v766, %v765
    %v782 = vpack.c.b16 %v768, %v767
    %v783 = vpack.c.b16 %v770, %v769
    %v784 = vpack.c.b16 %v772, %v771
    %v785 = vpack.c.b16 %v774, %v773
    %v786 = vpack.c.b16 %v776, %v775
    %v787 = vpack.c.b16 %v778, %v777
    %v788 = vpack.c.b16 %v780, %v779
    %797 = vmatpush.bf16.msra.mxu0 %v788
    %798 = vmatpush.bf16.msra.mxu0 %v787
    %799 = vmatpush.bf16.msra.mxu0 %v786
    %800 = vmatpush.bf16.msra.mxu0 %v785
    %801 = vmatpush.bf16.msra.mxu0 %v784
    %802 = vmatpush.bf16.msra.mxu0 %v783
    %803 = vmatpush.bf16.msra.mxu0 %v782
    %804 = vmatpush.bf16.msra.mxu0 %v781
    %805 = vmatmul.bf16.gmra.mxu0 %v733
    %v806 = vpop.f32.mrf.mxu0
    %v807 = vadd.f32 0.0, %v806
    %v808 = vpop.f32.mrf.mxu0
    %v809 = vadd.f32 0.0, %v808
    %810 = vmatmul.bf16.gmra.mxu0 %v734
    %v811 = vpop.f32.mrf.mxu0
    %v812 = vadd.f32 0.0, %v811
    %v813 = vpop.f32.mrf.mxu0
    %v814 = vadd.f32 0.0, %v813
    %815 = vmatmul.bf16.gmra.mxu0 %v735
    %v816 = vpop.f32.mrf.mxu0
    %v817 = vadd.f32 0.0, %v816
    %v818 = vpop.f32.mrf.mxu0
    %v819 = vadd.f32 0.0, %v818
    %820 = vmatmul.bf16.gmra.mxu0 %v736
    %v821 = vpop.f32.mrf.mxu0
    %v822 = vadd.f32 0.0, %v821
    %v823 = vpop.f32.mrf.mxu0
    %v824 = vadd.f32 0.0, %v823
    %825 = vmatmul.bf16.gmra.mxu0 %v737
    %v826 = vpop.f32.mrf.mxu0
    %v827 = vadd.f32 0.0, %v826
    %v828 = vpop.f32.mrf.mxu0
    %v829 = vadd.f32 0.0, %v828
    %830 = vmatmul.bf16.gmra.mxu0 %v738
    %v831 = vpop.f32.mrf.mxu0
    %v832 = vadd.f32 0.0, %v831
    %v833 = vpop.f32.mrf.mxu0
    %v834 = vadd.f32 0.0, %v833
    %835 = vmatmul.bf16.gmra.mxu0 %v739
    %v836 = vpop.f32.mrf.mxu0
    %v837 = vadd.f32 0.0, %v836
    %v838 = vpop.f32.mrf.mxu0
    %v839 = vadd.f32 0.0, %v838
    %840 = vmatmul.bf16.gmra.mxu0 %v740
    %v841 = vpop.f32.mrf.mxu0
    %v842 = vadd.f32 0.0, %v841
    %v843 = vpop.f32.mrf.mxu0
    %v844 = vadd.f32 0.0, %v843
    %845 = vdwg.mxu0
    %v846 = vadd.f32 %v547, %v807
    %v847 = vadd.f32 %v549, %v809
    %v848 = vadd.f32 %v552, %v812
    %v849 = vadd.f32 %v554, %v814
    %v850 = vadd.f32 %v557, %v817
    %v851 = vadd.f32 %v559, %v819
    %v852 = vadd.f32 %v562, %v822
    %v853 = vadd.f32 %v564, %v824
    %v854 = vadd.f32 %v567, %v827
    %v855 = vadd.f32 %v569, %v829
    %v856 = vadd.f32 %v572, %v832
    %v857 = vadd.f32 %v574, %v834
    %v858 = vadd.f32 %v577, %v837
    %v859 = vadd.f32 %v579, %v839
    %v860 = vadd.f32 %v582, %v842
    %v861 = vadd.f32 %v584, %v844
    %s862 = scalar_lea.vmem %s0, 8
    %v863 = vld [vmem:[%s862] sm:$0xf]
    %v864 = vld [vmem:[%s862 + $0x8] sm:$0xf]
    %v865 = vld [vmem:[%s862 + $0x10] sm:$0xf]
    %v866 = vld [vmem:[%s862 + $0x18] sm:$0xf]
    %v867 = vld [vmem:[%s862 + $0x20] sm:$0xf]
    %v868 = vld [vmem:[%s862 + $0x28] sm:$0xf]
    %v869 = vld [vmem:[%s862 + $0x30] sm:$0xf]
    %v870 = vld [vmem:[%s862 + $0x38] sm:$0xf]
    %v871 = vld [vmem:[%s862 + $0x50] sm:$0xf]
    %v872 = vld [vmem:[%s862 + $0x58] sm:$0xf]
    %v873 = vld [vmem:[%s862 + $0x60] sm:$0xf]
    %v874 = vld [vmem:[%s862 + $0x68] sm:$0xf]
    %v875 = vld [vmem:[%s862 + $0x70] sm:$0xf]
    %v876 = vld [vmem:[%s862 + $0x78] sm:$0xf]
    %v877 = vld [vmem:[%s862 + $0x80] sm:$0xf]
    %v878 = vld [vmem:[%s862 + $0x88] sm:$0xf]
    %v879 = vld [vmem:[%s1 + $0xc0] sm:$0xf]
    %v880 = vld [vmem:[%s1 + $0xc4] sm:$0xf]
    %v881 = vld [vmem:[%s1 + $0xc8] sm:$0xf]
    %v882 = vld [vmem:[%s1 + $0xcc] sm:$0xf]
    %v883 = vld [vmem:[%s1 + $0xd0] sm:$0xf]
    %v884 = vld [vmem:[%s1 + $0xd4] sm:$0xf]
    %v885 = vld [vmem:[%s1 + $0xd8] sm:$0xf]
    %v886 = vld [vmem:[%s1 + $0xdc] sm:$0xf]
    %v887 = vld [vmem:[%s1 + $0xe0] sm:$0xf]
    %v888 = vld [vmem:[%s1 + $0xe4] sm:$0xf]
    %v889 = vld [vmem:[%s1 + $0xe8] sm:$0xf]
    %v890 = vld [vmem:[%s1 + $0xec] sm:$0xf]
    %v891 = vld [vmem:[%s1 + $0xf0] sm:$0xf]
    %v892 = vld [vmem:[%s1 + $0xf4] sm:$0xf]
    %v893 = vld [vmem:[%s1 + $0xf8] sm:$0xf]
    %v894 = vld [vmem:[%s1 + $0xfc] sm:$0xf]
    %v911 = vunpack.c.l.b16 %v863
    %v912 = vunpack.c.l.b16 %v864
    %v913 = vunpack.c.l.b16 %v865
    %v914 = vunpack.c.l.b16 %v866
    %v915 = vunpack.c.l.b16 %v867
    %v916 = vunpack.c.l.b16 %v868
    %v917 = vunpack.c.l.b16 %v869
    %v918 = vunpack.c.l.b16 %v870
    %v919 = vunpack.c.l.b16 %v871
    %v920 = vunpack.c.l.b16 %v872
    %v921 = vunpack.c.l.b16 %v873
    %v922 = vunpack.c.l.b16 %v874
    %v923 = vunpack.c.l.b16 %v875
    %v924 = vunpack.c.l.b16 %v876
    %v925 = vunpack.c.l.b16 %v877
    %v926 = vunpack.c.l.b16 %v878
    %v927 = vpack.c.b16 %v912, %v911
    %v928 = vpack.c.b16 %v914, %v913
    %v929 = vpack.c.b16 %v916, %v915
    %v930 = vpack.c.b16 %v918, %v917
    %v931 = vpack.c.b16 %v920, %v919
    %v932 = vpack.c.b16 %v922, %v921
    %v933 = vpack.c.b16 %v924, %v923
    %v934 = vpack.c.b16 %v926, %v925
    %v959 = vunpack.c.l.b16 %v879
    %v960 = vunpack.c.l.b16 %v880
    %v961 = vunpack.c.l.b16 %v881
    %v962 = vunpack.c.l.b16 %v882
    %v963 = vunpack.c.l.b16 %v883
    %v964 = vunpack.c.l.b16 %v884
    %v965 = vunpack.c.l.b16 %v885
    %v966 = vunpack.c.l.b16 %v886
    %v967 = vunpack.c.l.b16 %v887
    %v968 = vunpack.c.l.b16 %v888
    %v969 = vunpack.c.l.b16 %v889
    %v970 = vunpack.c.l.b16 %v890
    %v971 = vunpack.c.l.b16 %v891
    %v972 = vunpack.c.l.b16 %v892
    %v973 = vunpack.c.l.b16 %v893
    %v974 = vunpack.c.l.b16 %v894
    %v975 = vpack.c.b16 %v960, %v959
    %v976 = vpack.c.b16 %v962, %v961
    %v977 = vpack.c.b16 %v964, %v963
    %v978 = vpack.c.b16 %v966, %v965
    %v979 = vpack.c.b16 %v968, %v967
    %v980 = vpack.c.b16 %v970, %v969
    %v981 = vpack.c.b16 %v972, %v971
    %v982 = vpack.c.b16 %v974, %v973
    %991 = vmatpush.bf16.msra.mxu0 %v982
    %992 = vmatpush.bf16.msra.mxu0 %v981
    %993 = vmatpush.bf16.msra.mxu0 %v980
    %994 = vmatpush.bf16.msra.mxu0 %v979
    %995 = vmatpush.bf16.msra.mxu0 %v978
    %996 = vmatpush.bf16.msra.mxu0 %v977
    %997 = vmatpush.bf16.msra.mxu0 %v976
    %998 = vmatpush.bf16.msra.mxu0 %v975
    %999 = vmatmul.bf16.gmra.mxu0 %v927
    %v1000 = vpop.f32.mrf.mxu0
    %v1001 = vadd.f32 0.0, %v1000
    %v1002 = vpop.f32.mrf.mxu0
    %v1003 = vadd.f32 0.0, %v1002
    %1004 = vmatmul.bf16.gmra.mxu0 %v928
    %v1005 = vpop.f32.mrf.mxu0
    %v1006 = vadd.f32 0.0, %v1005
    %v1007 = vpop.f32.mrf.mxu0
    %v1008 = vadd.f32 0.0, %v1007
    %1009 = vmatmul.bf16.gmra.mxu0 %v929
    %v1010 = vpop.f32.mrf.mxu0
    %v1011 = vadd.f32 0.0, %v1010
    %v1012 = vpop.f32.mrf.mxu0
    %v1013 = vadd.f32 0.0, %v1012
    %1014 = vmatmul.bf16.gmra.mxu0 %v930
    %v1015 = vpop.f32.mrf.mxu0
    %v1016 = vadd.f32 0.0, %v1015
    %v1017 = vpop.f32.mrf.mxu0
    %v1018 = vadd.f32 0.0, %v1017
    %1019 = vmatmul.bf16.gmra.mxu0 %v931
    %v1020 = vpop.f32.mrf.mxu0
    %v1021 = vadd.f32 0.0, %v1020
    %v1022 = vpop.f32.mrf.mxu0
    %v1023 = vadd.f32 0.0, %v1022
    %1024 = vmatmul.bf16.gmra.mxu0 %v932
    %v1025 = vpop.f32.mrf.mxu0
    %v1026 = vadd.f32 0.0, %v1025
    %v1027 = vpop.f32.mrf.mxu0
    %v1028 = vadd.f32 0.0, %v1027
    %1029 = vmatmul.bf16.gmra.mxu0 %v933
    %v1030 = vpop.f32.mrf.mxu0
    %v1031 = vadd.f32 0.0, %v1030
    %v1032 = vpop.f32.mrf.mxu0
    %v1033 = vadd.f32 0.0, %v1032
    %1034 = vmatmul.bf16.gmra.mxu0 %v934
    %v1035 = vpop.f32.mrf.mxu0
    %v1036 = vadd.f32 0.0, %v1035
    %v1037 = vpop.f32.mrf.mxu0
    %v1038 = vadd.f32 0.0, %v1037
    %1039 = vdwg.mxu0
    %v1040 = vadd.f32 %v846, %v1001
    %v1041 = vadd.f32 %v847, %v1003
    %v1042 = vadd.f32 %v848, %v1006
    %v1043 = vadd.f32 %v849, %v1008
    %v1044 = vadd.f32 %v850, %v1011
    %v1045 = vadd.f32 %v851, %v1013
    %v1046 = vadd.f32 %v852, %v1016
    %v1047 = vadd.f32 %v853, %v1018
    %v1048 = vadd.f32 %v854, %v1021
    %v1049 = vadd.f32 %v855, %v1023
    %v1050 = vadd.f32 %v856, %v1026
    %v1051 = vadd.f32 %v857, %v1028
    %v1052 = vadd.f32 %v858, %v1031
    %v1053 = vadd.f32 %v859, %v1033
    %v1054 = vadd.f32 %v860, %v1036
    %v1055 = vadd.f32 %v861, %v1038
    %v1056 = vld [vmem:[%s862] sm:$0xf]
    %v1057 = vld [vmem:[%s862 + $0x4] sm:$0x1]
    %v1058 = vld [vmem:[%s862 + $0x8] sm:$0xf]
    %v1059 = vld [vmem:[%s862 + $0xc] sm:$0x1]
    %v1060 = vld [vmem:[%s862 + $0x10] sm:$0xf]
    %v1061 = vld [vmem:[%s862 + $0x14] sm:$0x1]
    %v1062 = vld [vmem:[%s862 + $0x18] sm:$0xf]
    %v1063 = vld [vmem:[%s862 + $0x1c] sm:$0x1]
    %v1064 = vld [vmem:[%s862 + $0x20] sm:$0xf]
    %v1065 = vld [vmem:[%s862 + $0x24] sm:$0x1]
    %v1066 = vld [vmem:[%s862 + $0x28] sm:$0xf]
    %v1067 = vld [vmem:[%s862 + $0x2c] sm:$0x1]
    %v1068 = vld [vmem:[%s862 + $0x30] sm:$0xf]
    %v1069 = vld [vmem:[%s862 + $0x34] sm:$0x1]
    %v1070 = vld [vmem:[%s862 + $0x38] sm:$0xf]
    %v1071 = vld [vmem:[%s862 + $0x3c] sm:$0x1]
    %v1072 = vld [vmem:[%s862 + $0x50] sm:$0xf]
    %v1073 = vld [vmem:[%s862 + $0x54] sm:$0x1]
    %v1074 = vld [vmem:[%s862 + $0x58] sm:$0xf]
    %v1075 = vld [vmem:[%s862 + $0x5c] sm:$0x1]
    %v1076 = vld [vmem:[%s862 + $0x60] sm:$0xf]
    %v1077 = vld [vmem:[%s862 + $0x64] sm:$0x1]
    %v1078 = vld [vmem:[%s862 + $0x68] sm:$0xf]
    %v1079 = vld [vmem:[%s862 + $0x6c] sm:$0x1]
    %v1080 = vld [vmem:[%s862 + $0x70] sm:$0xf]
    %v1081 = vld [vmem:[%s862 + $0x74] sm:$0x1]
    %v1082 = vld [vmem:[%s862 + $0x78] sm:$0xf]
    %v1083 = vld [vmem:[%s862 + $0x7c] sm:$0x1]
    %v1084 = vld [vmem:[%s862 + $0x80] sm:$0xf]
    %v1085 = vld [vmem:[%s862 + $0x84] sm:$0x1]
    %v1086 = vld [vmem:[%s862 + $0x88] sm:$0xf]
    %v1087 = vld [vmem:[%s862 + $0x8c] sm:$0x1]
    %v1089 = vshrl.u32 %v1056, 16
    %v1091 = vrot.slane %v1089, 4
    %v1092 = vshll.u32 %v1056, 16
    %v1094 = vrot.slane %v1092, 5
    %v1095 = vor.u32 %v1091, %v1094
    %v1096 = vrot.slane %v1095, 4
    %v1098 = vshll.u32 %v1057, 16
    %v1100 = vrot.slane %v1098, 5
    %v1101 = vsel %vm71, %v1096, %v1100
    %v1103 = vshrl.u32 %v1058, 16
    %v1105 = vrot.slane %v1103, 4
    %v1106 = vshll.u32 %v1058, 16
    %v1108 = vrot.slane %v1106, 5
    %v1109 = vor.u32 %v1105, %v1108
    %v1110 = vrot.slane %v1109, 4
    %v1112 = vshll.u32 %v1059, 16
    %v1114 = vrot.slane %v1112, 5
    %v1115 = vsel %vm71, %v1110, %v1114
    %v1117 = vshrl.u32 %v1060, 16
    %v1119 = vrot.slane %v1117, 4
    %v1120 = vshll.u32 %v1060, 16
    %v1122 = vrot.slane %v1120, 5
    %v1123 = vor.u32 %v1119, %v1122
    %v1124 = vrot.slane %v1123, 4
    %v1126 = vshll.u32 %v1061, 16
    %v1128 = vrot.slane %v1126, 5
    %v1129 = vsel %vm71, %v1124, %v1128
    %v1131 = vshrl.u32 %v1062, 16
    %v1133 = vrot.slane %v1131, 4
    %v1134 = vshll.u32 %v1062, 16
    %v1136 = vrot.slane %v1134, 5
    %v1137 = vor.u32 %v1133, %v1136
    %v1138 = vrot.slane %v1137, 4
    %v1140 = vshll.u32 %v1063, 16
    %v1142 = vrot.slane %v1140, 5
    %v1143 = vsel %vm71, %v1138, %v1142
    %v1145 = vshrl.u32 %v1064, 16
    %v1147 = vrot.slane %v1145, 4
    %v1148 = vshll.u32 %v1064, 16
    %v1150 = vrot.slane %v1148, 5
    %v1151 = vor.u32 %v1147, %v1150
    %v1152 = vrot.slane %v1151, 4
    %v1154 = vshll.u32 %v1065, 16
    %v1156 = vrot.slane %v1154, 5
    %v1157 = vsel %vm71, %v1152, %v1156
    %v1159 = vshrl.u32 %v1066, 16
    %v1161 = vrot.slane %v1159, 4
    %v1162 = vshll.u32 %v1066, 16
    %v1164 = vrot.slane %v1162, 5
    %v1165 = vor.u32 %v1161, %v1164
    %v1166 = vrot.slane %v1165, 4
    %v1168 = vshll.u32 %v1067, 16
    %v1170 = vrot.slane %v1168, 5
    %v1171 = vsel %vm71, %v1166, %v1170
    %v1173 = vshrl.u32 %v1068, 16
    %v1175 = vrot.slane %v1173, 4
    %v1176 = vshll.u32 %v1068, 16
    %v1178 = vrot.slane %v1176, 5
    %v1179 = vor.u32 %v1175, %v1178
    %v1180 = vrot.slane %v1179, 4
    %v1182 = vshll.u32 %v1069, 16
    %v1184 = vrot.slane %v1182, 5
    %v1185 = vsel %vm71, %v1180, %v1184
    %v1187 = vshrl.u32 %v1070, 16
    %v1189 = vrot.slane %v1187, 4
    %v1190 = vshll.u32 %v1070, 16
    %v1192 = vrot.slane %v1190, 5
    %v1193 = vor.u32 %v1189, %v1192
    %v1194 = vrot.slane %v1193, 4
    %v1196 = vshll.u32 %v1071, 16
    %v1198 = vrot.slane %v1196, 5
    %v1199 = vsel %vm71, %v1194, %v1198
    %v1201 = vshrl.u32 %v1072, 16
    %v1203 = vrot.slane %v1201, 4
    %v1204 = vshll.u32 %v1072, 16
    %v1206 = vrot.slane %v1204, 5
    %v1207 = vor.u32 %v1203, %v1206
    %v1208 = vrot.slane %v1207, 4
    %v1210 = vshll.u32 %v1073, 16
    %v1212 = vrot.slane %v1210, 5
    %v1213 = vsel %vm71, %v1208, %v1212
    %v1215 = vshrl.u32 %v1074, 16
    %v1217 = vrot.slane %v1215, 4
    %v1218 = vshll.u32 %v1074, 16
    %v1220 = vrot.slane %v1218, 5
    %v1221 = vor.u32 %v1217, %v1220
    %v1222 = vrot.slane %v1221, 4
    %v1224 = vshll.u32 %v1075, 16
    %v1226 = vrot.slane %v1224, 5
    %v1227 = vsel %vm71, %v1222, %v1226
    %v1229 = vshrl.u32 %v1076, 16
    %v1231 = vrot.slane %v1229, 4
    %v1232 = vshll.u32 %v1076, 16
    %v1234 = vrot.slane %v1232, 5
    %v1235 = vor.u32 %v1231, %v1234
    %v1236 = vrot.slane %v1235, 4
    %v1238 = vshll.u32 %v1077, 16
    %v1240 = vrot.slane %v1238, 5
    %v1241 = vsel %vm71, %v1236, %v1240
    %v1243 = vshrl.u32 %v1078, 16
    %v1245 = vrot.slane %v1243, 4
    %v1246 = vshll.u32 %v1078, 16
    %v1248 = vrot.slane %v1246, 5
    %v1249 = vor.u32 %v1245, %v1248
    %v1250 = vrot.slane %v1249, 4
    %v1252 = vshll.u32 %v1079, 16
    %v1254 = vrot.slane %v1252, 5
    %v1255 = vsel %vm71, %v1250, %v1254
    %v1257 = vshrl.u32 %v1080, 16
    %v1259 = vrot.slane %v1257, 4
    %v1260 = vshll.u32 %v1080, 16
    %v1262 = vrot.slane %v1260, 5
    %v1263 = vor.u32 %v1259, %v1262
    %v1264 = vrot.slane %v1263, 4
    %v1266 = vshll.u32 %v1081, 16
    %v1268 = vrot.slane %v1266, 5
    %v1269 = vsel %vm71, %v1264, %v1268
    %v1271 = vshrl.u32 %v1082, 16
    %v1273 = vrot.slane %v1271, 4
    %v1274 = vshll.u32 %v1082, 16
    %v1276 = vrot.slane %v1274, 5
    %v1277 = vor.u32 %v1273, %v1276
    %v1278 = vrot.slane %v1277, 4
    %v1280 = vshll.u32 %v1083, 16
    %v1282 = vrot.slane %v1280, 5
    %v1283 = vsel %vm71, %v1278, %v1282
    %v1285 = vshrl.u32 %v1084, 16
    %v1287 = vrot.slane %v1285, 4
    %v1288 = vshll.u32 %v1084, 16
    %v1290 = vrot.slane %v1288, 5
    %v1291 = vor.u32 %v1287, %v1290
    %v1292 = vrot.slane %v1291, 4
    %v1294 = vshll.u32 %v1085, 16
    %v1296 = vrot.slane %v1294, 5
    %v1297 = vsel %vm71, %v1292, %v1296
    %v1299 = vshrl.u32 %v1086, 16
    %v1301 = vrot.slane %v1299, 4
    %v1302 = vshll.u32 %v1086, 16
    %v1304 = vrot.slane %v1302, 5
    %v1305 = vor.u32 %v1301, %v1304
    %v1306 = vrot.slane %v1305, 4
    %v1308 = vshll.u32 %v1087, 16
    %v1310 = vrot.slane %v1308, 5
    %v1311 = vsel %vm71, %v1306, %v1310
    %v1312 = vld [vmem:[%s1 + $0x100] sm:$0xf]
    %v1313 = vld [vmem:[%s1 + $0x104] sm:$0xf]
    %v1314 = vld [vmem:[%s1 + $0x108] sm:$0xf]
    %v1315 = vld [vmem:[%s1 + $0x10c] sm:$0xf]
    %v1316 = vld [vmem:[%s1 + $0x110] sm:$0xf]
    %v1317 = vld [vmem:[%s1 + $0x114] sm:$0xf]
    %v1318 = vld [vmem:[%s1 + $0x118] sm:$0xf]
    %v1319 = vld [vmem:[%s1 + $0x11c] sm:$0xf]
    %v1320 = vld [vmem:[%s1 + $0x120] sm:$0xf]
    %v1321 = vld [vmem:[%s1 + $0x124] sm:$0xf]
    %v1322 = vld [vmem:[%s1 + $0x128] sm:$0xf]
    %v1323 = vld [vmem:[%s1 + $0x12c] sm:$0xf]
    %v1324 = vld [vmem:[%s1 + $0x130] sm:$0xf]
    %v1325 = vld [vmem:[%s1 + $0x134] sm:$0xf]
    %v1326 = vld [vmem:[%s1 + $0x138] sm:$0xf]
    %v1327 = vld [vmem:[%s1 + $0x13c] sm:$0xf]
    %v1328 = vunpack.c.l.b16 %v1101
    %v1329 = vunpack.c.l.b16 %v1115
    %v1330 = vunpack.c.l.b16 %v1129
    %v1331 = vunpack.c.l.b16 %v1143
    %v1332 = vunpack.c.l.b16 %v1157
    %v1333 = vunpack.c.l.b16 %v1171
    %v1334 = vunpack.c.l.b16 %v1185
    %v1335 = vunpack.c.l.b16 %v1199
    %v1336 = vunpack.c.l.b16 %v1213
    %v1337 = vunpack.c.l.b16 %v1227
    %v1338 = vunpack.c.l.b16 %v1241
    %v1339 = vunpack.c.l.b16 %v1255
    %v1340 = vunpack.c.l.b16 %v1269
    %v1341 = vunpack.c.l.b16 %v1283
    %v1342 = vunpack.c.l.b16 %v1297
    %v1343 = vunpack.c.l.b16 %v1311
    %v1344 = vpack.c.b16 %v1329, %v1328
    %v1345 = vpack.c.b16 %v1331, %v1330
    %v1346 = vpack.c.b16 %v1333, %v1332
    %v1347 = vpack.c.b16 %v1335, %v1334
    %v1348 = vpack.c.b16 %v1337, %v1336
    %v1349 = vpack.c.b16 %v1339, %v1338
    %v1350 = vpack.c.b16 %v1341, %v1340
    %v1351 = vpack.c.b16 %v1343, %v1342
    %v1376 = vunpack.c.l.b16 %v1312
    %v1377 = vunpack.c.l.b16 %v1313
    %v1378 = vunpack.c.l.b16 %v1314
    %v1379 = vunpack.c.l.b16 %v1315
    %v1380 = vunpack.c.l.b16 %v1316
    %v1381 = vunpack.c.l.b16 %v1317
    %v1382 = vunpack.c.l.b16 %v1318
    %v1383 = vunpack.c.l.b16 %v1319
    %v1384 = vunpack.c.l.b16 %v1320
    %v1385 = vunpack.c.l.b16 %v1321
    %v1386 = vunpack.c.l.b16 %v1322
    %v1387 = vunpack.c.l.b16 %v1323
    %v1388 = vunpack.c.l.b16 %v1324
    %v1389 = vunpack.c.l.b16 %v1325
    %v1390 = vunpack.c.l.b16 %v1326
    %v1391 = vunpack.c.l.b16 %v1327
    %v1392 = vpack.c.b16 %v1377, %v1376
    %v1393 = vpack.c.b16 %v1379, %v1378
    %v1394 = vpack.c.b16 %v1381, %v1380
    %v1395 = vpack.c.b16 %v1383, %v1382
    %v1396 = vpack.c.b16 %v1385, %v1384
    %v1397 = vpack.c.b16 %v1387, %v1386
    %v1398 = vpack.c.b16 %v1389, %v1388
    %v1399 = vpack.c.b16 %v1391, %v1390
    %1408 = vmatpush.bf16.msra.mxu0 %v1399
    %1409 = vmatpush.bf16.msra.mxu0 %v1398
    %1410 = vmatpush.bf16.msra.mxu0 %v1397
    %1411 = vmatpush.bf16.msra.mxu0 %v1396
    %1412 = vmatpush.bf16.msra.mxu0 %v1395
    %1413 = vmatpush.bf16.msra.mxu0 %v1394
    %1414 = vmatpush.bf16.msra.mxu0 %v1393
    %1415 = vmatpush.bf16.msra.mxu0 %v1392
    %1416 = vmatmul.bf16.gmra.mxu0 %v1344
    %v1417 = vpop.f32.mrf.mxu0
    %v1418 = vadd.f32 0.0, %v1417
    %v1419 = vpop.f32.mrf.mxu0
    %v1420 = vadd.f32 0.0, %v1419
    %1421 = vmatmul.bf16.gmra.mxu0 %v1345
    %v1422 = vpop.f32.mrf.mxu0
    %v1423 = vadd.f32 0.0, %v1422
    %v1424 = vpop.f32.mrf.mxu0
    %v1425 = vadd.f32 0.0, %v1424
    %1426 = vmatmul.bf16.gmra.mxu0 %v1346
    %v1427 = vpop.f32.mrf.mxu0
    %v1428 = vadd.f32 0.0, %v1427
    %v1429 = vpop.f32.mrf.mxu0
    %v1430 = vadd.f32 0.0, %v1429
    %1431 = vmatmul.bf16.gmra.mxu0 %v1347
    %v1432 = vpop.f32.mrf.mxu0
    %v1433 = vadd.f32 0.0, %v1432
    %v1434 = vpop.f32.mrf.mxu0
    %v1435 = vadd.f32 0.0, %v1434
    %1436 = vmatmul.bf16.gmra.mxu0 %v1348
    %v1437 = vpop.f32.mrf.mxu0
    %v1438 = vadd.f32 0.0, %v1437
    %v1439 = vpop.f32.mrf.mxu0
    %v1440 = vadd.f32 0.0, %v1439
    %1441 = vmatmul.bf16.gmra.mxu0 %v1349
    %v1442 = vpop.f32.mrf.mxu0
    %v1443 = vadd.f32 0.0, %v1442
    %v1444 = vpop.f32.mrf.mxu0
    %v1445 = vadd.f32 0.0, %v1444
    %1446 = vmatmul.bf16.gmra.mxu0 %v1350
    %v1447 = vpop.f32.mrf.mxu0
    %v1448 = vadd.f32 0.0, %v1447
    %v1449 = vpop.f32.mrf.mxu0
    %v1450 = vadd.f32 0.0, %v1449
    %1451 = vmatmul.bf16.gmra.mxu0 %v1351
    %v1452 = vpop.f32.mrf.mxu0
    %v1453 = vadd.f32 0.0, %v1452
    %v1454 = vpop.f32.mrf.mxu0
    %v1455 = vadd.f32 0.0, %v1454
    %1456 = vdwg.mxu0
    %v1457 = vadd.f32 %v1040, %v1418
    %v1458 = vadd.f32 %v1041, %v1420
    %v1459 = vadd.f32 %v1042, %v1423
    %v1460 = vadd.f32 %v1043, %v1425
    %v1461 = vadd.f32 %v1044, %v1428
    %v1462 = vadd.f32 %v1045, %v1430
    %v1463 = vadd.f32 %v1046, %v1433
    %v1464 = vadd.f32 %v1047, %v1435
    %v1465 = vadd.f32 %v1048, %v1438
    %v1466 = vadd.f32 %v1049, %v1440
    %v1467 = vadd.f32 %v1050, %v1443
    %v1468 = vadd.f32 %v1051, %v1445
    %v1469 = vadd.f32 %v1052, %v1448
    %v1470 = vadd.f32 %v1053, %v1450
    %v1471 = vadd.f32 %v1054, %v1453
    %v1472 = vadd.f32 %v1055, %v1455
    %v1473 = vld [vmem:[%s862] sm:$0xe]
    %v1474 = vld [vmem:[%s862 + $0x8] sm:$0xe]
    %v1475 = vld [vmem:[%s862 + $0x10] sm:$0xe]
    %v1476 = vld [vmem:[%s862 + $0x18] sm:$0xe]
    %v1477 = vld [vmem:[%s862 + $0x20] sm:$0xe]
    %v1478 = vld [vmem:[%s862 + $0x28] sm:$0xe]
    %v1479 = vld [vmem:[%s862 + $0x30] sm:$0xe]
    %v1480 = vld [vmem:[%s862 + $0x38] sm:$0xe]
    %v1481 = vld [vmem:[%s862 + $0x50] sm:$0xe]
    %v1482 = vld [vmem:[%s862 + $0x58] sm:$0xe]
    %v1483 = vld [vmem:[%s862 + $0x60] sm:$0xe]
    %v1484 = vld [vmem:[%s862 + $0x68] sm:$0xe]
    %v1485 = vld [vmem:[%s862 + $0x70] sm:$0xe]
    %v1486 = vld [vmem:[%s862 + $0x78] sm:$0xe]
    %v1487 = vld [vmem:[%s862 + $0x80] sm:$0xe]
    %v1488 = vld [vmem:[%s862 + $0x88] sm:$0xe]
    %v1521 = vrot.slane %v1473, 5
    %v1522 = vrot.slane %v1521, 4
    %v1523 = vrot.slane %v1057, 5
    %v1524 = vsel %vm636, %v1522, %v1523
    %v1525 = vrot.slane %v1474, 5
    %v1526 = vrot.slane %v1525, 4
    %v1527 = vrot.slane %v1059, 5
    %v1528 = vsel %vm636, %v1526, %v1527
    %v1529 = vrot.slane %v1475, 5
    %v1530 = vrot.slane %v1529, 4
    %v1531 = vrot.slane %v1061, 5
    %v1532 = vsel %vm636, %v1530, %v1531
    %v1533 = vrot.slane %v1476, 5
    %v1534 = vrot.slane %v1533, 4
    %v1535 = vrot.slane %v1063, 5
    %v1536 = vsel %vm636, %v1534, %v1535
    %v1537 = vrot.slane %v1477, 5
    %v1538 = vrot.slane %v1537, 4
    %v1539 = vrot.slane %v1065, 5
    %v1540 = vsel %vm636, %v1538, %v1539
    %v1541 = vrot.slane %v1478, 5
    %v1542 = vrot.slane %v1541, 4
    %v1543 = vrot.slane %v1067, 5
    %v1544 = vsel %vm636, %v1542, %v1543
    %v1545 = vrot.slane %v1479, 5
    %v1546 = vrot.slane %v1545, 4
    %v1547 = vrot.slane %v1069, 5
    %v1548 = vsel %vm636, %v1546, %v1547
    %v1549 = vrot.slane %v1480, 5
    %v1550 = vrot.slane %v1549, 4
    %v1551 = vrot.slane %v1071, 5
    %v1552 = vsel %vm636, %v1550, %v1551
    %v1553 = vrot.slane %v1481, 5
    %v1554 = vrot.slane %v1553, 4
    %v1555 = vrot.slane %v1073, 5
    %v1556 = vsel %vm636, %v1554, %v1555
    %v1557 = vrot.slane %v1482, 5
    %v1558 = vrot.slane %v1557, 4
    %v1559 = vrot.slane %v1075, 5
    %v1560 = vsel %vm636, %v1558, %v1559
    %v1561 = vrot.slane %v1483, 5
    %v1562 = vrot.slane %v1561, 4
    %v1563 = vrot.slane %v1077, 5
    %v1564 = vsel %vm636, %v1562, %v1563
    %v1565 = vrot.slane %v1484, 5
    %v1566 = vrot.slane %v1565, 4
    %v1567 = vrot.slane %v1079, 5
    %v1568 = vsel %vm636, %v1566, %v1567
    %v1569 = vrot.slane %v1485, 5
    %v1570 = vrot.slane %v1569, 4
    %v1571 = vrot.slane %v1081, 5
    %v1572 = vsel %vm636, %v1570, %v1571
    %v1573 = vrot.slane %v1486, 5
    %v1574 = vrot.slane %v1573, 4
    %v1575 = vrot.slane %v1083, 5
    %v1576 = vsel %vm636, %v1574, %v1575
    %v1577 = vrot.slane %v1487, 5
    %v1578 = vrot.slane %v1577, 4
    %v1579 = vrot.slane %v1085, 5
    %v1580 = vsel %vm636, %v1578, %v1579
    %v1581 = vrot.slane %v1488, 5
    %v1582 = vrot.slane %v1581, 4
    %v1583 = vrot.slane %v1087, 5
    %v1584 = vsel %vm636, %v1582, %v1583
    %v1585 = vld [vmem:[%s1 + $0x140] sm:$0xf]
    %v1586 = vld [vmem:[%s1 + $0x144] sm:$0xf]
    %v1587 = vld [vmem:[%s1 + $0x148] sm:$0xf]
    %v1588 = vld [vmem:[%s1 + $0x14c] sm:$0xf]
    %v1589 = vld [vmem:[%s1 + $0x150] sm:$0xf]
    %v1590 = vld [vmem:[%s1 + $0x154] sm:$0xf]
    %v1591 = vld [vmem:[%s1 + $0x158] sm:$0xf]
    %v1592 = vld [vmem:[%s1 + $0x15c] sm:$0xf]
    %v1593 = vld [vmem:[%s1 + $0x160] sm:$0xf]
    %v1594 = vld [vmem:[%s1 + $0x164] sm:$0xf]
    %v1595 = vld [vmem:[%s1 + $0x168] sm:$0xf]
    %v1596 = vld [vmem:[%s1 + $0x16c] sm:$0xf]
    %v1597 = vld [vmem:[%s1 + $0x170] sm:$0xf]
    %v1598 = vld [vmem:[%s1 + $0x174] sm:$0xf]
    %v1599 = vld [vmem:[%s1 + $0x178] sm:$0xf]
    %v1600 = vld [vmem:[%s1 + $0x17c] sm:$0xf]
    %v1601 = vunpack.c.l.b16 %v1524
    %v1602 = vunpack.c.l.b16 %v1528
    %v1603 = vunpack.c.l.b16 %v1532
    %v1604 = vunpack.c.l.b16 %v1536
    %v1605 = vunpack.c.l.b16 %v1540
    %v1606 = vunpack.c.l.b16 %v1544
    %v1607 = vunpack.c.l.b16 %v1548
    %v1608 = vunpack.c.l.b16 %v1552
    %v1609 = vunpack.c.l.b16 %v1556
    %v1610 = vunpack.c.l.b16 %v1560
    %v1611 = vunpack.c.l.b16 %v1564
    %v1612 = vunpack.c.l.b16 %v1568
    %v1613 = vunpack.c.l.b16 %v1572
    %v1614 = vunpack.c.l.b16 %v1576
    %v1615 = vunpack.c.l.b16 %v1580
    %v1616 = vunpack.c.l.b16 %v1584
    %v1617 = vpack.c.b16 %v1602, %v1601
    %v1618 = vpack.c.b16 %v1604, %v1603
    %v1619 = vpack.c.b16 %v1606, %v1605
    %v1620 = vpack.c.b16 %v1608, %v1607
    %v1621 = vpack.c.b16 %v1610, %v1609
    %v1622 = vpack.c.b16 %v1612, %v1611
    %v1623 = vpack.c.b16 %v1614, %v1613
    %v1624 = vpack.c.b16 %v1616, %v1615
    %v1649 = vunpack.c.l.b16 %v1585
    %v1650 = vunpack.c.l.b16 %v1586
    %v1651 = vunpack.c.l.b16 %v1587
    %v1652 = vunpack.c.l.b16 %v1588
    %v1653 = vunpack.c.l.b16 %v1589
    %v1654 = vunpack.c.l.b16 %v1590
    %v1655 = vunpack.c.l.b16 %v1591
    %v1656 = vunpack.c.l.b16 %v1592
    %v1657 = vunpack.c.l.b16 %v1593
    %v1658 = vunpack.c.l.b16 %v1594
    %v1659 = vunpack.c.l.b16 %v1595
    %v1660 = vunpack.c.l.b16 %v1596
    %v1661 = vunpack.c.l.b16 %v1597
    %v1662 = vunpack.c.l.b16 %v1598
    %v1663 = vunpack.c.l.b16 %v1599
    %v1664 = vunpack.c.l.b16 %v1600
    %v1665 = vpack.c.b16 %v1650, %v1649
    %v1666 = vpack.c.b16 %v1652, %v1651
    %v1667 = vpack.c.b16 %v1654, %v1653
    %v1668 = vpack.c.b16 %v1656, %v1655
    %v1669 = vpack.c.b16 %v1658, %v1657
    %v1670 = vpack.c.b16 %v1660, %v1659
    %v1671 = vpack.c.b16 %v1662, %v1661
    %v1672 = vpack.c.b16 %v1664, %v1663
    %1681 = vmatpush.bf16.msra.mxu0 %v1672
    %1682 = vmatpush.bf16.msra.mxu0 %v1671
    %1683 = vmatpush.bf16.msra.mxu0 %v1670
    %1684 = vmatpush.bf16.msra.mxu0 %v1669
    %1685 = vmatpush.bf16.msra.mxu0 %v1668
    %1686 = vmatpush.bf16.msra.mxu0 %v1667
    %1687 = vmatpush.bf16.msra.mxu0 %v1666
    %1688 = vmatpush.bf16.msra.mxu0 %v1665
    %1689 = vmatmul.bf16.gmra.mxu0 %v1617
    %v1690 = vpop.f32.mrf.mxu0
    %v1691 = vadd.f32 0.0, %v1690
    %v1692 = vpop.f32.mrf.mxu0
    %v1693 = vadd.f32 0.0, %v1692
    %1694 = vmatmul.bf16.gmra.mxu0 %v1618
    %v1695 = vpop.f32.mrf.mxu0
    %v1696 = vadd.f32 0.0, %v1695
    %v1697 = vpop.f32.mrf.mxu0
    %v1698 = vadd.f32 0.0, %v1697
    %1699 = vmatmul.bf16.gmra.mxu0 %v1619
    %v1700 = vpop.f32.mrf.mxu0
    %v1701 = vadd.f32 0.0, %v1700
    %v1702 = vpop.f32.mrf.mxu0
    %v1703 = vadd.f32 0.0, %v1702
    %1704 = vmatmul.bf16.gmra.mxu0 %v1620
    %v1705 = vpop.f32.mrf.mxu0
    %v1706 = vadd.f32 0.0, %v1705
    %v1707 = vpop.f32.mrf.mxu0
    %v1708 = vadd.f32 0.0, %v1707
    %1709 = vmatmul.bf16.gmra.mxu0 %v1621
    %v1710 = vpop.f32.mrf.mxu0
    %v1711 = vadd.f32 0.0, %v1710
    %v1712 = vpop.f32.mrf.mxu0
    %v1713 = vadd.f32 0.0, %v1712
    %1714 = vmatmul.bf16.gmra.mxu0 %v1622
    %v1715 = vpop.f32.mrf.mxu0
    %v1716 = vadd.f32 0.0, %v1715
    %v1717 = vpop.f32.mrf.mxu0
    %v1718 = vadd.f32 0.0, %v1717
    %1719 = vmatmul.bf16.gmra.mxu0 %v1623
    %v1720 = vpop.f32.mrf.mxu0
    %v1721 = vadd.f32 0.0, %v1720
    %v1722 = vpop.f32.mrf.mxu0
    %v1723 = vadd.f32 0.0, %v1722
    %1724 = vmatmul.bf16.gmra.mxu0 %v1624
    %v1725 = vpop.f32.mrf.mxu0
    %v1726 = vadd.f32 0.0, %v1725
    %v1727 = vpop.f32.mrf.mxu0
    %v1728 = vadd.f32 0.0, %v1727
    %1729 = vdwg.mxu0
    %v1730 = vadd.f32 %v1457, %v1691
    %v1731 = vadd.f32 %v1458, %v1693
    %v1732 = vadd.f32 %v1459, %v1696
    %v1733 = vadd.f32 %v1460, %v1698
    %v1734 = vadd.f32 %v1461, %v1701
    %v1735 = vadd.f32 %v1462, %v1703
    %v1736 = vadd.f32 %v1463, %v1706
    %v1737 = vadd.f32 %v1464, %v1708
    %v1738 = vadd.f32 %v1465, %v1711
    %v1739 = vadd.f32 %v1466, %v1713
    %v1740 = vadd.f32 %v1467, %v1716
    %v1741 = vadd.f32 %v1468, %v1718
    %v1742 = vadd.f32 %v1469, %v1721
    %v1743 = vadd.f32 %v1470, %v1723
    %v1744 = vadd.f32 %v1471, %v1726
    %v1745 = vadd.f32 %v1472, %v1728
    %s1746 = scalar_lea.vmem %s0, 16
    %v1747 = vld [vmem:[%s1746] sm:$0xf]
    %v1748 = vld [vmem:[%s1746 + $0x8] sm:$0xf]
    %v1749 = vld [vmem:[%s1746 + $0x10] sm:$0xf]
    %v1750 = vld [vmem:[%s1746 + $0x18] sm:$0xf]
    %v1751 = vld [vmem:[%s1746 + $0x20] sm:$0xf]
    %v1752 = vld [vmem:[%s1746 + $0x28] sm:$0xf]
    %v1753 = vld [vmem:[%s1746 + $0x30] sm:$0xf]
    %v1754 = vld [vmem:[%s1746 + $0x38] sm:$0xf]
    %v1755 = vld [vmem:[%s1746 + $0x50] sm:$0xf]
    %v1756 = vld [vmem:[%s1746 + $0x58] sm:$0xf]
    %v1757 = vld [vmem:[%s1746 + $0x60] sm:$0xf]
    %v1758 = vld [vmem:[%s1746 + $0x68] sm:$0xf]
    %v1759 = vld [vmem:[%s1746 + $0x70] sm:$0xf]
    %v1760 = vld [vmem:[%s1746 + $0x78] sm:$0xf]
    %v1761 = vld [vmem:[%s1746 + $0x80] sm:$0xf]
    %v1762 = vld [vmem:[%s1746 + $0x88] sm:$0xf]
    %v1763 = vld [vmem:[%s1 + $0x180] sm:$0xf]
    %v1764 = vld [vmem:[%s1 + $0x184] sm:$0xf]
    %v1765 = vld [vmem:[%s1 + $0x188] sm:$0xf]
    %v1766 = vld [vmem:[%s1 + $0x18c] sm:$0xf]
    %v1767 = vld [vmem:[%s1 + $0x190] sm:$0xf]
    %v1768 = vld [vmem:[%s1 + $0x194] sm:$0xf]
    %v1769 = vld [vmem:[%s1 + $0x198] sm:$0xf]
    %v1770 = vld [vmem:[%s1 + $0x19c] sm:$0xf]
    %v1771 = vld [vmem:[%s1 + $0x1a0] sm:$0xf]
    %v1772 = vld [vmem:[%s1 + $0x1a4] sm:$0xf]
    %v1773 = vld [vmem:[%s1 + $0x1a8] sm:$0xf]
    %v1774 = vld [vmem:[%s1 + $0x1ac] sm:$0xf]
    %v1775 = vld [vmem:[%s1 + $0x1b0] sm:$0xf]
    %v1776 = vld [vmem:[%s1 + $0x1b4] sm:$0xf]
    %v1777 = vld [vmem:[%s1 + $0x1b8] sm:$0xf]
    %v1778 = vld [vmem:[%s1 + $0x1bc] sm:$0xf]
    %v1795 = vunpack.c.l.b16 %v1747
    %v1796 = vunpack.c.l.b16 %v1748
    %v1797 = vunpack.c.l.b16 %v1749
    %v1798 = vunpack.c.l.b16 %v1750
    %v1799 = vunpack.c.l.b16 %v1751
    %v1800 = vunpack.c.l.b16 %v1752
    %v1801 = vunpack.c.l.b16 %v1753
    %v1802 = vunpack.c.l.b16 %v1754
    %v1803 = vunpack.c.l.b16 %v1755
    %v1804 = vunpack.c.l.b16 %v1756
    %v1805 = vunpack.c.l.b16 %v1757
    %v1806 = vunpack.c.l.b16 %v1758
    %v1807 = vunpack.c.l.b16 %v1759
    %v1808 = vunpack.c.l.b16 %v1760
    %v1809 = vunpack.c.l.b16 %v1761
    %v1810 = vunpack.c.l.b16 %v1762
    %v1811 = vpack.c.b16 %v1796, %v1795
    %v1812 = vpack.c.b16 %v1798, %v1797
    %v1813 = vpack.c.b16 %v1800, %v1799
    %v1814 = vpack.c.b16 %v1802, %v1801
    %v1815 = vpack.c.b16 %v1804, %v1803
    %v1816 = vpack.c.b16 %v1806, %v1805
    %v1817 = vpack.c.b16 %v1808, %v1807
    %v1818 = vpack.c.b16 %v1810, %v1809
    %v1843 = vunpack.c.l.b16 %v1763
    %v1844 = vunpack.c.l.b16 %v1764
    %v1845 = vunpack.c.l.b16 %v1765
    %v1846 = vunpack.c.l.b16 %v1766
    %v1847 = vunpack.c.l.b16 %v1767
    %v1848 = vunpack.c.l.b16 %v1768
    %v1849 = vunpack.c.l.b16 %v1769
    %v1850 = vunpack.c.l.b16 %v1770
    %v1851 = vunpack.c.l.b16 %v1771
    %v1852 = vunpack.c.l.b16 %v1772
    %v1853 = vunpack.c.l.b16 %v1773
    %v1854 = vunpack.c.l.b16 %v1774
    %v1855 = vunpack.c.l.b16 %v1775
    %v1856 = vunpack.c.l.b16 %v1776
    %v1857 = vunpack.c.l.b16 %v1777
    %v1858 = vunpack.c.l.b16 %v1778
    %v1859 = vpack.c.b16 %v1844, %v1843
    %v1860 = vpack.c.b16 %v1846, %v1845
    %v1861 = vpack.c.b16 %v1848, %v1847
    %v1862 = vpack.c.b16 %v1850, %v1849
    %v1863 = vpack.c.b16 %v1852, %v1851
    %v1864 = vpack.c.b16 %v1854, %v1853
    %v1865 = vpack.c.b16 %v1856, %v1855
    %v1866 = vpack.c.b16 %v1858, %v1857
    %1875 = vmatpush.bf16.msra.mxu0 %v1866
    %1876 = vmatpush.bf16.msra.mxu0 %v1865
    %1877 = vmatpush.bf16.msra.mxu0 %v1864
    %1878 = vmatpush.bf16.msra.mxu0 %v1863
    %1879 = vmatpush.bf16.msra.mxu0 %v1862
    %1880 = vmatpush.bf16.msra.mxu0 %v1861
    %1881 = vmatpush.bf16.msra.mxu0 %v1860
    %1882 = vmatpush.bf16.msra.mxu0 %v1859
    %1883 = vmatmul.bf16.gmra.mxu0 %v1811
    %v1884 = vpop.f32.mrf.mxu0
    %v1885 = vadd.f32 0.0, %v1884
    %v1886 = vpop.f32.mrf.mxu0
    %v1887 = vadd.f32 0.0, %v1886
    %1888 = vmatmul.bf16.gmra.mxu0 %v1812
    %v1889 = vpop.f32.mrf.mxu0
    %v1890 = vadd.f32 0.0, %v1889
    %v1891 = vpop.f32.mrf.mxu0
    %v1892 = vadd.f32 0.0, %v1891
    %1893 = vmatmul.bf16.gmra.mxu0 %v1813
    %v1894 = vpop.f32.mrf.mxu0
    %v1895 = vadd.f32 0.0, %v1894
    %v1896 = vpop.f32.mrf.mxu0
    %v1897 = vadd.f32 0.0, %v1896
    %1898 = vmatmul.bf16.gmra.mxu0 %v1814
    %v1899 = vpop.f32.mrf.mxu0
    %v1900 = vadd.f32 0.0, %v1899
    %v1901 = vpop.f32.mrf.mxu0
    %v1902 = vadd.f32 0.0, %v1901
    %1903 = vmatmul.bf16.gmra.mxu0 %v1815
    %v1904 = vpop.f32.mrf.mxu0
    %v1905 = vadd.f32 0.0, %v1904
    %v1906 = vpop.f32.mrf.mxu0
    %v1907 = vadd.f32 0.0, %v1906
    %1908 = vmatmul.bf16.gmra.mxu0 %v1816
    %v1909 = vpop.f32.mrf.mxu0
    %v1910 = vadd.f32 0.0, %v1909
    %v1911 = vpop.f32.mrf.mxu0
    %v1912 = vadd.f32 0.0, %v1911
    %1913 = vmatmul.bf16.gmra.mxu0 %v1817
    %v1914 = vpop.f32.mrf.mxu0
    %v1915 = vadd.f32 0.0, %v1914
    %v1916 = vpop.f32.mrf.mxu0
    %v1917 = vadd.f32 0.0, %v1916
    %1918 = vmatmul.bf16.gmra.mxu0 %v1818
    %v1919 = vpop.f32.mrf.mxu0
    %v1920 = vadd.f32 0.0, %v1919
    %v1921 = vpop.f32.mrf.mxu0
    %v1922 = vadd.f32 0.0, %v1921
    %1923 = vdwg.mxu0
    %v1924 = vadd.f32 %v1730, %v1885
    %v1925 = vadd.f32 %v1731, %v1887
    %v1926 = vadd.f32 %v1732, %v1890
    %v1927 = vadd.f32 %v1733, %v1892
    %v1928 = vadd.f32 %v1734, %v1895
    %v1929 = vadd.f32 %v1735, %v1897
    %v1930 = vadd.f32 %v1736, %v1900
    %v1931 = vadd.f32 %v1737, %v1902
    %v1932 = vadd.f32 %v1738, %v1905
    %v1933 = vadd.f32 %v1739, %v1907
    %v1934 = vadd.f32 %v1740, %v1910
    %v1935 = vadd.f32 %v1741, %v1912
    %v1936 = vadd.f32 %v1742, %v1915
    %v1937 = vadd.f32 %v1743, %v1917
    %v1938 = vadd.f32 %v1744, %v1920
    %v1939 = vadd.f32 %v1745, %v1922
    %v1940 = vld [vmem:[%s1746] sm:$0xf]
    %v1941 = vld [vmem:[%s1746 + $0x4] sm:$0x1]
    %v1942 = vld [vmem:[%s1746 + $0x8] sm:$0xf]
    %v1943 = vld [vmem:[%s1746 + $0xc] sm:$0x1]
    %v1944 = vld [vmem:[%s1746 + $0x10] sm:$0xf]
    %v1945 = vld [vmem:[%s1746 + $0x14] sm:$0x1]
    %v1946 = vld [vmem:[%s1746 + $0x18] sm:$0xf]
    %v1947 = vld [vmem:[%s1746 + $0x1c] sm:$0x1]
    %v1948 = vld [vmem:[%s1746 + $0x20] sm:$0xf]
    %v1949 = vld [vmem:[%s1746 + $0x24] sm:$0x1]
    %v1950 = vld [vmem:[%s1746 + $0x28] sm:$0xf]
    %v1951 = vld [vmem:[%s1746 + $0x2c] sm:$0x1]
    %v1952 = vld [vmem:[%s1746 + $0x30] sm:$0xf]
    %v1953 = vld [vmem:[%s1746 + $0x34] sm:$0x1]
    %v1954 = vld [vmem:[%s1746 + $0x38] sm:$0xf]
    %v1955 = vld [vmem:[%s1746 + $0x3c] sm:$0x1]
    %v1956 = vld [vmem:[%s1746 + $0x50] sm:$0xf]
    %v1957 = vld [vmem:[%s1746 + $0x54] sm:$0x1]
    %v1958 = vld [vmem:[%s1746 + $0x58] sm:$0xf]
    %v1959 = vld [vmem:[%s1746 + $0x5c] sm:$0x1]
    %v1960 = vld [vmem:[%s1746 + $0x60] sm:$0xf]
    %v1961 = vld [vmem:[%s1746 + $0x64] sm:$0x1]
    %v1962 = vld [vmem:[%s1746 + $0x68] sm:$0xf]
    %v1963 = vld [vmem:[%s1746 + $0x6c] sm:$0x1]
    %v1964 = vld [vmem:[%s1746 + $0x70] sm:$0xf]
    %v1965 = vld [vmem:[%s1746 + $0x74] sm:$0x1]
    %v1966 = vld [vmem:[%s1746 + $0x78] sm:$0xf]
    %v1967 = vld [vmem:[%s1746 + $0x7c] sm:$0x1]
    %v1968 = vld [vmem:[%s1746 + $0x80] sm:$0xf]
    %v1969 = vld [vmem:[%s1746 + $0x84] sm:$0x1]
    %v1970 = vld [vmem:[%s1746 + $0x88] sm:$0xf]
    %v1971 = vld [vmem:[%s1746 + $0x8c] sm:$0x1]
    %v1973 = vshrl.u32 %v1940, 16
    %v1975 = vrot.slane %v1973, 4
    %v1976 = vshll.u32 %v1940, 16
    %v1978 = vrot.slane %v1976, 5
    %v1979 = vor.u32 %v1975, %v1978
    %v1980 = vrot.slane %v1979, 4
    %v1982 = vshll.u32 %v1941, 16
    %v1984 = vrot.slane %v1982, 5
    %v1985 = vsel %vm71, %v1980, %v1984
    %v1987 = vshrl.u32 %v1942, 16
    %v1989 = vrot.slane %v1987, 4
    %v1990 = vshll.u32 %v1942, 16
    %v1992 = vrot.slane %v1990, 5
    %v1993 = vor.u32 %v1989, %v1992
    %v1994 = vrot.slane %v1993, 4
    %v1996 = vshll.u32 %v1943, 16
    %v1998 = vrot.slane %v1996, 5
    %v1999 = vsel %vm71, %v1994, %v1998
    %v2001 = vshrl.u32 %v1944, 16
    %v2003 = vrot.slane %v2001, 4
    %v2004 = vshll.u32 %v1944, 16
    %v2006 = vrot.slane %v2004, 5
    %v2007 = vor.u32 %v2003, %v2006
    %v2008 = vrot.slane %v2007, 4
    %v2010 = vshll.u32 %v1945, 16
    %v2012 = vrot.slane %v2010, 5
    %v2013 = vsel %vm71, %v2008, %v2012
    %v2015 = vshrl.u32 %v1946, 16
    %v2017 = vrot.slane %v2015, 4
    %v2018 = vshll.u32 %v1946, 16
    %v2020 = vrot.slane %v2018, 5
    %v2021 = vor.u32 %v2017, %v2020
    %v2022 = vrot.slane %v2021, 4
    %v2024 = vshll.u32 %v1947, 16
    %v2026 = vrot.slane %v2024, 5
    %v2027 = vsel %vm71, %v2022, %v2026
    %v2029 = vshrl.u32 %v1948, 16
    %v2031 = vrot.slane %v2029, 4
    %v2032 = vshll.u32 %v1948, 16
    %v2034 = vrot.slane %v2032, 5
    %v2035 = vor.u32 %v2031, %v2034
    %v2036 = vrot.slane %v2035, 4
    %v2038 = vshll.u32 %v1949, 16
    %v2040 = vrot.slane %v2038, 5
    %v2041 = vsel %vm71, %v2036, %v2040
    %v2043 = vshrl.u32 %v1950, 16
    %v2045 = vrot.slane %v2043, 4
    %v2046 = vshll.u32 %v1950, 16
    %v2048 = vrot.slane %v2046, 5
    %v2049 = vor.u32 %v2045, %v2048
    %v2050 = vrot.slane %v2049, 4
    %v2052 = vshll.u32 %v1951, 16
    %v2054 = vrot.slane %v2052, 5
    %v2055 = vsel %vm71, %v2050, %v2054
    %v2057 = vshrl.u32 %v1952, 16
    %v2059 = vrot.slane %v2057, 4
    %v2060 = vshll.u32 %v1952, 16
    %v2062 = vrot.slane %v2060, 5
    %v2063 = vor.u32 %v2059, %v2062
    %v2064 = vrot.slane %v2063, 4
    %v2066 = vshll.u32 %v1953, 16
    %v2068 = vrot.slane %v2066, 5
    %v2069 = vsel %vm71, %v2064, %v2068
    %v2071 = vshrl.u32 %v1954, 16
    %v2073 = vrot.slane %v2071, 4
    %v2074 = vshll.u32 %v1954, 16
    %v2076 = vrot.slane %v2074, 5
    %v2077 = vor.u32 %v2073, %v2076
    %v2078 = vrot.slane %v2077, 4
    %v2080 = vshll.u32 %v1955, 16
    %v2082 = vrot.slane %v2080, 5
    %v2083 = vsel %vm71, %v2078, %v2082
    %v2085 = vshrl.u32 %v1956, 16
    %v2087 = vrot.slane %v2085, 4
    %v2088 = vshll.u32 %v1956, 16
    %v2090 = vrot.slane %v2088, 5
    %v2091 = vor.u32 %v2087, %v2090
    %v2092 = vrot.slane %v2091, 4
    %v2094 = vshll.u32 %v1957, 16
    %v2096 = vrot.slane %v2094, 5
    %v2097 = vsel %vm71, %v2092, %v2096
    %v2099 = vshrl.u32 %v1958, 16
    %v2101 = vrot.slane %v2099, 4
    %v2102 = vshll.u32 %v1958, 16
    %v2104 = vrot.slane %v2102, 5
    %v2105 = vor.u32 %v2101, %v2104
    %v2106 = vrot.slane %v2105, 4
    %v2108 = vshll.u32 %v1959, 16
    %v2110 = vrot.slane %v2108, 5
    %v2111 = vsel %vm71, %v2106, %v2110
    %v2113 = vshrl.u32 %v1960, 16
    %v2115 = vrot.slane %v2113, 4
    %v2116 = vshll.u32 %v1960, 16
    %v2118 = vrot.slane %v2116, 5
    %v2119 = vor.u32 %v2115, %v2118
    %v2120 = vrot.slane %v2119, 4
    %v2122 = vshll.u32 %v1961, 16
    %v2124 = vrot.slane %v2122, 5
    %v2125 = vsel %vm71, %v2120, %v2124
    %v2127 = vshrl.u32 %v1962, 16
    %v2129 = vrot.slane %v2127, 4
    %v2130 = vshll.u32 %v1962, 16
    %v2132 = vrot.slane %v2130, 5
    %v2133 = vor.u32 %v2129, %v2132
    %v2134 = vrot.slane %v2133, 4
    %v2136 = vshll.u32 %v1963, 16
    %v2138 = vrot.slane %v2136, 5
    %v2139 = vsel %vm71, %v2134, %v2138
    %v2141 = vshrl.u32 %v1964, 16
    %v2143 = vrot.slane %v2141, 4
    %v2144 = vshll.u32 %v1964, 16
    %v2146 = vrot.slane %v2144, 5
    %v2147 = vor.u32 %v2143, %v2146
    %v2148 = vrot.slane %v2147, 4
    %v2150 = vshll.u32 %v1965, 16
    %v2152 = vrot.slane %v2150, 5
    %v2153 = vsel %vm71, %v2148, %v2152
    %v2155 = vshrl.u32 %v1966, 16
    %v2157 = vrot.slane %v2155, 4
    %v2158 = vshll.u32 %v1966, 16
    %v2160 = vrot.slane %v2158, 5
    %v2161 = vor.u32 %v2157, %v2160
    %v2162 = vrot.slane %v2161, 4
    %v2164 = vshll.u32 %v1967, 16
    %v2166 = vrot.slane %v2164, 5
    %v2167 = vsel %vm71, %v2162, %v2166
    %v2169 = vshrl.u32 %v1968, 16
    %v2171 = vrot.slane %v2169, 4
    %v2172 = vshll.u32 %v1968, 16
    %v2174 = vrot.slane %v2172, 5
    %v2175 = vor.u32 %v2171, %v2174
    %v2176 = vrot.slane %v2175, 4
    %v2178 = vshll.u32 %v1969, 16
    %v2180 = vrot.slane %v2178, 5
    %v2181 = vsel %vm71, %v2176, %v2180
    %v2183 = vshrl.u32 %v1970, 16
    %v2185 = vrot.slane %v2183, 4
    %v2186 = vshll.u32 %v1970, 16
    %v2188 = vrot.slane %v2186, 5
    %v2189 = vor.u32 %v2185, %v2188
    %v2190 = vrot.slane %v2189, 4
    %v2192 = vshll.u32 %v1971, 16
    %v2194 = vrot.slane %v2192, 5
    %v2195 = vsel %vm71, %v2190, %v2194
    %v2196 = vld [vmem:[%s1 + $0x1c0] sm:$0xf]
    %v2197 = vld [vmem:[%s1 + $0x1c4] sm:$0xf]
    %v2198 = vld [vmem:[%s1 + $0x1c8] sm:$0xf]
    %v2199 = vld [vmem:[%s1 + $0x1cc] sm:$0xf]
    %v2200 = vld [vmem:[%s1 + $0x1d0] sm:$0xf]
    %v2201 = vld [vmem:[%s1 + $0x1d4] sm:$0xf]
    %v2202 = vld [vmem:[%s1 + $0x1d8] sm:$0xf]
    %v2203 = vld [vmem:[%s1 + $0x1dc] sm:$0xf]
    %v2204 = vld [vmem:[%s1 + $0x1e0] sm:$0xf]
    %v2205 = vld [vmem:[%s1 + $0x1e4] sm:$0xf]
    %v2206 = vld [vmem:[%s1 + $0x1e8] sm:$0xf]
    %v2207 = vld [vmem:[%s1 + $0x1ec] sm:$0xf]
    %v2208 = vld [vmem:[%s1 + $0x1f0] sm:$0xf]
    %v2209 = vld [vmem:[%s1 + $0x1f4] sm:$0xf]
    %v2210 = vld [vmem:[%s1 + $0x1f8] sm:$0xf]
    %v2211 = vld [vmem:[%s1 + $0x1fc] sm:$0xf]
    %v2212 = vunpack.c.l.b16 %v1985
    %v2213 = vunpack.c.l.b16 %v1999
    %v2214 = vunpack.c.l.b16 %v2013
    %v2215 = vunpack.c.l.b16 %v2027
    %v2216 = vunpack.c.l.b16 %v2041
    %v2217 = vunpack.c.l.b16 %v2055
    %v2218 = vunpack.c.l.b16 %v2069
    %v2219 = vunpack.c.l.b16 %v2083
    %v2220 = vunpack.c.l.b16 %v2097
    %v2221 = vunpack.c.l.b16 %v2111
    %v2222 = vunpack.c.l.b16 %v2125
    %v2223 = vunpack.c.l.b16 %v2139
    %v2224 = vunpack.c.l.b16 %v2153
    %v2225 = vunpack.c.l.b16 %v2167
    %v2226 = vunpack.c.l.b16 %v2181
    %v2227 = vunpack.c.l.b16 %v2195
    %v2228 = vpack.c.b16 %v2213, %v2212
    %v2229 = vpack.c.b16 %v2215, %v2214
    %v2230 = vpack.c.b16 %v2217, %v2216
    %v2231 = vpack.c.b16 %v2219, %v2218
    %v2232 = vpack.c.b16 %v2221, %v2220
    %v2233 = vpack.c.b16 %v2223, %v2222
    %v2234 = vpack.c.b16 %v2225, %v2224
    %v2235 = vpack.c.b16 %v2227, %v2226
    %v2260 = vunpack.c.l.b16 %v2196
    %v2261 = vunpack.c.l.b16 %v2197
    %v2262 = vunpack.c.l.b16 %v2198
    %v2263 = vunpack.c.l.b16 %v2199
    %v2264 = vunpack.c.l.b16 %v2200
    %v2265 = vunpack.c.l.b16 %v2201
    %v2266 = vunpack.c.l.b16 %v2202
    %v2267 = vunpack.c.l.b16 %v2203
    %v2268 = vunpack.c.l.b16 %v2204
    %v2269 = vunpack.c.l.b16 %v2205
    %v2270 = vunpack.c.l.b16 %v2206
    %v2271 = vunpack.c.l.b16 %v2207
    %v2272 = vunpack.c.l.b16 %v2208
    %v2273 = vunpack.c.l.b16 %v2209
    %v2274 = vunpack.c.l.b16 %v2210
    %v2275 = vunpack.c.l.b16 %v2211
    %v2276 = vpack.c.b16 %v2261, %v2260
    %v2277 = vpack.c.b16 %v2263, %v2262
    %v2278 = vpack.c.b16 %v2265, %v2264
    %v2279 = vpack.c.b16 %v2267, %v2266
    %v2280 = vpack.c.b16 %v2269, %v2268
    %v2281 = vpack.c.b16 %v2271, %v2270
    %v2282 = vpack.c.b16 %v2273, %v2272
    %v2283 = vpack.c.b16 %v2275, %v2274
    %2292 = vmatpush.bf16.msra.mxu0 %v2283
    %2293 = vmatpush.bf16.msra.mxu0 %v2282
    %2294 = vmatpush.bf16.msra.mxu0 %v2281
    %2295 = vmatpush.bf16.msra.mxu0 %v2280
    %2296 = vmatpush.bf16.msra.mxu0 %v2279
    %2297 = vmatpush.bf16.msra.mxu0 %v2278
    %2298 = vmatpush.bf16.msra.mxu0 %v2277
    %2299 = vmatpush.bf16.msra.mxu0 %v2276
    %2300 = vmatmul.bf16.gmra.mxu0 %v2228
    %v2301 = vpop.f32.mrf.mxu0
    %v2302 = vadd.f32 0.0, %v2301
    %v2303 = vpop.f32.mrf.mxu0
    %v2304 = vadd.f32 0.0, %v2303
    %2305 = vmatmul.bf16.gmra.mxu0 %v2229
    %v2306 = vpop.f32.mrf.mxu0
    %v2307 = vadd.f32 0.0, %v2306
    %v2308 = vpop.f32.mrf.mxu0
    %v2309 = vadd.f32 0.0, %v2308
    %2310 = vmatmul.bf16.gmra.mxu0 %v2230
    %v2311 = vpop.f32.mrf.mxu0
    %v2312 = vadd.f32 0.0, %v2311
    %v2313 = vpop.f32.mrf.mxu0
    %v2314 = vadd.f32 0.0, %v2313
    %2315 = vmatmul.bf16.gmra.mxu0 %v2231
    %v2316 = vpop.f32.mrf.mxu0
    %v2317 = vadd.f32 0.0, %v2316
    %v2318 = vpop.f32.mrf.mxu0
    %v2319 = vadd.f32 0.0, %v2318
    %2320 = vmatmul.bf16.gmra.mxu0 %v2232
    %v2321 = vpop.f32.mrf.mxu0
    %v2322 = vadd.f32 0.0, %v2321
    %v2323 = vpop.f32.mrf.mxu0
    %v2324 = vadd.f32 0.0, %v2323
    %2325 = vmatmul.bf16.gmra.mxu0 %v2233
    %v2326 = vpop.f32.mrf.mxu0
    %v2327 = vadd.f32 0.0, %v2326
    %v2328 = vpop.f32.mrf.mxu0
    %v2329 = vadd.f32 0.0, %v2328
    %2330 = vmatmul.bf16.gmra.mxu0 %v2234
    %v2331 = vpop.f32.mrf.mxu0
    %v2332 = vadd.f32 0.0, %v2331
    %v2333 = vpop.f32.mrf.mxu0
    %v2334 = vadd.f32 0.0, %v2333
    %2335 = vmatmul.bf16.gmra.mxu0 %v2235
    %v2336 = vpop.f32.mrf.mxu0
    %v2337 = vadd.f32 0.0, %v2336
    %v2338 = vpop.f32.mrf.mxu0
    %v2339 = vadd.f32 0.0, %v2338
    %2340 = vdwg.mxu0
    %v2341 = vadd.f32 %v1924, %v2302
    %v2342 = vadd.f32 %v1925, %v2304
    %v2343 = vadd.f32 %v1926, %v2307
    %v2344 = vadd.f32 %v1927, %v2309
    %v2345 = vadd.f32 %v1928, %v2312
    %v2346 = vadd.f32 %v1929, %v2314
    %v2347 = vadd.f32 %v1930, %v2317
    %v2348 = vadd.f32 %v1931, %v2319
    %v2349 = vadd.f32 %v1932, %v2322
    %v2350 = vadd.f32 %v1933, %v2324
    %v2351 = vadd.f32 %v1934, %v2327
    %v2352 = vadd.f32 %v1935, %v2329
    %v2353 = vadd.f32 %v1936, %v2332
    %v2354 = vadd.f32 %v1937, %v2334
    %v2355 = vadd.f32 %v1938, %v2337
    %v2356 = vadd.f32 %v1939, %v2339
    %v2357 = vld [vmem:[%s1746] sm:$0xe]
    %v2358 = vld [vmem:[%s1746 + $0x8] sm:$0xe]
    %v2359 = vld [vmem:[%s1746 + $0x10] sm:$0xe]
    %v2360 = vld [vmem:[%s1746 + $0x18] sm:$0xe]
    %v2361 = vld [vmem:[%s1746 + $0x20] sm:$0xe]
    %v2362 = vld [vmem:[%s1746 + $0x28] sm:$0xe]
    %v2363 = vld [vmem:[%s1746 + $0x30] sm:$0xe]
    %v2364 = vld [vmem:[%s1746 + $0x38] sm:$0xe]
    %v2365 = vld [vmem:[%s1746 + $0x50] sm:$0xe]
    %v2366 = vld [vmem:[%s1746 + $0x58] sm:$0xe]
    %v2367 = vld [vmem:[%s1746 + $0x60] sm:$0xe]
    %v2368 = vld [vmem:[%s1746 + $0x68] sm:$0xe]
    %v2369 = vld [vmem:[%s1746 + $0x70] sm:$0xe]
    %v2370 = vld [vmem:[%s1746 + $0x78] sm:$0xe]
    %v2371 = vld [vmem:[%s1746 + $0x80] sm:$0xe]
    %v2372 = vld [vmem:[%s1746 + $0x88] sm:$0xe]
    %v2405 = vrot.slane %v2357, 5
    %v2406 = vrot.slane %v2405, 4
    %v2407 = vrot.slane %v1941, 5
    %v2408 = vsel %vm636, %v2406, %v2407
    %v2409 = vrot.slane %v2358, 5
    %v2410 = vrot.slane %v2409, 4
    %v2411 = vrot.slane %v1943, 5
    %v2412 = vsel %vm636, %v2410, %v2411
    %v2413 = vrot.slane %v2359, 5
    %v2414 = vrot.slane %v2413, 4
    %v2415 = vrot.slane %v1945, 5
    %v2416 = vsel %vm636, %v2414, %v2415
    %v2417 = vrot.slane %v2360, 5
    %v2418 = vrot.slane %v2417, 4
    %v2419 = vrot.slane %v1947, 5
    %v2420 = vsel %vm636, %v2418, %v2419
    %v2421 = vrot.slane %v2361, 5
    %v2422 = vrot.slane %v2421, 4
    %v2423 = vrot.slane %v1949, 5
    %v2424 = vsel %vm636, %v2422, %v2423
    %v2425 = vrot.slane %v2362, 5
    %v2426 = vrot.slane %v2425, 4
    %v2427 = vrot.slane %v1951, 5
    %v2428 = vsel %vm636, %v2426, %v2427
    %v2429 = vrot.slane %v2363, 5
    %v2430 = vrot.slane %v2429, 4
    %v2431 = vrot.slane %v1953, 5
    %v2432 = vsel %vm636, %v2430, %v2431
    %v2433 = vrot.slane %v2364, 5
    %v2434 = vrot.slane %v2433, 4
    %v2435 = vrot.slane %v1955, 5
    %v2436 = vsel %vm636, %v2434, %v2435
    %v2437 = vrot.slane %v2365, 5
    %v2438 = vrot.slane %v2437, 4
    %v2439 = vrot.slane %v1957, 5
    %v2440 = vsel %vm636, %v2438, %v2439
    %v2441 = vrot.slane %v2366, 5
    %v2442 = vrot.slane %v2441, 4
    %v2443 = vrot.slane %v1959, 5
    %v2444 = vsel %vm636, %v2442, %v2443
    %v2445 = vrot.slane %v2367, 5
    %v2446 = vrot.slane %v2445, 4
    %v2447 = vrot.slane %v1961, 5
    %v2448 = vsel %vm636, %v2446, %v2447
    %v2449 = vrot.slane %v2368, 5
    %v2450 = vrot.slane %v2449, 4
    %v2451 = vrot.slane %v1963, 5
    %v2452 = vsel %vm636, %v2450, %v2451
    %v2453 = vrot.slane %v2369, 5
    %v2454 = vrot.slane %v2453, 4
    %v2455 = vrot.slane %v1965, 5
    %v2456 = vsel %vm636, %v2454, %v2455
    %v2457 = vrot.slane %v2370, 5
    %v2458 = vrot.slane %v2457, 4
    %v2459 = vrot.slane %v1967, 5
    %v2460 = vsel %vm636, %v2458, %v2459
    %v2461 = vrot.slane %v2371, 5
    %v2462 = vrot.slane %v2461, 4
    %v2463 = vrot.slane %v1969, 5
    %v2464 = vsel %vm636, %v2462, %v2463
    %v2465 = vrot.slane %v2372, 5
    %v2466 = vrot.slane %v2465, 4
    %v2467 = vrot.slane %v1971, 5
    %v2468 = vsel %vm636, %v2466, %v2467
    %v2469 = vld [vmem:[%s1 + $0x200] sm:$0xf]
    %v2470 = vld [vmem:[%s1 + $0x204] sm:$0xf]
    %v2471 = vld [vmem:[%s1 + $0x208] sm:$0xf]
    %v2472 = vld [vmem:[%s1 + $0x20c] sm:$0xf]
    %v2473 = vld [vmem:[%s1 + $0x210] sm:$0xf]
    %v2474 = vld [vmem:[%s1 + $0x214] sm:$0xf]
    %v2475 = vld [vmem:[%s1 + $0x218] sm:$0xf]
    %v2476 = vld [vmem:[%s1 + $0x21c] sm:$0xf]
    %v2477 = vld [vmem:[%s1 + $0x220] sm:$0xf]
    %v2478 = vld [vmem:[%s1 + $0x224] sm:$0xf]
    %v2479 = vld [vmem:[%s1 + $0x228] sm:$0xf]
    %v2480 = vld [vmem:[%s1 + $0x22c] sm:$0xf]
    %v2481 = vld [vmem:[%s1 + $0x230] sm:$0xf]
    %v2482 = vld [vmem:[%s1 + $0x234] sm:$0xf]
    %v2483 = vld [vmem:[%s1 + $0x238] sm:$0xf]
    %v2484 = vld [vmem:[%s1 + $0x23c] sm:$0xf]
    %v2485 = vunpack.c.l.b16 %v2408
    %v2486 = vunpack.c.l.b16 %v2412
    %v2487 = vunpack.c.l.b16 %v2416
    %v2488 = vunpack.c.l.b16 %v2420
    %v2489 = vunpack.c.l.b16 %v2424
    %v2490 = vunpack.c.l.b16 %v2428
    %v2491 = vunpack.c.l.b16 %v2432
    %v2492 = vunpack.c.l.b16 %v2436
    %v2493 = vunpack.c.l.b16 %v2440
    %v2494 = vunpack.c.l.b16 %v2444
    %v2495 = vunpack.c.l.b16 %v2448
    %v2496 = vunpack.c.l.b16 %v2452
    %v2497 = vunpack.c.l.b16 %v2456
    %v2498 = vunpack.c.l.b16 %v2460
    %v2499 = vunpack.c.l.b16 %v2464
    %v2500 = vunpack.c.l.b16 %v2468
    %v2501 = vpack.c.b16 %v2486, %v2485
    %v2502 = vpack.c.b16 %v2488, %v2487
    %v2503 = vpack.c.b16 %v2490, %v2489
    %v2504 = vpack.c.b16 %v2492, %v2491
    %v2505 = vpack.c.b16 %v2494, %v2493
    %v2506 = vpack.c.b16 %v2496, %v2495
    %v2507 = vpack.c.b16 %v2498, %v2497
    %v2508 = vpack.c.b16 %v2500, %v2499
    %v2533 = vunpack.c.l.b16 %v2469
    %v2534 = vunpack.c.l.b16 %v2470
    %v2535 = vunpack.c.l.b16 %v2471
    %v2536 = vunpack.c.l.b16 %v2472
    %v2537 = vunpack.c.l.b16 %v2473
    %v2538 = vunpack.c.l.b16 %v2474
    %v2539 = vunpack.c.l.b16 %v2475
    %v2540 = vunpack.c.l.b16 %v2476
    %v2541 = vunpack.c.l.b16 %v2477
    %v2542 = vunpack.c.l.b16 %v2478
    %v2543 = vunpack.c.l.b16 %v2479
    %v2544 = vunpack.c.l.b16 %v2480
    %v2545 = vunpack.c.l.b16 %v2481
    %v2546 = vunpack.c.l.b16 %v2482
    %v2547 = vunpack.c.l.b16 %v2483
    %v2548 = vunpack.c.l.b16 %v2484
    %v2549 = vpack.c.b16 %v2534, %v2533
    %v2550 = vpack.c.b16 %v2536, %v2535
    %v2551 = vpack.c.b16 %v2538, %v2537
    %v2552 = vpack.c.b16 %v2540, %v2539
    %v2553 = vpack.c.b16 %v2542, %v2541
    %v2554 = vpack.c.b16 %v2544, %v2543
    %v2555 = vpack.c.b16 %v2546, %v2545
    %v2556 = vpack.c.b16 %v2548, %v2547
    %2565 = vmatpush.bf16.msra.mxu0 %v2556
    %2566 = vmatpush.bf16.msra.mxu0 %v2555
    %2567 = vmatpush.bf16.msra.mxu0 %v2554
    %2568 = vmatpush.bf16.msra.mxu0 %v2553
    %2569 = vmatpush.bf16.msra.mxu0 %v2552
    %2570 = vmatpush.bf16.msra.mxu0 %v2551
    %2571 = vmatpush.bf16.msra.mxu0 %v2550
    %2572 = vmatpush.bf16.msra.mxu0 %v2549
    %2573 = vmatmul.bf16.gmra.mxu0 %v2501
    %v2574 = vpop.f32.mrf.mxu0
    %v2575 = vadd.f32 0.0, %v2574
    %v2576 = vpop.f32.mrf.mxu0
    %v2577 = vadd.f32 0.0, %v2576
    %2578 = vmatmul.bf16.gmra.mxu0 %v2502
    %v2579 = vpop.f32.mrf.mxu0
    %v2580 = vadd.f32 0.0, %v2579
    %v2581 = vpop.f32.mrf.mxu0
    %v2582 = vadd.f32 0.0, %v2581
    %2583 = vmatmul.bf16.gmra.mxu0 %v2503
    %v2584 = vpop.f32.mrf.mxu0
    %v2585 = vadd.f32 0.0, %v2584
    %v2586 = vpop.f32.mrf.mxu0
    %v2587 = vadd.f32 0.0, %v2586
    %2588 = vmatmul.bf16.gmra.mxu0 %v2504
    %v2589 = vpop.f32.mrf.mxu0
    %v2590 = vadd.f32 0.0, %v2589
    %v2591 = vpop.f32.mrf.mxu0
    %v2592 = vadd.f32 0.0, %v2591
    %2593 = vmatmul.bf16.gmra.mxu0 %v2505
    %v2594 = vpop.f32.mrf.mxu0
    %v2595 = vadd.f32 0.0, %v2594
    %v2596 = vpop.f32.mrf.mxu0
    %v2597 = vadd.f32 0.0, %v2596
    %2598 = vmatmul.bf16.gmra.mxu0 %v2506
    %v2599 = vpop.f32.mrf.mxu0
    %v2600 = vadd.f32 0.0, %v2599
    %v2601 = vpop.f32.mrf.mxu0
    %v2602 = vadd.f32 0.0, %v2601
    %2603 = vmatmul.bf16.gmra.mxu0 %v2507
    %v2604 = vpop.f32.mrf.mxu0
    %v2605 = vadd.f32 0.0, %v2604
    %v2606 = vpop.f32.mrf.mxu0
    %v2607 = vadd.f32 0.0, %v2606
    %2608 = vmatmul.bf16.gmra.mxu0 %v2508
    %v2609 = vpop.f32.mrf.mxu0
    %v2610 = vadd.f32 0.0, %v2609
    %v2611 = vpop.f32.mrf.mxu0
    %v2612 = vadd.f32 0.0, %v2611
    %2613 = vdwg.mxu0
    %v2614 = vadd.f32 %v2341, %v2575
    %v2615 = vadd.f32 %v2342, %v2577
    %v2616 = vadd.f32 %v2343, %v2580
    %v2617 = vadd.f32 %v2344, %v2582
    %v2618 = vadd.f32 %v2345, %v2585
    %v2619 = vadd.f32 %v2346, %v2587
    %v2620 = vadd.f32 %v2347, %v2590
    %v2621 = vadd.f32 %v2348, %v2592
    %v2622 = vadd.f32 %v2349, %v2595
    %v2623 = vadd.f32 %v2350, %v2597
    %v2624 = vadd.f32 %v2351, %v2600
    %v2625 = vadd.f32 %v2352, %v2602
    %v2626 = vadd.f32 %v2353, %v2605
    %v2627 = vadd.f32 %v2354, %v2607
    %v2628 = vadd.f32 %v2355, %v2610
    %v2629 = vadd.f32 %v2356, %v2612
    %v2630 = vadd.f32 %v2614, %v2615
    %v2631 = vadd.f32 %v2630, %v2616
    %v2632 = vadd.f32 %v2631, %v2617
    %v2633 = vadd.f32 %v2632, %v2618
    %v2634 = vadd.f32 %v2633, %v2619
    %v2635 = vadd.f32 %v2634, %v2620
    %v2636 = vadd.f32 %v2635, %v2621
    %v2637 = vadd.f32 %v2636, %v2622
    %v2638 = vadd.f32 %v2637, %v2623
    %v2639 = vadd.f32 %v2638, %v2624
    %v2640 = vadd.f32 %v2639, %v2625
    %v2641 = vadd.f32 %v2640, %v2626
    %v2642 = vadd.f32 %v2641, %v2627
    %v2643 = vadd.f32 %v2642, %v2628
    %v2644 = vadd.f32 %v2643, %v2629
    %v2645 = vrot.slane %v2644, 4
    %v2646 = vadd.f32 %v2644, %v2645
    %v2647 = vrot.slane %v2646, 2
    %v2648 = vadd.f32 %v2646, %v2647
    %v2649 = vrot.slane %v2648, 1
    %v2650 = vadd.f32 %v2648, %v2649
    %v2651 = vmul.f32 %v2650, 0.0078125
    %v2652 = vsub.f32 %v2614, %v2651
    %v2653 = vsub.f32 %v2615, %v2651
    %v2654 = vsub.f32 %v2616, %v2651
    %v2655 = vsub.f32 %v2617, %v2651
    %v2656 = vsub.f32 %v2618, %v2651
    %v2657 = vsub.f32 %v2619, %v2651
    %v2658 = vsub.f32 %v2620, %v2651
    %v2659 = vsub.f32 %v2621, %v2651
    %v2660 = vsub.f32 %v2622, %v2651
    %v2661 = vsub.f32 %v2623, %v2651
    %v2662 = vsub.f32 %v2624, %v2651
    %v2663 = vsub.f32 %v2625, %v2651
    %v2664 = vsub.f32 %v2626, %v2651
    %v2665 = vsub.f32 %v2627, %v2651
    %v2666 = vsub.f32 %v2628, %v2651
    %v2667 = vsub.f32 %v2629, %v2651
    %v2668 = vmul.f32 %v2652, %v2652
    %v2669 = vmul.f32 %v2653, %v2653
    %v2670 = vmul.f32 %v2654, %v2654
    %v2671 = vmul.f32 %v2655, %v2655
    %v2672 = vmul.f32 %v2656, %v2656
    %v2673 = vmul.f32 %v2657, %v2657
    %v2674 = vmul.f32 %v2658, %v2658
    %v2675 = vmul.f32 %v2659, %v2659
    %v2676 = vmul.f32 %v2660, %v2660
    %v2677 = vmul.f32 %v2661, %v2661
    %v2678 = vmul.f32 %v2662, %v2662
    %v2679 = vmul.f32 %v2663, %v2663
    %v2680 = vmul.f32 %v2664, %v2664
    %v2681 = vmul.f32 %v2665, %v2665
    %v2682 = vmul.f32 %v2666, %v2666
    %v2683 = vmul.f32 %v2667, %v2667
    %v2684 = vadd.f32 %v2668, %v2669
    %v2685 = vadd.f32 %v2684, %v2670
    %v2686 = vadd.f32 %v2685, %v2671
    %v2687 = vadd.f32 %v2686, %v2672
    %v2688 = vadd.f32 %v2687, %v2673
    %v2689 = vadd.f32 %v2688, %v2674
    %v2690 = vadd.f32 %v2689, %v2675
    %v2691 = vadd.f32 %v2690, %v2676
    %v2692 = vadd.f32 %v2691, %v2677
    %v2693 = vadd.f32 %v2692, %v2678
    %v2694 = vadd.f32 %v2693, %v2679
    %v2695 = vadd.f32 %v2694, %v2680
    %v2696 = vadd.f32 %v2695, %v2681
    %v2697 = vadd.f32 %v2696, %v2682
    %v2698 = vadd.f32 %v2697, %v2683
    %v2699 = vrot.slane %v2698, 4
    %v2700 = vadd.f32 %v2698, %v2699
    %v2701 = vrot.slane %v2700, 2
    %v2702 = vadd.f32 %v2700, %v2701
    %v2703 = vrot.slane %v2702, 1
    %v2704 = vadd.f32 %v2702, %v2703
    %v2705 = vmul.f32 %v2704, 0.0078125
    %v2706 = vadd.f32 %v2705, 1e-05
    %v2707 = vrsqrt.pop %v2706
    %v2708 = vmul.f32 %v2707, %v2706
    %v2709 = vmul.f32 %v2708, %v2707
    %v2710 = vmul.f32 0.5, %v2709
    %v2711 = vsub.f32 1.5, %v2710
    %v2712 = vmul.f32 %v2707, %v2711
    %vm2713 = vweird.f32 %v2706
    %vm2714 = vweird.f32 %v2707
    %vm2715 = vmor %vm2713, %vm2714
    %v2716 = vsel %vm2715, %v2707, %v2712
    %v2717 = vmul.f32 %v2652, %v2716
    %v2718 = vmul.f32 %v2653, %v2716
    %v2719 = vmul.f32 %v2654, %v2716
    %v2720 = vmul.f32 %v2655, %v2716
    %v2721 = vmul.f32 %v2656, %v2716
    %v2722 = vmul.f32 %v2657, %v2716
    %v2723 = vmul.f32 %v2658, %v2716
    %v2724 = vmul.f32 %v2659, %v2716
    %v2725 = vmul.f32 %v2660, %v2716
    %v2726 = vmul.f32 %v2661, %v2716
    %v2727 = vmul.f32 %v2662, %v2716
    %v2728 = vmul.f32 %v2663, %v2716
    %v2729 = vmul.f32 %v2664, %v2716
    %v2730 = vmul.f32 %v2665, %v2716
    %v2731 = vmul.f32 %v2666, %v2716
    %v2732 = vmul.f32 %v2667, %v2716
    %v2733 = vld [vmem:[%s2] sm:$0x1]
    %v2735 = vperm.slane %v2733, 0
    %v2737 = vmul.f32 %v2717, %v2735
    %v2738 = vmul.f32 %v2718, %v2735
    %v2739 = vmul.f32 %v2719, %v2735
    %v2740 = vmul.f32 %v2720, %v2735
    %v2741 = vmul.f32 %v2721, %v2735
    %v2742 = vmul.f32 %v2722, %v2735
    %v2743 = vmul.f32 %v2723, %v2735
    %v2744 = vmul.f32 %v2724, %v2735
    %v2745 = vmul.f32 %v2725, %v2735
    %v2746 = vmul.f32 %v2726, %v2735
    %v2747 = vmul.f32 %v2727, %v2735
    %v2748 = vmul.f32 %v2728, %v2735
    %v2749 = vmul.f32 %v2729, %v2735
    %v2750 = vmul.f32 %v2730, %v2735
    %v2751 = vmul.f32 %v2731, %v2735
    %v2752 = vmul.f32 %v2732, %v2735
    %v2753 = vld [vmem:[%s3] sm:$0x1]
    %v2755 = vperm.slane %v2753, 0
    %v2757 = vadd.f32 %v2737, %v2755
    %v2758 = vadd.f32 %v2738, %v2755
    %v2759 = vadd.f32 %v2739, %v2755
    %v2760 = vadd.f32 %v2740, %v2755
    %v2761 = vadd.f32 %v2741, %v2755
    %v2762 = vadd.f32 %v2742, %v2755
    %v2763 = vadd.f32 %v2743, %v2755
    %v2764 = vadd.f32 %v2744, %v2755
    %v2765 = vadd.f32 %v2745, %v2755
    %v2766 = vadd.f32 %v2746, %v2755
    %v2767 = vadd.f32 %v2747, %v2755
    %v2768 = vadd.f32 %v2748, %v2755
    %v2769 = vadd.f32 %v2749, %v2755
    %v2770 = vadd.f32 %v2750, %v2755
    %v2771 = vadd.f32 %v2751, %v2755
    %v2772 = vadd.f32 %v2752, %v2755
    %v2773 = vld [vmem:[%s4] sm:$0xff]
    %v2774 = vld [vmem:[%s4 + $0x8] sm:$0xff]
    %v2775 = vld [vmem:[%s4 + $0x10] sm:$0xff]
    %v2776 = vld [vmem:[%s4 + $0x18] sm:$0xff]
    %v2777 = vld [vmem:[%s4 + $0x20] sm:$0xff]
    %v2778 = vld [vmem:[%s4 + $0x28] sm:$0xff]
    %v2779 = vld [vmem:[%s4 + $0x30] sm:$0xff]
    %v2780 = vld [vmem:[%s4 + $0x38] sm:$0xff]
    %v2781 = vld [vmem:[%s4 + $0x40] sm:$0xff]
    %v2782 = vld [vmem:[%s4 + $0x48] sm:$0xff]
    %v2783 = vld [vmem:[%s4 + $0x50] sm:$0xff]
    %v2784 = vld [vmem:[%s4 + $0x58] sm:$0xff]
    %v2785 = vld [vmem:[%s4 + $0x60] sm:$0xff]
    %v2786 = vld [vmem:[%s4 + $0x68] sm:$0xff]
    %v2787 = vld [vmem:[%s4 + $0x70] sm:$0xff]
    %v2788 = vld [vmem:[%s4 + $0x78] sm:$0xff]
    %v2789 = vadd.f32 %v2757, %v2773
    %v2790 = vadd.f32 %v2758, %v2774
    %v2791 = vadd.f32 %v2759, %v2775
    %v2792 = vadd.f32 %v2760, %v2776
    %v2793 = vadd.f32 %v2761, %v2777
    %v2794 = vadd.f32 %v2762, %v2778
    %v2795 = vadd.f32 %v2763, %v2779
    %v2796 = vadd.f32 %v2764, %v2780
    %v2797 = vadd.f32 %v2765, %v2781
    %v2798 = vadd.f32 %v2766, %v2782
    %v2799 = vadd.f32 %v2767, %v2783
    %v2800 = vadd.f32 %v2768, %v2784
    %v2801 = vadd.f32 %v2769, %v2785
    %v2802 = vadd.f32 %v2770, %v2786
    %v2803 = vadd.f32 %v2771, %v2787
    %v2804 = vadd.f32 %v2772, %v2788
    %v2805 = vmax.f32 %v2789, 0.0
    %v2806 = vmax.f32 %v2790, 0.0
    %v2807 = vmax.f32 %v2791, 0.0
    %v2808 = vmax.f32 %v2792, 0.0
    %v2809 = vmax.f32 %v2793, 0.0
    %v2810 = vmax.f32 %v2794, 0.0
    %v2811 = vmax.f32 %v2795, 0.0
    %v2812 = vmax.f32 %v2796, 0.0
    %v2813 = vmax.f32 %v2797, 0.0
    %v2814 = vmax.f32 %v2798, 0.0
    %v2815 = vmax.f32 %v2799, 0.0
    %v2816 = vmax.f32 %v2800, 0.0
    %v2817 = vmax.f32 %v2801, 0.0
    %v2818 = vmax.f32 %v2802, 0.0
    %v2819 = vmax.f32 %v2803, 0.0
    %v2820 = vmax.f32 %v2804, 0.0
    %2821 = vst [vmem:[#allocation2] sm:$0xff] %v2805
    %2822 = vst [vmem:[#allocation2 + $0x8] sm:$0xff] %v2806
    %2823 = vst [vmem:[#allocation2 + $0x10] sm:$0xff] %v2807
    %2824 = vst [vmem:[#allocation2 + $0x18] sm:$0xff] %v2808
    %2825 = vst [vmem:[#allocation2 + $0x20] sm:$0xff] %v2809
    %2826 = vst [vmem:[#allocation2 + $0x28] sm:$0xff] %v2810
    %2827 = vst [vmem:[#allocation2 + $0x30] sm:$0xff] %v2811
    %2828 = vst [vmem:[#allocation2 + $0x38] sm:$0xff] %v2812
    %2829 = vst [vmem:[#allocation2 + $0x40] sm:$0xff] %v2813
    %2830 = vst [vmem:[#allocation2 + $0x48] sm:$0xff] %v2814
    %2831 = vst [vmem:[#allocation2 + $0x50] sm:$0xff] %v2815
    %2832 = vst [vmem:[#allocation2 + $0x58] sm:$0xff] %v2816
    %2833 = vst [vmem:[#allocation2 + $0x60] sm:$0xff] %v2817
    %2834 = vst [vmem:[#allocation2 + $0x68] sm:$0xff] %v2818
    %2835 = vst [vmem:[#allocation2 + $0x70] sm:$0xff] %v2819
    %2836 = vst [vmem:[#allocation2 + $0x78] sm:$0xff] %v2820
    // Predicated region
    $region22: #{forward.9} parent=1 // pred_check
      _
    $region23: #{forward.9} parent=1 // pred_check_branch
      %2838 = sbr.rel (0) target = $region25
    $region24: #{forward.9} parent=1 // pred_region
      %2840 = vsyncadd [#allocation3], 0
      %s2841 = sshll.u32 [#allocation2], 4
      %s2842 = int_to_ptr.vmem [resolvable:$true] %s2841
      %s2843 = sshll.u32 %s5, 4
      %s2844 = int_to_ptr.hbm [resolvable:$true] %s2843
      %2849 = dma.vmem_to_hbm [thread:$0]  %s2842, 2048, %s2844, [#allocation3], 128, 128, 8
    $region25: #{forward.9} parent=1 // pred_fallthru
      _
    // Predicated region
    $region26: #{forward.9} parent=1 // pred_check
      _
    $region27: #{forward.9} parent=1 // pred_check_branch
      %2851 = sbr.rel (0) target = $region29
    $region28: #{forward.9} parent=1 // pred_region
      %2853 = dma.done [#allocation3], 2048
    $region29: #{forward.9} parent=1 // pred_fallthru
      _
    %2854 = vsyncpa [#allocation3], 1

</llo_original>
